<compile_context>
chip_gen: v7x
topology: tpu7x:2x2x1
jax: 0.10.0
libtpu: 0.0.40
codegen_flags: <defaults>
</compile_context>

<pallas_src>
import numpy as np
import jax
import jax.numpy as jnp
from jax import lax
from jax.experimental import pallas as pl
from jax.experimental.pallas import tpu as pltpu


def _encoder_step_kernel(x_ref, w1_ref, b1_ref, w2_ref, b2_ref, mask_ref,
                         y_ref, skip_ref, pad1_ref, pad2_ref):
    # x_ref    : (1, H, W, Cin)        bf16, unpadded input (one batch element)
    # w1_ref   : (9, Cin, Cp)          bf16, BN-folded conv1 taps
    # w2_ref   : (9, Cp, Cp)           bf16, BN-folded conv2 taps
    # b1_ref/b2_ref : (1, Cp)          f32, BN-folded biases
    # mask_ref : (H*Wr, 1)             f32, 1.0 for real W columns, 0.0 for junk cols
    # y_ref    : (1, H//2, W//2, Cp)   f32 pooled output
    # skip_ref : (1, H, W, Cp)         f32 skip output
    # pad1_ref : ((H+4)*Wr, Cin)       bf16 flat padded conv1 input
    # pad2_ref : ((H+4)*Wr, Cp)        bf16 flat padded conv2 input
    H = x_ref.shape[1]
    W = x_ref.shape[2]
    Cin = x_ref.shape[3]
    Cp = skip_ref.shape[3]
    Wr = pad2_ref.shape[0] // (H + 4)        # padded row pitch (multiple of 8)
    HW = H * Wr
    bf16 = jnp.bfloat16

    # ---- zero only the halo bands the data stores below do not cover ----------
    zb1 = jnp.zeros((2 * Wr, Cin), bf16)
    pad1_ref[pl.ds(0, 2 * Wr), :] = zb1
    pad1_ref[pl.ds((H + 2) * Wr, 2 * Wr), :] = zb1
    zb2 = jnp.zeros((2 * Wr, Cp), bf16)
    pad2_ref[pl.ds(0, 2 * Wr), :] = zb2
    pad2_ref[pl.ds((H + 2) * Wr, 2 * Wr), :] = zb2

    # ---- scatter the input rows into the flat padded layout -------------------
    # data[y, x] lives at flat row (y+2)*Wr + x ; the (Wr-W) trailing columns of
    # each flat row carry the right zero-pad / next row's left zero-pad.
    # H is small & static here -> static Python loop gives aligned static offsets.
    zrow = jnp.zeros((Wr - W, Cin), bf16)
    for y in range(H):
        base = (y + 2) * Wr                  # Wr is a multiple of 8 -> aligned store
        pad1_ref[pl.ds(base, W), :] = x_ref[0, y]
        pad1_ref[pl.ds(base + W, Wr - W), :] = zrow

    # ---- conv1: 9 taps, each a single contiguous flat window -> MXU matmul ----
    acc1 = jnp.zeros((HW, Cp), jnp.float32)
    for t in range(9):
        ky, kx = t // 3, t % 3
        start = (ky + 1) * Wr + (kx - 1)     # static offset; shifted load, no relayout
        win = pad1_ref[pl.ds(start, HW), :]                  # (H*Wr, Cin) bf16
        acc1 = acc1 + jnp.dot(win, w1_ref[t], preferred_element_type=jnp.float32)
    # bias (BN-folded) + ReLU, with the junk columns zeroed in the same VPU pass
    # so they become valid zero-padding for conv2.
    h1 = jnp.maximum(acc1 + b1_ref[...], 0.0) * mask_ref[...]
    pad2_ref[pl.ds(2 * Wr, HW), :] = h1.astype(bf16)         # one aligned store

    # ---- conv2 -----------------------------------------------------------------
    acc2 = jnp.zeros((HW, Cp), jnp.float32)
    for t in range(9):
        ky, kx = t // 3, t % 3
        start = (ky + 1) * Wr + (kx - 1)
        win = pad2_ref[pl.ds(start, HW), :]                  # (H*Wr, Cp) bf16
        acc2 = acc2 + jnp.dot(win, w2_ref[t], preferred_element_type=jnp.float32)
    h2 = jnp.maximum(acc2 + b2_ref[...], 0.0)

    skip = h2.reshape(H, Wr, Cp)[:, :W, :]                   # drop junk columns
    skip_ref[0] = skip.astype(skip_ref.dtype)

    # ---- 2x2 max-pool: H first (free leading-dim split), then W ----------------
    hm = jnp.max(skip.reshape(H // 2, 2, W, Cp), axis=1)     # (H//2, W, Cp)
    pooled = jnp.max(hm.reshape(H // 2, W // 2, 2, Cp), axis=2)
    y_ref[0] = pooled.astype(y_ref.dtype)


def _pad_axis(a, axis, target):
    pad = [(0, 0)] * a.ndim
    pad[axis] = (0, target - a.shape[axis])
    return jnp.pad(a, pad)


def encoder_step_pallas_nhwc(x_nhwc, params):
    """x_nhwc: (N, H, W, Cin) f32. Returns (pooled, skip) in NHWC."""
    N, H, W, Cin = x_nhwc.shape
    Cout = params["w1"].shape[-1]
    assert H % 2 == 0 and W % 2 == 0, "MaxPool2d(2) requires even H, W"

    LANE = 128
    Cp = ((Cout + LANE - 1) // LANE) * LANE          # lane-dense channel count
    Wr = ((W + 2 + 7) // 8) * 8                      # padded row pitch (mult of 8)

    eps = 1e-5
    # Fold eval-mode BatchNorm into the convs:  y = conv(x, w*s) + ((b-m)*s + beta)
    s1 = params["bn1_gamma"] / jnp.sqrt(params["bn1_var"] + eps)
    s2 = params["bn2_gamma"] / jnp.sqrt(params["bn2_var"] + eps)
    w1f = params["w1"] * s1
    w2f = params["w2"] * s2
    b1f = (params["b1"] - params["bn1_mean"]) * s1 + params["bn1_beta"]
    b2f = (params["b2"] - params["bn2_mean"]) * s2 + params["bn2_beta"]

    # Pad out-channels (and conv2 in-channels) to Cp, flatten the 3x3 taps.
    w1_p = _pad_axis(w1f, 3, Cp).reshape(9, Cin, Cp).astype(jnp.bfloat16)
    w2_p = _pad_axis(_pad_axis(w2f, 3, Cp), 2, Cp).reshape(9, Cp, Cp).astype(jnp.bfloat16)
    b1_p = _pad_axis(b1f, 0, Cp).reshape(1, Cp).astype(jnp.float32)
    b2_p = _pad_axis(b2f, 0, Cp).reshape(1, Cp).astype(jnp.float32)

    # Column mask for the flat layout: 1.0 on real W columns, 0.0 on the junk tail.
    col = jnp.arange(H * Wr, dtype=jnp.int32) % Wr
    mask = (col < W).astype(jnp.float32).reshape(H * Wr, 1)

    x_bf = x_nhwc.astype(jnp.bfloat16)

    # Per-grid-step VMEM working set (double-buffered blocks + scratch), with 2x
    # headroom, floored at 32 MiB and capped at 64 MiB (valid on v5e/v6e/v7x).
    bytes_est = (
        2 * H * W * Cin * 2                          # x block (bf16), double-buffered
        + 2 * 9 * Cin * Cp * 2                       # w1 (bf16)
        + 2 * 9 * Cp * Cp * 2                        # w2 (bf16)
        + 2 * 2 * Cp * 4                             # biases (f32)
        + 2 * H * Wr * 4                             # mask (f32)
        + 2 * (H // 2) * (W // 2) * Cp * 4           # pooled output block (f32)
        + 2 * H * W * Cp * 4                         # skip output block (f32)
        + (H + 4) * Wr * Cin * 2                     # pad1 scratch (bf16)
        + (H + 4) * Wr * Cp * 2                      # pad2 scratch (bf16)
    )
    vmem_limit = int(min(64 * 1024 * 1024, max(32 * 1024 * 1024, 2 * bytes_est)))

    grid_spec = pltpu.PrefetchScalarGridSpec(
        num_scalar_prefetch=0,
        grid=(N,),
        in_specs=[
            pl.BlockSpec((1, H, W, Cin), lambda n: (n, 0, 0, 0)),
            pl.BlockSpec((9, Cin, Cp), lambda n: (0, 0, 0)),
            pl.BlockSpec((1, Cp), lambda n: (0, 0)),
            pl.BlockSpec((9, Cp, Cp), lambda n: (0, 0, 0)),
            pl.BlockSpec((1, Cp), lambda n: (0, 0)),
            pl.BlockSpec((H * Wr, 1), lambda n: (0, 0)),
        ],
        out_specs=[
            pl.BlockSpec((1, H // 2, W // 2, Cp), lambda n: (n, 0, 0, 0)),
            pl.BlockSpec((1, H, W, Cp), lambda n: (n, 0, 0, 0)),
        ],
        scratch_shapes=[
            pltpu.VMEM(((H + 4) * Wr, Cin), jnp.bfloat16),
            pltpu.VMEM(((H + 4) * Wr, Cp), jnp.bfloat16),
        ],
    )

    y_p, skip_p = pl.pallas_call(
        _encoder_step_kernel,
        out_shape=(jax.ShapeDtypeStruct((N, H // 2, W // 2, Cp), jnp.float32),
                   jax.ShapeDtypeStruct((N, H, W, Cp), jnp.float32)),
        grid_spec=grid_spec,
        compiler_params=pltpu.CompilerParams(
            dimension_semantics=("parallel",),
            vmem_limit_bytes=vmem_limit),
    )(x_bf, w1_p, b1_p, w2_p, b2_p, mask)

    # Drop the channel padding (no-op when Cout is already a multiple of 128).
    return y_p[..., :Cout], skip_p[..., :Cout]


def encoder_step_pallas(x_nchw, params):
    """NCHW wrapper matching the PyTorch module interface."""
    x = jnp.transpose(x_nchw, (0, 2, 3, 1)).astype(jnp.float32)
    y, skip = encoder_step_pallas_nhwc(x, params)
    return jnp.transpose(y, (0, 3, 1, 2)), jnp.transpose(skip, (0, 3, 1, 2))


def encoder_step_ref(x_nchw, params):
    """Pure-JAX f32 reference (eval-mode BN), for correctness checking."""
    x = jnp.transpose(x_nchw, (0, 2, 3, 1)).astype(jnp.float32)
    eps = 1e-5

    def conv(h, w, b):
        return lax.conv_general_dilated(
            h, w, (1, 1), ((1, 1), (1, 1)),
            dimension_numbers=("NHWC", "HWIO", "NHWC")) + b

    def bn(h, g, beta, m, v):
        return (h - m) / jnp.sqrt(v + eps) * g + beta

    h = jax.nn.relu(bn(conv(x, params["w1"], params["b1"]),
                       params["bn1_gamma"], params["bn1_beta"],
                       params["bn1_mean"], params["bn1_var"]))
    skip = jax.nn.relu(bn(conv(h, params["w2"], params["b2"]),
                          params["bn2_gamma"], params["bn2_beta"],
                          params["bn2_mean"], params["bn2_var"]))
    y = lax.reduce_window(skip, -jnp.inf, lax.max, (1, 2, 2, 1), (1, 2, 2, 1), "VALID")
    return jnp.transpose(y, (0, 3, 1, 2)), jnp.transpose(skip, (0, 3, 1, 2))


if __name__ == "__main__":
    N, Cin, Cout, H, W = 2, 4, 8, 16, 16
    key = jax.random.PRNGKey(0)
    ks = jax.random.split(key, 13)
    params = {
        "w1": 0.1 * jax.random.normal(ks[0], (3, 3, Cin, Cout), jnp.float32),
        "b1": 0.1 * jax.random.normal(ks[1], (Cout,), jnp.float32),
        "bn1_gamma": 1.0 + 0.1 * jax.random.normal(ks[2], (Cout,), jnp.float32),
        "bn1_beta": 0.1 * jax.random.normal(ks[3], (Cout,), jnp.float32),
        "bn1_mean": 0.1 * jax.random.normal(ks[4], (Cout,), jnp.float32),
        "bn1_var": 1.0 + 0.1 * jnp.abs(jax.random.normal(ks[5], (Cout,), jnp.float32)),
        "w2": 0.1 * jax.random.normal(ks[6], (3, 3, Cout, Cout), jnp.float32),
        "b2": 0.1 * jax.random.normal(ks[7], (Cout,), jnp.float32),
        "bn2_gamma": 1.0 + 0.1 * jax.random.normal(ks[8], (Cout,), jnp.float32),
        "bn2_beta": 0.1 * jax.random.normal(ks[9], (Cout,), jnp.float32),
        "bn2_mean": 0.1 * jax.random.normal(ks[10], (Cout,), jnp.float32),
        "bn2_var": 1.0 + 0.1 * jnp.abs(jax.random.normal(ks[11], (Cout,), jnp.float32)),
    }
    x = jax.random.normal(ks[12], (N, Cin, H, W), jnp.float32)

    y, skip = jax.block_until_ready(jax.jit(encoder_step_pallas)(x, params))
    y_r, skip_r = encoder_step_ref(x, params)

    assert y.shape == (N, Cout, H // 2, W // 2)
    assert skip.shape == (N, Cout, H, W)
    # bf16 matmul inputs (f32 accumulation) -> compare at a bf16-appropriate tolerance.
    np.testing.assert_allclose(np.asarray(skip), np.asarray(skip_r), rtol=5e-2, atol=5e-2)
    np.testing.assert_allclose(np.asarray(y), np.asarray(y_r), rtol=5e-2, atol=5e-2)
    print("KERNEL_OK")
</pallas_src>

<mosaic_0001>
module attributes {stable_mosaic.version = 11 : i64} {
  func.func @_encoder_step_kernel(%arg0: i32, %arg1: memref<1x16x16x4xbf16, #tpu.memory_space<vmem>>, %arg2: memref<9x4x128xbf16, #tpu.memory_space<vmem>>, %arg3: memref<1x128xf32, #tpu.memory_space<vmem>>, %arg4: memref<9x128x128xbf16, #tpu.memory_space<vmem>>, %arg5: memref<1x128xf32, #tpu.memory_space<vmem>>, %arg6: memref<384x1xf32, #tpu.memory_space<vmem>>, %arg7: memref<1x8x8x128xf32, #tpu.memory_space<vmem>>, %arg8: memref<1x16x16x128xf32, #tpu.memory_space<vmem>>, %arg9: memref<480x4xbf16, #tpu.memory_space<vmem>>, %arg10: memref<480x128xbf16, #tpu.memory_space<vmem>>) attributes {dimension_semantics = [#tpu.dimension_semantics<parallel>], iteration_bounds = array<i64: 2>, scalar_prefetch = 0 : i64, scratch_operands = 2 : i64, tpu.core_type = #tpu.core_type<tc>, window_params = [{transform_indices = @transform_0, window_bounds = array<i64: 1, 16, 16, 4>}, {pipeline_mode = #tpu.pipeline_mode<synchronous>, transform_indices = @transform_1, window_bounds = array<i64: 9, 4, 128>}, {pipeline_mode = #tpu.pipeline_mode<synchronous>, transform_indices = @transform_2, window_bounds = array<i64: 1, 128>}, {pipeline_mode = #tpu.pipeline_mode<synchronous>, transform_indices = @transform_3, window_bounds = array<i64: 9, 128, 128>}, {pipeline_mode = #tpu.pipeline_mode<synchronous>, transform_indices = @transform_4, window_bounds = array<i64: 1, 128>}, {pipeline_mode = #tpu.pipeline_mode<synchronous>, transform_indices = @transform_5, window_bounds = array<i64: 384, 1>}, {transform_indices = @transform_6, window_bounds = array<i64: 1, 8, 8, 128>}, {transform_indices = @transform_7, window_bounds = array<i64: 1, 16, 16, 128>}]} {
    %cst = arith.constant 0.000000e+00 : bf16
    %0 = vector.broadcast %cst : bf16 to vector<48x4xbf16>
    %c0 = arith.constant 0 : index
    %c0_0 = arith.constant 0 : index
    %1 = vector.load %arg9[%c0, %c0_0] : memref<480x4xbf16, #tpu.memory_space<vmem>>, vector<48x4xbf16>
    tpu.vector_store %arg9[%c0, %c0_0], %0 {strides = array<i32>} : memref<480x4xbf16, #tpu.memory_space<vmem>>, vector<48x4xbf16>,
    %c432 = arith.constant 432 : index
    %c0_1 = arith.constant 0 : index
    %2 = vector.load %arg9[%c432, %c0_1] : memref<480x4xbf16, #tpu.memory_space<vmem>>, vector<48x4xbf16>
    tpu.vector_store %arg9[%c432, %c0_1], %0 {strides = array<i32>} : memref<480x4xbf16, #tpu.memory_space<vmem>>, vector<48x4xbf16>,
    %cst_2 = arith.constant 0.000000e+00 : bf16
    %3 = vector.broadcast %cst_2 : bf16 to vector<48x128xbf16>
    %c0_3 = arith.constant 0 : index
    %c0_4 = arith.constant 0 : index
    %4 = vector.load %arg10[%c0_3, %c0_4] : memref<480x128xbf16, #tpu.memory_space<vmem>>, vector<48x128xbf16>
    tpu.vector_store %arg10[%c0_3, %c0_4], %3 {strides = array<i32>} : memref<480x128xbf16, #tpu.memory_space<vmem>>, vector<48x128xbf16>,
    %c432_5 = arith.constant 432 : index
    %c0_6 = arith.constant 0 : index
    %5 = vector.load %arg10[%c432_5, %c0_6] : memref<480x128xbf16, #tpu.memory_space<vmem>>, vector<48x128xbf16>
    tpu.vector_store %arg10[%c432_5, %c0_6], %3 {strides = array<i32>} : memref<480x128xbf16, #tpu.memory_space<vmem>>, vector<48x128xbf16>,
    %cst_7 = arith.constant 0.000000e+00 : bf16
    %6 = vector.broadcast %cst_7 : bf16 to vector<8x4xbf16>
    %c0_8 = arith.constant 0 : index
    %c0_9 = arith.constant 0 : index
    %c0_10 = arith.constant 0 : index
    %c0_11 = arith.constant 0 : index
    %7 = vector.load %arg1[%c0_8, %c0_9, %c0_10, %c0_11] : memref<1x16x16x4xbf16, #tpu.memory_space<vmem>>, vector<1x1x16x4xbf16>
    %8 = vector.shape_cast %7 : vector<1x1x16x4xbf16> to vector<16x4xbf16>
    %c48 = arith.constant 48 : index
    %c0_12 = arith.constant 0 : index
    %9 = vector.load %arg9[%c48, %c0_12] : memref<480x4xbf16, #tpu.memory_space<vmem>>, vector<16x4xbf16>
    tpu.vector_store %arg9[%c48, %c0_12], %8 {strides = array<i32>} : memref<480x4xbf16, #tpu.memory_space<vmem>>, vector<16x4xbf16>,
    %c64 = arith.constant 64 : index
    %c0_13 = arith.constant 0 : index
    %10 = vector.load %arg9[%c64, %c0_13] : memref<480x4xbf16, #tpu.memory_space<vmem>>, vector<8x4xbf16>
    tpu.vector_store %arg9[%c64, %c0_13], %6 {strides = array<i32>} : memref<480x4xbf16, #tpu.memory_space<vmem>>, vector<8x4xbf16>,
    %c0_14 = arith.constant 0 : index
    %c1 = arith.constant 1 : index
    %c0_15 = arith.constant 0 : index
    %c0_16 = arith.constant 0 : index
    %11 = vector.load %arg1[%c0_14, %c1, %c0_15, %c0_16] : memref<1x16x16x4xbf16, #tpu.memory_space<vmem>>, vector<1x1x16x4xbf16>
    %12 = vector.shape_cast %11 : vector<1x1x16x4xbf16> to vector<16x4xbf16>
    %c72 = arith.constant 72 : index
    %c0_17 = arith.constant 0 : index
    %13 = vector.load %arg9[%c72, %c0_17] : memref<480x4xbf16, #tpu.memory_space<vmem>>, vector<16x4xbf16>
    tpu.vector_store %arg9[%c72, %c0_17], %12 {strides = array<i32>} : memref<480x4xbf16, #tpu.memory_space<vmem>>, vector<16x4xbf16>,
    %c88 = arith.constant 88 : index
    %c0_18 = arith.constant 0 : index
    %14 = vector.load %arg9[%c88, %c0_18] : memref<480x4xbf16, #tpu.memory_space<vmem>>, vector<8x4xbf16>
    tpu.vector_store %arg9[%c88, %c0_18], %6 {strides = array<i32>} : memref<480x4xbf16, #tpu.memory_space<vmem>>, vector<8x4xbf16>,
    %c0_19 = arith.constant 0 : index
    %c2 = arith.constant 2 : index
    %c0_20 = arith.constant 0 : index
    %c0_21 = arith.constant 0 : index
    %15 = vector.load %arg1[%c0_19, %c2, %c0_20, %c0_21] : memref<1x16x16x4xbf16, #tpu.memory_space<vmem>>, vector<1x1x16x4xbf16>
    %16 = vector.shape_cast %15 : vector<1x1x16x4xbf16> to vector<16x4xbf16>
    %c96 = arith.constant 96 : index
    %c0_22 = arith.constant 0 : index
    %17 = vector.load %arg9[%c96, %c0_22] : memref<480x4xbf16, #tpu.memory_space<vmem>>, vector<16x4xbf16>
    tpu.vector_store %arg9[%c96, %c0_22], %16 {strides = array<i32>} : memref<480x4xbf16, #tpu.memory_space<vmem>>, vector<16x4xbf16>,
    %c112 = arith.constant 112 : index
    %c0_23 = arith.constant 0 : index
    %18 = vector.load %arg9[%c112, %c0_23] : memref<480x4xbf16, #tpu.memory_space<vmem>>, vector<8x4xbf16>
    tpu.vector_store %arg9[%c112, %c0_23], %6 {strides = array<i32>} : memref<480x4xbf16, #tpu.memory_space<vmem>>, vector<8x4xbf16>,
    %c0_24 = arith.constant 0 : index
    %c3 = arith.constant 3 : index
    %c0_25 = arith.constant 0 : index
    %c0_26 = arith.constant 0 : index
    %19 = vector.load %arg1[%c0_24, %c3, %c0_25, %c0_26] : memref<1x16x16x4xbf16, #tpu.memory_space<vmem>>, vector<1x1x16x4xbf16>
    %20 = vector.shape_cast %19 : vector<1x1x16x4xbf16> to vector<16x4xbf16>
    %c120 = arith.constant 120 : index
    %c0_27 = arith.constant 0 : index
    %21 = vector.load %arg9[%c120, %c0_27] : memref<480x4xbf16, #tpu.memory_space<vmem>>, vector<16x4xbf16>
    tpu.vector_store %arg9[%c120, %c0_27], %20 {strides = array<i32>} : memref<480x4xbf16, #tpu.memory_space<vmem>>, vector<16x4xbf16>,
    %c136 = arith.constant 136 : index
    %c0_28 = arith.constant 0 : index
    %22 = vector.load %arg9[%c136, %c0_28] : memref<480x4xbf16, #tpu.memory_space<vmem>>, vector<8x4xbf16>
    tpu.vector_store %arg9[%c136, %c0_28], %6 {strides = array<i32>} : memref<480x4xbf16, #tpu.memory_space<vmem>>, vector<8x4xbf16>,
    %c0_29 = arith.constant 0 : index
    %c4 = arith.constant 4 : index
    %c0_30 = arith.constant 0 : index
    %c0_31 = arith.constant 0 : index
    %23 = vector.load %arg1[%c0_29, %c4, %c0_30, %c0_31] : memref<1x16x16x4xbf16, #tpu.memory_space<vmem>>, vector<1x1x16x4xbf16>
    %24 = vector.shape_cast %23 : vector<1x1x16x4xbf16> to vector<16x4xbf16>
    %c144 = arith.constant 144 : index
    %c0_32 = arith.constant 0 : index
    %25 = vector.load %arg9[%c144, %c0_32] : memref<480x4xbf16, #tpu.memory_space<vmem>>, vector<16x4xbf16>
    tpu.vector_store %arg9[%c144, %c0_32], %24 {strides = array<i32>} : memref<480x4xbf16, #tpu.memory_space<vmem>>, vector<16x4xbf16>,
    %c160 = arith.constant 160 : index
    %c0_33 = arith.constant 0 : index
    %26 = vector.load %arg9[%c160, %c0_33] : memref<480x4xbf16, #tpu.memory_space<vmem>>, vector<8x4xbf16>
    tpu.vector_store %arg9[%c160, %c0_33], %6 {strides = array<i32>} : memref<480x4xbf16, #tpu.memory_space<vmem>>, vector<8x4xbf16>,
    %c0_34 = arith.constant 0 : index
    %c5 = arith.constant 5 : index
    %c0_35 = arith.constant 0 : index
    %c0_36 = arith.constant 0 : index
    %27 = vector.load %arg1[%c0_34, %c5, %c0_35, %c0_36] : memref<1x16x16x4xbf16, #tpu.memory_space<vmem>>, vector<1x1x16x4xbf16>
    %28 = vector.shape_cast %27 : vector<1x1x16x4xbf16> to vector<16x4xbf16>
    %c168 = arith.constant 168 : index
    %c0_37 = arith.constant 0 : index
    %29 = vector.load %arg9[%c168, %c0_37] : memref<480x4xbf16, #tpu.memory_space<vmem>>, vector<16x4xbf16>
    tpu.vector_store %arg9[%c168, %c0_37], %28 {strides = array<i32>} : memref<480x4xbf16, #tpu.memory_space<vmem>>, vector<16x4xbf16>,
    %c184 = arith.constant 184 : index
    %c0_38 = arith.constant 0 : index
    %30 = vector.load %arg9[%c184, %c0_38] : memref<480x4xbf16, #tpu.memory_space<vmem>>, vector<8x4xbf16>
    tpu.vector_store %arg9[%c184, %c0_38], %6 {strides = array<i32>} : memref<480x4xbf16, #tpu.memory_space<vmem>>, vector<8x4xbf16>,
    %c0_39 = arith.constant 0 : index
    %c6 = arith.constant 6 : index
    %c0_40 = arith.constant 0 : index
    %c0_41 = arith.constant 0 : index
    %31 = vector.load %arg1[%c0_39, %c6, %c0_40, %c0_41] : memref<1x16x16x4xbf16, #tpu.memory_space<vmem>>, vector<1x1x16x4xbf16>
    %32 = vector.shape_cast %31 : vector<1x1x16x4xbf16> to vector<16x4xbf16>
    %c192 = arith.constant 192 : index
    %c0_42 = arith.constant 0 : index
    %33 = vector.load %arg9[%c192, %c0_42] : memref<480x4xbf16, #tpu.memory_space<vmem>>, vector<16x4xbf16>
    tpu.vector_store %arg9[%c192, %c0_42], %32 {strides = array<i32>} : memref<480x4xbf16, #tpu.memory_space<vmem>>, vector<16x4xbf16>,
    %c208 = arith.constant 208 : index
    %c0_43 = arith.constant 0 : index
    %34 = vector.load %arg9[%c208, %c0_43] : memref<480x4xbf16, #tpu.memory_space<vmem>>, vector<8x4xbf16>
    tpu.vector_store %arg9[%c208, %c0_43], %6 {strides = array<i32>} : memref<480x4xbf16, #tpu.memory_space<vmem>>, vector<8x4xbf16>,
    %c0_44 = arith.constant 0 : index
    %c7 = arith.constant 7 : index
    %c0_45 = arith.constant 0 : index
    %c0_46 = arith.constant 0 : index
    %35 = vector.load %arg1[%c0_44, %c7, %c0_45, %c0_46] : memref<1x16x16x4xbf16, #tpu.memory_space<vmem>>, vector<1x1x16x4xbf16>
    %36 = vector.shape_cast %35 : vector<1x1x16x4xbf16> to vector<16x4xbf16>
    %c216 = arith.constant 216 : index
    %c0_47 = arith.constant 0 : index
    %37 = vector.load %arg9[%c216, %c0_47] : memref<480x4xbf16, #tpu.memory_space<vmem>>, vector<16x4xbf16>
    tpu.vector_store %arg9[%c216, %c0_47], %36 {strides = array<i32>} : memref<480x4xbf16, #tpu.memory_space<vmem>>, vector<16x4xbf16>,
    %c232 = arith.constant 232 : index
    %c0_48 = arith.constant 0 : index
    %38 = vector.load %arg9[%c232, %c0_48] : memref<480x4xbf16, #tpu.memory_space<vmem>>, vector<8x4xbf16>
    tpu.vector_store %arg9[%c232, %c0_48], %6 {strides = array<i32>} : memref<480x4xbf16, #tpu.memory_space<vmem>>, vector<8x4xbf16>,
    %c0_49 = arith.constant 0 : index
    %c8 = arith.constant 8 : index
    %c0_50 = arith.constant 0 : index
    %c0_51 = arith.constant 0 : index
    %39 = vector.load %arg1[%c0_49, %c8, %c0_50, %c0_51] : memref<1x16x16x4xbf16, #tpu.memory_space<vmem>>, vector<1x1x16x4xbf16>
    %40 = vector.shape_cast %39 : vector<1x1x16x4xbf16> to vector<16x4xbf16>
    %c240 = arith.constant 240 : index
    %c0_52 = arith.constant 0 : index
    %41 = vector.load %arg9[%c240, %c0_52] : memref<480x4xbf16, #tpu.memory_space<vmem>>, vector<16x4xbf16>
    tpu.vector_store %arg9[%c240, %c0_52], %40 {strides = array<i32>} : memref<480x4xbf16, #tpu.memory_space<vmem>>, vector<16x4xbf16>,
    %c256 = arith.constant 256 : index
    %c0_53 = arith.constant 0 : index
    %42 = vector.load %arg9[%c256, %c0_53] : memref<480x4xbf16, #tpu.memory_space<vmem>>, vector<8x4xbf16>
    tpu.vector_store %arg9[%c256, %c0_53], %6 {strides = array<i32>} : memref<480x4xbf16, #tpu.memory_space<vmem>>, vector<8x4xbf16>,
    %c0_54 = arith.constant 0 : index
    %c9 = arith.constant 9 : index
    %c0_55 = arith.constant 0 : index
    %c0_56 = arith.constant 0 : index
    %43 = vector.load %arg1[%c0_54, %c9, %c0_55, %c0_56] : memref<1x16x16x4xbf16, #tpu.memory_space<vmem>>, vector<1x1x16x4xbf16>
    %44 = vector.shape_cast %43 : vector<1x1x16x4xbf16> to vector<16x4xbf16>
    %c264 = arith.constant 264 : index
    %c0_57 = arith.constant 0 : index
    %45 = vector.load %arg9[%c264, %c0_57] : memref<480x4xbf16, #tpu.memory_space<vmem>>, vector<16x4xbf16>
    tpu.vector_store %arg9[%c264, %c0_57], %44 {strides = array<i32>} : memref<480x4xbf16, #tpu.memory_space<vmem>>, vector<16x4xbf16>,
    %c280 = arith.constant 280 : index
    %c0_58 = arith.constant 0 : index
    %46 = vector.load %arg9[%c280, %c0_58] : memref<480x4xbf16, #tpu.memory_space<vmem>>, vector<8x4xbf16>
    tpu.vector_store %arg9[%c280, %c0_58], %6 {strides = array<i32>} : memref<480x4xbf16, #tpu.memory_space<vmem>>, vector<8x4xbf16>,
    %c0_59 = arith.constant 0 : index
    %c10 = arith.constant 10 : index
    %c0_60 = arith.constant 0 : index
    %c0_61 = arith.constant 0 : index
    %47 = vector.load %arg1[%c0_59, %c10, %c0_60, %c0_61] : memref<1x16x16x4xbf16, #tpu.memory_space<vmem>>, vector<1x1x16x4xbf16>
    %48 = vector.shape_cast %47 : vector<1x1x16x4xbf16> to vector<16x4xbf16>
    %c288 = arith.constant 288 : index
    %c0_62 = arith.constant 0 : index
    %49 = vector.load %arg9[%c288, %c0_62] : memref<480x4xbf16, #tpu.memory_space<vmem>>, vector<16x4xbf16>
    tpu.vector_store %arg9[%c288, %c0_62], %48 {strides = array<i32>} : memref<480x4xbf16, #tpu.memory_space<vmem>>, vector<16x4xbf16>,
    %c304 = arith.constant 304 : index
    %c0_63 = arith.constant 0 : index
    %50 = vector.load %arg9[%c304, %c0_63] : memref<480x4xbf16, #tpu.memory_space<vmem>>, vector<8x4xbf16>
    tpu.vector_store %arg9[%c304, %c0_63], %6 {strides = array<i32>} : memref<480x4xbf16, #tpu.memory_space<vmem>>, vector<8x4xbf16>,
    %c0_64 = arith.constant 0 : index
    %c11 = arith.constant 11 : index
    %c0_65 = arith.constant 0 : index
    %c0_66 = arith.constant 0 : index
    %51 = vector.load %arg1[%c0_64, %c11, %c0_65, %c0_66] : memref<1x16x16x4xbf16, #tpu.memory_space<vmem>>, vector<1x1x16x4xbf16>
    %52 = vector.shape_cast %51 : vector<1x1x16x4xbf16> to vector<16x4xbf16>
    %c312 = arith.constant 312 : index
    %c0_67 = arith.constant 0 : index
    %53 = vector.load %arg9[%c312, %c0_67] : memref<480x4xbf16, #tpu.memory_space<vmem>>, vector<16x4xbf16>
    tpu.vector_store %arg9[%c312, %c0_67], %52 {strides = array<i32>} : memref<480x4xbf16, #tpu.memory_space<vmem>>, vector<16x4xbf16>,
    %c328 = arith.constant 328 : index
    %c0_68 = arith.constant 0 : index
    %54 = vector.load %arg9[%c328, %c0_68] : memref<480x4xbf16, #tpu.memory_space<vmem>>, vector<8x4xbf16>
    tpu.vector_store %arg9[%c328, %c0_68], %6 {strides = array<i32>} : memref<480x4xbf16, #tpu.memory_space<vmem>>, vector<8x4xbf16>,
    %c0_69 = arith.constant 0 : index
    %c12 = arith.constant 12 : index
    %c0_70 = arith.constant 0 : index
    %c0_71 = arith.constant 0 : index
    %55 = vector.load %arg1[%c0_69, %c12, %c0_70, %c0_71] : memref<1x16x16x4xbf16, #tpu.memory_space<vmem>>, vector<1x1x16x4xbf16>
    %56 = vector.shape_cast %55 : vector<1x1x16x4xbf16> to vector<16x4xbf16>
    %c336 = arith.constant 336 : index
    %c0_72 = arith.constant 0 : index
    %57 = vector.load %arg9[%c336, %c0_72] : memref<480x4xbf16, #tpu.memory_space<vmem>>, vector<16x4xbf16>
    tpu.vector_store %arg9[%c336, %c0_72], %56 {strides = array<i32>} : memref<480x4xbf16, #tpu.memory_space<vmem>>, vector<16x4xbf16>,
    %c352 = arith.constant 352 : index
    %c0_73 = arith.constant 0 : index
    %58 = vector.load %arg9[%c352, %c0_73] : memref<480x4xbf16, #tpu.memory_space<vmem>>, vector<8x4xbf16>
    tpu.vector_store %arg9[%c352, %c0_73], %6 {strides = array<i32>} : memref<480x4xbf16, #tpu.memory_space<vmem>>, vector<8x4xbf16>,
    %c0_74 = arith.constant 0 : index
    %c13 = arith.constant 13 : index
    %c0_75 = arith.constant 0 : index
    %c0_76 = arith.constant 0 : index
    %59 = vector.load %arg1[%c0_74, %c13, %c0_75, %c0_76] : memref<1x16x16x4xbf16, #tpu.memory_space<vmem>>, vector<1x1x16x4xbf16>
    %60 = vector.shape_cast %59 : vector<1x1x16x4xbf16> to vector<16x4xbf16>
    %c360 = arith.constant 360 : index
    %c0_77 = arith.constant 0 : index
    %61 = vector.load %arg9[%c360, %c0_77] : memref<480x4xbf16, #tpu.memory_space<vmem>>, vector<16x4xbf16>
    tpu.vector_store %arg9[%c360, %c0_77], %60 {strides = array<i32>} : memref<480x4xbf16, #tpu.memory_space<vmem>>, vector<16x4xbf16>,
    %c376 = arith.constant 376 : index
    %c0_78 = arith.constant 0 : index
    %62 = vector.load %arg9[%c376, %c0_78] : memref<480x4xbf16, #tpu.memory_space<vmem>>, vector<8x4xbf16>
    tpu.vector_store %arg9[%c376, %c0_78], %6 {strides = array<i32>} : memref<480x4xbf16, #tpu.memory_space<vmem>>, vector<8x4xbf16>,
    %c0_79 = arith.constant 0 : index
    %c14 = arith.constant 14 : index
    %c0_80 = arith.constant 0 : index
    %c0_81 = arith.constant 0 : index
    %63 = vector.load %arg1[%c0_79, %c14, %c0_80, %c0_81] : memref<1x16x16x4xbf16, #tpu.memory_space<vmem>>, vector<1x1x16x4xbf16>
    %64 = vector.shape_cast %63 : vector<1x1x16x4xbf16> to vector<16x4xbf16>
    %c384 = arith.constant 384 : index
    %c0_82 = arith.constant 0 : index
    %65 = vector.load %arg9[%c384, %c0_82] : memref<480x4xbf16, #tpu.memory_space<vmem>>, vector<16x4xbf16>
    tpu.vector_store %arg9[%c384, %c0_82], %64 {strides = array<i32>} : memref<480x4xbf16, #tpu.memory_space<vmem>>, vector<16x4xbf16>,
    %c400 = arith.constant 400 : index
    %c0_83 = arith.constant 0 : index
    %66 = vector.load %arg9[%c400, %c0_83] : memref<480x4xbf16, #tpu.memory_space<vmem>>, vector<8x4xbf16>
    tpu.vector_store %arg9[%c400, %c0_83], %6 {strides = array<i32>} : memref<480x4xbf16, #tpu.memory_space<vmem>>, vector<8x4xbf16>,
    %c0_84 = arith.constant 0 : index
    %c15 = arith.constant 15 : index
    %c0_85 = arith.constant 0 : index
    %c0_86 = arith.constant 0 : index
    %67 = vector.load %arg1[%c0_84, %c15, %c0_85, %c0_86] : memref<1x16x16x4xbf16, #tpu.memory_space<vmem>>, vector<1x1x16x4xbf16>
    %68 = vector.shape_cast %67 : vector<1x1x16x4xbf16> to vector<16x4xbf16>
    %c408 = arith.constant 408 : index
    %c0_87 = arith.constant 0 : index
    %69 = vector.load %arg9[%c408, %c0_87] : memref<480x4xbf16, #tpu.memory_space<vmem>>, vector<16x4xbf16>
    tpu.vector_store %arg9[%c408, %c0_87], %68 {strides = array<i32>} : memref<480x4xbf16, #tpu.memory_space<vmem>>, vector<16x4xbf16>,
    %c424 = arith.constant 424 : index
    %c0_88 = arith.constant 0 : index
    %70 = vector.load %arg9[%c424, %c0_88] : memref<480x4xbf16, #tpu.memory_space<vmem>>, vector<8x4xbf16>
    tpu.vector_store %arg9[%c424, %c0_88], %6 {strides = array<i32>} : memref<480x4xbf16, #tpu.memory_space<vmem>>, vector<8x4xbf16>,
    %cst_89 = arith.constant 0.000000e+00 : f32
    %71 = vector.broadcast %cst_89 : f32 to vector<384x128xf32>
    %c23 = arith.constant 23 : index
    %c0_90 = arith.constant 0 : index
    %72 = vector.load %arg9[%c23, %c0_90] : memref<480x4xbf16, #tpu.memory_space<vmem>>, vector<384x4xbf16>
    %c0_91 = arith.constant 0 : index
    %c0_92 = arith.constant 0 : index
    %c0_93 = arith.constant 0 : index
    %73 = vector.load %arg2[%c0_91, %c0_92, %c0_93] : memref<9x4x128xbf16, #tpu.memory_space<vmem>>, vector<1x4x128xbf16>
    %74 = vector.shape_cast %73 : vector<1x4x128xbf16> to vector<4x128xbf16>
    %cst_94 = arith.constant dense<0.000000e+00> : vector<384x128xf32>
    %75 = tpu.matmul %72, %74, %cst_94 {dimension_numbers = #tpu.dot_dimension_numbers<[1], [0], [0], [1], [0, 0, 1, 1], [], []>} : vector<384x4xbf16>, vector<4x128xbf16>, vector<384x128xf32> -> vector<384x128xf32>
    %76 = arith.addf %71, %75 : vector<384x128xf32>
    %c24 = arith.constant 24 : index
    %c0_95 = arith.constant 0 : index
    %77 = vector.load %arg9[%c24, %c0_95] : memref<480x4xbf16, #tpu.memory_space<vmem>>, vector<384x4xbf16>
    %c1_96 = arith.constant 1 : index
    %c0_97 = arith.constant 0 : index
    %c0_98 = arith.constant 0 : index
    %78 = vector.load %arg2[%c1_96, %c0_97, %c0_98] : memref<9x4x128xbf16, #tpu.memory_space<vmem>>, vector<1x4x128xbf16>
    %79 = vector.shape_cast %78 : vector<1x4x128xbf16> to vector<4x128xbf16>
    %cst_99 = arith.constant dense<0.000000e+00> : vector<384x128xf32>
    %80 = tpu.matmul %77, %79, %cst_99 {dimension_numbers = #tpu.dot_dimension_numbers<[1], [0], [0], [1], [0, 0, 1, 1], [], []>} : vector<384x4xbf16>, vector<4x128xbf16>, vector<384x128xf32> -> vector<384x128xf32>
    %81 = arith.addf %76, %80 : vector<384x128xf32>
    %c25 = arith.constant 25 : index
    %c0_100 = arith.constant 0 : index
    %82 = vector.load %arg9[%c25, %c0_100] : memref<480x4xbf16, #tpu.memory_space<vmem>>, vector<384x4xbf16>
    %c2_101 = arith.constant 2 : index
    %c0_102 = arith.constant 0 : index
    %c0_103 = arith.constant 0 : index
    %83 = vector.load %arg2[%c2_101, %c0_102, %c0_103] : memref<9x4x128xbf16, #tpu.memory_space<vmem>>, vector<1x4x128xbf16>
    %84 = vector.shape_cast %83 : vector<1x4x128xbf16> to vector<4x128xbf16>
    %cst_104 = arith.constant dense<0.000000e+00> : vector<384x128xf32>
    %85 = tpu.matmul %82, %84, %cst_104 {dimension_numbers = #tpu.dot_dimension_numbers<[1], [0], [0], [1], [0, 0, 1, 1], [], []>} : vector<384x4xbf16>, vector<4x128xbf16>, vector<384x128xf32> -> vector<384x128xf32>
    %86 = arith.addf %81, %85 : vector<384x128xf32>
    %c47 = arith.constant 47 : index
    %c0_105 = arith.constant 0 : index
    %87 = vector.load %arg9[%c47, %c0_105] : memref<480x4xbf16, #tpu.memory_space<vmem>>, vector<384x4xbf16>
    %c3_106 = arith.constant 3 : index
    %c0_107 = arith.constant 0 : index
    %c0_108 = arith.constant 0 : index
    %88 = vector.load %arg2[%c3_106, %c0_107, %c0_108] : memref<9x4x128xbf16, #tpu.memory_space<vmem>>, vector<1x4x128xbf16>
    %89 = vector.shape_cast %88 : vector<1x4x128xbf16> to vector<4x128xbf16>
    %cst_109 = arith.constant dense<0.000000e+00> : vector<384x128xf32>
    %90 = tpu.matmul %87, %89, %cst_109 {dimension_numbers = #tpu.dot_dimension_numbers<[1], [0], [0], [1], [0, 0, 1, 1], [], []>} : vector<384x4xbf16>, vector<4x128xbf16>, vector<384x128xf32> -> vector<384x128xf32>
    %91 = arith.addf %86, %90 : vector<384x128xf32>
    %c48_110 = arith.constant 48 : index
    %c0_111 = arith.constant 0 : index
    %92 = vector.load %arg9[%c48_110, %c0_111] : memref<480x4xbf16, #tpu.memory_space<vmem>>, vector<384x4xbf16>
    %c4_112 = arith.constant 4 : index
    %c0_113 = arith.constant 0 : index
    %c0_114 = arith.constant 0 : index
    %93 = vector.load %arg2[%c4_112, %c0_113, %c0_114] : memref<9x4x128xbf16, #tpu.memory_space<vmem>>, vector<1x4x128xbf16>
    %94 = vector.shape_cast %93 : vector<1x4x128xbf16> to vector<4x128xbf16>
    %cst_115 = arith.constant dense<0.000000e+00> : vector<384x128xf32>
    %95 = tpu.matmul %92, %94, %cst_115 {dimension_numbers = #tpu.dot_dimension_numbers<[1], [0], [0], [1], [0, 0, 1, 1], [], []>} : vector<384x4xbf16>, vector<4x128xbf16>, vector<384x128xf32> -> vector<384x128xf32>
    %96 = arith.addf %91, %95 : vector<384x128xf32>
    %c49 = arith.constant 49 : index
    %c0_116 = arith.constant 0 : index
    %97 = vector.load %arg9[%c49, %c0_116] : memref<480x4xbf16, #tpu.memory_space<vmem>>, vector<384x4xbf16>
    %c5_117 = arith.constant 5 : index
    %c0_118 = arith.constant 0 : index
    %c0_119 = arith.constant 0 : index
    %98 = vector.load %arg2[%c5_117, %c0_118, %c0_119] : memref<9x4x128xbf16, #tpu.memory_space<vmem>>, vector<1x4x128xbf16>
    %99 = vector.shape_cast %98 : vector<1x4x128xbf16> to vector<4x128xbf16>
    %cst_120 = arith.constant dense<0.000000e+00> : vector<384x128xf32>
    %100 = tpu.matmul %97, %99, %cst_120 {dimension_numbers = #tpu.dot_dimension_numbers<[1], [0], [0], [1], [0, 0, 1, 1], [], []>} : vector<384x4xbf16>, vector<4x128xbf16>, vector<384x128xf32> -> vector<384x128xf32>
    %101 = arith.addf %96, %100 : vector<384x128xf32>
    %c71 = arith.constant 71 : index
    %c0_121 = arith.constant 0 : index
    %102 = vector.load %arg9[%c71, %c0_121] : memref<480x4xbf16, #tpu.memory_space<vmem>>, vector<384x4xbf16>
    %c6_122 = arith.constant 6 : index
    %c0_123 = arith.constant 0 : index
    %c0_124 = arith.constant 0 : index
    %103 = vector.load %arg2[%c6_122, %c0_123, %c0_124] : memref<9x4x128xbf16, #tpu.memory_space<vmem>>, vector<1x4x128xbf16>
    %104 = vector.shape_cast %103 : vector<1x4x128xbf16> to vector<4x128xbf16>
    %cst_125 = arith.constant dense<0.000000e+00> : vector<384x128xf32>
    %105 = tpu.matmul %102, %104, %cst_125 {dimension_numbers = #tpu.dot_dimension_numbers<[1], [0], [0], [1], [0, 0, 1, 1], [], []>} : vector<384x4xbf16>, vector<4x128xbf16>, vector<384x128xf32> -> vector<384x128xf32>
    %106 = arith.addf %101, %105 : vector<384x128xf32>
    %c72_126 = arith.constant 72 : index
    %c0_127 = arith.constant 0 : index
    %107 = vector.load %arg9[%c72_126, %c0_127] : memref<480x4xbf16, #tpu.memory_space<vmem>>, vector<384x4xbf16>
    %c7_128 = arith.constant 7 : index
    %c0_129 = arith.constant 0 : index
    %c0_130 = arith.constant 0 : index
    %108 = vector.load %arg2[%c7_128, %c0_129, %c0_130] : memref<9x4x128xbf16, #tpu.memory_space<vmem>>, vector<1x4x128xbf16>
    %109 = vector.shape_cast %108 : vector<1x4x128xbf16> to vector<4x128xbf16>
    %cst_131 = arith.constant dense<0.000000e+00> : vector<384x128xf32>
    %110 = tpu.matmul %107, %109, %cst_131 {dimension_numbers = #tpu.dot_dimension_numbers<[1], [0], [0], [1], [0, 0, 1, 1], [], []>} : vector<384x4xbf16>, vector<4x128xbf16>, vector<384x128xf32> -> vector<384x128xf32>
    %111 = arith.addf %106, %110 : vector<384x128xf32>
    %c73 = arith.constant 73 : index
    %c0_132 = arith.constant 0 : index
    %112 = vector.load %arg9[%c73, %c0_132] : memref<480x4xbf16, #tpu.memory_space<vmem>>, vector<384x4xbf16>
    %c8_133 = arith.constant 8 : index
    %c0_134 = arith.constant 0 : index
    %c0_135 = arith.constant 0 : index
    %113 = vector.load %arg2[%c8_133, %c0_134, %c0_135] : memref<9x4x128xbf16, #tpu.memory_space<vmem>>, vector<1x4x128xbf16>
    %114 = vector.shape_cast %113 : vector<1x4x128xbf16> to vector<4x128xbf16>
    %cst_136 = arith.constant dense<0.000000e+00> : vector<384x128xf32>
    %115 = tpu.matmul %112, %114, %cst_136 {dimension_numbers = #tpu.dot_dimension_numbers<[1], [0], [0], [1], [0, 0, 1, 1], [], []>} : vector<384x4xbf16>, vector<4x128xbf16>, vector<384x128xf32> -> vector<384x128xf32>
    %116 = arith.addf %111, %115 : vector<384x128xf32>
    %c0_137 = arith.constant 0 : index
    %c0_138 = arith.constant 0 : index
    %117 = vector.load %arg3[%c0_137, %c0_138] : memref<1x128xf32, #tpu.memory_space<vmem>>, vector<1x128xf32>
    %118 = vector.broadcast %117 : vector<1x128xf32> to vector<384x128xf32>
    %119 = arith.addf %116, %118 : vector<384x128xf32>
    %cst_139 = arith.constant 0.000000e+00 : f32
    %120 = vector.broadcast %cst_139 : f32 to vector<384x128xf32>
    %121 = arith.maximumf %119, %120 : vector<384x128xf32>
    %c0_140 = arith.constant 0 : index
    %c0_141 = arith.constant 0 : index
    %122 = vector.load %arg6[%c0_140, %c0_141] : memref<384x1xf32, #tpu.memory_space<vmem>>, vector<384x1xf32>
    %123 = vector.broadcast %122 : vector<384x1xf32> to vector<384x128xf32>
    %124 = arith.mulf %121, %123 : vector<384x128xf32>
    %125 = arith.truncf %124 : vector<384x128xf32> to vector<384x128xbf16>
    %c48_142 = arith.constant 48 : index
    %c0_143 = arith.constant 0 : index
    %126 = vector.load %arg10[%c48_142, %c0_143] : memref<480x128xbf16, #tpu.memory_space<vmem>>, vector<384x128xbf16>
    tpu.vector_store %arg10[%c48_142, %c0_143], %125 {strides = array<i32>} : memref<480x128xbf16, #tpu.memory_space<vmem>>, vector<384x128xbf16>,
    %cst_144 = arith.constant 0.000000e+00 : f32
    %127 = vector.broadcast %cst_144 : f32 to vector<384x128xf32>
    %c23_145 = arith.constant 23 : index
    %c0_146 = arith.constant 0 : index
    %128 = vector.load %arg10[%c23_145, %c0_146] : memref<480x128xbf16, #tpu.memory_space<vmem>>, vector<384x128xbf16>
    %c0_147 = arith.constant 0 : index
    %c0_148 = arith.constant 0 : index
    %c0_149 = arith.constant 0 : index
    %129 = vector.load %arg4[%c0_147, %c0_148, %c0_149] : memref<9x128x128xbf16, #tpu.memory_space<vmem>>, vector<1x128x128xbf16>
    %130 = vector.shape_cast %129 : vector<1x128x128xbf16> to vector<128x128xbf16>
    %cst_150 = arith.constant dense<0.000000e+00> : vector<384x128xf32>
    %131 = tpu.matmul %128, %130, %cst_150 {dimension_numbers = #tpu.dot_dimension_numbers<[1], [0], [0], [1], [0, 0, 1, 1], [], []>} : vector<384x128xbf16>, vector<128x128xbf16>, vector<384x128xf32> -> vector<384x128xf32>
    %132 = arith.addf %127, %131 : vector<384x128xf32>
    %c24_151 = arith.constant 24 : index
    %c0_152 = arith.constant 0 : index
    %133 = vector.load %arg10[%c24_151, %c0_152] : memref<480x128xbf16, #tpu.memory_space<vmem>>, vector<384x128xbf16>
    %c1_153 = arith.constant 1 : index
    %c0_154 = arith.constant 0 : index
    %c0_155 = arith.constant 0 : index
    %134 = vector.load %arg4[%c1_153, %c0_154, %c0_155] : memref<9x128x128xbf16, #tpu.memory_space<vmem>>, vector<1x128x128xbf16>
    %135 = vector.shape_cast %134 : vector<1x128x128xbf16> to vector<128x128xbf16>
    %cst_156 = arith.constant dense<0.000000e+00> : vector<384x128xf32>
    %136 = tpu.matmul %133, %135, %cst_156 {dimension_numbers = #tpu.dot_dimension_numbers<[1], [0], [0], [1], [0, 0, 1, 1], [], []>} : vector<384x128xbf16>, vector<128x128xbf16>, vector<384x128xf32> -> vector<384x128xf32>
    %137 = arith.addf %132, %136 : vector<384x128xf32>
    %c25_157 = arith.constant 25 : index
    %c0_158 = arith.constant 0 : index
    %138 = vector.load %arg10[%c25_157, %c0_158] : memref<480x128xbf16, #tpu.memory_space<vmem>>, vector<384x128xbf16>
    %c2_159 = arith.constant 2 : index
    %c0_160 = arith.constant 0 : index
    %c0_161 = arith.constant 0 : index
    %139 = vector.load %arg4[%c2_159, %c0_160, %c0_161] : memref<9x128x128xbf16, #tpu.memory_space<vmem>>, vector<1x128x128xbf16>
    %140 = vector.shape_cast %139 : vector<1x128x128xbf16> to vector<128x128xbf16>
    %cst_162 = arith.constant dense<0.000000e+00> : vector<384x128xf32>
    %141 = tpu.matmul %138, %140, %cst_162 {dimension_numbers = #tpu.dot_dimension_numbers<[1], [0], [0], [1], [0, 0, 1, 1], [], []>} : vector<384x128xbf16>, vector<128x128xbf16>, vector<384x128xf32> -> vector<384x128xf32>
    %142 = arith.addf %137, %141 : vector<384x128xf32>
    %c47_163 = arith.constant 47 : index
    %c0_164 = arith.constant 0 : index
    %143 = vector.load %arg10[%c47_163, %c0_164] : memref<480x128xbf16, #tpu.memory_space<vmem>>, vector<384x128xbf16>
    %c3_165 = arith.constant 3 : index
    %c0_166 = arith.constant 0 : index
    %c0_167 = arith.constant 0 : index
    %144 = vector.load %arg4[%c3_165, %c0_166, %c0_167] : memref<9x128x128xbf16, #tpu.memory_space<vmem>>, vector<1x128x128xbf16>
    %145 = vector.shape_cast %144 : vector<1x128x128xbf16> to vector<128x128xbf16>
    %cst_168 = arith.constant dense<0.000000e+00> : vector<384x128xf32>
    %146 = tpu.matmul %143, %145, %cst_168 {dimension_numbers = #tpu.dot_dimension_numbers<[1], [0], [0], [1], [0, 0, 1, 1], [], []>} : vector<384x128xbf16>, vector<128x128xbf16>, vector<384x128xf32> -> vector<384x128xf32>
    %147 = arith.addf %142, %146 : vector<384x128xf32>
    %c48_169 = arith.constant 48 : index
    %c0_170 = arith.constant 0 : index
    %148 = vector.load %arg10[%c48_169, %c0_170] : memref<480x128xbf16, #tpu.memory_space<vmem>>, vector<384x128xbf16>
    %c4_171 = arith.constant 4 : index
    %c0_172 = arith.constant 0 : index
    %c0_173 = arith.constant 0 : index
    %149 = vector.load %arg4[%c4_171, %c0_172, %c0_173] : memref<9x128x128xbf16, #tpu.memory_space<vmem>>, vector<1x128x128xbf16>
    %150 = vector.shape_cast %149 : vector<1x128x128xbf16> to vector<128x128xbf16>
    %cst_174 = arith.constant dense<0.000000e+00> : vector<384x128xf32>
    %151 = tpu.matmul %148, %150, %cst_174 {dimension_numbers = #tpu.dot_dimension_numbers<[1], [0], [0], [1], [0, 0, 1, 1], [], []>} : vector<384x128xbf16>, vector<128x128xbf16>, vector<384x128xf32> -> vector<384x128xf32>
    %152 = arith.addf %147, %151 : vector<384x128xf32>
    %c49_175 = arith.constant 49 : index
    %c0_176 = arith.constant 0 : index
    %153 = vector.load %arg10[%c49_175, %c0_176] : memref<480x128xbf16, #tpu.memory_space<vmem>>, vector<384x128xbf16>
    %c5_177 = arith.constant 5 : index
    %c0_178 = arith.constant 0 : index
    %c0_179 = arith.constant 0 : index
    %154 = vector.load %arg4[%c5_177, %c0_178, %c0_179] : memref<9x128x128xbf16, #tpu.memory_space<vmem>>, vector<1x128x128xbf16>
    %155 = vector.shape_cast %154 : vector<1x128x128xbf16> to vector<128x128xbf16>
    %cst_180 = arith.constant dense<0.000000e+00> : vector<384x128xf32>
    %156 = tpu.matmul %153, %155, %cst_180 {dimension_numbers = #tpu.dot_dimension_numbers<[1], [0], [0], [1], [0, 0, 1, 1], [], []>} : vector<384x128xbf16>, vector<128x128xbf16>, vector<384x128xf32> -> vector<384x128xf32>
    %157 = arith.addf %152, %156 : vector<384x128xf32>
    %c71_181 = arith.constant 71 : index
    %c0_182 = arith.constant 0 : index
    %158 = vector.load %arg10[%c71_181, %c0_182] : memref<480x128xbf16, #tpu.memory_space<vmem>>, vector<384x128xbf16>
    %c6_183 = arith.constant 6 : index
    %c0_184 = arith.constant 0 : index
    %c0_185 = arith.constant 0 : index
    %159 = vector.load %arg4[%c6_183, %c0_184, %c0_185] : memref<9x128x128xbf16, #tpu.memory_space<vmem>>, vector<1x128x128xbf16>
    %160 = vector.shape_cast %159 : vector<1x128x128xbf16> to vector<128x128xbf16>
    %cst_186 = arith.constant dense<0.000000e+00> : vector<384x128xf32>
    %161 = tpu.matmul %158, %160, %cst_186 {dimension_numbers = #tpu.dot_dimension_numbers<[1], [0], [0], [1], [0, 0, 1, 1], [], []>} : vector<384x128xbf16>, vector<128x128xbf16>, vector<384x128xf32> -> vector<384x128xf32>
    %162 = arith.addf %157, %161 : vector<384x128xf32>
    %c72_187 = arith.constant 72 : index
    %c0_188 = arith.constant 0 : index
    %163 = vector.load %arg10[%c72_187, %c0_188] : memref<480x128xbf16, #tpu.memory_space<vmem>>, vector<384x128xbf16>
    %c7_189 = arith.constant 7 : index
    %c0_190 = arith.constant 0 : index
    %c0_191 = arith.constant 0 : index
    %164 = vector.load %arg4[%c7_189, %c0_190, %c0_191] : memref<9x128x128xbf16, #tpu.memory_space<vmem>>, vector<1x128x128xbf16>
    %165 = vector.shape_cast %164 : vector<1x128x128xbf16> to vector<128x128xbf16>
    %cst_192 = arith.constant dense<0.000000e+00> : vector<384x128xf32>
    %166 = tpu.matmul %163, %165, %cst_192 {dimension_numbers = #tpu.dot_dimension_numbers<[1], [0], [0], [1], [0, 0, 1, 1], [], []>} : vector<384x128xbf16>, vector<128x128xbf16>, vector<384x128xf32> -> vector<384x128xf32>
    %167 = arith.addf %162, %166 : vector<384x128xf32>
    %c73_193 = arith.constant 73 : index
    %c0_194 = arith.constant 0 : index
    %168 = vector.load %arg10[%c73_193, %c0_194] : memref<480x128xbf16, #tpu.memory_space<vmem>>, vector<384x128xbf16>
    %c8_195 = arith.constant 8 : index
    %c0_196 = arith.constant 0 : index
    %c0_197 = arith.constant 0 : index
    %169 = vector.load %arg4[%c8_195, %c0_196, %c0_197] : memref<9x128x128xbf16, #tpu.memory_space<vmem>>, vector<1x128x128xbf16>
    %170 = vector.shape_cast %169 : vector<1x128x128xbf16> to vector<128x128xbf16>
    %cst_198 = arith.constant dense<0.000000e+00> : vector<384x128xf32>
    %171 = tpu.matmul %168, %170, %cst_198 {dimension_numbers = #tpu.dot_dimension_numbers<[1], [0], [0], [1], [0, 0, 1, 1], [], []>} : vector<384x128xbf16>, vector<128x128xbf16>, vector<384x128xf32> -> vector<384x128xf32>
    %172 = arith.addf %167, %171 : vector<384x128xf32>
    %c0_199 = arith.constant 0 : index
    %c0_200 = arith.constant 0 : index
    %173 = vector.load %arg5[%c0_199, %c0_200] : memref<1x128xf32, #tpu.memory_space<vmem>>, vector<1x128xf32>
    %174 = vector.broadcast %173 : vector<1x128xf32> to vector<384x128xf32>
    %175 = arith.addf %172, %174 : vector<384x128xf32>
    %cst_201 = arith.constant 0.000000e+00 : f32
    %176 = vector.broadcast %cst_201 : f32 to vector<384x128xf32>
    %177 = arith.maximumf %175, %176 : vector<384x128xf32>
    %178 = vector.shape_cast %177 : vector<384x128xf32> to vector<16x24x128xf32>
    %179 = vector.extract_strided_slice %178 {offsets = [0, 0, 0], sizes = [16, 16, 128], strides = [1, 1, 1]} : vector<16x24x128xf32> to vector<16x16x128xf32>
    %c0_202 = arith.constant 0 : index
    %c0_203 = arith.constant 0 : index
    %c0_204 = arith.constant 0 : index
    %c0_205 = arith.constant 0 : index
    %180 = vector.load %arg8[%c0_202, %c0_203, %c0_204, %c0_205] : memref<1x16x16x128xf32, #tpu.memory_space<vmem>>, vector<1x16x16x128xf32>
    %181 = vector.shape_cast %180 : vector<1x16x16x128xf32> to vector<16x16x128xf32>
    %182 = vector.shape_cast %179 : vector<16x16x128xf32> to vector<1x16x16x128xf32>
    tpu.vector_store %arg8[%c0_202, %c0_203, %c0_204, %c0_205], %182 {strides = array<i32>} : memref<1x16x16x128xf32, #tpu.memory_space<vmem>>, vector<1x16x16x128xf32>,
    %183 = vector.shape_cast %179 : vector<16x16x128xf32> to vector<8x2x16x128xf32>
    %cst_206 = arith.constant dense<0xFF800000> : vector<8x16x128xf32>
    %184 = vector.multi_reduction <maximumf>, %183, %cst_206 [1] : vector<8x2x16x128xf32> to vector<8x16x128xf32>
    %185 = vector.shape_cast %184 : vector<8x16x128xf32> to vector<8x8x2x128xf32>
    %cst_207 = arith.constant dense<0xFF800000> : vector<8x8x128xf32>
    %186 = vector.multi_reduction <maximumf>, %185, %cst_207 [2] : vector<8x8x2x128xf32> to vector<8x8x128xf32>
    %c0_208 = arith.constant 0 : index
    %c0_209 = arith.constant 0 : index
    %c0_210 = arith.constant 0 : index
    %c0_211 = arith.constant 0 : index
    %187 = vector.load %arg7[%c0_208, %c0_209, %c0_210, %c0_211] : memref<1x8x8x128xf32, #tpu.memory_space<vmem>>, vector<1x8x8x128xf32>
    %188 = vector.shape_cast %187 : vector<1x8x8x128xf32> to vector<8x8x128xf32>
    %189 = vector.shape_cast %186 : vector<8x8x128xf32> to vector<1x8x8x128xf32>
    tpu.vector_store %arg7[%c0_208, %c0_209, %c0_210, %c0_211], %189 {strides = array<i32>} : memref<1x8x8x128xf32, #tpu.memory_space<vmem>>, vector<1x8x8x128xf32>,
    return
  }
  func.func @transform_0(%arg0: i32) -> (i32, i32, i32, i32) {
    %c0_i32 = arith.constant 0 : i32
    %c0_i32_0 = arith.constant 0 : i32
    %c0_i32_1 = arith.constant 0 : i32
    %c0_i32_2 = arith.constant 0 : i32
    return %arg0, %c0_i32, %c0_i32_0, %c0_i32_1 : i32, i32, i32, i32
  }
  func.func @transform_1(%arg0: i32) -> (i32, i32, i32) {
    %c0_i32 = arith.constant 0 : i32
    %c0_i32_0 = arith.constant 0 : i32
    %c0_i32_1 = arith.constant 0 : i32
    %c0_i32_2 = arith.constant 0 : i32
    return %c0_i32, %c0_i32_0, %c0_i32_1 : i32, i32, i32
  }
  func.func @transform_2(%arg0: i32) -> (i32, i32) {
    %c0_i32 = arith.constant 0 : i32
    %c0_i32_0 = arith.constant 0 : i32
    %c0_i32_1 = arith.constant 0 : i32
    return %c0_i32, %c0_i32_0 : i32, i32
  }
  func.func @transform_3(%arg0: i32) -> (i32, i32, i32) {
    %c0_i32 = arith.constant 0 : i32
    %c0_i32_0 = arith.constant 0 : i32
    %c0_i32_1 = arith.constant 0 : i32
    %c0_i32_2 = arith.constant 0 : i32
    return %c0_i32, %c0_i32_0, %c0_i32_1 : i32, i32, i32
  }
  func.func @transform_4(%arg0: i32) -> (i32, i32) {
    %c0_i32 = arith.constant 0 : i32
    %c0_i32_0 = arith.constant 0 : i32
    %c0_i32_1 = arith.constant 0 : i32
    return %c0_i32, %c0_i32_0 : i32, i32
  }
  func.func @transform_5(%arg0: i32) -> (i32, i32) {
    %c0_i32 = arith.constant 0 : i32
    %c0_i32_0 = arith.constant 0 : i32
    %c0_i32_1 = arith.constant 0 : i32
    return %c0_i32, %c0_i32_0 : i32, i32
  }
  func.func @transform_6(%arg0: i32) -> (i32, i32, i32, i32) {
    %c0_i32 = arith.constant 0 : i32
    %c0_i32_0 = arith.constant 0 : i32
    %c0_i32_1 = arith.constant 0 : i32
    %c0_i32_2 = arith.constant 0 : i32
    return %arg0, %c0_i32, %c0_i32_0, %c0_i32_1 : i32, i32, i32, i32
  }
  func.func @transform_7(%arg0: i32) -> (i32, i32, i32, i32) {
    %c0_i32 = arith.constant 0 : i32
    %c0_i32_0 = arith.constant 0 : i32
    %c0_i32_1 = arith.constant 0 : i32
    %c0_i32_2 = arith.constant 0 : i32
    return %arg0, %c0_i32, %c0_i32_0, %c0_i32_1 : i32, i32, i32, i32
  }
}

</mosaic_0001>

<llo_original>
// kernel: encoder_step_pallas.1
$region0: #{encoder_step_pallas.1}
  #allocation0 [shape = 'u32[]', space=smem, size = 0x4, offset = 0x4, fixed_abs, tag = 'smem constant byte address 0x4 - core index']
  #allocation1 [shape = 'u32[144,128]{1,0:T(1,128)}', space=vmem, size = 0x12000, scoped, tag = 'internal scratch']
  #allocation2 [shape = 'bf16[480,4]{1,0:T(16,128)(2,1)}', space=vmem, size = 0x1e000, scoped, tag = 'scratch operand']
  #allocation3 [shape = 'bf16[480,128]{1,0:T(16,128)(2,1)}', space=vmem, size = 0x1e000, scoped, tag = 'scratch operand']
  %s0 = inlined_call_operand.vmem [shape: bf16[2,16,16,4], index: 0, kind: input, shape index: {}]
  %s1 = inlined_call_operand.vmem [shape: bf16[9,4,128], index: 1, kind: input, shape index: {}]
  %s2 = inlined_call_operand.vmem [shape: f32[1,128], index: 2, kind: input, shape index: {}]
  %s3 = inlined_call_operand.vmem [shape: bf16[9,128,128], index: 3, kind: input, shape index: {}]
  %s4 = inlined_call_operand.vmem [shape: f32[1,128], index: 4, kind: input, shape index: {}]
  %s5 = inlined_call_operand.vmem [shape: f32[384,1], index: 5, kind: input, shape index: {}]
  %s6 = inlined_call_operand.vmem [shape: f32[2,8,8,128], index: 6, kind: output, shape index: {0}]
  %s7 = inlined_call_operand.vmem [shape: f32[2,16,16,128], index: 7, kind: output, shape index: {1}]
  %8 = xla_tuple %s6, %s7
  %s9 = sld [smem:[#allocation0]]
  $region65: #{encoder_step_pallas.1} parent=0
    _
  %s11 = ssub.s32 1, %s9
  %s12 = scalar_select 0, %s11, %s9
  loop: start=0, step=1, limit=4
  $region2: #{encoder_step_pallas.1} parent=0 // loop_pre_header
    _
  $region3: #{encoder_step_pallas.1} parent=0 // loop_header
    %s14 = sphi 0, %s18
    %p15 = scmp.ge.s32.totalorder %s14, 4
    %s24 = sphi 0, %s26
    %s27 = sphi 0, %s24
    %s28 = sphi 0, %s27
    %s44 = sphi 0, %s28
    %s48 = sphi 0, %s48
    %s50 = sphi 0, %s48
    %s51 = sphi 0, %s50
    %s65 = sphi 0, %s51
    %s69 = sphi 0, %s69
    %s71 = sphi 0, %s69
    %s72 = sphi 0, %s71
    %s86 = sphi 0, %s72
    %s90 = sphi 0, %s90
    %s92 = sphi 0, %s90
    %s93 = sphi 0, %s92
    %s107 = sphi 0, %s93
    %s111 = sphi 0, %s111
    %s113 = sphi 0, %s111
    %s114 = sphi 0, %s113
    %s128 = sphi 0, %s114
    %s132 = sphi 0, %s132
    %s134 = sphi 0, %s132
    %s135 = sphi 0, %s134
    %s149 = sphi 0, %s135
    %s155 = sphi 0, %s157
    %s158 = sphi 0, %s155
    %s159 = sphi 0, %s158
    %s175 = sphi 0, %s159
    %s181 = sphi 0, %s183
    %s184 = sphi 0, %s181
    %s185 = sphi 0, %s184
    %s201 = sphi 0, %s185
  $region4: #{encoder_step_pallas.1} parent=0 // loop_header_branch
    %17 = sbr.rel (%p15) target = $region8
  $region5: #{encoder_step_pallas.1} parent=0 // loop_body
    %s19 = ssub.s32 %s14, 1
    %s20 = ssub.s32 %s14, 2
    %s21 = sadd.s32 %s14, 1
    %s22 = ssub.s32 %s14, %s21
    %p23 = scmp.eq.s32.totalorder %s22, 0
    %s25 = sadd.s32 %s24, 1
    %s26 = scalar_select %p23, %s24, %s25
    %p29 = pneg %p23
    %p30 = scmp.eq.s32.totalorder %s14, 1
    %p31 = por %p29, %p30
    %p32 = scmp.ne.s32.totalorder %s24, %s27
    %p33 = scmp.eq.s32.totalorder %s14, 0
    %p34 = por %p32, %p33
    %p35 = scmp.ne.s32.totalorder %s24, %s27
    %p36 = scmp.eq.s32.totalorder %s19, 1
    %p37 = por %p35, %p36
    %p38 = scmp.ne.s32.totalorder %s27, %s28
    %p39 = scmp.eq.s32.totalorder %s19, 0
    %p40 = por %p38, %p39
    %p41 = scmp.ne.s32.totalorder %s27, %s28
    %p42 = scmp.eq.s32.totalorder %s20, 1
    %p43 = por %p41, %p42
    %p45 = scmp.ne.s32.totalorder %s28, %s44
    %p46 = scmp.eq.s32.totalorder %s20, 0
    %p47 = por %p45, %p46
    %s49 = sadd.s32 %s48, 1
    %p52 = scmp.eq.s32.totalorder %s14, 1
    %p53 = scmp.ne.s32.totalorder %s48, %s50
    %p54 = scmp.eq.s32.totalorder %s14, 0
    %p55 = por %p53, %p54
    %p56 = scmp.ne.s32.totalorder %s48, %s50
    %p57 = scmp.eq.s32.totalorder %s19, 1
    %p58 = por %p56, %p57
    %p59 = scmp.ne.s32.totalorder %s50, %s51
    %p60 = scmp.eq.s32.totalorder %s19, 0
    %p61 = por %p59, %p60
    %p62 = scmp.ne.s32.totalorder %s50, %s51
    %p63 = scmp.eq.s32.totalorder %s20, 1
    %p64 = por %p62, %p63
    %p66 = scmp.ne.s32.totalorder %s51, %s65
    %p67 = scmp.eq.s32.totalorder %s20, 0
    %p68 = por %p66, %p67
    %s70 = sadd.s32 %s69, 1
    %p73 = scmp.eq.s32.totalorder %s14, 1
    %p74 = scmp.ne.s32.totalorder %s69, %s71
    %p75 = scmp.eq.s32.totalorder %s14, 0
    %p76 = por %p74, %p75
    %p77 = scmp.ne.s32.totalorder %s69, %s71
    %p78 = scmp.eq.s32.totalorder %s19, 1
    %p79 = por %p77, %p78
    %p80 = scmp.ne.s32.totalorder %s71, %s72
    %p81 = scmp.eq.s32.totalorder %s19, 0
    %p82 = por %p80, %p81
    %p83 = scmp.ne.s32.totalorder %s71, %s72
    %p84 = scmp.eq.s32.totalorder %s20, 1
    %p85 = por %p83, %p84
    %p87 = scmp.ne.s32.totalorder %s72, %s86
    %p88 = scmp.eq.s32.totalorder %s20, 0
    %p89 = por %p87, %p88
    %s91 = sadd.s32 %s90, 1
    %p94 = scmp.eq.s32.totalorder %s14, 1
    %p95 = scmp.ne.s32.totalorder %s90, %s92
    %p96 = scmp.eq.s32.totalorder %s14, 0
    %p97 = por %p95, %p96
    %p98 = scmp.ne.s32.totalorder %s90, %s92
    %p99 = scmp.eq.s32.totalorder %s19, 1
    %p100 = por %p98, %p99
    %p101 = scmp.ne.s32.totalorder %s92, %s93
    %p102 = scmp.eq.s32.totalorder %s19, 0
    %p103 = por %p101, %p102
    %p104 = scmp.ne.s32.totalorder %s92, %s93
    %p105 = scmp.eq.s32.totalorder %s20, 1
    %p106 = por %p104, %p105
    %p108 = scmp.ne.s32.totalorder %s93, %s107
    %p109 = scmp.eq.s32.totalorder %s20, 0
    %p110 = por %p108, %p109
    %s112 = sadd.s32 %s111, 1
    %p115 = scmp.eq.s32.totalorder %s14, 1
    %p116 = scmp.ne.s32.totalorder %s111, %s113
    %p117 = scmp.eq.s32.totalorder %s14, 0
    %p118 = por %p116, %p117
    %p119 = scmp.ne.s32.totalorder %s111, %s113
    %p120 = scmp.eq.s32.totalorder %s19, 1
    %p121 = por %p119, %p120
    %p122 = scmp.ne.s32.totalorder %s113, %s114
    %p123 = scmp.eq.s32.totalorder %s19, 0
    %p124 = por %p122, %p123
    %p125 = scmp.ne.s32.totalorder %s113, %s114
    %p126 = scmp.eq.s32.totalorder %s20, 1
    %p127 = por %p125, %p126
    %p129 = scmp.ne.s32.totalorder %s114, %s128
    %p130 = scmp.eq.s32.totalorder %s20, 0
    %p131 = por %p129, %p130
    %s133 = sadd.s32 %s132, 1
    %p136 = scmp.eq.s32.totalorder %s14, 1
    %p137 = scmp.ne.s32.totalorder %s132, %s134
    %p138 = scmp.eq.s32.totalorder %s14, 0
    %p139 = por %p137, %p138
    %p140 = scmp.ne.s32.totalorder %s132, %s134
    %p141 = scmp.eq.s32.totalorder %s19, 1
    %p142 = por %p140, %p141
    %p143 = scmp.ne.s32.totalorder %s134, %s135
    %p144 = scmp.eq.s32.totalorder %s19, 0
    %p145 = por %p143, %p144
    %p146 = scmp.ne.s32.totalorder %s134, %s135
    %p147 = scmp.eq.s32.totalorder %s20, 1
    %p148 = por %p146, %p147
    %p150 = scmp.ne.s32.totalorder %s135, %s149
    %p151 = scmp.eq.s32.totalorder %s20, 0
    %p152 = por %p150, %p151
    %s153 = ssub.s32 %s14, %s21
    %p154 = scmp.eq.s32.totalorder %s153, 0
    %s156 = sadd.s32 %s155, 1
    %s157 = scalar_select %p154, %s155, %s156
    %p160 = pneg %p154
    %p161 = scmp.eq.s32.totalorder %s14, 1
    %p162 = por %p160, %p161
    %p163 = scmp.ne.s32.totalorder %s155, %s158
    %p164 = scmp.eq.s32.totalorder %s14, 0
    %p165 = por %p163, %p164
    %p166 = scmp.ne.s32.totalorder %s155, %s158
    %p167 = scmp.eq.s32.totalorder %s19, 1
    %p168 = por %p166, %p167
    %p169 = scmp.ne.s32.totalorder %s158, %s159
    %p170 = scmp.eq.s32.totalorder %s19, 0
    %p171 = por %p169, %p170
    %p172 = scmp.ne.s32.totalorder %s158, %s159
    %p173 = scmp.eq.s32.totalorder %s20, 1
    %p174 = por %p172, %p173
    %p176 = scmp.ne.s32.totalorder %s159, %s175
    %p177 = scmp.eq.s32.totalorder %s20, 0
    %p178 = por %p176, %p177
    %s179 = ssub.s32 %s14, %s21
    %p180 = scmp.eq.s32.totalorder %s179, 0
    %s182 = sadd.s32 %s181, 1
    %s183 = scalar_select %p180, %s181, %s182
    %p186 = pneg %p180
    %p187 = scmp.eq.s32.totalorder %s14, 1
    %p188 = por %p186, %p187
    %p189 = scmp.ne.s32.totalorder %s181, %s184
    %p190 = scmp.eq.s32.totalorder %s14, 0
    %p191 = por %p189, %p190
    %p192 = scmp.ne.s32.totalorder %s181, %s184
    %p193 = scmp.eq.s32.totalorder %s19, 1
    %p194 = por %p192, %p193
    %p195 = scmp.ne.s32.totalorder %s184, %s185
    %p196 = scmp.eq.s32.totalorder %s19, 0
    %p197 = por %p195, %p196
    %p198 = scmp.ne.s32.totalorder %s184, %s185
    %p199 = scmp.eq.s32.totalorder %s20, 1
    %p200 = por %p198, %p199
    %p202 = scmp.ne.s32.totalorder %s185, %s201
    %p203 = scmp.eq.s32.totalorder %s20, 0
    %p204 = por %p202, %p203
    %p205 = scmp.le.s32.totalorder 1, %s14
    %p206 = scmp.lt.s32.totalorder %s14, 3
    %p207 = pnand %p205, %p206
    %p208 = pneg %p207
    // Predicated region
    $region9: #{encoder_step_pallas.1} parent=5 // pred_check
      _
    $region10: #{encoder_step_pallas.1} parent=5 // pred_check_branch
      %210 = sbr.rel (%p207) target = $region12
    $region11: #{encoder_step_pallas.1} parent=5 // pred_region
      %s211 = ssub.s32 %s14, 1
      // Predicated region
      $region13: #{encoder_step_pallas.1} parent=11 // pred_check
        %p212 = pneg %p61
      $region14: #{encoder_step_pallas.1} parent=11 // pred_check_branch
        %214 = sbr.rel (%p212) target = $region16
      $region15: #{encoder_step_pallas.1} parent=11 // pred_region
        _
      $region16: #{encoder_step_pallas.1} parent=11 // pred_fallthru
        _
      // Predicated region
      $region17: #{encoder_step_pallas.1} parent=11 // pred_check
        %p215 = pneg %p82
      $region18: #{encoder_step_pallas.1} parent=11 // pred_check_branch
        %217 = sbr.rel (%p215) target = $region20
      $region19: #{encoder_step_pallas.1} parent=11 // pred_region
        _
      $region20: #{encoder_step_pallas.1} parent=11 // pred_fallthru
        _
      // Predicated region
      $region21: #{encoder_step_pallas.1} parent=11 // pred_check
        %p218 = pneg %p103
      $region22: #{encoder_step_pallas.1} parent=11 // pred_check_branch
        %220 = sbr.rel (%p218) target = $region24
      $region23: #{encoder_step_pallas.1} parent=11 // pred_region
        _
      $region24: #{encoder_step_pallas.1} parent=11 // pred_fallthru
        _
      // Predicated region
      $region25: #{encoder_step_pallas.1} parent=11 // pred_check
        %p221 = pneg %p124
      $region26: #{encoder_step_pallas.1} parent=11 // pred_check_branch
        %223 = sbr.rel (%p221) target = $region28
      $region27: #{encoder_step_pallas.1} parent=11 // pred_region
        _
      $region28: #{encoder_step_pallas.1} parent=11 // pred_fallthru
        _
      // Predicated region
      $region29: #{encoder_step_pallas.1} parent=11 // pred_check
        %p224 = pneg %p145
      $region30: #{encoder_step_pallas.1} parent=11 // pred_check_branch
        %226 = sbr.rel (%p224) target = $region32
      $region31: #{encoder_step_pallas.1} parent=11 // pred_region
        _
      $region32: #{encoder_step_pallas.1} parent=11 // pred_fallthru
        _
    $region12: #{encoder_step_pallas.1} parent=5 // pred_fallthru
      _
    %p227 = scmp.lt.s32.totalorder %s14, 2
    // Predicated region
    $region33: #{encoder_step_pallas.1} parent=5 // pred_check
      %p228 = pneg %p227
    $region34: #{encoder_step_pallas.1} parent=5 // pred_check_branch
      %230 = sbr.rel (%p228) target = $region36
    $region35: #{encoder_step_pallas.1} parent=5 // pred_region
      // Predicated region
      $region37: #{encoder_step_pallas.1} parent=35 // pred_check
        %p231 = pneg %p34
      $region38: #{encoder_step_pallas.1} parent=35 // pred_check_branch
        %233 = sbr.rel (%p231) target = $region40
      $region39: #{encoder_step_pallas.1} parent=35 // pred_region
        %p234 = scmp.lt.s32.totalorder %s14, 1
        %s235 = scalar_select %p234, %s14, 1
        %s236 = smul.addr %s235, 32
        %s237 = smul.addr %s236, 4
        %s238 = scalar_lea.vmem %s0, %s237
      $region40: #{encoder_step_pallas.1} parent=35 // pred_fallthru
        _
    $region36: #{encoder_step_pallas.1} parent=5 // pred_fallthru
      _
    %p239 = scmp.le.s32.totalorder 1, %s14
    %p240 = scmp.lt.s32.totalorder %s14, 3
    %p241 = pnand %p239, %p240
    %p242 = pneg %p241
    // Predicated region
    $region41: #{encoder_step_pallas.1} parent=5 // pred_check
      _
    $region42: #{encoder_step_pallas.1} parent=5 // pred_check_branch
      %244 = sbr.rel (%p241) target = $region44
    $region43: #{encoder_step_pallas.1} parent=5 // pred_region
      %s245 = ssub.s32 %s14, 1
      %p246 = scmp.lt.s32.totalorder %s19, 1
      %s247 = scalar_select %p246, %s19, 1
      %s248 = smul.addr %s247, 32
      %s249 = smul.addr %s248, 4
      %s250 = scalar_lea.vmem %s0, %s249
      %p251 = pneg %p40
      %p252 = pneg %p37
      %p253 = pneg %p61
      %p254 = pneg %p58
      %p255 = pneg %p82
      %p256 = pneg %p79
      %p257 = pneg %p103
      %p258 = pneg %p100
      %p259 = pneg %p124
      %p260 = pneg %p121
      %p261 = pneg %p145
      %p262 = pneg %p142
      %p263 = pneg %p171
      %p264 = pneg %p168
      %p265 = scmp.lt.s32.totalorder %s19, 1
      %s266 = scalar_select %p265, %s19, 1
      %s267 = smul.addr %s266, 8
      %s268 = smul.addr %s267, 8
      %s269 = scalar_lea.vmem %s6, %s268
      %p270 = pneg %p197
      %p271 = pneg %p194
      %p272 = scmp.lt.s32.totalorder %s19, 1
      %s273 = scalar_select %p272, %s19, 1
      %s274 = smul.addr %s273, 32
      %s275 = smul.addr %s274, 8
      %s276 = scalar_lea.vmem %s7, %s275
      %p277 = scmp.lt.s32.totalorder %s19, 1
      %s278 = scalar_select %p277, %s19, 1
      %s279 = smul.addr %s278, 32
      %s280 = smul.addr %s279, 4
      %s281 = scalar_lea.vmem %s0, %s280
      %p282 = scmp.lt.s32.totalorder %s19, 1
      %s283 = scalar_select %p282, %s19, 1
      %s284 = smul.addr %s283, 8
      %s285 = smul.addr %s284, 8
      %s286 = scalar_lea.vmem %s6, %s285
      %p287 = scmp.lt.s32.totalorder %s19, 1
      %s288 = scalar_select %p287, %s19, 1
      %s289 = smul.addr %s288, 32
      %s290 = smul.addr %s289, 8
      %s291 = scalar_lea.vmem %s7, %s290
      %vm293 = vcmask 31744
      %294 = vst.msk [vmem:[#allocation2] sm:$0xff] %vm293, 0
      %295 = vst.msk [vmem:[#allocation2 + $0x8] sm:$0xff] %vm293, 0
      %296 = vst.msk [vmem:[#allocation2 + $0x10] sm:$0xff] %vm293, 0
      %297 = vst.msk [vmem:[#allocation2 + $0xd8] sm:$0xff] %vm293, 0
      %298 = vst.msk [vmem:[#allocation2 + $0xe0] sm:$0xff] %vm293, 0
      %299 = vst.msk [vmem:[#allocation2 + $0xe8] sm:$0xff] %vm293, 0
      %300 = vst [vmem:[#allocation3] sm:$0xff] 0
      %301 = vst [vmem:[#allocation3 + $0x8] sm:$0xff] 0
      %302 = vst [vmem:[#allocation3 + $0x10] sm:$0xff] 0
      %303 = vst [vmem:[#allocation3 + $0xd8] sm:$0xff] 0
      %304 = vst [vmem:[#allocation3 + $0xe0] sm:$0xff] 0
      %305 = vst [vmem:[#allocation3 + $0xe8] sm:$0xff] 0
      %v306 = vld [vmem:[%s281] sm:$0xf]
      %v307 = vld [vmem:[%s281 + $0x4] sm:$0xf]
      %v310 = vunpack.c.l.b16 %v306
      %v311 = vunpack.c.l.b16 %v307
      %v312 = vpack.c.b16 %v311, %v310
      %314 = vst.msk [vmem:[#allocation2 + $0x18] sm:$0xff] %vm293, %v312
      %vm315 = vcmask 27648
      %316 = vst.msk [vmem:[#allocation2 + $0x20] sm:$0xf] %vm315, 0
      %s317 = scalar_lea.vmem %s281, 8
      %v318 = vld [vmem:[%s317] sm:$0xf]
      %v319 = vld [vmem:[%s317 + $0x4] sm:$0xf]
      %v322 = vunpack.c.l.b16 %v318
      %v323 = vunpack.c.l.b16 %v319
      %v324 = vpack.c.b16 %v322, %v322
      %v325 = vpack.c.b16 %v323, %v323
      %vm328 = vcmask 31748
      %329 = vst.msk [vmem:[#allocation2 + $0x20] sm:$0xf0] %vm328, %v324
      %330 = vst.msk [vmem:[#allocation2 + $0x28] sm:$0xf] %vm315, %v325
      %331 = vst.msk [vmem:[#allocation2 + $0x28] sm:$0xf0] %vm328, 0
      %s332 = scalar_lea.vmem %s281, 16
      %v333 = vld [vmem:[%s332] sm:$0xf]
      %v334 = vld [vmem:[%s332 + $0x4] sm:$0xf]
      %v337 = vunpack.c.l.b16 %v333
      %v338 = vunpack.c.l.b16 %v334
      %v339 = vpack.c.b16 %v338, %v337
      %341 = vst.msk [vmem:[#allocation2 + $0x30] sm:$0xff] %vm293, %v339
      %342 = vst.msk [vmem:[#allocation2 + $0x38] sm:$0xf] %vm315, 0
      %s343 = scalar_lea.vmem %s281, 24
      %v344 = vld [vmem:[%s343] sm:$0xf]
      %v345 = vld [vmem:[%s343 + $0x4] sm:$0xf]
      %v348 = vunpack.c.l.b16 %v344
      %v349 = vunpack.c.l.b16 %v345
      %v350 = vpack.c.b16 %v348, %v348
      %v351 = vpack.c.b16 %v349, %v349
      %354 = vst.msk [vmem:[#allocation2 + $0x38] sm:$0xf0] %vm328, %v350
      %355 = vst.msk [vmem:[#allocation2 + $0x40] sm:$0xf] %vm315, %v351
      %356 = vst.msk [vmem:[#allocation2 + $0x40] sm:$0xf0] %vm328, 0
      %s357 = scalar_lea.vmem %s281, 32
      %v358 = vld [vmem:[%s357] sm:$0xf]
      %v359 = vld [vmem:[%s357 + $0x4] sm:$0xf]
      %v362 = vunpack.c.l.b16 %v358
      %v363 = vunpack.c.l.b16 %v359
      %v364 = vpack.c.b16 %v363, %v362
      %366 = vst.msk [vmem:[#allocation2 + $0x48] sm:$0xff] %vm293, %v364
      %367 = vst.msk [vmem:[#allocation2 + $0x50] sm:$0xf] %vm315, 0
      %s368 = scalar_lea.vmem %s281, 40
      %v369 = vld [vmem:[%s368] sm:$0xf]
      %v370 = vld [vmem:[%s368 + $0x4] sm:$0xf]
      %v373 = vunpack.c.l.b16 %v369
      %v374 = vunpack.c.l.b16 %v370
      %v375 = vpack.c.b16 %v373, %v373
      %v376 = vpack.c.b16 %v374, %v374
      %379 = vst.msk [vmem:[#allocation2 + $0x50] sm:$0xf0] %vm328, %v375
      %380 = vst.msk [vmem:[#allocation2 + $0x58] sm:$0xf] %vm315, %v376
      %381 = vst.msk [vmem:[#allocation2 + $0x58] sm:$0xf0] %vm328, 0
      %s382 = scalar_lea.vmem %s281, 48
      %v383 = vld [vmem:[%s382] sm:$0xf]
      %v384 = vld [vmem:[%s382 + $0x4] sm:$0xf]
      %v387 = vunpack.c.l.b16 %v383
      %v388 = vunpack.c.l.b16 %v384
      %v389 = vpack.c.b16 %v388, %v387
      %391 = vst.msk [vmem:[#allocation2 + $0x60] sm:$0xff] %vm293, %v389
      %392 = vst.msk [vmem:[#allocation2 + $0x68] sm:$0xf] %vm315, 0
      %s393 = scalar_lea.vmem %s281, 56
      %v394 = vld [vmem:[%s393] sm:$0xf]
      %v395 = vld [vmem:[%s393 + $0x4] sm:$0xf]
      %v398 = vunpack.c.l.b16 %v394
      %v399 = vunpack.c.l.b16 %v395
      %v400 = vpack.c.b16 %v398, %v398
      %v401 = vpack.c.b16 %v399, %v399
      %404 = vst.msk [vmem:[#allocation2 + $0x68] sm:$0xf0] %vm328, %v400
      %405 = vst.msk [vmem:[#allocation2 + $0x70] sm:$0xf] %vm315, %v401
      %406 = vst.msk [vmem:[#allocation2 + $0x70] sm:$0xf0] %vm328, 0
      %s407 = scalar_lea.vmem %s281, 64
      %v408 = vld [vmem:[%s407] sm:$0xf]
      %v409 = vld [vmem:[%s407 + $0x4] sm:$0xf]
      %v412 = vunpack.c.l.b16 %v408
      %v413 = vunpack.c.l.b16 %v409
      %v414 = vpack.c.b16 %v413, %v412
      %416 = vst.msk [vmem:[#allocation2 + $0x78] sm:$0xff] %vm293, %v414
      %417 = vst.msk [vmem:[#allocation2 + $0x80] sm:$0xf] %vm315, 0
      %s418 = scalar_lea.vmem %s281, 72
      %v419 = vld [vmem:[%s418] sm:$0xf]
      %v420 = vld [vmem:[%s418 + $0x4] sm:$0xf]
      %v423 = vunpack.c.l.b16 %v419
      %v424 = vunpack.c.l.b16 %v420
      %v425 = vpack.c.b16 %v423, %v423
      %v426 = vpack.c.b16 %v424, %v424
      %429 = vst.msk [vmem:[#allocation2 + $0x80] sm:$0xf0] %vm328, %v425
      %430 = vst.msk [vmem:[#allocation2 + $0x88] sm:$0xf] %vm315, %v426
      %431 = vst.msk [vmem:[#allocation2 + $0x88] sm:$0xf0] %vm328, 0
      %s432 = scalar_lea.vmem %s281, 80
      %v433 = vld [vmem:[%s432] sm:$0xf]
      %v434 = vld [vmem:[%s432 + $0x4] sm:$0xf]
      %v437 = vunpack.c.l.b16 %v433
      %v438 = vunpack.c.l.b16 %v434
      %v439 = vpack.c.b16 %v438, %v437
      %441 = vst.msk [vmem:[#allocation2 + $0x90] sm:$0xff] %vm293, %v439
      %442 = vst.msk [vmem:[#allocation2 + $0x98] sm:$0xf] %vm315, 0
      %s443 = scalar_lea.vmem %s281, 88
      %v444 = vld [vmem:[%s443] sm:$0xf]
      %v445 = vld [vmem:[%s443 + $0x4] sm:$0xf]
      %v448 = vunpack.c.l.b16 %v444
      %v449 = vunpack.c.l.b16 %v445
      %v450 = vpack.c.b16 %v448, %v448
      %v451 = vpack.c.b16 %v449, %v449
      %454 = vst.msk [vmem:[#allocation2 + $0x98] sm:$0xf0] %vm328, %v450
      %455 = vst.msk [vmem:[#allocation2 + $0xa0] sm:$0xf] %vm315, %v451
      %456 = vst.msk [vmem:[#allocation2 + $0xa0] sm:$0xf0] %vm328, 0
      %s457 = scalar_lea.vmem %s281, 96
      %v458 = vld [vmem:[%s457] sm:$0xf]
      %v459 = vld [vmem:[%s457 + $0x4] sm:$0xf]
      %v462 = vunpack.c.l.b16 %v458
      %v463 = vunpack.c.l.b16 %v459
      %v464 = vpack.c.b16 %v463, %v462
      %466 = vst.msk [vmem:[#allocation2 + $0xa8] sm:$0xff] %vm293, %v464
      %467 = vst.msk [vmem:[#allocation2 + $0xb0] sm:$0xf] %vm315, 0
      %s468 = scalar_lea.vmem %s281, 104
      %v469 = vld [vmem:[%s468] sm:$0xf]
      %v470 = vld [vmem:[%s468 + $0x4] sm:$0xf]
      %v473 = vunpack.c.l.b16 %v469
      %v474 = vunpack.c.l.b16 %v470
      %v475 = vpack.c.b16 %v473, %v473
      %v476 = vpack.c.b16 %v474, %v474
      %479 = vst.msk [vmem:[#allocation2 + $0xb0] sm:$0xf0] %vm328, %v475
      %480 = vst.msk [vmem:[#allocation2 + $0xb8] sm:$0xf] %vm315, %v476
      %481 = vst.msk [vmem:[#allocation2 + $0xb8] sm:$0xf0] %vm328, 0
      %s482 = scalar_lea.vmem %s281, 112
      %v483 = vld [vmem:[%s482] sm:$0xf]
      %v484 = vld [vmem:[%s482 + $0x4] sm:$0xf]
      %v487 = vunpack.c.l.b16 %v483
      %v488 = vunpack.c.l.b16 %v484
      %v489 = vpack.c.b16 %v488, %v487
      %491 = vst.msk [vmem:[#allocation2 + $0xc0] sm:$0xff] %vm293, %v489
      %492 = vst.msk [vmem:[#allocation2 + $0xc8] sm:$0xf] %vm315, 0
      %s493 = scalar_lea.vmem %s281, 120
      %v494 = vld [vmem:[%s493] sm:$0xf]
      %v495 = vld [vmem:[%s493 + $0x4] sm:$0xf]
      %v498 = vunpack.c.l.b16 %v494
      %v499 = vunpack.c.l.b16 %v495
      %v500 = vpack.c.b16 %v498, %v498
      %v501 = vpack.c.b16 %v499, %v499
      %504 = vst.msk [vmem:[#allocation2 + $0xc8] sm:$0xf0] %vm328, %v500
      %505 = vst.msk [vmem:[#allocation2 + $0xd0] sm:$0xf] %vm315, %v501
      %506 = vst.msk [vmem:[#allocation2 + $0xd0] sm:$0xf0] %vm328, 0
      %v507 = vld [vmem:[#allocation2 + $0x8] sm:$0xf8]
      %v508 = vld [vmem:[#allocation2 + $0x10] sm:$0xff]
      %v509 = vld [vmem:[#allocation2 + $0x18] sm:$0xff]
      %v510 = vld [vmem:[#allocation2 + $0x20] sm:$0xff]
      %v511 = vld [vmem:[#allocation2 + $0x28] sm:$0xff]
      %v512 = vld [vmem:[#allocation2 + $0x30] sm:$0xff]
      %v513 = vld [vmem:[#allocation2 + $0x38] sm:$0xff]
      %v514 = vld [vmem:[#allocation2 + $0x40] sm:$0xff]
      %v515 = vld [vmem:[#allocation2 + $0x48] sm:$0xff]
      %v516 = vld [vmem:[#allocation2 + $0x50] sm:$0xff]
      %v517 = vld [vmem:[#allocation2 + $0x58] sm:$0xff]
      %v518 = vld [vmem:[#allocation2 + $0x60] sm:$0xff]
      %v519 = vld [vmem:[#allocation2 + $0x68] sm:$0xff]
      %v520 = vld [vmem:[#allocation2 + $0x70] sm:$0xff]
      %v521 = vld [vmem:[#allocation2 + $0x78] sm:$0xff]
      %v522 = vld [vmem:[#allocation2 + $0x80] sm:$0xff]
      %v523 = vld [vmem:[#allocation2 + $0x88] sm:$0xff]
      %v524 = vld [vmem:[#allocation2 + $0x90] sm:$0xff]
      %v525 = vld [vmem:[#allocation2 + $0x98] sm:$0xff]
      %v526 = vld [vmem:[#allocation2 + $0xa0] sm:$0xff]
      %v527 = vld [vmem:[#allocation2 + $0xa8] sm:$0xff]
      %v528 = vld [vmem:[#allocation2 + $0xb0] sm:$0xff]
      %v529 = vld [vmem:[#allocation2 + $0xb8] sm:$0xff]
      %v530 = vld [vmem:[#allocation2 + $0xc0] sm:$0xff]
      %v531 = vld [vmem:[#allocation2 + $0xc8] sm:$0xf]
      %v532 = vld [vmem:[%s1] sm:$0x3]
      %v533 = vld [vmem:[#allocation2 + $0x8] sm:$0xf0]
      %s534 = scalar_lea.vmem %s1, 2
      %v535 = vld [vmem:[%s534] sm:$0x3]
      %vm561 = vcmask 1043456
      %v562 = vrot.slane %v533, 4
      %v563 = vrot.slane %v508, 4
      %v564 = vsel %vm561, %v562, %v563
      %v565 = vrot.slane %v509, 4
      %v566 = vsel %vm561, %v563, %v565
      %v567 = vrot.slane %v510, 4
      %v568 = vsel %vm561, %v565, %v567
      %v569 = vrot.slane %v511, 4
      %v570 = vsel %vm561, %v567, %v569
      %v571 = vrot.slane %v512, 4
      %v572 = vsel %vm561, %v569, %v571
      %v573 = vrot.slane %v513, 4
      %v574 = vsel %vm561, %v571, %v573
      %v575 = vrot.slane %v514, 4
      %v576 = vsel %vm561, %v573, %v575
      %v577 = vrot.slane %v515, 4
      %v578 = vsel %vm561, %v575, %v577
      %v579 = vrot.slane %v516, 4
      %v580 = vsel %vm561, %v577, %v579
      %v581 = vrot.slane %v517, 4
      %v582 = vsel %vm561, %v579, %v581
      %v583 = vrot.slane %v518, 4
      %v584 = vsel %vm561, %v581, %v583
      %v585 = vrot.slane %v519, 4
      %v586 = vsel %vm561, %v583, %v585
      %v587 = vrot.slane %v520, 4
      %v588 = vsel %vm561, %v585, %v587
      %v589 = vrot.slane %v521, 4
      %v590 = vsel %vm561, %v587, %v589
      %v591 = vrot.slane %v522, 4
      %v592 = vsel %vm561, %v589, %v591
      %v593 = vrot.slane %v523, 4
      %v594 = vsel %vm561, %v591, %v593
      %v595 = vrot.slane %v524, 4
      %v596 = vsel %vm561, %v593, %v595
      %v597 = vrot.slane %v525, 4
      %v598 = vsel %vm561, %v595, %v597
      %v599 = vrot.slane %v526, 4
      %v600 = vsel %vm561, %v597, %v599
      %v601 = vrot.slane %v527, 4
      %v602 = vsel %vm561, %v599, %v601
      %v603 = vrot.slane %v528, 4
      %v604 = vsel %vm561, %v601, %v603
      %v605 = vrot.slane %v529, 4
      %v606 = vsel %vm561, %v603, %v605
      %v607 = vrot.slane %v530, 4
      %v608 = vsel %vm561, %v605, %v607
      %v609 = vrot.slane %v531, 4
      %v610 = vsel %vm561, %v607, %v609
      %v612 = vsel %vm293, %v564, 0
      %v615 = vsel %vm293, %v566, 0
      %v618 = vsel %vm293, %v568, 0
      %v621 = vsel %vm293, %v570, 0
      %v624 = vsel %vm293, %v572, 0
      %v627 = vsel %vm293, %v574, 0
      %v630 = vsel %vm293, %v576, 0
      %v633 = vsel %vm293, %v578, 0
      %v636 = vsel %vm293, %v580, 0
      %v639 = vsel %vm293, %v582, 0
      %v642 = vsel %vm293, %v584, 0
      %v645 = vsel %vm293, %v586, 0
      %v648 = vsel %vm293, %v588, 0
      %v651 = vsel %vm293, %v590, 0
      %v654 = vsel %vm293, %v592, 0
      %v657 = vsel %vm293, %v594, 0
      %v660 = vsel %vm293, %v596, 0
      %v663 = vsel %vm293, %v598, 0
      %v666 = vsel %vm293, %v600, 0
      %v669 = vsel %vm293, %v602, 0
      %v672 = vsel %vm293, %v604, 0
      %v675 = vsel %vm293, %v606, 0
      %v678 = vsel %vm293, %v608, 0
      %v681 = vsel %vm293, %v610, 0
      %vm683 = vcmask 1041408
      %v685 = vsel %vm683, %v535, 0
      %687 = vmatprep.subr.bf16.mxu0 0
      %688 = vmatpush1.bf16.msra.mxu0 %v685
      %689 = vmatprep.subr.bf16.mxu0 0
      %690 = vmatpush1.bf16.msra.mxu0 0
      %691 = vmatprep.subr.bf16.mxu0 0
      %692 = vmatpush1.bf16.msra.mxu0 0
      %693 = vmatprep.subr.bf16.mxu0 0
      %694 = vmatpush1.bf16.msra.mxu0 0
      %695 = vmatprep.subr.bf16.mxu0 0
      %696 = vmatpush1.bf16.msra.mxu0 0
      %697 = vmatprep.subr.bf16.mxu0 0
      %698 = vmatpush1.bf16.msra.mxu0 0
      %699 = vmatprep.subr.bf16.mxu0 0
      %700 = vmatpush1.bf16.msra.mxu0 0
      %701 = vmatprep.subr.bf16.mxu0 0
      %702 = vmatpush1.bf16.msra.mxu0 0
      %703 = vmatprep.subr.bf16.mxu0 0
      %704 = vmatpush1.bf16.msra.mxu0 0
      %705 = vmatprep.subr.bf16.mxu0 0
      %706 = vmatpush1.bf16.msra.mxu0 0
      %707 = vmatprep.subr.bf16.mxu0 0
      %708 = vmatpush1.bf16.msra.mxu0 0
      %709 = vmatprep.subr.bf16.mxu0 0
      %710 = vmatpush1.bf16.msra.mxu0 0
      %711 = vmatprep.subr.bf16.mxu0 0
      %712 = vmatpush1.bf16.msra.mxu0 0
      %713 = vmatprep.subr.bf16.mxu0 0
      %714 = vmatpush1.bf16.msra.mxu0 0
      %715 = vmatprep.subr.bf16.mxu0 0
      %716 = vmatpush1.bf16.msra.mxu0 0
      %717 = vmatprep.subr.bf16.mxu0 0
      %718 = vmatpush1.bf16.msra.mxu0 0
      %719 = vmatprep.mubr.bf16.mxu0 0
      %720 = vmatmul.mubr.bf16.gmra.mrb[0].mxu0 %v612
      %v721 = vpop.f32.mrb[0].mxu0
      %v722 = vadd.f32 0.0, %v721
      %v723 = vpop.f32.mrb[0].mxu0
      %v724 = vpop.f32.mrb[0].mxu0
      %v725 = vadd.f32 0.0, %v724
      %v726 = vpop.f32.mrb[0].mxu0
      %727 = vmatprep.mubr.bf16.mxu0 0
      %728 = vmatmul.mubr.bf16.gmra.mrb[0].mxu0 %v615
      %v729 = vpop.f32.mrb[0].mxu0
      %v730 = vadd.f32 0.0, %v729
      %v731 = vpop.f32.mrb[0].mxu0
      %v732 = vpop.f32.mrb[0].mxu0
      %v733 = vadd.f32 0.0, %v732
      %v734 = vpop.f32.mrb[0].mxu0
      %735 = vmatprep.mubr.bf16.mxu0 0
      %736 = vmatmul.mubr.bf16.gmra.mrb[0].mxu0 %v618
      %v737 = vpop.f32.mrb[0].mxu0
      %v738 = vadd.f32 0.0, %v737
      %v739 = vpop.f32.mrb[0].mxu0
      %v740 = vpop.f32.mrb[0].mxu0
      %v741 = vadd.f32 0.0, %v740
      %v742 = vpop.f32.mrb[0].mxu0
      %743 = vmatprep.mubr.bf16.mxu0 0
      %744 = vmatmul.mubr.bf16.gmra.mrb[0].mxu0 %v621
      %v745 = vpop.f32.mrb[0].mxu0
      %v746 = vadd.f32 0.0, %v745
      %v747 = vpop.f32.mrb[0].mxu0
      %v748 = vpop.f32.mrb[0].mxu0
      %v749 = vadd.f32 0.0, %v748
      %v750 = vpop.f32.mrb[0].mxu0
      %751 = vmatprep.mubr.bf16.mxu0 0
      %752 = vmatmul.mubr.bf16.gmra.mrb[0].mxu0 %v624
      %v753 = vpop.f32.mrb[0].mxu0
      %v754 = vadd.f32 0.0, %v753
      %v755 = vpop.f32.mrb[0].mxu0
      %v756 = vpop.f32.mrb[0].mxu0
      %v757 = vadd.f32 0.0, %v756
      %v758 = vpop.f32.mrb[0].mxu0
      %759 = vmatprep.mubr.bf16.mxu0 0
      %760 = vmatmul.mubr.bf16.gmra.mrb[0].mxu0 %v627
      %v761 = vpop.f32.mrb[0].mxu0
      %v762 = vadd.f32 0.0, %v761
      %v763 = vpop.f32.mrb[0].mxu0
      %v764 = vpop.f32.mrb[0].mxu0
      %v765 = vadd.f32 0.0, %v764
      %v766 = vpop.f32.mrb[0].mxu0
      %767 = vmatprep.mubr.bf16.mxu0 0
      %768 = vmatmul.mubr.bf16.gmra.mrb[0].mxu0 %v630
      %v769 = vpop.f32.mrb[0].mxu0
      %v770 = vadd.f32 0.0, %v769
      %v771 = vpop.f32.mrb[0].mxu0
      %v772 = vpop.f32.mrb[0].mxu0
      %v773 = vadd.f32 0.0, %v772
      %v774 = vpop.f32.mrb[0].mxu0
      %775 = vmatprep.mubr.bf16.mxu0 0
      %776 = vmatmul.mubr.bf16.gmra.mrb[0].mxu0 %v633
      %v777 = vpop.f32.mrb[0].mxu0
      %v778 = vadd.f32 0.0, %v777
      %v779 = vpop.f32.mrb[0].mxu0
      %v780 = vpop.f32.mrb[0].mxu0
      %v781 = vadd.f32 0.0, %v780
      %v782 = vpop.f32.mrb[0].mxu0
      %783 = vmatprep.mubr.bf16.mxu0 0
      %784 = vmatmul.mubr.bf16.gmra.mrb[0].mxu0 %v636
      %v785 = vpop.f32.mrb[0].mxu0
      %v786 = vadd.f32 0.0, %v785
      %v787 = vpop.f32.mrb[0].mxu0
      %v788 = vpop.f32.mrb[0].mxu0
      %v789 = vadd.f32 0.0, %v788
      %v790 = vpop.f32.mrb[0].mxu0
      %791 = vmatprep.mubr.bf16.mxu0 0
      %792 = vmatmul.mubr.bf16.gmra.mrb[0].mxu0 %v639
      %v793 = vpop.f32.mrb[0].mxu0
      %v794 = vadd.f32 0.0, %v793
      %v795 = vpop.f32.mrb[0].mxu0
      %v796 = vpop.f32.mrb[0].mxu0
      %v797 = vadd.f32 0.0, %v796
      %v798 = vpop.f32.mrb[0].mxu0
      %799 = vmatprep.mubr.bf16.mxu0 0
      %800 = vmatmul.mubr.bf16.gmra.mrb[0].mxu0 %v642
      %v801 = vpop.f32.mrb[0].mxu0
      %v802 = vadd.f32 0.0, %v801
      %v803 = vpop.f32.mrb[0].mxu0
      %v804 = vpop.f32.mrb[0].mxu0
      %v805 = vadd.f32 0.0, %v804
      %v806 = vpop.f32.mrb[0].mxu0
      %807 = vmatprep.mubr.bf16.mxu0 0
      %808 = vmatmul.mubr.bf16.gmra.mrb[0].mxu0 %v645
      %v809 = vpop.f32.mrb[0].mxu0
      %v810 = vadd.f32 0.0, %v809
      %v811 = vpop.f32.mrb[0].mxu0
      %v812 = vpop.f32.mrb[0].mxu0
      %v813 = vadd.f32 0.0, %v812
      %v814 = vpop.f32.mrb[0].mxu0
      %815 = vmatprep.mubr.bf16.mxu0 0
      %816 = vmatmul.mubr.bf16.gmra.mrb[0].mxu0 %v648
      %v817 = vpop.f32.mrb[0].mxu0
      %v818 = vadd.f32 0.0, %v817
      %v819 = vpop.f32.mrb[0].mxu0
      %v820 = vpop.f32.mrb[0].mxu0
      %v821 = vadd.f32 0.0, %v820
      %v822 = vpop.f32.mrb[0].mxu0
      %823 = vmatprep.mubr.bf16.mxu0 0
      %824 = vmatmul.mubr.bf16.gmra.mrb[0].mxu0 %v651
      %v825 = vpop.f32.mrb[0].mxu0
      %v826 = vadd.f32 0.0, %v825
      %v827 = vpop.f32.mrb[0].mxu0
      %v828 = vpop.f32.mrb[0].mxu0
      %v829 = vadd.f32 0.0, %v828
      %v830 = vpop.f32.mrb[0].mxu0
      %831 = vmatprep.mubr.bf16.mxu0 0
      %832 = vmatmul.mubr.bf16.gmra.mrb[0].mxu0 %v654
      %v833 = vpop.f32.mrb[0].mxu0
      %v834 = vadd.f32 0.0, %v833
      %v835 = vpop.f32.mrb[0].mxu0
      %v836 = vpop.f32.mrb[0].mxu0
      %v837 = vadd.f32 0.0, %v836
      %v838 = vpop.f32.mrb[0].mxu0
      %839 = vmatprep.mubr.bf16.mxu0 0
      %840 = vmatmul.mubr.bf16.gmra.mrb[0].mxu0 %v657
      %v841 = vpop.f32.mrb[0].mxu0
      %v842 = vadd.f32 0.0, %v841
      %v843 = vpop.f32.mrb[0].mxu0
      %v844 = vpop.f32.mrb[0].mxu0
      %v845 = vadd.f32 0.0, %v844
      %v846 = vpop.f32.mrb[0].mxu0
      %847 = vmatprep.mubr.bf16.mxu0 0
      %848 = vmatmul.mubr.bf16.gmra.mrb[0].mxu0 %v660
      %v849 = vpop.f32.mrb[0].mxu0
      %v850 = vadd.f32 0.0, %v849
      %v851 = vpop.f32.mrb[0].mxu0
      %v852 = vpop.f32.mrb[0].mxu0
      %v853 = vadd.f32 0.0, %v852
      %v854 = vpop.f32.mrb[0].mxu0
      %855 = vmatprep.mubr.bf16.mxu0 0
      %856 = vmatmul.mubr.bf16.gmra.mrb[0].mxu0 %v663
      %v857 = vpop.f32.mrb[0].mxu0
      %v858 = vadd.f32 0.0, %v857
      %v859 = vpop.f32.mrb[0].mxu0
      %v860 = vpop.f32.mrb[0].mxu0
      %v861 = vadd.f32 0.0, %v860
      %v862 = vpop.f32.mrb[0].mxu0
      %863 = vmatprep.mubr.bf16.mxu0 0
      %864 = vmatmul.mubr.bf16.gmra.mrb[0].mxu0 %v666
      %v865 = vpop.f32.mrb[0].mxu0
      %v866 = vadd.f32 0.0, %v865
      %v867 = vpop.f32.mrb[0].mxu0
      %v868 = vpop.f32.mrb[0].mxu0
      %v869 = vadd.f32 0.0, %v868
      %v870 = vpop.f32.mrb[0].mxu0
      %871 = vmatprep.mubr.bf16.mxu0 0
      %872 = vmatmul.mubr.bf16.gmra.mrb[0].mxu0 %v669
      %v873 = vpop.f32.mrb[0].mxu0
      %v874 = vadd.f32 0.0, %v873
      %v875 = vpop.f32.mrb[0].mxu0
      %v876 = vpop.f32.mrb[0].mxu0
      %v877 = vadd.f32 0.0, %v876
      %v878 = vpop.f32.mrb[0].mxu0
      %879 = vmatprep.mubr.bf16.mxu0 0
      %880 = vmatmul.mubr.bf16.gmra.mrb[0].mxu0 %v672
      %v881 = vpop.f32.mrb[0].mxu0
      %v882 = vadd.f32 0.0, %v881
      %v883 = vpop.f32.mrb[0].mxu0
      %v884 = vpop.f32.mrb[0].mxu0
      %v885 = vadd.f32 0.0, %v884
      %v886 = vpop.f32.mrb[0].mxu0
      %887 = vmatprep.mubr.bf16.mxu0 0
      %888 = vmatmul.mubr.bf16.gmra.mrb[0].mxu0 %v675
      %v889 = vpop.f32.mrb[0].mxu0
      %v890 = vadd.f32 0.0, %v889
      %v891 = vpop.f32.mrb[0].mxu0
      %v892 = vpop.f32.mrb[0].mxu0
      %v893 = vadd.f32 0.0, %v892
      %v894 = vpop.f32.mrb[0].mxu0
      %895 = vmatprep.mubr.bf16.mxu0 0
      %896 = vmatmul.mubr.bf16.gmra.mrb[0].mxu0 %v678
      %v897 = vpop.f32.mrb[0].mxu0
      %v898 = vadd.f32 0.0, %v897
      %v899 = vpop.f32.mrb[0].mxu0
      %v900 = vpop.f32.mrb[0].mxu0
      %v901 = vadd.f32 0.0, %v900
      %v902 = vpop.f32.mrb[0].mxu0
      %903 = vmatprep.mubr.bf16.mxu0 0
      %904 = vmatmul.mubr.bf16.gmra.mrb[0].mxu0 %v681
      %v905 = vpop.f32.mrb[0].mxu0
      %v906 = vadd.f32 0.0, %v905
      %v907 = vpop.f32.mrb[0].mxu0
      %v908 = vpop.f32.mrb[0].mxu0
      %v909 = vadd.f32 0.0, %v908
      %v910 = vpop.f32.mrb[0].mxu0
      %911 = vdwg.mxu0
      %vm912 = vsmask.f32 4352
      %v914 = vshrl.u32 %v507, 16
      %v916 = vrot.slane %v914, 3
      %v917 = vshll.u32 %v507, 16
      %v919 = vrot.slane %v917, 4
      %v920 = vor.u32 %v916, %v919
      %v922 = vshrl.u32 %v508, 16
      %v924 = vrot.slane %v922, 3
      %v925 = vshll.u32 %v508, 16
      %v927 = vrot.slane %v925, 4
      %v928 = vor.u32 %v924, %v927
      %v929 = vsel %vm912, %v920, %v928
      %v931 = vshrl.u32 %v509, 16
      %v933 = vrot.slane %v931, 3
      %v934 = vshll.u32 %v509, 16
      %v936 = vrot.slane %v934, 4
      %v937 = vor.u32 %v933, %v936
      %v938 = vsel %vm912, %v928, %v937
      %v940 = vshrl.u32 %v510, 16
      %v942 = vrot.slane %v940, 3
      %v943 = vshll.u32 %v510, 16
      %v945 = vrot.slane %v943, 4
      %v946 = vor.u32 %v942, %v945
      %v947 = vsel %vm912, %v937, %v946
      %v949 = vshrl.u32 %v511, 16
      %v951 = vrot.slane %v949, 3
      %v952 = vshll.u32 %v511, 16
      %v954 = vrot.slane %v952, 4
      %v955 = vor.u32 %v951, %v954
      %v956 = vsel %vm912, %v946, %v955
      %v958 = vshrl.u32 %v512, 16
      %v960 = vrot.slane %v958, 3
      %v961 = vshll.u32 %v512, 16
      %v963 = vrot.slane %v961, 4
      %v964 = vor.u32 %v960, %v963
      %v965 = vsel %vm912, %v955, %v964
      %v967 = vshrl.u32 %v513, 16
      %v969 = vrot.slane %v967, 3
      %v970 = vshll.u32 %v513, 16
      %v972 = vrot.slane %v970, 4
      %v973 = vor.u32 %v969, %v972
      %v974 = vsel %vm912, %v964, %v973
      %v976 = vshrl.u32 %v514, 16
      %v978 = vrot.slane %v976, 3
      %v979 = vshll.u32 %v514, 16
      %v981 = vrot.slane %v979, 4
      %v982 = vor.u32 %v978, %v981
      %v983 = vsel %vm912, %v973, %v982
      %v985 = vshrl.u32 %v515, 16
      %v987 = vrot.slane %v985, 3
      %v988 = vshll.u32 %v515, 16
      %v990 = vrot.slane %v988, 4
      %v991 = vor.u32 %v987, %v990
      %v992 = vsel %vm912, %v982, %v991
      %v994 = vshrl.u32 %v516, 16
      %v996 = vrot.slane %v994, 3
      %v997 = vshll.u32 %v516, 16
      %v999 = vrot.slane %v997, 4
      %v1000 = vor.u32 %v996, %v999
      %v1001 = vsel %vm912, %v991, %v1000
      %v1003 = vshrl.u32 %v517, 16
      %v1005 = vrot.slane %v1003, 3
      %v1006 = vshll.u32 %v517, 16
      %v1008 = vrot.slane %v1006, 4
      %v1009 = vor.u32 %v1005, %v1008
      %v1010 = vsel %vm912, %v1000, %v1009
      %v1012 = vshrl.u32 %v518, 16
      %v1014 = vrot.slane %v1012, 3
      %v1015 = vshll.u32 %v518, 16
      %v1017 = vrot.slane %v1015, 4
      %v1018 = vor.u32 %v1014, %v1017
      %v1019 = vsel %vm912, %v1009, %v1018
      %v1021 = vshrl.u32 %v519, 16
      %v1023 = vrot.slane %v1021, 3
      %v1024 = vshll.u32 %v519, 16
      %v1026 = vrot.slane %v1024, 4
      %v1027 = vor.u32 %v1023, %v1026
      %v1028 = vsel %vm912, %v1018, %v1027
      %v1030 = vshrl.u32 %v520, 16
      %v1032 = vrot.slane %v1030, 3
      %v1033 = vshll.u32 %v520, 16
      %v1035 = vrot.slane %v1033, 4
      %v1036 = vor.u32 %v1032, %v1035
      %v1037 = vsel %vm912, %v1027, %v1036
      %v1039 = vshrl.u32 %v521, 16
      %v1041 = vrot.slane %v1039, 3
      %v1042 = vshll.u32 %v521, 16
      %v1044 = vrot.slane %v1042, 4
      %v1045 = vor.u32 %v1041, %v1044
      %v1046 = vsel %vm912, %v1036, %v1045
      %v1048 = vshrl.u32 %v522, 16
      %v1050 = vrot.slane %v1048, 3
      %v1051 = vshll.u32 %v522, 16
      %v1053 = vrot.slane %v1051, 4
      %v1054 = vor.u32 %v1050, %v1053
      %v1055 = vsel %vm912, %v1045, %v1054
      %v1057 = vshrl.u32 %v523, 16
      %v1059 = vrot.slane %v1057, 3
      %v1060 = vshll.u32 %v523, 16
      %v1062 = vrot.slane %v1060, 4
      %v1063 = vor.u32 %v1059, %v1062
      %v1064 = vsel %vm912, %v1054, %v1063
      %v1066 = vshrl.u32 %v524, 16
      %v1068 = vrot.slane %v1066, 3
      %v1069 = vshll.u32 %v524, 16
      %v1071 = vrot.slane %v1069, 4
      %v1072 = vor.u32 %v1068, %v1071
      %v1073 = vsel %vm912, %v1063, %v1072
      %v1075 = vshrl.u32 %v525, 16
      %v1077 = vrot.slane %v1075, 3
      %v1078 = vshll.u32 %v525, 16
      %v1080 = vrot.slane %v1078, 4
      %v1081 = vor.u32 %v1077, %v1080
      %v1082 = vsel %vm912, %v1072, %v1081
      %v1084 = vshrl.u32 %v526, 16
      %v1086 = vrot.slane %v1084, 3
      %v1087 = vshll.u32 %v526, 16
      %v1089 = vrot.slane %v1087, 4
      %v1090 = vor.u32 %v1086, %v1089
      %v1091 = vsel %vm912, %v1081, %v1090
      %v1093 = vshrl.u32 %v527, 16
      %v1095 = vrot.slane %v1093, 3
      %v1096 = vshll.u32 %v527, 16
      %v1098 = vrot.slane %v1096, 4
      %v1099 = vor.u32 %v1095, %v1098
      %v1100 = vsel %vm912, %v1090, %v1099
      %v1102 = vshrl.u32 %v528, 16
      %v1104 = vrot.slane %v1102, 3
      %v1105 = vshll.u32 %v528, 16
      %v1107 = vrot.slane %v1105, 4
      %v1108 = vor.u32 %v1104, %v1107
      %v1109 = vsel %vm912, %v1099, %v1108
      %v1111 = vshrl.u32 %v529, 16
      %v1113 = vrot.slane %v1111, 3
      %v1114 = vshll.u32 %v529, 16
      %v1116 = vrot.slane %v1114, 4
      %v1117 = vor.u32 %v1113, %v1116
      %v1118 = vsel %vm912, %v1108, %v1117
      %v1120 = vshrl.u32 %v530, 16
      %v1122 = vrot.slane %v1120, 3
      %v1123 = vshll.u32 %v530, 16
      %v1125 = vrot.slane %v1123, 4
      %v1126 = vor.u32 %v1122, %v1125
      %v1127 = vsel %vm912, %v1117, %v1126
      %v1129 = vshrl.u32 %v531, 16
      %v1131 = vrot.slane %v1129, 3
      %v1132 = vshll.u32 %v531, 16
      %v1134 = vrot.slane %v1132, 4
      %v1135 = vor.u32 %v1131, %v1134
      %v1136 = vsel %vm912, %v1126, %v1135
      %v1138 = vsel %vm293, %v929, 0
      %v1141 = vsel %vm293, %v938, 0
      %v1144 = vsel %vm293, %v947, 0
      %v1147 = vsel %vm293, %v956, 0
      %v1150 = vsel %vm293, %v965, 0
      %v1153 = vsel %vm293, %v974, 0
      %v1156 = vsel %vm293, %v983, 0
      %v1159 = vsel %vm293, %v992, 0
      %v1162 = vsel %vm293, %v1001, 0
      %v1165 = vsel %vm293, %v1010, 0
      %v1168 = vsel %vm293, %v1019, 0
      %v1171 = vsel %vm293, %v1028, 0
      %v1174 = vsel %vm293, %v1037, 0
      %v1177 = vsel %vm293, %v1046, 0
      %v1180 = vsel %vm293, %v1055, 0
      %v1183 = vsel %vm293, %v1064, 0
      %v1186 = vsel %vm293, %v1073, 0
      %v1189 = vsel %vm293, %v1082, 0
      %v1192 = vsel %vm293, %v1091, 0
      %v1195 = vsel %vm293, %v1100, 0
      %v1198 = vsel %vm293, %v1109, 0
      %v1201 = vsel %vm293, %v1118, 0
      %v1204 = vsel %vm293, %v1127, 0
      %v1207 = vsel %vm293, %v1136, 0
      %v1210 = vsel %vm683, %v532, 0
      %1212 = vmatprep.subr.bf16.mxu0 0
      %1213 = vmatpush1.bf16.msra.mxu0 %v1210
      %1214 = vmatprep.subr.bf16.mxu0 0
      %1215 = vmatpush1.bf16.msra.mxu0 0
      %1216 = vmatprep.subr.bf16.mxu0 0
      %1217 = vmatpush1.bf16.msra.mxu0 0
      %1218 = vmatprep.subr.bf16.mxu0 0
      %1219 = vmatpush1.bf16.msra.mxu0 0
      %1220 = vmatprep.subr.bf16.mxu0 0
      %1221 = vmatpush1.bf16.msra.mxu0 0
      %1222 = vmatprep.subr.bf16.mxu0 0
      %1223 = vmatpush1.bf16.msra.mxu0 0
      %1224 = vmatprep.subr.bf16.mxu0 0
      %1225 = vmatpush1.bf16.msra.mxu0 0
      %1226 = vmatprep.subr.bf16.mxu0 0
      %1227 = vmatpush1.bf16.msra.mxu0 0
      %1228 = vmatprep.subr.bf16.mxu0 0
      %1229 = vmatpush1.bf16.msra.mxu0 0
      %1230 = vmatprep.subr.bf16.mxu0 0
      %1231 = vmatpush1.bf16.msra.mxu0 0
      %1232 = vmatprep.subr.bf16.mxu0 0
      %1233 = vmatpush1.bf16.msra.mxu0 0
      %1234 = vmatprep.subr.bf16.mxu0 0
      %1235 = vmatpush1.bf16.msra.mxu0 0
      %1236 = vmatprep.subr.bf16.mxu0 0
      %1237 = vmatpush1.bf16.msra.mxu0 0
      %1238 = vmatprep.subr.bf16.mxu0 0
      %1239 = vmatpush1.bf16.msra.mxu0 0
      %1240 = vmatprep.subr.bf16.mxu0 0
      %1241 = vmatpush1.bf16.msra.mxu0 0
      %1242 = vmatprep.subr.bf16.mxu0 0
      %1243 = vmatpush1.bf16.msra.mxu0 0
      %1244 = vmatprep.mubr.bf16.mxu0 0
      %1245 = vmatmul.mubr.bf16.gmra.mrb[0].mxu0 %v1138
      %v1246 = vpop.f32.mrb[0].mxu0
      %v1247 = vadd.f32 %v722, %v1246
      %v1248 = vpop.f32.mrb[0].mxu0
      %v1249 = vpop.f32.mrb[0].mxu0
      %v1250 = vadd.f32 %v725, %v1249
      %v1251 = vpop.f32.mrb[0].mxu0
      %1252 = vmatprep.mubr.bf16.mxu0 0
      %1253 = vmatmul.mubr.bf16.gmra.mrb[0].mxu0 %v1141
      %v1254 = vpop.f32.mrb[0].mxu0
      %v1255 = vadd.f32 %v730, %v1254
      %v1256 = vpop.f32.mrb[0].mxu0
      %v1257 = vpop.f32.mrb[0].mxu0
      %v1258 = vadd.f32 %v733, %v1257
      %v1259 = vpop.f32.mrb[0].mxu0
      %1260 = vmatprep.mubr.bf16.mxu0 0
      %1261 = vmatmul.mubr.bf16.gmra.mrb[0].mxu0 %v1144
      %v1262 = vpop.f32.mrb[0].mxu0
      %v1263 = vadd.f32 %v738, %v1262
      %v1264 = vpop.f32.mrb[0].mxu0
      %v1265 = vpop.f32.mrb[0].mxu0
      %v1266 = vadd.f32 %v741, %v1265
      %v1267 = vpop.f32.mrb[0].mxu0
      %1268 = vmatprep.mubr.bf16.mxu0 0
      %1269 = vmatmul.mubr.bf16.gmra.mrb[0].mxu0 %v1147
      %v1270 = vpop.f32.mrb[0].mxu0
      %v1271 = vadd.f32 %v746, %v1270
      %v1272 = vpop.f32.mrb[0].mxu0
      %v1273 = vpop.f32.mrb[0].mxu0
      %v1274 = vadd.f32 %v749, %v1273
      %v1275 = vpop.f32.mrb[0].mxu0
      %1276 = vmatprep.mubr.bf16.mxu0 0
      %1277 = vmatmul.mubr.bf16.gmra.mrb[0].mxu0 %v1150
      %v1278 = vpop.f32.mrb[0].mxu0
      %v1279 = vadd.f32 %v754, %v1278
      %v1280 = vpop.f32.mrb[0].mxu0
      %v1281 = vpop.f32.mrb[0].mxu0
      %v1282 = vadd.f32 %v757, %v1281
      %v1283 = vpop.f32.mrb[0].mxu0
      %1284 = vmatprep.mubr.bf16.mxu0 0
      %1285 = vmatmul.mubr.bf16.gmra.mrb[0].mxu0 %v1153
      %v1286 = vpop.f32.mrb[0].mxu0
      %v1287 = vadd.f32 %v762, %v1286
      %v1288 = vpop.f32.mrb[0].mxu0
      %v1289 = vpop.f32.mrb[0].mxu0
      %v1290 = vadd.f32 %v765, %v1289
      %v1291 = vpop.f32.mrb[0].mxu0
      %1292 = vmatprep.mubr.bf16.mxu0 0
      %1293 = vmatmul.mubr.bf16.gmra.mrb[0].mxu0 %v1156
      %v1294 = vpop.f32.mrb[0].mxu0
      %v1295 = vadd.f32 %v770, %v1294
      %v1296 = vpop.f32.mrb[0].mxu0
      %v1297 = vpop.f32.mrb[0].mxu0
      %v1298 = vadd.f32 %v773, %v1297
      %v1299 = vpop.f32.mrb[0].mxu0
      %1300 = vmatprep.mubr.bf16.mxu0 0
      %1301 = vmatmul.mubr.bf16.gmra.mrb[0].mxu0 %v1159
      %v1302 = vpop.f32.mrb[0].mxu0
      %v1303 = vadd.f32 %v778, %v1302
      %v1304 = vpop.f32.mrb[0].mxu0
      %v1305 = vpop.f32.mrb[0].mxu0
      %v1306 = vadd.f32 %v781, %v1305
      %v1307 = vpop.f32.mrb[0].mxu0
      %1308 = vmatprep.mubr.bf16.mxu0 0
      %1309 = vmatmul.mubr.bf16.gmra.mrb[0].mxu0 %v1162
      %v1310 = vpop.f32.mrb[0].mxu0
      %v1311 = vadd.f32 %v786, %v1310
      %v1312 = vpop.f32.mrb[0].mxu0
      %v1313 = vpop.f32.mrb[0].mxu0
      %v1314 = vadd.f32 %v789, %v1313
      %v1315 = vpop.f32.mrb[0].mxu0
      %1316 = vmatprep.mubr.bf16.mxu0 0
      %1317 = vmatmul.mubr.bf16.gmra.mrb[0].mxu0 %v1165
      %v1318 = vpop.f32.mrb[0].mxu0
      %v1319 = vadd.f32 %v794, %v1318
      %v1320 = vpop.f32.mrb[0].mxu0
      %v1321 = vpop.f32.mrb[0].mxu0
      %v1322 = vadd.f32 %v797, %v1321
      %v1323 = vpop.f32.mrb[0].mxu0
      %1324 = vmatprep.mubr.bf16.mxu0 0
      %1325 = vmatmul.mubr.bf16.gmra.mrb[0].mxu0 %v1168
      %v1326 = vpop.f32.mrb[0].mxu0
      %v1327 = vadd.f32 %v802, %v1326
      %v1328 = vpop.f32.mrb[0].mxu0
      %v1329 = vpop.f32.mrb[0].mxu0
      %v1330 = vadd.f32 %v805, %v1329
      %v1331 = vpop.f32.mrb[0].mxu0
      %1332 = vmatprep.mubr.bf16.mxu0 0
      %1333 = vmatmul.mubr.bf16.gmra.mrb[0].mxu0 %v1171
      %v1334 = vpop.f32.mrb[0].mxu0
      %v1335 = vadd.f32 %v810, %v1334
      %v1336 = vpop.f32.mrb[0].mxu0
      %v1337 = vpop.f32.mrb[0].mxu0
      %v1338 = vadd.f32 %v813, %v1337
      %v1339 = vpop.f32.mrb[0].mxu0
      %1340 = vmatprep.mubr.bf16.mxu0 0
      %1341 = vmatmul.mubr.bf16.gmra.mrb[0].mxu0 %v1174
      %v1342 = vpop.f32.mrb[0].mxu0
      %v1343 = vadd.f32 %v818, %v1342
      %v1344 = vpop.f32.mrb[0].mxu0
      %v1345 = vpop.f32.mrb[0].mxu0
      %v1346 = vadd.f32 %v821, %v1345
      %v1347 = vpop.f32.mrb[0].mxu0
      %1348 = vmatprep.mubr.bf16.mxu0 0
      %1349 = vmatmul.mubr.bf16.gmra.mrb[0].mxu0 %v1177
      %v1350 = vpop.f32.mrb[0].mxu0
      %v1351 = vadd.f32 %v826, %v1350
      %v1352 = vpop.f32.mrb[0].mxu0
      %v1353 = vpop.f32.mrb[0].mxu0
      %v1354 = vadd.f32 %v829, %v1353
      %v1355 = vpop.f32.mrb[0].mxu0
      %1356 = vmatprep.mubr.bf16.mxu0 0
      %1357 = vmatmul.mubr.bf16.gmra.mrb[0].mxu0 %v1180
      %v1358 = vpop.f32.mrb[0].mxu0
      %v1359 = vadd.f32 %v834, %v1358
      %v1360 = vpop.f32.mrb[0].mxu0
      %v1361 = vpop.f32.mrb[0].mxu0
      %v1362 = vadd.f32 %v837, %v1361
      %v1363 = vpop.f32.mrb[0].mxu0
      %1364 = vmatprep.mubr.bf16.mxu0 0
      %1365 = vmatmul.mubr.bf16.gmra.mrb[0].mxu0 %v1183
      %v1366 = vpop.f32.mrb[0].mxu0
      %v1367 = vadd.f32 %v842, %v1366
      %v1368 = vpop.f32.mrb[0].mxu0
      %v1369 = vpop.f32.mrb[0].mxu0
      %v1370 = vadd.f32 %v845, %v1369
      %v1371 = vpop.f32.mrb[0].mxu0
      %1372 = vmatprep.mubr.bf16.mxu0 0
      %1373 = vmatmul.mubr.bf16.gmra.mrb[0].mxu0 %v1186
      %v1374 = vpop.f32.mrb[0].mxu0
      %v1375 = vadd.f32 %v850, %v1374
      %v1376 = vpop.f32.mrb[0].mxu0
      %v1377 = vpop.f32.mrb[0].mxu0
      %v1378 = vadd.f32 %v853, %v1377
      %v1379 = vpop.f32.mrb[0].mxu0
      %1380 = vmatprep.mubr.bf16.mxu0 0
      %1381 = vmatmul.mubr.bf16.gmra.mrb[0].mxu0 %v1189
      %v1382 = vpop.f32.mrb[0].mxu0
      %v1383 = vadd.f32 %v858, %v1382
      %v1384 = vpop.f32.mrb[0].mxu0
      %v1385 = vpop.f32.mrb[0].mxu0
      %v1386 = vadd.f32 %v861, %v1385
      %v1387 = vpop.f32.mrb[0].mxu0
      %1388 = vmatprep.mubr.bf16.mxu0 0
      %1389 = vmatmul.mubr.bf16.gmra.mrb[0].mxu0 %v1192
      %v1390 = vpop.f32.mrb[0].mxu0
      %v1391 = vadd.f32 %v866, %v1390
      %v1392 = vpop.f32.mrb[0].mxu0
      %v1393 = vpop.f32.mrb[0].mxu0
      %v1394 = vadd.f32 %v869, %v1393
      %v1395 = vpop.f32.mrb[0].mxu0
      %1396 = vmatprep.mubr.bf16.mxu0 0
      %1397 = vmatmul.mubr.bf16.gmra.mrb[0].mxu0 %v1195
      %v1398 = vpop.f32.mrb[0].mxu0
      %v1399 = vadd.f32 %v874, %v1398
      %v1400 = vpop.f32.mrb[0].mxu0
      %v1401 = vpop.f32.mrb[0].mxu0
      %v1402 = vadd.f32 %v877, %v1401
      %v1403 = vpop.f32.mrb[0].mxu0
      %1404 = vmatprep.mubr.bf16.mxu0 0
      %1405 = vmatmul.mubr.bf16.gmra.mrb[0].mxu0 %v1198
      %v1406 = vpop.f32.mrb[0].mxu0
      %v1407 = vadd.f32 %v882, %v1406
      %v1408 = vpop.f32.mrb[0].mxu0
      %v1409 = vpop.f32.mrb[0].mxu0
      %v1410 = vadd.f32 %v885, %v1409
      %v1411 = vpop.f32.mrb[0].mxu0
      %1412 = vmatprep.mubr.bf16.mxu0 0
      %1413 = vmatmul.mubr.bf16.gmra.mrb[0].mxu0 %v1201
      %v1414 = vpop.f32.mrb[0].mxu0
      %v1415 = vadd.f32 %v890, %v1414
      %v1416 = vpop.f32.mrb[0].mxu0
      %v1417 = vpop.f32.mrb[0].mxu0
      %v1418 = vadd.f32 %v893, %v1417
      %v1419 = vpop.f32.mrb[0].mxu0
      %1420 = vmatprep.mubr.bf16.mxu0 0
      %1421 = vmatmul.mubr.bf16.gmra.mrb[0].mxu0 %v1204
      %v1422 = vpop.f32.mrb[0].mxu0
      %v1423 = vadd.f32 %v898, %v1422
      %v1424 = vpop.f32.mrb[0].mxu0
      %v1425 = vpop.f32.mrb[0].mxu0
      %v1426 = vadd.f32 %v901, %v1425
      %v1427 = vpop.f32.mrb[0].mxu0
      %1428 = vmatprep.mubr.bf16.mxu0 0
      %1429 = vmatmul.mubr.bf16.gmra.mrb[0].mxu0 %v1207
      %v1430 = vpop.f32.mrb[0].mxu0
      %v1431 = vadd.f32 %v906, %v1430
      %v1432 = vpop.f32.mrb[0].mxu0
      %v1433 = vpop.f32.mrb[0].mxu0
      %v1434 = vadd.f32 %v909, %v1433
      %v1435 = vpop.f32.mrb[0].mxu0
      %1436 = vdwg.mxu0
      %v1437 = vld [vmem:[#allocation2 + $0xc8] sm:$0x1f]
      %s1438 = scalar_lea.vmem %s1, 4
      %v1439 = vld [vmem:[%s1438] sm:$0x3]
      %vm1440 = vsmask.f32 3328
      %v1442 = vshrl.u32 %v533, 16
      %v1444 = vrot.slane %v1442, 4
      %v1445 = vshll.u32 %v533, 16
      %v1447 = vrot.slane %v1445, 5
      %v1448 = vor.u32 %v1444, %v1447
      %v1449 = vrot.slane %v922, 4
      %v1450 = vrot.slane %v925, 5
      %v1451 = vor.u32 %v1449, %v1450
      %v1452 = vsel %vm1440, %v1448, %v1451
      %v1453 = vrot.slane %v931, 4
      %v1454 = vrot.slane %v934, 5
      %v1455 = vor.u32 %v1453, %v1454
      %v1456 = vsel %vm1440, %v1451, %v1455
      %v1457 = vrot.slane %v940, 4
      %v1458 = vrot.slane %v943, 5
      %v1459 = vor.u32 %v1457, %v1458
      %v1460 = vsel %vm1440, %v1455, %v1459
      %v1461 = vrot.slane %v949, 4
      %v1462 = vrot.slane %v952, 5
      %v1463 = vor.u32 %v1461, %v1462
      %v1464 = vsel %vm1440, %v1459, %v1463
      %v1465 = vrot.slane %v958, 4
      %v1466 = vrot.slane %v961, 5
      %v1467 = vor.u32 %v1465, %v1466
      %v1468 = vsel %vm1440, %v1463, %v1467
      %v1469 = vrot.slane %v967, 4
      %v1470 = vrot.slane %v970, 5
      %v1471 = vor.u32 %v1469, %v1470
      %v1472 = vsel %vm1440, %v1467, %v1471
      %v1473 = vrot.slane %v976, 4
      %v1474 = vrot.slane %v979, 5
      %v1475 = vor.u32 %v1473, %v1474
      %v1476 = vsel %vm1440, %v1471, %v1475
      %v1477 = vrot.slane %v985, 4
      %v1478 = vrot.slane %v988, 5
      %v1479 = vor.u32 %v1477, %v1478
      %v1480 = vsel %vm1440, %v1475, %v1479
      %v1481 = vrot.slane %v994, 4
      %v1482 = vrot.slane %v997, 5
      %v1483 = vor.u32 %v1481, %v1482
      %v1484 = vsel %vm1440, %v1479, %v1483
      %v1485 = vrot.slane %v1003, 4
      %v1486 = vrot.slane %v1006, 5
      %v1487 = vor.u32 %v1485, %v1486
      %v1488 = vsel %vm1440, %v1483, %v1487
      %v1489 = vrot.slane %v1012, 4
      %v1490 = vrot.slane %v1015, 5
      %v1491 = vor.u32 %v1489, %v1490
      %v1492 = vsel %vm1440, %v1487, %v1491
      %v1493 = vrot.slane %v1021, 4
      %v1494 = vrot.slane %v1024, 5
      %v1495 = vor.u32 %v1493, %v1494
      %v1496 = vsel %vm1440, %v1491, %v1495
      %v1497 = vrot.slane %v1030, 4
      %v1498 = vrot.slane %v1033, 5
      %v1499 = vor.u32 %v1497, %v1498
      %v1500 = vsel %vm1440, %v1495, %v1499
      %v1501 = vrot.slane %v1039, 4
      %v1502 = vrot.slane %v1042, 5
      %v1503 = vor.u32 %v1501, %v1502
      %v1504 = vsel %vm1440, %v1499, %v1503
      %v1505 = vrot.slane %v1048, 4
      %v1506 = vrot.slane %v1051, 5
      %v1507 = vor.u32 %v1505, %v1506
      %v1508 = vsel %vm1440, %v1503, %v1507
      %v1509 = vrot.slane %v1057, 4
      %v1510 = vrot.slane %v1060, 5
      %v1511 = vor.u32 %v1509, %v1510
      %v1512 = vsel %vm1440, %v1507, %v1511
      %v1513 = vrot.slane %v1066, 4
      %v1514 = vrot.slane %v1069, 5
      %v1515 = vor.u32 %v1513, %v1514
      %v1516 = vsel %vm1440, %v1511, %v1515
      %v1517 = vrot.slane %v1075, 4
      %v1518 = vrot.slane %v1078, 5
      %v1519 = vor.u32 %v1517, %v1518
      %v1520 = vsel %vm1440, %v1515, %v1519
      %v1521 = vrot.slane %v1084, 4
      %v1522 = vrot.slane %v1087, 5
      %v1523 = vor.u32 %v1521, %v1522
      %v1524 = vsel %vm1440, %v1519, %v1523
      %v1525 = vrot.slane %v1093, 4
      %v1526 = vrot.slane %v1096, 5
      %v1527 = vor.u32 %v1525, %v1526
      %v1528 = vsel %vm1440, %v1523, %v1527
      %v1529 = vrot.slane %v1102, 4
      %v1530 = vrot.slane %v1105, 5
      %v1531 = vor.u32 %v1529, %v1530
      %v1532 = vsel %vm1440, %v1527, %v1531
      %v1533 = vrot.slane %v1111, 4
      %v1534 = vrot.slane %v1114, 5
      %v1535 = vor.u32 %v1533, %v1534
      %v1536 = vsel %vm1440, %v1531, %v1535
      %v1537 = vrot.slane %v1120, 4
      %v1538 = vrot.slane %v1123, 5
      %v1539 = vor.u32 %v1537, %v1538
      %v1540 = vsel %vm1440, %v1535, %v1539
      %v1542 = vshrl.u32 %v1437, 16
      %v1544 = vrot.slane %v1542, 4
      %v1545 = vshll.u32 %v1437, 16
      %v1547 = vrot.slane %v1545, 5
      %v1548 = vor.u32 %v1544, %v1547
      %v1549 = vsel %vm1440, %v1539, %v1548
      %v1551 = vsel %vm293, %v1452, 0
      %v1554 = vsel %vm293, %v1456, 0
      %v1557 = vsel %vm293, %v1460, 0
      %v1560 = vsel %vm293, %v1464, 0
      %v1563 = vsel %vm293, %v1468, 0
      %v1566 = vsel %vm293, %v1472, 0
      %v1569 = vsel %vm293, %v1476, 0
      %v1572 = vsel %vm293, %v1480, 0
      %v1575 = vsel %vm293, %v1484, 0
      %v1578 = vsel %vm293, %v1488, 0
      %v1581 = vsel %vm293, %v1492, 0
      %v1584 = vsel %vm293, %v1496, 0
      %v1587 = vsel %vm293, %v1500, 0
      %v1590 = vsel %vm293, %v1504, 0
      %v1593 = vsel %vm293, %v1508, 0
      %v1596 = vsel %vm293, %v1512, 0
      %v1599 = vsel %vm293, %v1516, 0
      %v1602 = vsel %vm293, %v1520, 0
      %v1605 = vsel %vm293, %v1524, 0
      %v1608 = vsel %vm293, %v1528, 0
      %v1611 = vsel %vm293, %v1532, 0
      %v1614 = vsel %vm293, %v1536, 0
      %v1617 = vsel %vm293, %v1540, 0
      %v1620 = vsel %vm293, %v1549, 0
      %v1623 = vsel %vm683, %v1439, 0
      %1625 = vmatprep.subr.bf16.mxu0 0
      %1626 = vmatpush1.bf16.msra.mxu0 %v1623
      %1627 = vmatprep.subr.bf16.mxu0 0
      %1628 = vmatpush1.bf16.msra.mxu0 0
      %1629 = vmatprep.subr.bf16.mxu0 0
      %1630 = vmatpush1.bf16.msra.mxu0 0
      %1631 = vmatprep.subr.bf16.mxu0 0
      %1632 = vmatpush1.bf16.msra.mxu0 0
      %1633 = vmatprep.subr.bf16.mxu0 0
      %1634 = vmatpush1.bf16.msra.mxu0 0
      %1635 = vmatprep.subr.bf16.mxu0 0
      %1636 = vmatpush1.bf16.msra.mxu0 0
      %1637 = vmatprep.subr.bf16.mxu0 0
      %1638 = vmatpush1.bf16.msra.mxu0 0
      %1639 = vmatprep.subr.bf16.mxu0 0
      %1640 = vmatpush1.bf16.msra.mxu0 0
      %1641 = vmatprep.subr.bf16.mxu0 0
      %1642 = vmatpush1.bf16.msra.mxu0 0
      %1643 = vmatprep.subr.bf16.mxu0 0
      %1644 = vmatpush1.bf16.msra.mxu0 0
      %1645 = vmatprep.subr.bf16.mxu0 0
      %1646 = vmatpush1.bf16.msra.mxu0 0
      %1647 = vmatprep.subr.bf16.mxu0 0
      %1648 = vmatpush1.bf16.msra.mxu0 0
      %1649 = vmatprep.subr.bf16.mxu0 0
      %1650 = vmatpush1.bf16.msra.mxu0 0
      %1651 = vmatprep.subr.bf16.mxu0 0
      %1652 = vmatpush1.bf16.msra.mxu0 0
      %1653 = vmatprep.subr.bf16.mxu0 0
      %1654 = vmatpush1.bf16.msra.mxu0 0
      %1655 = vmatprep.subr.bf16.mxu0 0
      %1656 = vmatpush1.bf16.msra.mxu0 0
      %1657 = vmatprep.mubr.bf16.mxu0 0
      %1658 = vmatmul.mubr.bf16.gmra.mrb[0].mxu0 %v1551
      %v1659 = vpop.f32.mrb[0].mxu0
      %v1660 = vadd.f32 0.0, %v1659
      %v1661 = vpop.f32.mrb[0].mxu0
      %v1662 = vpop.f32.mrb[0].mxu0
      %v1663 = vadd.f32 0.0, %v1662
      %v1664 = vpop.f32.mrb[0].mxu0
      %1665 = vmatprep.mubr.bf16.mxu0 0
      %1666 = vmatmul.mubr.bf16.gmra.mrb[0].mxu0 %v1554
      %v1667 = vpop.f32.mrb[0].mxu0
      %v1668 = vadd.f32 0.0, %v1667
      %v1669 = vpop.f32.mrb[0].mxu0
      %v1670 = vpop.f32.mrb[0].mxu0
      %v1671 = vadd.f32 0.0, %v1670
      %v1672 = vpop.f32.mrb[0].mxu0
      %1673 = vmatprep.mubr.bf16.mxu0 0
      %1674 = vmatmul.mubr.bf16.gmra.mrb[0].mxu0 %v1557
      %v1675 = vpop.f32.mrb[0].mxu0
      %v1676 = vadd.f32 0.0, %v1675
      %v1677 = vpop.f32.mrb[0].mxu0
      %v1678 = vpop.f32.mrb[0].mxu0
      %v1679 = vadd.f32 0.0, %v1678
      %v1680 = vpop.f32.mrb[0].mxu0
      %1681 = vmatprep.mubr.bf16.mxu0 0
      %1682 = vmatmul.mubr.bf16.gmra.mrb[0].mxu0 %v1560
      %v1683 = vpop.f32.mrb[0].mxu0
      %v1684 = vadd.f32 0.0, %v1683
      %v1685 = vpop.f32.mrb[0].mxu0
      %v1686 = vpop.f32.mrb[0].mxu0
      %v1687 = vadd.f32 0.0, %v1686
      %v1688 = vpop.f32.mrb[0].mxu0
      %1689 = vmatprep.mubr.bf16.mxu0 0
      %1690 = vmatmul.mubr.bf16.gmra.mrb[0].mxu0 %v1563
      %v1691 = vpop.f32.mrb[0].mxu0
      %v1692 = vadd.f32 0.0, %v1691
      %v1693 = vpop.f32.mrb[0].mxu0
      %v1694 = vpop.f32.mrb[0].mxu0
      %v1695 = vadd.f32 0.0, %v1694
      %v1696 = vpop.f32.mrb[0].mxu0
      %1697 = vmatprep.mubr.bf16.mxu0 0
      %1698 = vmatmul.mubr.bf16.gmra.mrb[0].mxu0 %v1566
      %v1699 = vpop.f32.mrb[0].mxu0
      %v1700 = vadd.f32 0.0, %v1699
      %v1701 = vpop.f32.mrb[0].mxu0
      %v1702 = vpop.f32.mrb[0].mxu0
      %v1703 = vadd.f32 0.0, %v1702
      %v1704 = vpop.f32.mrb[0].mxu0
      %1705 = vmatprep.mubr.bf16.mxu0 0
      %1706 = vmatmul.mubr.bf16.gmra.mrb[0].mxu0 %v1569
      %v1707 = vpop.f32.mrb[0].mxu0
      %v1708 = vadd.f32 0.0, %v1707
      %v1709 = vpop.f32.mrb[0].mxu0
      %v1710 = vpop.f32.mrb[0].mxu0
      %v1711 = vadd.f32 0.0, %v1710
      %v1712 = vpop.f32.mrb[0].mxu0
      %1713 = vmatprep.mubr.bf16.mxu0 0
      %1714 = vmatmul.mubr.bf16.gmra.mrb[0].mxu0 %v1572
      %v1715 = vpop.f32.mrb[0].mxu0
      %v1716 = vadd.f32 0.0, %v1715
      %v1717 = vpop.f32.mrb[0].mxu0
      %v1718 = vpop.f32.mrb[0].mxu0
      %v1719 = vadd.f32 0.0, %v1718
      %v1720 = vpop.f32.mrb[0].mxu0
      %1721 = vmatprep.mubr.bf16.mxu0 0
      %1722 = vmatmul.mubr.bf16.gmra.mrb[0].mxu0 %v1575
      %v1723 = vpop.f32.mrb[0].mxu0
      %v1724 = vadd.f32 0.0, %v1723
      %v1725 = vpop.f32.mrb[0].mxu0
      %v1726 = vpop.f32.mrb[0].mxu0
      %v1727 = vadd.f32 0.0, %v1726
      %v1728 = vpop.f32.mrb[0].mxu0
      %1729 = vmatprep.mubr.bf16.mxu0 0
      %1730 = vmatmul.mubr.bf16.gmra.mrb[0].mxu0 %v1578
      %v1731 = vpop.f32.mrb[0].mxu0
      %v1732 = vadd.f32 0.0, %v1731
      %v1733 = vpop.f32.mrb[0].mxu0
      %v1734 = vpop.f32.mrb[0].mxu0
      %v1735 = vadd.f32 0.0, %v1734
      %v1736 = vpop.f32.mrb[0].mxu0
      %1737 = vmatprep.mubr.bf16.mxu0 0
      %1738 = vmatmul.mubr.bf16.gmra.mrb[0].mxu0 %v1581
      %v1739 = vpop.f32.mrb[0].mxu0
      %v1740 = vadd.f32 0.0, %v1739
      %v1741 = vpop.f32.mrb[0].mxu0
      %v1742 = vpop.f32.mrb[0].mxu0
      %v1743 = vadd.f32 0.0, %v1742
      %v1744 = vpop.f32.mrb[0].mxu0
      %1745 = vmatprep.mubr.bf16.mxu0 0
      %1746 = vmatmul.mubr.bf16.gmra.mrb[0].mxu0 %v1584
      %v1747 = vpop.f32.mrb[0].mxu0
      %v1748 = vadd.f32 0.0, %v1747
      %v1749 = vpop.f32.mrb[0].mxu0
      %v1750 = vpop.f32.mrb[0].mxu0
      %v1751 = vadd.f32 0.0, %v1750
      %v1752 = vpop.f32.mrb[0].mxu0
      %1753 = vmatprep.mubr.bf16.mxu0 0
      %1754 = vmatmul.mubr.bf16.gmra.mrb[0].mxu0 %v1587
      %v1755 = vpop.f32.mrb[0].mxu0
      %v1756 = vadd.f32 0.0, %v1755
      %v1757 = vpop.f32.mrb[0].mxu0
      %v1758 = vpop.f32.mrb[0].mxu0
      %v1759 = vadd.f32 0.0, %v1758
      %v1760 = vpop.f32.mrb[0].mxu0
      %1761 = vmatprep.mubr.bf16.mxu0 0
      %1762 = vmatmul.mubr.bf16.gmra.mrb[0].mxu0 %v1590
      %v1763 = vpop.f32.mrb[0].mxu0
      %v1764 = vadd.f32 0.0, %v1763
      %v1765 = vpop.f32.mrb[0].mxu0
      %v1766 = vpop.f32.mrb[0].mxu0
      %v1767 = vadd.f32 0.0, %v1766
      %v1768 = vpop.f32.mrb[0].mxu0
      %1769 = vmatprep.mubr.bf16.mxu0 0
      %1770 = vmatmul.mubr.bf16.gmra.mrb[0].mxu0 %v1593
      %v1771 = vpop.f32.mrb[0].mxu0
      %v1772 = vadd.f32 0.0, %v1771
      %v1773 = vpop.f32.mrb[0].mxu0
      %v1774 = vpop.f32.mrb[0].mxu0
      %v1775 = vadd.f32 0.0, %v1774
      %v1776 = vpop.f32.mrb[0].mxu0
      %1777 = vmatprep.mubr.bf16.mxu0 0
      %1778 = vmatmul.mubr.bf16.gmra.mrb[0].mxu0 %v1596
      %v1779 = vpop.f32.mrb[0].mxu0
      %v1780 = vadd.f32 0.0, %v1779
      %v1781 = vpop.f32.mrb[0].mxu0
      %v1782 = vpop.f32.mrb[0].mxu0
      %v1783 = vadd.f32 0.0, %v1782
      %v1784 = vpop.f32.mrb[0].mxu0
      %1785 = vmatprep.mubr.bf16.mxu0 0
      %1786 = vmatmul.mubr.bf16.gmra.mrb[0].mxu0 %v1599
      %v1787 = vpop.f32.mrb[0].mxu0
      %v1788 = vadd.f32 0.0, %v1787
      %v1789 = vpop.f32.mrb[0].mxu0
      %v1790 = vpop.f32.mrb[0].mxu0
      %v1791 = vadd.f32 0.0, %v1790
      %v1792 = vpop.f32.mrb[0].mxu0
      %1793 = vmatprep.mubr.bf16.mxu0 0
      %1794 = vmatmul.mubr.bf16.gmra.mrb[0].mxu0 %v1602
      %v1795 = vpop.f32.mrb[0].mxu0
      %v1796 = vadd.f32 0.0, %v1795
      %v1797 = vpop.f32.mrb[0].mxu0
      %v1798 = vpop.f32.mrb[0].mxu0
      %v1799 = vadd.f32 0.0, %v1798
      %v1800 = vpop.f32.mrb[0].mxu0
      %1801 = vmatprep.mubr.bf16.mxu0 0
      %1802 = vmatmul.mubr.bf16.gmra.mrb[0].mxu0 %v1605
      %v1803 = vpop.f32.mrb[0].mxu0
      %v1804 = vadd.f32 0.0, %v1803
      %v1805 = vpop.f32.mrb[0].mxu0
      %v1806 = vpop.f32.mrb[0].mxu0
      %v1807 = vadd.f32 0.0, %v1806
      %v1808 = vpop.f32.mrb[0].mxu0
      %1809 = vmatprep.mubr.bf16.mxu0 0
      %1810 = vmatmul.mubr.bf16.gmra.mrb[0].mxu0 %v1608
      %v1811 = vpop.f32.mrb[0].mxu0
      %v1812 = vadd.f32 0.0, %v1811
      %v1813 = vpop.f32.mrb[0].mxu0
      %v1814 = vpop.f32.mrb[0].mxu0
      %v1815 = vadd.f32 0.0, %v1814
      %v1816 = vpop.f32.mrb[0].mxu0
      %1817 = vmatprep.mubr.bf16.mxu0 0
      %1818 = vmatmul.mubr.bf16.gmra.mrb[0].mxu0 %v1611
      %v1819 = vpop.f32.mrb[0].mxu0
      %v1820 = vadd.f32 0.0, %v1819
      %v1821 = vpop.f32.mrb[0].mxu0
      %v1822 = vpop.f32.mrb[0].mxu0
      %v1823 = vadd.f32 0.0, %v1822
      %v1824 = vpop.f32.mrb[0].mxu0
      %1825 = vmatprep.mubr.bf16.mxu0 0
      %1826 = vmatmul.mubr.bf16.gmra.mrb[0].mxu0 %v1614
      %v1827 = vpop.f32.mrb[0].mxu0
      %v1828 = vadd.f32 0.0, %v1827
      %v1829 = vpop.f32.mrb[0].mxu0
      %v1830 = vpop.f32.mrb[0].mxu0
      %v1831 = vadd.f32 0.0, %v1830
      %v1832 = vpop.f32.mrb[0].mxu0
      %1833 = vmatprep.mubr.bf16.mxu0 0
      %1834 = vmatmul.mubr.bf16.gmra.mrb[0].mxu0 %v1617
      %v1835 = vpop.f32.mrb[0].mxu0
      %v1836 = vadd.f32 0.0, %v1835
      %v1837 = vpop.f32.mrb[0].mxu0
      %v1838 = vpop.f32.mrb[0].mxu0
      %v1839 = vadd.f32 0.0, %v1838
      %v1840 = vpop.f32.mrb[0].mxu0
      %1841 = vmatprep.mubr.bf16.mxu0 0
      %1842 = vmatmul.mubr.bf16.gmra.mrb[0].mxu0 %v1620
      %v1843 = vpop.f32.mrb[0].mxu0
      %v1844 = vadd.f32 0.0, %v1843
      %v1845 = vpop.f32.mrb[0].mxu0
      %v1846 = vpop.f32.mrb[0].mxu0
      %v1847 = vadd.f32 0.0, %v1846
      %v1848 = vpop.f32.mrb[0].mxu0
      %1849 = vdwg.mxu0
      %v1850 = vadd.f32 %v1247, %v1660
      %v1851 = vadd.f32 %v1250, %v1663
      %v1852 = vadd.f32 %v1255, %v1668
      %v1853 = vadd.f32 %v1258, %v1671
      %v1854 = vadd.f32 %v1263, %v1676
      %v1855 = vadd.f32 %v1266, %v1679
      %v1856 = vadd.f32 %v1271, %v1684
      %v1857 = vadd.f32 %v1274, %v1687
      %v1858 = vadd.f32 %v1279, %v1692
      %v1859 = vadd.f32 %v1282, %v1695
      %v1860 = vadd.f32 %v1287, %v1700
      %v1861 = vadd.f32 %v1290, %v1703
      %v1862 = vadd.f32 %v1295, %v1708
      %v1863 = vadd.f32 %v1298, %v1711
      %v1864 = vadd.f32 %v1303, %v1716
      %v1865 = vadd.f32 %v1306, %v1719
      %v1866 = vadd.f32 %v1311, %v1724
      %v1867 = vadd.f32 %v1314, %v1727
      %v1868 = vadd.f32 %v1319, %v1732
      %v1869 = vadd.f32 %v1322, %v1735
      %v1870 = vadd.f32 %v1327, %v1740
      %v1871 = vadd.f32 %v1330, %v1743
      %v1872 = vadd.f32 %v1335, %v1748
      %v1873 = vadd.f32 %v1338, %v1751
      %v1874 = vadd.f32 %v1343, %v1756
      %v1875 = vadd.f32 %v1346, %v1759
      %v1876 = vadd.f32 %v1351, %v1764
      %v1877 = vadd.f32 %v1354, %v1767
      %v1878 = vadd.f32 %v1359, %v1772
      %v1879 = vadd.f32 %v1362, %v1775
      %v1880 = vadd.f32 %v1367, %v1780
      %v1881 = vadd.f32 %v1370, %v1783
      %v1882 = vadd.f32 %v1375, %v1788
      %v1883 = vadd.f32 %v1378, %v1791
      %v1884 = vadd.f32 %v1383, %v1796
      %v1885 = vadd.f32 %v1386, %v1799
      %v1886 = vadd.f32 %v1391, %v1804
      %v1887 = vadd.f32 %v1394, %v1807
      %v1888 = vadd.f32 %v1399, %v1812
      %v1889 = vadd.f32 %v1402, %v1815
      %v1890 = vadd.f32 %v1407, %v1820
      %v1891 = vadd.f32 %v1410, %v1823
      %v1892 = vadd.f32 %v1415, %v1828
      %v1893 = vadd.f32 %v1418, %v1831
      %v1894 = vadd.f32 %v1423, %v1836
      %v1895 = vadd.f32 %v1426, %v1839
      %v1896 = vadd.f32 %v1431, %v1844
      %v1897 = vadd.f32 %v1434, %v1847
      %v1898 = vld [vmem:[#allocation2 + $0x10] sm:$0x80]
      %v1899 = vld [vmem:[#allocation2 + $0x18] sm:$0xff]
      %v1900 = vld [vmem:[#allocation2 + $0x20] sm:$0xff]
      %v1901 = vld [vmem:[#allocation2 + $0x28] sm:$0xff]
      %v1902 = vld [vmem:[#allocation2 + $0x30] sm:$0xff]
      %v1903 = vld [vmem:[#allocation2 + $0x38] sm:$0xff]
      %v1904 = vld [vmem:[#allocation2 + $0x40] sm:$0xff]
      %v1905 = vld [vmem:[#allocation2 + $0x48] sm:$0xff]
      %v1906 = vld [vmem:[#allocation2 + $0x50] sm:$0xff]
      %v1907 = vld [vmem:[#allocation2 + $0x58] sm:$0xff]
      %v1908 = vld [vmem:[#allocation2 + $0x60] sm:$0xff]
      %v1909 = vld [vmem:[#allocation2 + $0x68] sm:$0xff]
      %v1910 = vld [vmem:[#allocation2 + $0x70] sm:$0xff]
      %v1911 = vld [vmem:[#allocation2 + $0x78] sm:$0xff]
      %v1912 = vld [vmem:[#allocation2 + $0x80] sm:$0xff]
      %v1913 = vld [vmem:[#allocation2 + $0x88] sm:$0xff]
      %v1914 = vld [vmem:[#allocation2 + $0x90] sm:$0xff]
      %v1915 = vld [vmem:[#allocation2 + $0x98] sm:$0xff]
      %v1916 = vld [vmem:[#allocation2 + $0xa0] sm:$0xff]
      %v1917 = vld [vmem:[#allocation2 + $0xa8] sm:$0xff]
      %v1918 = vld [vmem:[#allocation2 + $0xb0] sm:$0xff]
      %v1919 = vld [vmem:[#allocation2 + $0xb8] sm:$0xff]
      %v1920 = vld [vmem:[#allocation2 + $0xc0] sm:$0xff]
      %v1921 = vld [vmem:[#allocation2 + $0xc8] sm:$0xff]
      %v1922 = vld [vmem:[#allocation2 + $0xd0] sm:$0xff]
      %s1923 = scalar_lea.vmem %s1, 6
      %v1924 = vld [vmem:[%s1923] sm:$0x3]
      %vm1925 = vsmask.f32 256
      %v1927 = vshrl.u32 %v1898, 16
      %v1929 = vrot.slane %v1927, 7
      %v1931 = vshrl.u32 %v1899, 16
      %v1933 = vrot.slane %v1931, 7
      %v1934 = vshll.u32 %v1899, 16
      %v1936 = vor.u32 %v1933, %v1934
      %v1937 = vsel %vm1925, %v1929, %v1936
      %v1939 = vshrl.u32 %v1900, 16
      %v1941 = vrot.slane %v1939, 7
      %v1942 = vshll.u32 %v1900, 16
      %v1944 = vor.u32 %v1941, %v1942
      %v1945 = vsel %vm1925, %v1933, %v1944
      %v1947 = vshrl.u32 %v1901, 16
      %v1949 = vrot.slane %v1947, 7
      %v1950 = vshll.u32 %v1901, 16
      %v1952 = vor.u32 %v1949, %v1950
      %v1953 = vsel %vm1925, %v1941, %v1952
      %v1955 = vshrl.u32 %v1902, 16
      %v1957 = vrot.slane %v1955, 7
      %v1958 = vshll.u32 %v1902, 16
      %v1960 = vor.u32 %v1957, %v1958
      %v1961 = vsel %vm1925, %v1949, %v1960
      %v1963 = vshrl.u32 %v1903, 16
      %v1965 = vrot.slane %v1963, 7
      %v1966 = vshll.u32 %v1903, 16
      %v1968 = vor.u32 %v1965, %v1966
      %v1969 = vsel %vm1925, %v1957, %v1968
      %v1971 = vshrl.u32 %v1904, 16
      %v1973 = vrot.slane %v1971, 7
      %v1974 = vshll.u32 %v1904, 16
      %v1976 = vor.u32 %v1973, %v1974
      %v1977 = vsel %vm1925, %v1965, %v1976
      %v1979 = vshrl.u32 %v1905, 16
      %v1981 = vrot.slane %v1979, 7
      %v1982 = vshll.u32 %v1905, 16
      %v1984 = vor.u32 %v1981, %v1982
      %v1985 = vsel %vm1925, %v1973, %v1984
      %v1987 = vshrl.u32 %v1906, 16
      %v1989 = vrot.slane %v1987, 7
      %v1990 = vshll.u32 %v1906, 16
      %v1992 = vor.u32 %v1989, %v1990
      %v1993 = vsel %vm1925, %v1981, %v1992
      %v1995 = vshrl.u32 %v1907, 16
      %v1997 = vrot.slane %v1995, 7
      %v1998 = vshll.u32 %v1907, 16
      %v2000 = vor.u32 %v1997, %v1998
      %v2001 = vsel %vm1925, %v1989, %v2000
      %v2003 = vshrl.u32 %v1908, 16
      %v2005 = vrot.slane %v2003, 7
      %v2006 = vshll.u32 %v1908, 16
      %v2008 = vor.u32 %v2005, %v2006
      %v2009 = vsel %vm1925, %v1997, %v2008
      %v2011 = vshrl.u32 %v1909, 16
      %v2013 = vrot.slane %v2011, 7
      %v2014 = vshll.u32 %v1909, 16
      %v2016 = vor.u32 %v2013, %v2014
      %v2017 = vsel %vm1925, %v2005, %v2016
      %v2019 = vshrl.u32 %v1910, 16
      %v2021 = vrot.slane %v2019, 7
      %v2022 = vshll.u32 %v1910, 16
      %v2024 = vor.u32 %v2021, %v2022
      %v2025 = vsel %vm1925, %v2013, %v2024
      %v2027 = vshrl.u32 %v1911, 16
      %v2029 = vrot.slane %v2027, 7
      %v2030 = vshll.u32 %v1911, 16
      %v2032 = vor.u32 %v2029, %v2030
      %v2033 = vsel %vm1925, %v2021, %v2032
      %v2035 = vshrl.u32 %v1912, 16
      %v2037 = vrot.slane %v2035, 7
      %v2038 = vshll.u32 %v1912, 16
      %v2040 = vor.u32 %v2037, %v2038
      %v2041 = vsel %vm1925, %v2029, %v2040
      %v2043 = vshrl.u32 %v1913, 16
      %v2045 = vrot.slane %v2043, 7
      %v2046 = vshll.u32 %v1913, 16
      %v2048 = vor.u32 %v2045, %v2046
      %v2049 = vsel %vm1925, %v2037, %v2048
      %v2051 = vshrl.u32 %v1914, 16
      %v2053 = vrot.slane %v2051, 7
      %v2054 = vshll.u32 %v1914, 16
      %v2056 = vor.u32 %v2053, %v2054
      %v2057 = vsel %vm1925, %v2045, %v2056
      %v2059 = vshrl.u32 %v1915, 16
      %v2061 = vrot.slane %v2059, 7
      %v2062 = vshll.u32 %v1915, 16
      %v2064 = vor.u32 %v2061, %v2062
      %v2065 = vsel %vm1925, %v2053, %v2064
      %v2067 = vshrl.u32 %v1916, 16
      %v2069 = vrot.slane %v2067, 7
      %v2070 = vshll.u32 %v1916, 16
      %v2072 = vor.u32 %v2069, %v2070
      %v2073 = vsel %vm1925, %v2061, %v2072
      %v2075 = vshrl.u32 %v1917, 16
      %v2077 = vrot.slane %v2075, 7
      %v2078 = vshll.u32 %v1917, 16
      %v2080 = vor.u32 %v2077, %v2078
      %v2081 = vsel %vm1925, %v2069, %v2080
      %v2083 = vshrl.u32 %v1918, 16
      %v2085 = vrot.slane %v2083, 7
      %v2086 = vshll.u32 %v1918, 16
      %v2088 = vor.u32 %v2085, %v2086
      %v2089 = vsel %vm1925, %v2077, %v2088
      %v2091 = vshrl.u32 %v1919, 16
      %v2093 = vrot.slane %v2091, 7
      %v2094 = vshll.u32 %v1919, 16
      %v2096 = vor.u32 %v2093, %v2094
      %v2097 = vsel %vm1925, %v2085, %v2096
      %v2099 = vshrl.u32 %v1920, 16
      %v2101 = vrot.slane %v2099, 7
      %v2102 = vshll.u32 %v1920, 16
      %v2104 = vor.u32 %v2101, %v2102
      %v2105 = vsel %vm1925, %v2093, %v2104
      %v2107 = vshrl.u32 %v1921, 16
      %v2109 = vrot.slane %v2107, 7
      %v2110 = vshll.u32 %v1921, 16
      %v2112 = vor.u32 %v2109, %v2110
      %v2113 = vsel %vm1925, %v2101, %v2112
      %v2115 = vshrl.u32 %v1922, 16
      %v2117 = vrot.slane %v2115, 7
      %v2118 = vshll.u32 %v1922, 16
      %v2120 = vor.u32 %v2117, %v2118
      %v2121 = vsel %vm1925, %v2109, %v2120
      %v2123 = vsel %vm293, %v1937, 0
      %v2126 = vsel %vm293, %v1945, 0
      %v2129 = vsel %vm293, %v1953, 0
      %v2132 = vsel %vm293, %v1961, 0
      %v2135 = vsel %vm293, %v1969, 0
      %v2138 = vsel %vm293, %v1977, 0
      %v2141 = vsel %vm293, %v1985, 0
      %v2144 = vsel %vm293, %v1993, 0
      %v2147 = vsel %vm293, %v2001, 0
      %v2150 = vsel %vm293, %v2009, 0
      %v2153 = vsel %vm293, %v2017, 0
      %v2156 = vsel %vm293, %v2025, 0
      %v2159 = vsel %vm293, %v2033, 0
      %v2162 = vsel %vm293, %v2041, 0
      %v2165 = vsel %vm293, %v2049, 0
      %v2168 = vsel %vm293, %v2057, 0
      %v2171 = vsel %vm293, %v2065, 0
      %v2174 = vsel %vm293, %v2073, 0
      %v2177 = vsel %vm293, %v2081, 0
      %v2180 = vsel %vm293, %v2089, 0
      %v2183 = vsel %vm293, %v2097, 0
      %v2186 = vsel %vm293, %v2105, 0
      %v2189 = vsel %vm293, %v2113, 0
      %v2192 = vsel %vm293, %v2121, 0
      %v2195 = vsel %vm683, %v1924, 0
      %2197 = vmatprep.subr.bf16.mxu0 0
      %2198 = vmatpush1.bf16.msra.mxu0 %v2195
      %2199 = vmatprep.subr.bf16.mxu0 0
      %2200 = vmatpush1.bf16.msra.mxu0 0
      %2201 = vmatprep.subr.bf16.mxu0 0
      %2202 = vmatpush1.bf16.msra.mxu0 0
      %2203 = vmatprep.subr.bf16.mxu0 0
      %2204 = vmatpush1.bf16.msra.mxu0 0
      %2205 = vmatprep.subr.bf16.mxu0 0
      %2206 = vmatpush1.bf16.msra.mxu0 0
      %2207 = vmatprep.subr.bf16.mxu0 0
      %2208 = vmatpush1.bf16.msra.mxu0 0
      %2209 = vmatprep.subr.bf16.mxu0 0
      %2210 = vmatpush1.bf16.msra.mxu0 0
      %2211 = vmatprep.subr.bf16.mxu0 0
      %2212 = vmatpush1.bf16.msra.mxu0 0
      %2213 = vmatprep.subr.bf16.mxu0 0
      %2214 = vmatpush1.bf16.msra.mxu0 0
      %2215 = vmatprep.subr.bf16.mxu0 0
      %2216 = vmatpush1.bf16.msra.mxu0 0
      %2217 = vmatprep.subr.bf16.mxu0 0
      %2218 = vmatpush1.bf16.msra.mxu0 0
      %2219 = vmatprep.subr.bf16.mxu0 0
      %2220 = vmatpush1.bf16.msra.mxu0 0
      %2221 = vmatprep.subr.bf16.mxu0 0
      %2222 = vmatpush1.bf16.msra.mxu0 0
      %2223 = vmatprep.subr.bf16.mxu0 0
      %2224 = vmatpush1.bf16.msra.mxu0 0
      %2225 = vmatprep.subr.bf16.mxu0 0
      %2226 = vmatpush1.bf16.msra.mxu0 0
      %2227 = vmatprep.subr.bf16.mxu0 0
      %2228 = vmatpush1.bf16.msra.mxu0 0
      %2229 = vmatprep.mubr.bf16.mxu0 0
      %2230 = vmatmul.mubr.bf16.gmra.mrb[0].mxu0 %v2123
      %v2231 = vpop.f32.mrb[0].mxu0
      %v2232 = vadd.f32 0.0, %v2231
      %v2233 = vpop.f32.mrb[0].mxu0
      %v2234 = vpop.f32.mrb[0].mxu0
      %v2235 = vadd.f32 0.0, %v2234
      %v2236 = vpop.f32.mrb[0].mxu0
      %2237 = vmatprep.mubr.bf16.mxu0 0
      %2238 = vmatmul.mubr.bf16.gmra.mrb[0].mxu0 %v2126
      %v2239 = vpop.f32.mrb[0].mxu0
      %v2240 = vadd.f32 0.0, %v2239
      %v2241 = vpop.f32.mrb[0].mxu0
      %v2242 = vpop.f32.mrb[0].mxu0
      %v2243 = vadd.f32 0.0, %v2242
      %v2244 = vpop.f32.mrb[0].mxu0
      %2245 = vmatprep.mubr.bf16.mxu0 0
      %2246 = vmatmul.mubr.bf16.gmra.mrb[0].mxu0 %v2129
      %v2247 = vpop.f32.mrb[0].mxu0
      %v2248 = vadd.f32 0.0, %v2247
      %v2249 = vpop.f32.mrb[0].mxu0
      %v2250 = vpop.f32.mrb[0].mxu0
      %v2251 = vadd.f32 0.0, %v2250
      %v2252 = vpop.f32.mrb[0].mxu0
      %2253 = vmatprep.mubr.bf16.mxu0 0
      %2254 = vmatmul.mubr.bf16.gmra.mrb[0].mxu0 %v2132
      %v2255 = vpop.f32.mrb[0].mxu0
      %v2256 = vadd.f32 0.0, %v2255
      %v2257 = vpop.f32.mrb[0].mxu0
      %v2258 = vpop.f32.mrb[0].mxu0
      %v2259 = vadd.f32 0.0, %v2258
      %v2260 = vpop.f32.mrb[0].mxu0
      %2261 = vmatprep.mubr.bf16.mxu0 0
      %2262 = vmatmul.mubr.bf16.gmra.mrb[0].mxu0 %v2135
      %v2263 = vpop.f32.mrb[0].mxu0
      %v2264 = vadd.f32 0.0, %v2263
      %v2265 = vpop.f32.mrb[0].mxu0
      %v2266 = vpop.f32.mrb[0].mxu0
      %v2267 = vadd.f32 0.0, %v2266
      %v2268 = vpop.f32.mrb[0].mxu0
      %2269 = vmatprep.mubr.bf16.mxu0 0
      %2270 = vmatmul.mubr.bf16.gmra.mrb[0].mxu0 %v2138
      %v2271 = vpop.f32.mrb[0].mxu0
      %v2272 = vadd.f32 0.0, %v2271
      %v2273 = vpop.f32.mrb[0].mxu0
      %v2274 = vpop.f32.mrb[0].mxu0
      %v2275 = vadd.f32 0.0, %v2274
      %v2276 = vpop.f32.mrb[0].mxu0
      %2277 = vmatprep.mubr.bf16.mxu0 0
      %2278 = vmatmul.mubr.bf16.gmra.mrb[0].mxu0 %v2141
      %v2279 = vpop.f32.mrb[0].mxu0
      %v2280 = vadd.f32 0.0, %v2279
      %v2281 = vpop.f32.mrb[0].mxu0
      %v2282 = vpop.f32.mrb[0].mxu0
      %v2283 = vadd.f32 0.0, %v2282
      %v2284 = vpop.f32.mrb[0].mxu0
      %2285 = vmatprep.mubr.bf16.mxu0 0
      %2286 = vmatmul.mubr.bf16.gmra.mrb[0].mxu0 %v2144
      %v2287 = vpop.f32.mrb[0].mxu0
      %v2288 = vadd.f32 0.0, %v2287
      %v2289 = vpop.f32.mrb[0].mxu0
      %v2290 = vpop.f32.mrb[0].mxu0
      %v2291 = vadd.f32 0.0, %v2290
      %v2292 = vpop.f32.mrb[0].mxu0
      %2293 = vmatprep.mubr.bf16.mxu0 0
      %2294 = vmatmul.mubr.bf16.gmra.mrb[0].mxu0 %v2147
      %v2295 = vpop.f32.mrb[0].mxu0
      %v2296 = vadd.f32 0.0, %v2295
      %v2297 = vpop.f32.mrb[0].mxu0
      %v2298 = vpop.f32.mrb[0].mxu0
      %v2299 = vadd.f32 0.0, %v2298
      %v2300 = vpop.f32.mrb[0].mxu0
      %2301 = vmatprep.mubr.bf16.mxu0 0
      %2302 = vmatmul.mubr.bf16.gmra.mrb[0].mxu0 %v2150
      %v2303 = vpop.f32.mrb[0].mxu0
      %v2304 = vadd.f32 0.0, %v2303
      %v2305 = vpop.f32.mrb[0].mxu0
      %v2306 = vpop.f32.mrb[0].mxu0
      %v2307 = vadd.f32 0.0, %v2306
      %v2308 = vpop.f32.mrb[0].mxu0
      %2309 = vmatprep.mubr.bf16.mxu0 0
      %2310 = vmatmul.mubr.bf16.gmra.mrb[0].mxu0 %v2153
      %v2311 = vpop.f32.mrb[0].mxu0
      %v2312 = vadd.f32 0.0, %v2311
      %v2313 = vpop.f32.mrb[0].mxu0
      %v2314 = vpop.f32.mrb[0].mxu0
      %v2315 = vadd.f32 0.0, %v2314
      %v2316 = vpop.f32.mrb[0].mxu0
      %2317 = vmatprep.mubr.bf16.mxu0 0
      %2318 = vmatmul.mubr.bf16.gmra.mrb[0].mxu0 %v2156
      %v2319 = vpop.f32.mrb[0].mxu0
      %v2320 = vadd.f32 0.0, %v2319
      %v2321 = vpop.f32.mrb[0].mxu0
      %v2322 = vpop.f32.mrb[0].mxu0
      %v2323 = vadd.f32 0.0, %v2322
      %v2324 = vpop.f32.mrb[0].mxu0
      %2325 = vmatprep.mubr.bf16.mxu0 0
      %2326 = vmatmul.mubr.bf16.gmra.mrb[0].mxu0 %v2159
      %v2327 = vpop.f32.mrb[0].mxu0
      %v2328 = vadd.f32 0.0, %v2327
      %v2329 = vpop.f32.mrb[0].mxu0
      %v2330 = vpop.f32.mrb[0].mxu0
      %v2331 = vadd.f32 0.0, %v2330
      %v2332 = vpop.f32.mrb[0].mxu0
      %2333 = vmatprep.mubr.bf16.mxu0 0
      %2334 = vmatmul.mubr.bf16.gmra.mrb[0].mxu0 %v2162
      %v2335 = vpop.f32.mrb[0].mxu0
      %v2336 = vadd.f32 0.0, %v2335
      %v2337 = vpop.f32.mrb[0].mxu0
      %v2338 = vpop.f32.mrb[0].mxu0
      %v2339 = vadd.f32 0.0, %v2338
      %v2340 = vpop.f32.mrb[0].mxu0
      %2341 = vmatprep.mubr.bf16.mxu0 0
      %2342 = vmatmul.mubr.bf16.gmra.mrb[0].mxu0 %v2165
      %v2343 = vpop.f32.mrb[0].mxu0
      %v2344 = vadd.f32 0.0, %v2343
      %v2345 = vpop.f32.mrb[0].mxu0
      %v2346 = vpop.f32.mrb[0].mxu0
      %v2347 = vadd.f32 0.0, %v2346
      %v2348 = vpop.f32.mrb[0].mxu0
      %2349 = vmatprep.mubr.bf16.mxu0 0
      %2350 = vmatmul.mubr.bf16.gmra.mrb[0].mxu0 %v2168
      %v2351 = vpop.f32.mrb[0].mxu0
      %v2352 = vadd.f32 0.0, %v2351
      %v2353 = vpop.f32.mrb[0].mxu0
      %v2354 = vpop.f32.mrb[0].mxu0
      %v2355 = vadd.f32 0.0, %v2354
      %v2356 = vpop.f32.mrb[0].mxu0
      %2357 = vmatprep.mubr.bf16.mxu0 0
      %2358 = vmatmul.mubr.bf16.gmra.mrb[0].mxu0 %v2171
      %v2359 = vpop.f32.mrb[0].mxu0
      %v2360 = vadd.f32 0.0, %v2359
      %v2361 = vpop.f32.mrb[0].mxu0
      %v2362 = vpop.f32.mrb[0].mxu0
      %v2363 = vadd.f32 0.0, %v2362
      %v2364 = vpop.f32.mrb[0].mxu0
      %2365 = vmatprep.mubr.bf16.mxu0 0
      %2366 = vmatmul.mubr.bf16.gmra.mrb[0].mxu0 %v2174
      %v2367 = vpop.f32.mrb[0].mxu0
      %v2368 = vadd.f32 0.0, %v2367
      %v2369 = vpop.f32.mrb[0].mxu0
      %v2370 = vpop.f32.mrb[0].mxu0
      %v2371 = vadd.f32 0.0, %v2370
      %v2372 = vpop.f32.mrb[0].mxu0
      %2373 = vmatprep.mubr.bf16.mxu0 0
      %2374 = vmatmul.mubr.bf16.gmra.mrb[0].mxu0 %v2177
      %v2375 = vpop.f32.mrb[0].mxu0
      %v2376 = vadd.f32 0.0, %v2375
      %v2377 = vpop.f32.mrb[0].mxu0
      %v2378 = vpop.f32.mrb[0].mxu0
      %v2379 = vadd.f32 0.0, %v2378
      %v2380 = vpop.f32.mrb[0].mxu0
      %2381 = vmatprep.mubr.bf16.mxu0 0
      %2382 = vmatmul.mubr.bf16.gmra.mrb[0].mxu0 %v2180
      %v2383 = vpop.f32.mrb[0].mxu0
      %v2384 = vadd.f32 0.0, %v2383
      %v2385 = vpop.f32.mrb[0].mxu0
      %v2386 = vpop.f32.mrb[0].mxu0
      %v2387 = vadd.f32 0.0, %v2386
      %v2388 = vpop.f32.mrb[0].mxu0
      %2389 = vmatprep.mubr.bf16.mxu0 0
      %2390 = vmatmul.mubr.bf16.gmra.mrb[0].mxu0 %v2183
      %v2391 = vpop.f32.mrb[0].mxu0
      %v2392 = vadd.f32 0.0, %v2391
      %v2393 = vpop.f32.mrb[0].mxu0
      %v2394 = vpop.f32.mrb[0].mxu0
      %v2395 = vadd.f32 0.0, %v2394
      %v2396 = vpop.f32.mrb[0].mxu0
      %2397 = vmatprep.mubr.bf16.mxu0 0
      %2398 = vmatmul.mubr.bf16.gmra.mrb[0].mxu0 %v2186
      %v2399 = vpop.f32.mrb[0].mxu0
      %v2400 = vadd.f32 0.0, %v2399
      %v2401 = vpop.f32.mrb[0].mxu0
      %v2402 = vpop.f32.mrb[0].mxu0
      %v2403 = vadd.f32 0.0, %v2402
      %v2404 = vpop.f32.mrb[0].mxu0
      %2405 = vmatprep.mubr.bf16.mxu0 0
      %2406 = vmatmul.mubr.bf16.gmra.mrb[0].mxu0 %v2189
      %v2407 = vpop.f32.mrb[0].mxu0
      %v2408 = vadd.f32 0.0, %v2407
      %v2409 = vpop.f32.mrb[0].mxu0
      %v2410 = vpop.f32.mrb[0].mxu0
      %v2411 = vadd.f32 0.0, %v2410
      %v2412 = vpop.f32.mrb[0].mxu0
      %2413 = vmatprep.mubr.bf16.mxu0 0
      %2414 = vmatmul.mubr.bf16.gmra.mrb[0].mxu0 %v2192
      %v2415 = vpop.f32.mrb[0].mxu0
      %v2416 = vadd.f32 0.0, %v2415
      %v2417 = vpop.f32.mrb[0].mxu0
      %v2418 = vpop.f32.mrb[0].mxu0
      %v2419 = vadd.f32 0.0, %v2418
      %v2420 = vpop.f32.mrb[0].mxu0
      %2421 = vdwg.mxu0
      %v2422 = vadd.f32 %v1850, %v2232
      %v2423 = vadd.f32 %v1851, %v2235
      %v2424 = vadd.f32 %v1852, %v2240
      %v2425 = vadd.f32 %v1853, %v2243
      %v2426 = vadd.f32 %v1854, %v2248
      %v2427 = vadd.f32 %v1855, %v2251
      %v2428 = vadd.f32 %v1856, %v2256
      %v2429 = vadd.f32 %v1857, %v2259
      %v2430 = vadd.f32 %v1858, %v2264
      %v2431 = vadd.f32 %v1859, %v2267
      %v2432 = vadd.f32 %v1860, %v2272
      %v2433 = vadd.f32 %v1861, %v2275
      %v2434 = vadd.f32 %v1862, %v2280
      %v2435 = vadd.f32 %v1863, %v2283
      %v2436 = vadd.f32 %v1864, %v2288
      %v2437 = vadd.f32 %v1865, %v2291
      %v2438 = vadd.f32 %v1866, %v2296
      %v2439 = vadd.f32 %v1867, %v2299
      %v2440 = vadd.f32 %v1868, %v2304
      %v2441 = vadd.f32 %v1869, %v2307
      %v2442 = vadd.f32 %v1870, %v2312
      %v2443 = vadd.f32 %v1871, %v2315
      %v2444 = vadd.f32 %v1872, %v2320
      %v2445 = vadd.f32 %v1873, %v2323
      %v2446 = vadd.f32 %v1874, %v2328
      %v2447 = vadd.f32 %v1875, %v2331
      %v2448 = vadd.f32 %v1876, %v2336
      %v2449 = vadd.f32 %v1877, %v2339
      %v2450 = vadd.f32 %v1878, %v2344
      %v2451 = vadd.f32 %v1879, %v2347
      %v2452 = vadd.f32 %v1880, %v2352
      %v2453 = vadd.f32 %v1881, %v2355
      %v2454 = vadd.f32 %v1882, %v2360
      %v2455 = vadd.f32 %v1883, %v2363
      %v2456 = vadd.f32 %v1884, %v2368
      %v2457 = vadd.f32 %v1885, %v2371
      %v2458 = vadd.f32 %v1886, %v2376
      %v2459 = vadd.f32 %v1887, %v2379
      %v2460 = vadd.f32 %v1888, %v2384
      %v2461 = vadd.f32 %v1889, %v2387
      %v2462 = vadd.f32 %v1890, %v2392
      %v2463 = vadd.f32 %v1891, %v2395
      %v2464 = vadd.f32 %v1892, %v2400
      %v2465 = vadd.f32 %v1893, %v2403
      %v2466 = vadd.f32 %v1894, %v2408
      %v2467 = vadd.f32 %v1895, %v2411
      %v2468 = vadd.f32 %v1896, %v2416
      %v2469 = vadd.f32 %v1897, %v2419
      %s2470 = scalar_lea.vmem %s1, 8
      %v2471 = vld [vmem:[%s2470] sm:$0x3]
      %v2472 = vsel %vm293, %v1899, 0
      %v2474 = vsel %vm293, %v1900, 0
      %v2476 = vsel %vm293, %v1901, 0
      %v2478 = vsel %vm293, %v1902, 0
      %v2480 = vsel %vm293, %v1903, 0
      %v2482 = vsel %vm293, %v1904, 0
      %v2484 = vsel %vm293, %v1905, 0
      %v2486 = vsel %vm293, %v1906, 0
      %v2488 = vsel %vm293, %v1907, 0
      %v2490 = vsel %vm293, %v1908, 0
      %v2492 = vsel %vm293, %v1909, 0
      %v2494 = vsel %vm293, %v1910, 0
      %v2496 = vsel %vm293, %v1911, 0
      %v2498 = vsel %vm293, %v1912, 0
      %v2500 = vsel %vm293, %v1913, 0
      %v2502 = vsel %vm293, %v1914, 0
      %v2504 = vsel %vm293, %v1915, 0
      %v2506 = vsel %vm293, %v1916, 0
      %v2508 = vsel %vm293, %v1917, 0
      %v2510 = vsel %vm293, %v1918, 0
      %v2512 = vsel %vm293, %v1919, 0
      %v2514 = vsel %vm293, %v1920, 0
      %v2516 = vsel %vm293, %v1921, 0
      %v2518 = vsel %vm293, %v1922, 0
      %v2521 = vsel %vm683, %v2471, 0
      %2523 = vmatprep.subr.bf16.mxu0 0
      %2524 = vmatpush1.bf16.msra.mxu0 %v2521
      %2525 = vmatprep.subr.bf16.mxu0 0
      %2526 = vmatpush1.bf16.msra.mxu0 0
      %2527 = vmatprep.subr.bf16.mxu0 0
      %2528 = vmatpush1.bf16.msra.mxu0 0
      %2529 = vmatprep.subr.bf16.mxu0 0
      %2530 = vmatpush1.bf16.msra.mxu0 0
      %2531 = vmatprep.subr.bf16.mxu0 0
      %2532 = vmatpush1.bf16.msra.mxu0 0
      %2533 = vmatprep.subr.bf16.mxu0 0
      %2534 = vmatpush1.bf16.msra.mxu0 0
      %2535 = vmatprep.subr.bf16.mxu0 0
      %2536 = vmatpush1.bf16.msra.mxu0 0
      %2537 = vmatprep.subr.bf16.mxu0 0
      %2538 = vmatpush1.bf16.msra.mxu0 0
      %2539 = vmatprep.subr.bf16.mxu0 0
      %2540 = vmatpush1.bf16.msra.mxu0 0
      %2541 = vmatprep.subr.bf16.mxu0 0
      %2542 = vmatpush1.bf16.msra.mxu0 0
      %2543 = vmatprep.subr.bf16.mxu0 0
      %2544 = vmatpush1.bf16.msra.mxu0 0
      %2545 = vmatprep.subr.bf16.mxu0 0
      %2546 = vmatpush1.bf16.msra.mxu0 0
      %2547 = vmatprep.subr.bf16.mxu0 0
      %2548 = vmatpush1.bf16.msra.mxu0 0
      %2549 = vmatprep.subr.bf16.mxu0 0
      %2550 = vmatpush1.bf16.msra.mxu0 0
      %2551 = vmatprep.subr.bf16.mxu0 0
      %2552 = vmatpush1.bf16.msra.mxu0 0
      %2553 = vmatprep.subr.bf16.mxu0 0
      %2554 = vmatpush1.bf16.msra.mxu0 0
      %2555 = vmatprep.mubr.bf16.mxu0 0
      %2556 = vmatmul.mubr.bf16.gmra.mrb[0].mxu0 %v2472
      %v2557 = vpop.f32.mrb[0].mxu0
      %v2558 = vadd.f32 0.0, %v2557
      %v2559 = vpop.f32.mrb[0].mxu0
      %v2560 = vpop.f32.mrb[0].mxu0
      %v2561 = vadd.f32 0.0, %v2560
      %v2562 = vpop.f32.mrb[0].mxu0
      %2563 = vmatprep.mubr.bf16.mxu0 0
      %2564 = vmatmul.mubr.bf16.gmra.mrb[0].mxu0 %v2474
      %v2565 = vpop.f32.mrb[0].mxu0
      %v2566 = vadd.f32 0.0, %v2565
      %v2567 = vpop.f32.mrb[0].mxu0
      %v2568 = vpop.f32.mrb[0].mxu0
      %v2569 = vadd.f32 0.0, %v2568
      %v2570 = vpop.f32.mrb[0].mxu0
      %2571 = vmatprep.mubr.bf16.mxu0 0
      %2572 = vmatmul.mubr.bf16.gmra.mrb[0].mxu0 %v2476
      %v2573 = vpop.f32.mrb[0].mxu0
      %v2574 = vadd.f32 0.0, %v2573
      %v2575 = vpop.f32.mrb[0].mxu0
      %v2576 = vpop.f32.mrb[0].mxu0
      %v2577 = vadd.f32 0.0, %v2576
      %v2578 = vpop.f32.mrb[0].mxu0
      %2579 = vmatprep.mubr.bf16.mxu0 0
      %2580 = vmatmul.mubr.bf16.gmra.mrb[0].mxu0 %v2478
      %v2581 = vpop.f32.mrb[0].mxu0
      %v2582 = vadd.f32 0.0, %v2581
      %v2583 = vpop.f32.mrb[0].mxu0
      %v2584 = vpop.f32.mrb[0].mxu0
      %v2585 = vadd.f32 0.0, %v2584
      %v2586 = vpop.f32.mrb[0].mxu0
      %2587 = vmatprep.mubr.bf16.mxu0 0
      %2588 = vmatmul.mubr.bf16.gmra.mrb[0].mxu0 %v2480
      %v2589 = vpop.f32.mrb[0].mxu0
      %v2590 = vadd.f32 0.0, %v2589
      %v2591 = vpop.f32.mrb[0].mxu0
      %v2592 = vpop.f32.mrb[0].mxu0
      %v2593 = vadd.f32 0.0, %v2592
      %v2594 = vpop.f32.mrb[0].mxu0
      %2595 = vmatprep.mubr.bf16.mxu0 0
      %2596 = vmatmul.mubr.bf16.gmra.mrb[0].mxu0 %v2482
      %v2597 = vpop.f32.mrb[0].mxu0
      %v2598 = vadd.f32 0.0, %v2597
      %v2599 = vpop.f32.mrb[0].mxu0
      %v2600 = vpop.f32.mrb[0].mxu0
      %v2601 = vadd.f32 0.0, %v2600
      %v2602 = vpop.f32.mrb[0].mxu0
      %2603 = vmatprep.mubr.bf16.mxu0 0
      %2604 = vmatmul.mubr.bf16.gmra.mrb[0].mxu0 %v2484
      %v2605 = vpop.f32.mrb[0].mxu0
      %v2606 = vadd.f32 0.0, %v2605
      %v2607 = vpop.f32.mrb[0].mxu0
      %v2608 = vpop.f32.mrb[0].mxu0
      %v2609 = vadd.f32 0.0, %v2608
      %v2610 = vpop.f32.mrb[0].mxu0
      %2611 = vmatprep.mubr.bf16.mxu0 0
      %2612 = vmatmul.mubr.bf16.gmra.mrb[0].mxu0 %v2486
      %v2613 = vpop.f32.mrb[0].mxu0
      %v2614 = vadd.f32 0.0, %v2613
      %v2615 = vpop.f32.mrb[0].mxu0
      %v2616 = vpop.f32.mrb[0].mxu0
      %v2617 = vadd.f32 0.0, %v2616
      %v2618 = vpop.f32.mrb[0].mxu0
      %2619 = vmatprep.mubr.bf16.mxu0 0
      %2620 = vmatmul.mubr.bf16.gmra.mrb[0].mxu0 %v2488
      %v2621 = vpop.f32.mrb[0].mxu0
      %v2622 = vadd.f32 0.0, %v2621
      %v2623 = vpop.f32.mrb[0].mxu0
      %v2624 = vpop.f32.mrb[0].mxu0
      %v2625 = vadd.f32 0.0, %v2624
      %v2626 = vpop.f32.mrb[0].mxu0
      %2627 = vmatprep.mubr.bf16.mxu0 0
      %2628 = vmatmul.mubr.bf16.gmra.mrb[0].mxu0 %v2490
      %v2629 = vpop.f32.mrb[0].mxu0
      %v2630 = vadd.f32 0.0, %v2629
      %v2631 = vpop.f32.mrb[0].mxu0
      %v2632 = vpop.f32.mrb[0].mxu0
      %v2633 = vadd.f32 0.0, %v2632
      %v2634 = vpop.f32.mrb[0].mxu0
      %2635 = vmatprep.mubr.bf16.mxu0 0
      %2636 = vmatmul.mubr.bf16.gmra.mrb[0].mxu0 %v2492
      %v2637 = vpop.f32.mrb[0].mxu0
      %v2638 = vadd.f32 0.0, %v2637
      %v2639 = vpop.f32.mrb[0].mxu0
      %v2640 = vpop.f32.mrb[0].mxu0
      %v2641 = vadd.f32 0.0, %v2640
      %v2642 = vpop.f32.mrb[0].mxu0
      %2643 = vmatprep.mubr.bf16.mxu0 0
      %2644 = vmatmul.mubr.bf16.gmra.mrb[0].mxu0 %v2494
      %v2645 = vpop.f32.mrb[0].mxu0
      %v2646 = vadd.f32 0.0, %v2645
      %v2647 = vpop.f32.mrb[0].mxu0
      %v2648 = vpop.f32.mrb[0].mxu0
      %v2649 = vadd.f32 0.0, %v2648
      %v2650 = vpop.f32.mrb[0].mxu0
      %2651 = vmatprep.mubr.bf16.mxu0 0
      %2652 = vmatmul.mubr.bf16.gmra.mrb[0].mxu0 %v2496
      %v2653 = vpop.f32.mrb[0].mxu0
      %v2654 = vadd.f32 0.0, %v2653
      %v2655 = vpop.f32.mrb[0].mxu0
      %v2656 = vpop.f32.mrb[0].mxu0
      %v2657 = vadd.f32 0.0, %v2656
      %v2658 = vpop.f32.mrb[0].mxu0
      %2659 = vmatprep.mubr.bf16.mxu0 0
      %2660 = vmatmul.mubr.bf16.gmra.mrb[0].mxu0 %v2498
      %v2661 = vpop.f32.mrb[0].mxu0
      %v2662 = vadd.f32 0.0, %v2661
      %v2663 = vpop.f32.mrb[0].mxu0
      %v2664 = vpop.f32.mrb[0].mxu0
      %v2665 = vadd.f32 0.0, %v2664
      %v2666 = vpop.f32.mrb[0].mxu0
      %2667 = vmatprep.mubr.bf16.mxu0 0
      %2668 = vmatmul.mubr.bf16.gmra.mrb[0].mxu0 %v2500
      %v2669 = vpop.f32.mrb[0].mxu0
      %v2670 = vadd.f32 0.0, %v2669
      %v2671 = vpop.f32.mrb[0].mxu0
      %v2672 = vpop.f32.mrb[0].mxu0
      %v2673 = vadd.f32 0.0, %v2672
      %v2674 = vpop.f32.mrb[0].mxu0
      %2675 = vmatprep.mubr.bf16.mxu0 0
      %2676 = vmatmul.mubr.bf16.gmra.mrb[0].mxu0 %v2502
      %v2677 = vpop.f32.mrb[0].mxu0
      %v2678 = vadd.f32 0.0, %v2677
      %v2679 = vpop.f32.mrb[0].mxu0
      %v2680 = vpop.f32.mrb[0].mxu0
      %v2681 = vadd.f32 0.0, %v2680
      %v2682 = vpop.f32.mrb[0].mxu0
      %2683 = vmatprep.mubr.bf16.mxu0 0
      %2684 = vmatmul.mubr.bf16.gmra.mrb[0].mxu0 %v2504
      %v2685 = vpop.f32.mrb[0].mxu0
      %v2686 = vadd.f32 0.0, %v2685
      %v2687 = vpop.f32.mrb[0].mxu0
      %v2688 = vpop.f32.mrb[0].mxu0
      %v2689 = vadd.f32 0.0, %v2688
      %v2690 = vpop.f32.mrb[0].mxu0
      %2691 = vmatprep.mubr.bf16.mxu0 0
      %2692 = vmatmul.mubr.bf16.gmra.mrb[0].mxu0 %v2506
      %v2693 = vpop.f32.mrb[0].mxu0
      %v2694 = vadd.f32 0.0, %v2693
      %v2695 = vpop.f32.mrb[0].mxu0
      %v2696 = vpop.f32.mrb[0].mxu0
      %v2697 = vadd.f32 0.0, %v2696
      %v2698 = vpop.f32.mrb[0].mxu0
      %2699 = vmatprep.mubr.bf16.mxu0 0
      %2700 = vmatmul.mubr.bf16.gmra.mrb[0].mxu0 %v2508
      %v2701 = vpop.f32.mrb[0].mxu0
      %v2702 = vadd.f32 0.0, %v2701
      %v2703 = vpop.f32.mrb[0].mxu0
      %v2704 = vpop.f32.mrb[0].mxu0
      %v2705 = vadd.f32 0.0, %v2704
      %v2706 = vpop.f32.mrb[0].mxu0
      %2707 = vmatprep.mubr.bf16.mxu0 0
      %2708 = vmatmul.mubr.bf16.gmra.mrb[0].mxu0 %v2510
      %v2709 = vpop.f32.mrb[0].mxu0
      %v2710 = vadd.f32 0.0, %v2709
      %v2711 = vpop.f32.mrb[0].mxu0
      %v2712 = vpop.f32.mrb[0].mxu0
      %v2713 = vadd.f32 0.0, %v2712
      %v2714 = vpop.f32.mrb[0].mxu0
      %2715 = vmatprep.mubr.bf16.mxu0 0
      %2716 = vmatmul.mubr.bf16.gmra.mrb[0].mxu0 %v2512
      %v2717 = vpop.f32.mrb[0].mxu0
      %v2718 = vadd.f32 0.0, %v2717
      %v2719 = vpop.f32.mrb[0].mxu0
      %v2720 = vpop.f32.mrb[0].mxu0
      %v2721 = vadd.f32 0.0, %v2720
      %v2722 = vpop.f32.mrb[0].mxu0
      %2723 = vmatprep.mubr.bf16.mxu0 0
      %2724 = vmatmul.mubr.bf16.gmra.mrb[0].mxu0 %v2514
      %v2725 = vpop.f32.mrb[0].mxu0
      %v2726 = vadd.f32 0.0, %v2725
      %v2727 = vpop.f32.mrb[0].mxu0
      %v2728 = vpop.f32.mrb[0].mxu0
      %v2729 = vadd.f32 0.0, %v2728
      %v2730 = vpop.f32.mrb[0].mxu0
      %2731 = vmatprep.mubr.bf16.mxu0 0
      %2732 = vmatmul.mubr.bf16.gmra.mrb[0].mxu0 %v2516
      %v2733 = vpop.f32.mrb[0].mxu0
      %v2734 = vadd.f32 0.0, %v2733
      %v2735 = vpop.f32.mrb[0].mxu0
      %v2736 = vpop.f32.mrb[0].mxu0
      %v2737 = vadd.f32 0.0, %v2736
      %v2738 = vpop.f32.mrb[0].mxu0
      %2739 = vmatprep.mubr.bf16.mxu0 0
      %2740 = vmatmul.mubr.bf16.gmra.mrb[0].mxu0 %v2518
      %v2741 = vpop.f32.mrb[0].mxu0
      %v2742 = vadd.f32 0.0, %v2741
      %v2743 = vpop.f32.mrb[0].mxu0
      %v2744 = vpop.f32.mrb[0].mxu0
      %v2745 = vadd.f32 0.0, %v2744
      %v2746 = vpop.f32.mrb[0].mxu0
      %2747 = vdwg.mxu0
      %v2748 = vadd.f32 %v2422, %v2558
      %v2749 = vadd.f32 %v2423, %v2561
      %v2750 = vadd.f32 %v2424, %v2566
      %v2751 = vadd.f32 %v2425, %v2569
      %v2752 = vadd.f32 %v2426, %v2574
      %v2753 = vadd.f32 %v2427, %v2577
      %v2754 = vadd.f32 %v2428, %v2582
      %v2755 = vadd.f32 %v2429, %v2585
      %v2756 = vadd.f32 %v2430, %v2590
      %v2757 = vadd.f32 %v2431, %v2593
      %v2758 = vadd.f32 %v2432, %v2598
      %v2759 = vadd.f32 %v2433, %v2601
      %v2760 = vadd.f32 %v2434, %v2606
      %v2761 = vadd.f32 %v2435, %v2609
      %v2762 = vadd.f32 %v2436, %v2614
      %v2763 = vadd.f32 %v2437, %v2617
      %v2764 = vadd.f32 %v2438, %v2622
      %v2765 = vadd.f32 %v2439, %v2625
      %v2766 = vadd.f32 %v2440, %v2630
      %v2767 = vadd.f32 %v2441, %v2633
      %v2768 = vadd.f32 %v2442, %v2638
      %v2769 = vadd.f32 %v2443, %v2641
      %v2770 = vadd.f32 %v2444, %v2646
      %v2771 = vadd.f32 %v2445, %v2649
      %v2772 = vadd.f32 %v2446, %v2654
      %v2773 = vadd.f32 %v2447, %v2657
      %v2774 = vadd.f32 %v2448, %v2662
      %v2775 = vadd.f32 %v2449, %v2665
      %v2776 = vadd.f32 %v2450, %v2670
      %v2777 = vadd.f32 %v2451, %v2673
      %v2778 = vadd.f32 %v2452, %v2678
      %v2779 = vadd.f32 %v2453, %v2681
      %v2780 = vadd.f32 %v2454, %v2686
      %v2781 = vadd.f32 %v2455, %v2689
      %v2782 = vadd.f32 %v2456, %v2694
      %v2783 = vadd.f32 %v2457, %v2697
      %v2784 = vadd.f32 %v2458, %v2702
      %v2785 = vadd.f32 %v2459, %v2705
      %v2786 = vadd.f32 %v2460, %v2710
      %v2787 = vadd.f32 %v2461, %v2713
      %v2788 = vadd.f32 %v2462, %v2718
      %v2789 = vadd.f32 %v2463, %v2721
      %v2790 = vadd.f32 %v2464, %v2726
      %v2791 = vadd.f32 %v2465, %v2729
      %v2792 = vadd.f32 %v2466, %v2734
      %v2793 = vadd.f32 %v2467, %v2737
      %v2794 = vadd.f32 %v2468, %v2742
      %v2795 = vadd.f32 %v2469, %v2745
      %v2796 = vld [vmem:[#allocation2 + $0x18] sm:$0xff]
      %v2797 = vld [vmem:[#allocation2 + $0x20] sm:$0xff]
      %v2798 = vld [vmem:[#allocation2 + $0x28] sm:$0xff]
      %v2799 = vld [vmem:[#allocation2 + $0x30] sm:$0xff]
      %v2800 = vld [vmem:[#allocation2 + $0x38] sm:$0xff]
      %v2801 = vld [vmem:[#allocation2 + $0x40] sm:$0xff]
      %v2802 = vld [vmem:[#allocation2 + $0x48] sm:$0xff]
      %v2803 = vld [vmem:[#allocation2 + $0x50] sm:$0xff]
      %v2804 = vld [vmem:[#allocation2 + $0x58] sm:$0xff]
      %v2805 = vld [vmem:[#allocation2 + $0x60] sm:$0xff]
      %v2806 = vld [vmem:[#allocation2 + $0x68] sm:$0xff]
      %v2807 = vld [vmem:[#allocation2 + $0x70] sm:$0xff]
      %v2808 = vld [vmem:[#allocation2 + $0x78] sm:$0xff]
      %v2809 = vld [vmem:[#allocation2 + $0x80] sm:$0xff]
      %v2810 = vld [vmem:[#allocation2 + $0x88] sm:$0xff]
      %v2811 = vld [vmem:[#allocation2 + $0x90] sm:$0xff]
      %v2812 = vld [vmem:[#allocation2 + $0x98] sm:$0xff]
      %v2813 = vld [vmem:[#allocation2 + $0xa0] sm:$0xff]
      %v2814 = vld [vmem:[#allocation2 + $0xa8] sm:$0xff]
      %v2815 = vld [vmem:[#allocation2 + $0xb0] sm:$0xff]
      %v2816 = vld [vmem:[#allocation2 + $0xb8] sm:$0xff]
      %v2817 = vld [vmem:[#allocation2 + $0xc0] sm:$0xff]
      %v2818 = vld [vmem:[#allocation2 + $0xc8] sm:$0xff]
      %v2819 = vld [vmem:[#allocation2 + $0xd0] sm:$0xff]
      %v2820 = vld [vmem:[#allocation2 + $0xd8] sm:$0x1]
      %s2821 = scalar_lea.vmem %s1, 10
      %v2822 = vld [vmem:[%s2821] sm:$0x3]
      %vm2823 = vsmask.f32 7424
      %v2825 = vshrl.u32 %v2796, 16
      %v2827 = vshll.u32 %v2796, 16
      %v2829 = vrot.slane %v2827, 1
      %v2830 = vor.u32 %v2825, %v2829
      %v2832 = vshll.u32 %v2797, 16
      %v2834 = vrot.slane %v2832, 1
      %v2835 = vsel %vm2823, %v2830, %v2834
      %v2836 = vshrl.u32 %v2797, 16
      %v2838 = vor.u32 %v2836, %v2834
      %v2840 = vshll.u32 %v2798, 16
      %v2842 = vrot.slane %v2840, 1
      %v2843 = vsel %vm2823, %v2838, %v2842
      %v2844 = vshrl.u32 %v2798, 16
      %v2846 = vor.u32 %v2844, %v2842
      %v2848 = vshll.u32 %v2799, 16
      %v2850 = vrot.slane %v2848, 1
      %v2851 = vsel %vm2823, %v2846, %v2850
      %v2852 = vshrl.u32 %v2799, 16
      %v2854 = vor.u32 %v2852, %v2850
      %v2856 = vshll.u32 %v2800, 16
      %v2858 = vrot.slane %v2856, 1
      %v2859 = vsel %vm2823, %v2854, %v2858
      %v2860 = vshrl.u32 %v2800, 16
      %v2862 = vor.u32 %v2860, %v2858
      %v2864 = vshll.u32 %v2801, 16
      %v2866 = vrot.slane %v2864, 1
      %v2867 = vsel %vm2823, %v2862, %v2866
      %v2868 = vshrl.u32 %v2801, 16
      %v2870 = vor.u32 %v2868, %v2866
      %v2872 = vshll.u32 %v2802, 16
      %v2874 = vrot.slane %v2872, 1
      %v2875 = vsel %vm2823, %v2870, %v2874
      %v2876 = vshrl.u32 %v2802, 16
      %v2878 = vor.u32 %v2876, %v2874
      %v2880 = vshll.u32 %v2803, 16
      %v2882 = vrot.slane %v2880, 1
      %v2883 = vsel %vm2823, %v2878, %v2882
      %v2884 = vshrl.u32 %v2803, 16
      %v2886 = vor.u32 %v2884, %v2882
      %v2888 = vshll.u32 %v2804, 16
      %v2890 = vrot.slane %v2888, 1
      %v2891 = vsel %vm2823, %v2886, %v2890
      %v2892 = vshrl.u32 %v2804, 16
      %v2894 = vor.u32 %v2892, %v2890
      %v2896 = vshll.u32 %v2805, 16
      %v2898 = vrot.slane %v2896, 1
      %v2899 = vsel %vm2823, %v2894, %v2898
      %v2900 = vshrl.u32 %v2805, 16
      %v2902 = vor.u32 %v2900, %v2898
      %v2904 = vshll.u32 %v2806, 16
      %v2906 = vrot.slane %v2904, 1
      %v2907 = vsel %vm2823, %v2902, %v2906
      %v2908 = vshrl.u32 %v2806, 16
      %v2910 = vor.u32 %v2908, %v2906
      %v2912 = vshll.u32 %v2807, 16
      %v2914 = vrot.slane %v2912, 1
      %v2915 = vsel %vm2823, %v2910, %v2914
      %v2916 = vshrl.u32 %v2807, 16
      %v2918 = vor.u32 %v2916, %v2914
      %v2920 = vshll.u32 %v2808, 16
      %v2922 = vrot.slane %v2920, 1
      %v2923 = vsel %vm2823, %v2918, %v2922
      %v2924 = vshrl.u32 %v2808, 16
      %v2926 = vor.u32 %v2924, %v2922
      %v2928 = vshll.u32 %v2809, 16
      %v2930 = vrot.slane %v2928, 1
      %v2931 = vsel %vm2823, %v2926, %v2930
      %v2932 = vshrl.u32 %v2809, 16
      %v2934 = vor.u32 %v2932, %v2930
      %v2936 = vshll.u32 %v2810, 16
      %v2938 = vrot.slane %v2936, 1
      %v2939 = vsel %vm2823, %v2934, %v2938
      %v2940 = vshrl.u32 %v2810, 16
      %v2942 = vor.u32 %v2940, %v2938
      %v2944 = vshll.u32 %v2811, 16
      %v2946 = vrot.slane %v2944, 1
      %v2947 = vsel %vm2823, %v2942, %v2946
      %v2948 = vshrl.u32 %v2811, 16
      %v2950 = vor.u32 %v2948, %v2946
      %v2952 = vshll.u32 %v2812, 16
      %v2954 = vrot.slane %v2952, 1
      %v2955 = vsel %vm2823, %v2950, %v2954
      %v2956 = vshrl.u32 %v2812, 16
      %v2958 = vor.u32 %v2956, %v2954
      %v2960 = vshll.u32 %v2813, 16
      %v2962 = vrot.slane %v2960, 1
      %v2963 = vsel %vm2823, %v2958, %v2962
      %v2964 = vshrl.u32 %v2813, 16
      %v2966 = vor.u32 %v2964, %v2962
      %v2968 = vshll.u32 %v2814, 16
      %v2970 = vrot.slane %v2968, 1
      %v2971 = vsel %vm2823, %v2966, %v2970
      %v2972 = vshrl.u32 %v2814, 16
      %v2974 = vor.u32 %v2972, %v2970
      %v2976 = vshll.u32 %v2815, 16
      %v2978 = vrot.slane %v2976, 1
      %v2979 = vsel %vm2823, %v2974, %v2978
      %v2980 = vshrl.u32 %v2815, 16
      %v2982 = vor.u32 %v2980, %v2978
      %v2984 = vshll.u32 %v2816, 16
      %v2986 = vrot.slane %v2984, 1
      %v2987 = vsel %vm2823, %v2982, %v2986
      %v2988 = vshrl.u32 %v2816, 16
      %v2990 = vor.u32 %v2988, %v2986
      %v2992 = vshll.u32 %v2817, 16
      %v2994 = vrot.slane %v2992, 1
      %v2995 = vsel %vm2823, %v2990, %v2994
      %v2996 = vshrl.u32 %v2817, 16
      %v2998 = vor.u32 %v2996, %v2994
      %v3000 = vshll.u32 %v2818, 16
      %v3002 = vrot.slane %v3000, 1
      %v3003 = vsel %vm2823, %v2998, %v3002
      %v3004 = vshrl.u32 %v2818, 16
      %v3006 = vor.u32 %v3004, %v3002
      %v3008 = vshll.u32 %v2819, 16
      %v3010 = vrot.slane %v3008, 1
      %v3011 = vsel %vm2823, %v3006, %v3010
      %v3012 = vshrl.u32 %v2819, 16
      %v3014 = vor.u32 %v3012, %v3010
      %v3016 = vshll.u32 %v2820, 16
      %v3018 = vrot.slane %v3016, 1
      %v3019 = vsel %vm2823, %v3014, %v3018
      %v3021 = vsel %vm293, %v2835, 0
      %v3024 = vsel %vm293, %v2843, 0
      %v3027 = vsel %vm293, %v2851, 0
      %v3030 = vsel %vm293, %v2859, 0
      %v3033 = vsel %vm293, %v2867, 0
      %v3036 = vsel %vm293, %v2875, 0
      %v3039 = vsel %vm293, %v2883, 0
      %v3042 = vsel %vm293, %v2891, 0
      %v3045 = vsel %vm293, %v2899, 0
      %v3048 = vsel %vm293, %v2907, 0
      %v3051 = vsel %vm293, %v2915, 0
      %v3054 = vsel %vm293, %v2923, 0
      %v3057 = vsel %vm293, %v2931, 0
      %v3060 = vsel %vm293, %v2939, 0
      %v3063 = vsel %vm293, %v2947, 0
      %v3066 = vsel %vm293, %v2955, 0
      %v3069 = vsel %vm293, %v2963, 0
      %v3072 = vsel %vm293, %v2971, 0
      %v3075 = vsel %vm293, %v2979, 0
      %v3078 = vsel %vm293, %v2987, 0
      %v3081 = vsel %vm293, %v2995, 0
      %v3084 = vsel %vm293, %v3003, 0
      %v3087 = vsel %vm293, %v3011, 0
      %v3090 = vsel %vm293, %v3019, 0
      %v3093 = vsel %vm683, %v2822, 0
      %3095 = vmatprep.subr.bf16.mxu0 0
      %3096 = vmatpush1.bf16.msra.mxu0 %v3093
      %3097 = vmatprep.subr.bf16.mxu0 0
      %3098 = vmatpush1.bf16.msra.mxu0 0
      %3099 = vmatprep.subr.bf16.mxu0 0
      %3100 = vmatpush1.bf16.msra.mxu0 0
      %3101 = vmatprep.subr.bf16.mxu0 0
      %3102 = vmatpush1.bf16.msra.mxu0 0
      %3103 = vmatprep.subr.bf16.mxu0 0
      %3104 = vmatpush1.bf16.msra.mxu0 0
      %3105 = vmatprep.subr.bf16.mxu0 0
      %3106 = vmatpush1.bf16.msra.mxu0 0
      %3107 = vmatprep.subr.bf16.mxu0 0
      %3108 = vmatpush1.bf16.msra.mxu0 0
      %3109 = vmatprep.subr.bf16.mxu0 0
      %3110 = vmatpush1.bf16.msra.mxu0 0
      %3111 = vmatprep.subr.bf16.mxu0 0
      %3112 = vmatpush1.bf16.msra.mxu0 0
      %3113 = vmatprep.subr.bf16.mxu0 0
      %3114 = vmatpush1.bf16.msra.mxu0 0
      %3115 = vmatprep.subr.bf16.mxu0 0
      %3116 = vmatpush1.bf16.msra.mxu0 0
      %3117 = vmatprep.subr.bf16.mxu0 0
      %3118 = vmatpush1.bf16.msra.mxu0 0
      %3119 = vmatprep.subr.bf16.mxu0 0
      %3120 = vmatpush1.bf16.msra.mxu0 0
      %3121 = vmatprep.subr.bf16.mxu0 0
      %3122 = vmatpush1.bf16.msra.mxu0 0
      %3123 = vmatprep.subr.bf16.mxu0 0
      %3124 = vmatpush1.bf16.msra.mxu0 0
      %3125 = vmatprep.subr.bf16.mxu0 0
      %3126 = vmatpush1.bf16.msra.mxu0 0
      %3127 = vmatprep.mubr.bf16.mxu0 0
      %3128 = vmatmul.mubr.bf16.gmra.mrb[0].mxu0 %v3021
      %v3129 = vpop.f32.mrb[0].mxu0
      %v3130 = vadd.f32 0.0, %v3129
      %v3131 = vpop.f32.mrb[0].mxu0
      %v3132 = vpop.f32.mrb[0].mxu0
      %v3133 = vadd.f32 0.0, %v3132
      %v3134 = vpop.f32.mrb[0].mxu0
      %3135 = vmatprep.mubr.bf16.mxu0 0
      %3136 = vmatmul.mubr.bf16.gmra.mrb[0].mxu0 %v3024
      %v3137 = vpop.f32.mrb[0].mxu0
      %v3138 = vadd.f32 0.0, %v3137
      %v3139 = vpop.f32.mrb[0].mxu0
      %v3140 = vpop.f32.mrb[0].mxu0
      %v3141 = vadd.f32 0.0, %v3140
      %v3142 = vpop.f32.mrb[0].mxu0
      %3143 = vmatprep.mubr.bf16.mxu0 0
      %3144 = vmatmul.mubr.bf16.gmra.mrb[0].mxu0 %v3027
      %v3145 = vpop.f32.mrb[0].mxu0
      %v3146 = vadd.f32 0.0, %v3145
      %v3147 = vpop.f32.mrb[0].mxu0
      %v3148 = vpop.f32.mrb[0].mxu0
      %v3149 = vadd.f32 0.0, %v3148
      %v3150 = vpop.f32.mrb[0].mxu0
      %3151 = vmatprep.mubr.bf16.mxu0 0
      %3152 = vmatmul.mubr.bf16.gmra.mrb[0].mxu0 %v3030
      %v3153 = vpop.f32.mrb[0].mxu0
      %v3154 = vadd.f32 0.0, %v3153
      %v3155 = vpop.f32.mrb[0].mxu0
      %v3156 = vpop.f32.mrb[0].mxu0
      %v3157 = vadd.f32 0.0, %v3156
      %v3158 = vpop.f32.mrb[0].mxu0
      %3159 = vmatprep.mubr.bf16.mxu0 0
      %3160 = vmatmul.mubr.bf16.gmra.mrb[0].mxu0 %v3033
      %v3161 = vpop.f32.mrb[0].mxu0
      %v3162 = vadd.f32 0.0, %v3161
      %v3163 = vpop.f32.mrb[0].mxu0
      %v3164 = vpop.f32.mrb[0].mxu0
      %v3165 = vadd.f32 0.0, %v3164
      %v3166 = vpop.f32.mrb[0].mxu0
      %3167 = vmatprep.mubr.bf16.mxu0 0
      %3168 = vmatmul.mubr.bf16.gmra.mrb[0].mxu0 %v3036
      %v3169 = vpop.f32.mrb[0].mxu0
      %v3170 = vadd.f32 0.0, %v3169
      %v3171 = vpop.f32.mrb[0].mxu0
      %v3172 = vpop.f32.mrb[0].mxu0
      %v3173 = vadd.f32 0.0, %v3172
      %v3174 = vpop.f32.mrb[0].mxu0
      %3175 = vmatprep.mubr.bf16.mxu0 0
      %3176 = vmatmul.mubr.bf16.gmra.mrb[0].mxu0 %v3039
      %v3177 = vpop.f32.mrb[0].mxu0
      %v3178 = vadd.f32 0.0, %v3177
      %v3179 = vpop.f32.mrb[0].mxu0
      %v3180 = vpop.f32.mrb[0].mxu0
      %v3181 = vadd.f32 0.0, %v3180
      %v3182 = vpop.f32.mrb[0].mxu0
      %3183 = vmatprep.mubr.bf16.mxu0 0
      %3184 = vmatmul.mubr.bf16.gmra.mrb[0].mxu0 %v3042
      %v3185 = vpop.f32.mrb[0].mxu0
      %v3186 = vadd.f32 0.0, %v3185
      %v3187 = vpop.f32.mrb[0].mxu0
      %v3188 = vpop.f32.mrb[0].mxu0
      %v3189 = vadd.f32 0.0, %v3188
      %v3190 = vpop.f32.mrb[0].mxu0
      %3191 = vmatprep.mubr.bf16.mxu0 0
      %3192 = vmatmul.mubr.bf16.gmra.mrb[0].mxu0 %v3045
      %v3193 = vpop.f32.mrb[0].mxu0
      %v3194 = vadd.f32 0.0, %v3193
      %v3195 = vpop.f32.mrb[0].mxu0
      %v3196 = vpop.f32.mrb[0].mxu0
      %v3197 = vadd.f32 0.0, %v3196
      %v3198 = vpop.f32.mrb[0].mxu0
      %3199 = vmatprep.mubr.bf16.mxu0 0
      %3200 = vmatmul.mubr.bf16.gmra.mrb[0].mxu0 %v3048
      %v3201 = vpop.f32.mrb[0].mxu0
      %v3202 = vadd.f32 0.0, %v3201
      %v3203 = vpop.f32.mrb[0].mxu0
      %v3204 = vpop.f32.mrb[0].mxu0
      %v3205 = vadd.f32 0.0, %v3204
      %v3206 = vpop.f32.mrb[0].mxu0
      %3207 = vmatprep.mubr.bf16.mxu0 0
      %3208 = vmatmul.mubr.bf16.gmra.mrb[0].mxu0 %v3051
      %v3209 = vpop.f32.mrb[0].mxu0
      %v3210 = vadd.f32 0.0, %v3209
      %v3211 = vpop.f32.mrb[0].mxu0
      %v3212 = vpop.f32.mrb[0].mxu0
      %v3213 = vadd.f32 0.0, %v3212
      %v3214 = vpop.f32.mrb[0].mxu0
      %3215 = vmatprep.mubr.bf16.mxu0 0
      %3216 = vmatmul.mubr.bf16.gmra.mrb[0].mxu0 %v3054
      %v3217 = vpop.f32.mrb[0].mxu0
      %v3218 = vadd.f32 0.0, %v3217
      %v3219 = vpop.f32.mrb[0].mxu0
      %v3220 = vpop.f32.mrb[0].mxu0
      %v3221 = vadd.f32 0.0, %v3220
      %v3222 = vpop.f32.mrb[0].mxu0
      %3223 = vmatprep.mubr.bf16.mxu0 0
      %3224 = vmatmul.mubr.bf16.gmra.mrb[0].mxu0 %v3057
      %v3225 = vpop.f32.mrb[0].mxu0
      %v3226 = vadd.f32 0.0, %v3225
      %v3227 = vpop.f32.mrb[0].mxu0
      %v3228 = vpop.f32.mrb[0].mxu0
      %v3229 = vadd.f32 0.0, %v3228
      %v3230 = vpop.f32.mrb[0].mxu0
      %3231 = vmatprep.mubr.bf16.mxu0 0
      %3232 = vmatmul.mubr.bf16.gmra.mrb[0].mxu0 %v3060
      %v3233 = vpop.f32.mrb[0].mxu0
      %v3234 = vadd.f32 0.0, %v3233
      %v3235 = vpop.f32.mrb[0].mxu0
      %v3236 = vpop.f32.mrb[0].mxu0
      %v3237 = vadd.f32 0.0, %v3236
      %v3238 = vpop.f32.mrb[0].mxu0
      %3239 = vmatprep.mubr.bf16.mxu0 0
      %3240 = vmatmul.mubr.bf16.gmra.mrb[0].mxu0 %v3063
      %v3241 = vpop.f32.mrb[0].mxu0
      %v3242 = vadd.f32 0.0, %v3241
      %v3243 = vpop.f32.mrb[0].mxu0
      %v3244 = vpop.f32.mrb[0].mxu0
      %v3245 = vadd.f32 0.0, %v3244
      %v3246 = vpop.f32.mrb[0].mxu0
      %3247 = vmatprep.mubr.bf16.mxu0 0
      %3248 = vmatmul.mubr.bf16.gmra.mrb[0].mxu0 %v3066
      %v3249 = vpop.f32.mrb[0].mxu0
      %v3250 = vadd.f32 0.0, %v3249
      %v3251 = vpop.f32.mrb[0].mxu0
      %v3252 = vpop.f32.mrb[0].mxu0
      %v3253 = vadd.f32 0.0, %v3252
      %v3254 = vpop.f32.mrb[0].mxu0
      %3255 = vmatprep.mubr.bf16.mxu0 0
      %3256 = vmatmul.mubr.bf16.gmra.mrb[0].mxu0 %v3069
      %v3257 = vpop.f32.mrb[0].mxu0
      %v3258 = vadd.f32 0.0, %v3257
      %v3259 = vpop.f32.mrb[0].mxu0
      %v3260 = vpop.f32.mrb[0].mxu0
      %v3261 = vadd.f32 0.0, %v3260
      %v3262 = vpop.f32.mrb[0].mxu0
      %3263 = vmatprep.mubr.bf16.mxu0 0
      %3264 = vmatmul.mubr.bf16.gmra.mrb[0].mxu0 %v3072
      %v3265 = vpop.f32.mrb[0].mxu0
      %v3266 = vadd.f32 0.0, %v3265
      %v3267 = vpop.f32.mrb[0].mxu0
      %v3268 = vpop.f32.mrb[0].mxu0
      %v3269 = vadd.f32 0.0, %v3268
      %v3270 = vpop.f32.mrb[0].mxu0
      %3271 = vmatprep.mubr.bf16.mxu0 0
      %3272 = vmatmul.mubr.bf16.gmra.mrb[0].mxu0 %v3075
      %v3273 = vpop.f32.mrb[0].mxu0
      %v3274 = vadd.f32 0.0, %v3273
      %v3275 = vpop.f32.mrb[0].mxu0
      %v3276 = vpop.f32.mrb[0].mxu0
      %v3277 = vadd.f32 0.0, %v3276
      %v3278 = vpop.f32.mrb[0].mxu0
      %3279 = vmatprep.mubr.bf16.mxu0 0
      %3280 = vmatmul.mubr.bf16.gmra.mrb[0].mxu0 %v3078
      %v3281 = vpop.f32.mrb[0].mxu0
      %v3282 = vadd.f32 0.0, %v3281
      %v3283 = vpop.f32.mrb[0].mxu0
      %v3284 = vpop.f32.mrb[0].mxu0
      %v3285 = vadd.f32 0.0, %v3284
      %v3286 = vpop.f32.mrb[0].mxu0
      %3287 = vmatprep.mubr.bf16.mxu0 0
      %3288 = vmatmul.mubr.bf16.gmra.mrb[0].mxu0 %v3081
      %v3289 = vpop.f32.mrb[0].mxu0
      %v3290 = vadd.f32 0.0, %v3289
      %v3291 = vpop.f32.mrb[0].mxu0
      %v3292 = vpop.f32.mrb[0].mxu0
      %v3293 = vadd.f32 0.0, %v3292
      %v3294 = vpop.f32.mrb[0].mxu0
      %3295 = vmatprep.mubr.bf16.mxu0 0
      %3296 = vmatmul.mubr.bf16.gmra.mrb[0].mxu0 %v3084
      %v3297 = vpop.f32.mrb[0].mxu0
      %v3298 = vadd.f32 0.0, %v3297
      %v3299 = vpop.f32.mrb[0].mxu0
      %v3300 = vpop.f32.mrb[0].mxu0
      %v3301 = vadd.f32 0.0, %v3300
      %v3302 = vpop.f32.mrb[0].mxu0
      %3303 = vmatprep.mubr.bf16.mxu0 0
      %3304 = vmatmul.mubr.bf16.gmra.mrb[0].mxu0 %v3087
      %v3305 = vpop.f32.mrb[0].mxu0
      %v3306 = vadd.f32 0.0, %v3305
      %v3307 = vpop.f32.mrb[0].mxu0
      %v3308 = vpop.f32.mrb[0].mxu0
      %v3309 = vadd.f32 0.0, %v3308
      %v3310 = vpop.f32.mrb[0].mxu0
      %3311 = vmatprep.mubr.bf16.mxu0 0
      %3312 = vmatmul.mubr.bf16.gmra.mrb[0].mxu0 %v3090
      %v3313 = vpop.f32.mrb[0].mxu0
      %v3314 = vadd.f32 0.0, %v3313
      %v3315 = vpop.f32.mrb[0].mxu0
      %v3316 = vpop.f32.mrb[0].mxu0
      %v3317 = vadd.f32 0.0, %v3316
      %v3318 = vpop.f32.mrb[0].mxu0
      %3319 = vdwg.mxu0
      %v3320 = vadd.f32 %v2748, %v3130
      %v3321 = vadd.f32 %v2749, %v3133
      %v3322 = vadd.f32 %v2750, %v3138
      %v3323 = vadd.f32 %v2751, %v3141
      %v3324 = vadd.f32 %v2752, %v3146
      %v3325 = vadd.f32 %v2753, %v3149
      %v3326 = vadd.f32 %v2754, %v3154
      %v3327 = vadd.f32 %v2755, %v3157
      %v3328 = vadd.f32 %v2756, %v3162
      %v3329 = vadd.f32 %v2757, %v3165
      %v3330 = vadd.f32 %v2758, %v3170
      %v3331 = vadd.f32 %v2759, %v3173
      %v3332 = vadd.f32 %v2760, %v3178
      %v3333 = vadd.f32 %v2761, %v3181
      %v3334 = vadd.f32 %v2762, %v3186
      %v3335 = vadd.f32 %v2763, %v3189
      %v3336 = vadd.f32 %v2764, %v3194
      %v3337 = vadd.f32 %v2765, %v3197
      %v3338 = vadd.f32 %v2766, %v3202
      %v3339 = vadd.f32 %v2767, %v3205
      %v3340 = vadd.f32 %v2768, %v3210
      %v3341 = vadd.f32 %v2769, %v3213
      %v3342 = vadd.f32 %v2770, %v3218
      %v3343 = vadd.f32 %v2771, %v3221
      %v3344 = vadd.f32 %v2772, %v3226
      %v3345 = vadd.f32 %v2773, %v3229
      %v3346 = vadd.f32 %v2774, %v3234
      %v3347 = vadd.f32 %v2775, %v3237
      %v3348 = vadd.f32 %v2776, %v3242
      %v3349 = vadd.f32 %v2777, %v3245
      %v3350 = vadd.f32 %v2778, %v3250
      %v3351 = vadd.f32 %v2779, %v3253
      %v3352 = vadd.f32 %v2780, %v3258
      %v3353 = vadd.f32 %v2781, %v3261
      %v3354 = vadd.f32 %v2782, %v3266
      %v3355 = vadd.f32 %v2783, %v3269
      %v3356 = vadd.f32 %v2784, %v3274
      %v3357 = vadd.f32 %v2785, %v3277
      %v3358 = vadd.f32 %v2786, %v3282
      %v3359 = vadd.f32 %v2787, %v3285
      %v3360 = vadd.f32 %v2788, %v3290
      %v3361 = vadd.f32 %v2789, %v3293
      %v3362 = vadd.f32 %v2790, %v3298
      %v3363 = vadd.f32 %v2791, %v3301
      %v3364 = vadd.f32 %v2792, %v3306
      %v3365 = vadd.f32 %v2793, %v3309
      %v3366 = vadd.f32 %v2794, %v3314
      %v3367 = vadd.f32 %v2795, %v3317
      %v3368 = vld [vmem:[#allocation2 + $0x20] sm:$0xf8]
      %v3369 = vld [vmem:[#allocation2 + $0x28] sm:$0xff]
      %v3370 = vld [vmem:[#allocation2 + $0x30] sm:$0xff]
      %v3371 = vld [vmem:[#allocation2 + $0x38] sm:$0xff]
      %v3372 = vld [vmem:[#allocation2 + $0x40] sm:$0xff]
      %v3373 = vld [vmem:[#allocation2 + $0x48] sm:$0xff]
      %v3374 = vld [vmem:[#allocation2 + $0x50] sm:$0xff]
      %v3375 = vld [vmem:[#allocation2 + $0x58] sm:$0xff]
      %v3376 = vld [vmem:[#allocation2 + $0x60] sm:$0xff]
      %v3377 = vld [vmem:[#allocation2 + $0x68] sm:$0xff]
      %v3378 = vld [vmem:[#allocation2 + $0x70] sm:$0xff]
      %v3379 = vld [vmem:[#allocation2 + $0x78] sm:$0xff]
      %v3380 = vld [vmem:[#allocation2 + $0x80] sm:$0xff]
      %v3381 = vld [vmem:[#allocation2 + $0x88] sm:$0xff]
      %v3382 = vld [vmem:[#allocation2 + $0x90] sm:$0xff]
      %v3383 = vld [vmem:[#allocation2 + $0x98] sm:$0xff]
      %v3384 = vld [vmem:[#allocation2 + $0xa0] sm:$0xff]
      %v3385 = vld [vmem:[#allocation2 + $0xa8] sm:$0xff]
      %v3386 = vld [vmem:[#allocation2 + $0xb0] sm:$0xff]
      %v3387 = vld [vmem:[#allocation2 + $0xb8] sm:$0xff]
      %v3388 = vld [vmem:[#allocation2 + $0xc0] sm:$0xff]
      %v3389 = vld [vmem:[#allocation2 + $0xc8] sm:$0xff]
      %v3390 = vld [vmem:[#allocation2 + $0xd0] sm:$0xff]
      %v3391 = vld [vmem:[#allocation2 + $0xd8] sm:$0xff]
      %v3392 = vld [vmem:[#allocation2 + $0xe0] sm:$0xf]
      %s3393 = scalar_lea.vmem %s1, 12
      %v3394 = vld [vmem:[%s3393] sm:$0x3]
      %v3396 = vshrl.u32 %v3368, 16
      %v3398 = vrot.slane %v3396, 3
      %v3399 = vshll.u32 %v3368, 16
      %v3401 = vrot.slane %v3399, 4
      %v3402 = vor.u32 %v3398, %v3401
      %v3404 = vshrl.u32 %v3369, 16
      %v3406 = vrot.slane %v3404, 3
      %v3407 = vshll.u32 %v3369, 16
      %v3409 = vrot.slane %v3407, 4
      %v3410 = vor.u32 %v3406, %v3409
      %v3411 = vsel %vm912, %v3402, %v3410
      %v3413 = vshrl.u32 %v3370, 16
      %v3415 = vrot.slane %v3413, 3
      %v3416 = vshll.u32 %v3370, 16
      %v3418 = vrot.slane %v3416, 4
      %v3419 = vor.u32 %v3415, %v3418
      %v3420 = vsel %vm912, %v3410, %v3419
      %v3422 = vshrl.u32 %v3371, 16
      %v3424 = vrot.slane %v3422, 3
      %v3425 = vshll.u32 %v3371, 16
      %v3427 = vrot.slane %v3425, 4
      %v3428 = vor.u32 %v3424, %v3427
      %v3429 = vsel %vm912, %v3419, %v3428
      %v3431 = vshrl.u32 %v3372, 16
      %v3433 = vrot.slane %v3431, 3
      %v3434 = vshll.u32 %v3372, 16
      %v3436 = vrot.slane %v3434, 4
      %v3437 = vor.u32 %v3433, %v3436
      %v3438 = vsel %vm912, %v3428, %v3437
      %v3440 = vshrl.u32 %v3373, 16
      %v3442 = vrot.slane %v3440, 3
      %v3443 = vshll.u32 %v3373, 16
      %v3445 = vrot.slane %v3443, 4
      %v3446 = vor.u32 %v3442, %v3445
      %v3447 = vsel %vm912, %v3437, %v3446
      %v3449 = vshrl.u32 %v3374, 16
      %v3451 = vrot.slane %v3449, 3
      %v3452 = vshll.u32 %v3374, 16
      %v3454 = vrot.slane %v3452, 4
      %v3455 = vor.u32 %v3451, %v3454
      %v3456 = vsel %vm912, %v3446, %v3455
      %v3458 = vshrl.u32 %v3375, 16
      %v3460 = vrot.slane %v3458, 3
      %v3461 = vshll.u32 %v3375, 16
      %v3463 = vrot.slane %v3461, 4
      %v3464 = vor.u32 %v3460, %v3463
      %v3465 = vsel %vm912, %v3455, %v3464
      %v3467 = vshrl.u32 %v3376, 16
      %v3469 = vrot.slane %v3467, 3
      %v3470 = vshll.u32 %v3376, 16
      %v3472 = vrot.slane %v3470, 4
      %v3473 = vor.u32 %v3469, %v3472
      %v3474 = vsel %vm912, %v3464, %v3473
      %v3476 = vshrl.u32 %v3377, 16
      %v3478 = vrot.slane %v3476, 3
      %v3479 = vshll.u32 %v3377, 16
      %v3481 = vrot.slane %v3479, 4
      %v3482 = vor.u32 %v3478, %v3481
      %v3483 = vsel %vm912, %v3473, %v3482
      %v3485 = vshrl.u32 %v3378, 16
      %v3487 = vrot.slane %v3485, 3
      %v3488 = vshll.u32 %v3378, 16
      %v3490 = vrot.slane %v3488, 4
      %v3491 = vor.u32 %v3487, %v3490
      %v3492 = vsel %vm912, %v3482, %v3491
      %v3494 = vshrl.u32 %v3379, 16
      %v3496 = vrot.slane %v3494, 3
      %v3497 = vshll.u32 %v3379, 16
      %v3499 = vrot.slane %v3497, 4
      %v3500 = vor.u32 %v3496, %v3499
      %v3501 = vsel %vm912, %v3491, %v3500
      %v3503 = vshrl.u32 %v3380, 16
      %v3505 = vrot.slane %v3503, 3
      %v3506 = vshll.u32 %v3380, 16
      %v3508 = vrot.slane %v3506, 4
      %v3509 = vor.u32 %v3505, %v3508
      %v3510 = vsel %vm912, %v3500, %v3509
      %v3512 = vshrl.u32 %v3381, 16
      %v3514 = vrot.slane %v3512, 3
      %v3515 = vshll.u32 %v3381, 16
      %v3517 = vrot.slane %v3515, 4
      %v3518 = vor.u32 %v3514, %v3517
      %v3519 = vsel %vm912, %v3509, %v3518
      %v3521 = vshrl.u32 %v3382, 16
      %v3523 = vrot.slane %v3521, 3
      %v3524 = vshll.u32 %v3382, 16
      %v3526 = vrot.slane %v3524, 4
      %v3527 = vor.u32 %v3523, %v3526
      %v3528 = vsel %vm912, %v3518, %v3527
      %v3530 = vshrl.u32 %v3383, 16
      %v3532 = vrot.slane %v3530, 3
      %v3533 = vshll.u32 %v3383, 16
      %v3535 = vrot.slane %v3533, 4
      %v3536 = vor.u32 %v3532, %v3535
      %v3537 = vsel %vm912, %v3527, %v3536
      %v3539 = vshrl.u32 %v3384, 16
      %v3541 = vrot.slane %v3539, 3
      %v3542 = vshll.u32 %v3384, 16
      %v3544 = vrot.slane %v3542, 4
      %v3545 = vor.u32 %v3541, %v3544
      %v3546 = vsel %vm912, %v3536, %v3545
      %v3548 = vshrl.u32 %v3385, 16
      %v3550 = vrot.slane %v3548, 3
      %v3551 = vshll.u32 %v3385, 16
      %v3553 = vrot.slane %v3551, 4
      %v3554 = vor.u32 %v3550, %v3553
      %v3555 = vsel %vm912, %v3545, %v3554
      %v3557 = vshrl.u32 %v3386, 16
      %v3559 = vrot.slane %v3557, 3
      %v3560 = vshll.u32 %v3386, 16
      %v3562 = vrot.slane %v3560, 4
      %v3563 = vor.u32 %v3559, %v3562
      %v3564 = vsel %vm912, %v3554, %v3563
      %v3566 = vshrl.u32 %v3387, 16
      %v3568 = vrot.slane %v3566, 3
      %v3569 = vshll.u32 %v3387, 16
      %v3571 = vrot.slane %v3569, 4
      %v3572 = vor.u32 %v3568, %v3571
      %v3573 = vsel %vm912, %v3563, %v3572
      %v3575 = vshrl.u32 %v3388, 16
      %v3577 = vrot.slane %v3575, 3
      %v3578 = vshll.u32 %v3388, 16
      %v3580 = vrot.slane %v3578, 4
      %v3581 = vor.u32 %v3577, %v3580
      %v3582 = vsel %vm912, %v3572, %v3581
      %v3584 = vshrl.u32 %v3389, 16
      %v3586 = vrot.slane %v3584, 3
      %v3587 = vshll.u32 %v3389, 16
      %v3589 = vrot.slane %v3587, 4
      %v3590 = vor.u32 %v3586, %v3589
      %v3591 = vsel %vm912, %v3581, %v3590
      %v3593 = vshrl.u32 %v3390, 16
      %v3595 = vrot.slane %v3593, 3
      %v3596 = vshll.u32 %v3390, 16
      %v3598 = vrot.slane %v3596, 4
      %v3599 = vor.u32 %v3595, %v3598
      %v3600 = vsel %vm912, %v3590, %v3599
      %v3602 = vshrl.u32 %v3391, 16
      %v3604 = vrot.slane %v3602, 3
      %v3605 = vshll.u32 %v3391, 16
      %v3607 = vrot.slane %v3605, 4
      %v3608 = vor.u32 %v3604, %v3607
      %v3609 = vsel %vm912, %v3599, %v3608
      %v3611 = vshrl.u32 %v3392, 16
      %v3613 = vrot.slane %v3611, 3
      %v3614 = vshll.u32 %v3392, 16
      %v3616 = vrot.slane %v3614, 4
      %v3617 = vor.u32 %v3613, %v3616
      %v3618 = vsel %vm912, %v3608, %v3617
      %v3620 = vsel %vm293, %v3411, 0
      %v3623 = vsel %vm293, %v3420, 0
      %v3626 = vsel %vm293, %v3429, 0
      %v3629 = vsel %vm293, %v3438, 0
      %v3632 = vsel %vm293, %v3447, 0
      %v3635 = vsel %vm293, %v3456, 0
      %v3638 = vsel %vm293, %v3465, 0
      %v3641 = vsel %vm293, %v3474, 0
      %v3644 = vsel %vm293, %v3483, 0
      %v3647 = vsel %vm293, %v3492, 0
      %v3650 = vsel %vm293, %v3501, 0
      %v3653 = vsel %vm293, %v3510, 0
      %v3656 = vsel %vm293, %v3519, 0
      %v3659 = vsel %vm293, %v3528, 0
      %v3662 = vsel %vm293, %v3537, 0
      %v3665 = vsel %vm293, %v3546, 0
      %v3668 = vsel %vm293, %v3555, 0
      %v3671 = vsel %vm293, %v3564, 0
      %v3674 = vsel %vm293, %v3573, 0
      %v3677 = vsel %vm293, %v3582, 0
      %v3680 = vsel %vm293, %v3591, 0
      %v3683 = vsel %vm293, %v3600, 0
      %v3686 = vsel %vm293, %v3609, 0
      %v3689 = vsel %vm293, %v3618, 0
      %v3692 = vsel %vm683, %v3394, 0
      %3694 = vmatprep.subr.bf16.mxu0 0
      %3695 = vmatpush1.bf16.msra.mxu0 %v3692
      %3696 = vmatprep.subr.bf16.mxu0 0
      %3697 = vmatpush1.bf16.msra.mxu0 0
      %3698 = vmatprep.subr.bf16.mxu0 0
      %3699 = vmatpush1.bf16.msra.mxu0 0
      %3700 = vmatprep.subr.bf16.mxu0 0
      %3701 = vmatpush1.bf16.msra.mxu0 0
      %3702 = vmatprep.subr.bf16.mxu0 0
      %3703 = vmatpush1.bf16.msra.mxu0 0
      %3704 = vmatprep.subr.bf16.mxu0 0
      %3705 = vmatpush1.bf16.msra.mxu0 0
      %3706 = vmatprep.subr.bf16.mxu0 0
      %3707 = vmatpush1.bf16.msra.mxu0 0
      %3708 = vmatprep.subr.bf16.mxu0 0
      %3709 = vmatpush1.bf16.msra.mxu0 0
      %3710 = vmatprep.subr.bf16.mxu0 0
      %3711 = vmatpush1.bf16.msra.mxu0 0
      %3712 = vmatprep.subr.bf16.mxu0 0
      %3713 = vmatpush1.bf16.msra.mxu0 0
      %3714 = vmatprep.subr.bf16.mxu0 0
      %3715 = vmatpush1.bf16.msra.mxu0 0
      %3716 = vmatprep.subr.bf16.mxu0 0
      %3717 = vmatpush1.bf16.msra.mxu0 0
      %3718 = vmatprep.subr.bf16.mxu0 0
      %3719 = vmatpush1.bf16.msra.mxu0 0
      %3720 = vmatprep.subr.bf16.mxu0 0
      %3721 = vmatpush1.bf16.msra.mxu0 0
      %3722 = vmatprep.subr.bf16.mxu0 0
      %3723 = vmatpush1.bf16.msra.mxu0 0
      %3724 = vmatprep.subr.bf16.mxu0 0
      %3725 = vmatpush1.bf16.msra.mxu0 0
      %3726 = vmatprep.mubr.bf16.mxu0 0
      %3727 = vmatmul.mubr.bf16.gmra.mrb[0].mxu0 %v3620
      %v3728 = vpop.f32.mrb[0].mxu0
      %v3729 = vadd.f32 0.0, %v3728
      %v3730 = vpop.f32.mrb[0].mxu0
      %v3731 = vpop.f32.mrb[0].mxu0
      %v3732 = vadd.f32 0.0, %v3731
      %v3733 = vpop.f32.mrb[0].mxu0
      %3734 = vmatprep.mubr.bf16.mxu0 0
      %3735 = vmatmul.mubr.bf16.gmra.mrb[0].mxu0 %v3623
      %v3736 = vpop.f32.mrb[0].mxu0
      %v3737 = vadd.f32 0.0, %v3736
      %v3738 = vpop.f32.mrb[0].mxu0
      %v3739 = vpop.f32.mrb[0].mxu0
      %v3740 = vadd.f32 0.0, %v3739
      %v3741 = vpop.f32.mrb[0].mxu0
      %3742 = vmatprep.mubr.bf16.mxu0 0
      %3743 = vmatmul.mubr.bf16.gmra.mrb[0].mxu0 %v3626
      %v3744 = vpop.f32.mrb[0].mxu0
      %v3745 = vadd.f32 0.0, %v3744
      %v3746 = vpop.f32.mrb[0].mxu0
      %v3747 = vpop.f32.mrb[0].mxu0
      %v3748 = vadd.f32 0.0, %v3747
      %v3749 = vpop.f32.mrb[0].mxu0
      %3750 = vmatprep.mubr.bf16.mxu0 0
      %3751 = vmatmul.mubr.bf16.gmra.mrb[0].mxu0 %v3629
      %v3752 = vpop.f32.mrb[0].mxu0
      %v3753 = vadd.f32 0.0, %v3752
      %v3754 = vpop.f32.mrb[0].mxu0
      %v3755 = vpop.f32.mrb[0].mxu0
      %v3756 = vadd.f32 0.0, %v3755
      %v3757 = vpop.f32.mrb[0].mxu0
      %3758 = vmatprep.mubr.bf16.mxu0 0
      %3759 = vmatmul.mubr.bf16.gmra.mrb[0].mxu0 %v3632
      %v3760 = vpop.f32.mrb[0].mxu0
      %v3761 = vadd.f32 0.0, %v3760
      %v3762 = vpop.f32.mrb[0].mxu0
      %v3763 = vpop.f32.mrb[0].mxu0
      %v3764 = vadd.f32 0.0, %v3763
      %v3765 = vpop.f32.mrb[0].mxu0
      %3766 = vmatprep.mubr.bf16.mxu0 0
      %3767 = vmatmul.mubr.bf16.gmra.mrb[0].mxu0 %v3635
      %v3768 = vpop.f32.mrb[0].mxu0
      %v3769 = vadd.f32 0.0, %v3768
      %v3770 = vpop.f32.mrb[0].mxu0
      %v3771 = vpop.f32.mrb[0].mxu0
      %v3772 = vadd.f32 0.0, %v3771
      %v3773 = vpop.f32.mrb[0].mxu0
      %3774 = vmatprep.mubr.bf16.mxu0 0
      %3775 = vmatmul.mubr.bf16.gmra.mrb[0].mxu0 %v3638
      %v3776 = vpop.f32.mrb[0].mxu0
      %v3777 = vadd.f32 0.0, %v3776
      %v3778 = vpop.f32.mrb[0].mxu0
      %v3779 = vpop.f32.mrb[0].mxu0
      %v3780 = vadd.f32 0.0, %v3779
      %v3781 = vpop.f32.mrb[0].mxu0
      %3782 = vmatprep.mubr.bf16.mxu0 0
      %3783 = vmatmul.mubr.bf16.gmra.mrb[0].mxu0 %v3641
      %v3784 = vpop.f32.mrb[0].mxu0
      %v3785 = vadd.f32 0.0, %v3784
      %v3786 = vpop.f32.mrb[0].mxu0
      %v3787 = vpop.f32.mrb[0].mxu0
      %v3788 = vadd.f32 0.0, %v3787
      %v3789 = vpop.f32.mrb[0].mxu0
      %3790 = vmatprep.mubr.bf16.mxu0 0
      %3791 = vmatmul.mubr.bf16.gmra.mrb[0].mxu0 %v3644
      %v3792 = vpop.f32.mrb[0].mxu0
      %v3793 = vadd.f32 0.0, %v3792
      %v3794 = vpop.f32.mrb[0].mxu0
      %v3795 = vpop.f32.mrb[0].mxu0
      %v3796 = vadd.f32 0.0, %v3795
      %v3797 = vpop.f32.mrb[0].mxu0
      %3798 = vmatprep.mubr.bf16.mxu0 0
      %3799 = vmatmul.mubr.bf16.gmra.mrb[0].mxu0 %v3647
      %v3800 = vpop.f32.mrb[0].mxu0
      %v3801 = vadd.f32 0.0, %v3800
      %v3802 = vpop.f32.mrb[0].mxu0
      %v3803 = vpop.f32.mrb[0].mxu0
      %v3804 = vadd.f32 0.0, %v3803
      %v3805 = vpop.f32.mrb[0].mxu0
      %3806 = vmatprep.mubr.bf16.mxu0 0
      %3807 = vmatmul.mubr.bf16.gmra.mrb[0].mxu0 %v3650
      %v3808 = vpop.f32.mrb[0].mxu0
      %v3809 = vadd.f32 0.0, %v3808
      %v3810 = vpop.f32.mrb[0].mxu0
      %v3811 = vpop.f32.mrb[0].mxu0
      %v3812 = vadd.f32 0.0, %v3811
      %v3813 = vpop.f32.mrb[0].mxu0
      %3814 = vmatprep.mubr.bf16.mxu0 0
      %3815 = vmatmul.mubr.bf16.gmra.mrb[0].mxu0 %v3653
      %v3816 = vpop.f32.mrb[0].mxu0
      %v3817 = vadd.f32 0.0, %v3816
      %v3818 = vpop.f32.mrb[0].mxu0
      %v3819 = vpop.f32.mrb[0].mxu0
      %v3820 = vadd.f32 0.0, %v3819
      %v3821 = vpop.f32.mrb[0].mxu0
      %3822 = vmatprep.mubr.bf16.mxu0 0
      %3823 = vmatmul.mubr.bf16.gmra.mrb[0].mxu0 %v3656
      %v3824 = vpop.f32.mrb[0].mxu0
      %v3825 = vadd.f32 0.0, %v3824
      %v3826 = vpop.f32.mrb[0].mxu0
      %v3827 = vpop.f32.mrb[0].mxu0
      %v3828 = vadd.f32 0.0, %v3827
      %v3829 = vpop.f32.mrb[0].mxu0
      %3830 = vmatprep.mubr.bf16.mxu0 0
      %3831 = vmatmul.mubr.bf16.gmra.mrb[0].mxu0 %v3659
      %v3832 = vpop.f32.mrb[0].mxu0
      %v3833 = vadd.f32 0.0, %v3832
      %v3834 = vpop.f32.mrb[0].mxu0
      %v3835 = vpop.f32.mrb[0].mxu0
      %v3836 = vadd.f32 0.0, %v3835
      %v3837 = vpop.f32.mrb[0].mxu0
      %3838 = vmatprep.mubr.bf16.mxu0 0
      %3839 = vmatmul.mubr.bf16.gmra.mrb[0].mxu0 %v3662
      %v3840 = vpop.f32.mrb[0].mxu0
      %v3841 = vadd.f32 0.0, %v3840
      %v3842 = vpop.f32.mrb[0].mxu0
      %v3843 = vpop.f32.mrb[0].mxu0
      %v3844 = vadd.f32 0.0, %v3843
      %v3845 = vpop.f32.mrb[0].mxu0
      %3846 = vmatprep.mubr.bf16.mxu0 0
      %3847 = vmatmul.mubr.bf16.gmra.mrb[0].mxu0 %v3665
      %v3848 = vpop.f32.mrb[0].mxu0
      %v3849 = vadd.f32 0.0, %v3848
      %v3850 = vpop.f32.mrb[0].mxu0
      %v3851 = vpop.f32.mrb[0].mxu0
      %v3852 = vadd.f32 0.0, %v3851
      %v3853 = vpop.f32.mrb[0].mxu0
      %3854 = vmatprep.mubr.bf16.mxu0 0
      %3855 = vmatmul.mubr.bf16.gmra.mrb[0].mxu0 %v3668
      %v3856 = vpop.f32.mrb[0].mxu0
      %v3857 = vadd.f32 0.0, %v3856
      %v3858 = vpop.f32.mrb[0].mxu0
      %v3859 = vpop.f32.mrb[0].mxu0
      %v3860 = vadd.f32 0.0, %v3859
      %v3861 = vpop.f32.mrb[0].mxu0
      %3862 = vmatprep.mubr.bf16.mxu0 0
      %3863 = vmatmul.mubr.bf16.gmra.mrb[0].mxu0 %v3671
      %v3864 = vpop.f32.mrb[0].mxu0
      %v3865 = vadd.f32 0.0, %v3864
      %v3866 = vpop.f32.mrb[0].mxu0
      %v3867 = vpop.f32.mrb[0].mxu0
      %v3868 = vadd.f32 0.0, %v3867
      %v3869 = vpop.f32.mrb[0].mxu0
      %3870 = vmatprep.mubr.bf16.mxu0 0
      %3871 = vmatmul.mubr.bf16.gmra.mrb[0].mxu0 %v3674
      %v3872 = vpop.f32.mrb[0].mxu0
      %v3873 = vadd.f32 0.0, %v3872
      %v3874 = vpop.f32.mrb[0].mxu0
      %v3875 = vpop.f32.mrb[0].mxu0
      %v3876 = vadd.f32 0.0, %v3875
      %v3877 = vpop.f32.mrb[0].mxu0
      %3878 = vmatprep.mubr.bf16.mxu0 0
      %3879 = vmatmul.mubr.bf16.gmra.mrb[0].mxu0 %v3677
      %v3880 = vpop.f32.mrb[0].mxu0
      %v3881 = vadd.f32 0.0, %v3880
      %v3882 = vpop.f32.mrb[0].mxu0
      %v3883 = vpop.f32.mrb[0].mxu0
      %v3884 = vadd.f32 0.0, %v3883
      %v3885 = vpop.f32.mrb[0].mxu0
      %3886 = vmatprep.mubr.bf16.mxu0 0
      %3887 = vmatmul.mubr.bf16.gmra.mrb[0].mxu0 %v3680
      %v3888 = vpop.f32.mrb[0].mxu0
      %v3889 = vadd.f32 0.0, %v3888
      %v3890 = vpop.f32.mrb[0].mxu0
      %v3891 = vpop.f32.mrb[0].mxu0
      %v3892 = vadd.f32 0.0, %v3891
      %v3893 = vpop.f32.mrb[0].mxu0
      %3894 = vmatprep.mubr.bf16.mxu0 0
      %3895 = vmatmul.mubr.bf16.gmra.mrb[0].mxu0 %v3683
      %v3896 = vpop.f32.mrb[0].mxu0
      %v3897 = vadd.f32 0.0, %v3896
      %v3898 = vpop.f32.mrb[0].mxu0
      %v3899 = vpop.f32.mrb[0].mxu0
      %v3900 = vadd.f32 0.0, %v3899
      %v3901 = vpop.f32.mrb[0].mxu0
      %3902 = vmatprep.mubr.bf16.mxu0 0
      %3903 = vmatmul.mubr.bf16.gmra.mrb[0].mxu0 %v3686
      %v3904 = vpop.f32.mrb[0].mxu0
      %v3905 = vadd.f32 0.0, %v3904
      %v3906 = vpop.f32.mrb[0].mxu0
      %v3907 = vpop.f32.mrb[0].mxu0
      %v3908 = vadd.f32 0.0, %v3907
      %v3909 = vpop.f32.mrb[0].mxu0
      %3910 = vmatprep.mubr.bf16.mxu0 0
      %3911 = vmatmul.mubr.bf16.gmra.mrb[0].mxu0 %v3689
      %v3912 = vpop.f32.mrb[0].mxu0
      %v3913 = vadd.f32 0.0, %v3912
      %v3914 = vpop.f32.mrb[0].mxu0
      %v3915 = vpop.f32.mrb[0].mxu0
      %v3916 = vadd.f32 0.0, %v3915
      %v3917 = vpop.f32.mrb[0].mxu0
      %3918 = vdwg.mxu0
      %v3919 = vadd.f32 %v3320, %v3729
      %v3920 = vadd.f32 %v3321, %v3732
      %v3921 = vadd.f32 %v3322, %v3737
      %v3922 = vadd.f32 %v3323, %v3740
      %v3923 = vadd.f32 %v3324, %v3745
      %v3924 = vadd.f32 %v3325, %v3748
      %v3925 = vadd.f32 %v3326, %v3753
      %v3926 = vadd.f32 %v3327, %v3756
      %v3927 = vadd.f32 %v3328, %v3761
      %v3928 = vadd.f32 %v3329, %v3764
      %v3929 = vadd.f32 %v3330, %v3769
      %v3930 = vadd.f32 %v3331, %v3772
      %v3931 = vadd.f32 %v3332, %v3777
      %v3932 = vadd.f32 %v3333, %v3780
      %v3933 = vadd.f32 %v3334, %v3785
      %v3934 = vadd.f32 %v3335, %v3788
      %v3935 = vadd.f32 %v3336, %v3793
      %v3936 = vadd.f32 %v3337, %v3796
      %v3937 = vadd.f32 %v3338, %v3801
      %v3938 = vadd.f32 %v3339, %v3804
      %v3939 = vadd.f32 %v3340, %v3809
      %v3940 = vadd.f32 %v3341, %v3812
      %v3941 = vadd.f32 %v3342, %v3817
      %v3942 = vadd.f32 %v3343, %v3820
      %v3943 = vadd.f32 %v3344, %v3825
      %v3944 = vadd.f32 %v3345, %v3828
      %v3945 = vadd.f32 %v3346, %v3833
      %v3946 = vadd.f32 %v3347, %v3836
      %v3947 = vadd.f32 %v3348, %v3841
      %v3948 = vadd.f32 %v3349, %v3844
      %v3949 = vadd.f32 %v3350, %v3849
      %v3950 = vadd.f32 %v3351, %v3852
      %v3951 = vadd.f32 %v3352, %v3857
      %v3952 = vadd.f32 %v3353, %v3860
      %v3953 = vadd.f32 %v3354, %v3865
      %v3954 = vadd.f32 %v3355, %v3868
      %v3955 = vadd.f32 %v3356, %v3873
      %v3956 = vadd.f32 %v3357, %v3876
      %v3957 = vadd.f32 %v3358, %v3881
      %v3958 = vadd.f32 %v3359, %v3884
      %v3959 = vadd.f32 %v3360, %v3889
      %v3960 = vadd.f32 %v3361, %v3892
      %v3961 = vadd.f32 %v3362, %v3897
      %v3962 = vadd.f32 %v3363, %v3900
      %v3963 = vadd.f32 %v3364, %v3905
      %v3964 = vadd.f32 %v3365, %v3908
      %v3965 = vadd.f32 %v3366, %v3913
      %v3966 = vadd.f32 %v3367, %v3916
      %v3967 = vld [vmem:[#allocation2 + $0x20] sm:$0xf0]
      %s3968 = scalar_lea.vmem %s1, 14
      %v3969 = vld [vmem:[%s3968] sm:$0x3]
      %v3995 = vrot.slane %v3967, 4
      %v3996 = vrot.slane %v3369, 4
      %v3997 = vsel %vm561, %v3995, %v3996
      %v3998 = vrot.slane %v3370, 4
      %v3999 = vsel %vm561, %v3996, %v3998
      %v4000 = vrot.slane %v3371, 4
      %v4001 = vsel %vm561, %v3998, %v4000
      %v4002 = vrot.slane %v3372, 4
      %v4003 = vsel %vm561, %v4000, %v4002
      %v4004 = vrot.slane %v3373, 4
      %v4005 = vsel %vm561, %v4002, %v4004
      %v4006 = vrot.slane %v3374, 4
      %v4007 = vsel %vm561, %v4004, %v4006
      %v4008 = vrot.slane %v3375, 4
      %v4009 = vsel %vm561, %v4006, %v4008
      %v4010 = vrot.slane %v3376, 4
      %v4011 = vsel %vm561, %v4008, %v4010
      %v4012 = vrot.slane %v3377, 4
      %v4013 = vsel %vm561, %v4010, %v4012
      %v4014 = vrot.slane %v3378, 4
      %v4015 = vsel %vm561, %v4012, %v4014
      %v4016 = vrot.slane %v3379, 4
      %v4017 = vsel %vm561, %v4014, %v4016
      %v4018 = vrot.slane %v3380, 4
      %v4019 = vsel %vm561, %v4016, %v4018
      %v4020 = vrot.slane %v3381, 4
      %v4021 = vsel %vm561, %v4018, %v4020
      %v4022 = vrot.slane %v3382, 4
      %v4023 = vsel %vm561, %v4020, %v4022
      %v4024 = vrot.slane %v3383, 4
      %v4025 = vsel %vm561, %v4022, %v4024
      %v4026 = vrot.slane %v3384, 4
      %v4027 = vsel %vm561, %v4024, %v4026
      %v4028 = vrot.slane %v3385, 4
      %v4029 = vsel %vm561, %v4026, %v4028
      %v4030 = vrot.slane %v3386, 4
      %v4031 = vsel %vm561, %v4028, %v4030
      %v4032 = vrot.slane %v3387, 4
      %v4033 = vsel %vm561, %v4030, %v4032
      %v4034 = vrot.slane %v3388, 4
      %v4035 = vsel %vm561, %v4032, %v4034
      %v4036 = vrot.slane %v3389, 4
      %v4037 = vsel %vm561, %v4034, %v4036
      %v4038 = vrot.slane %v3390, 4
      %v4039 = vsel %vm561, %v4036, %v4038
      %v4040 = vrot.slane %v3391, 4
      %v4041 = vsel %vm561, %v4038, %v4040
      %v4042 = vrot.slane %v3392, 4
      %v4043 = vsel %vm561, %v4040, %v4042
      %v4045 = vsel %vm293, %v3997, 0
      %v4048 = vsel %vm293, %v3999, 0
      %v4051 = vsel %vm293, %v4001, 0
      %v4054 = vsel %vm293, %v4003, 0
      %v4057 = vsel %vm293, %v4005, 0
      %v4060 = vsel %vm293, %v4007, 0
      %v4063 = vsel %vm293, %v4009, 0
      %v4066 = vsel %vm293, %v4011, 0
      %v4069 = vsel %vm293, %v4013, 0
      %v4072 = vsel %vm293, %v4015, 0
      %v4075 = vsel %vm293, %v4017, 0
      %v4078 = vsel %vm293, %v4019, 0
      %v4081 = vsel %vm293, %v4021, 0
      %v4084 = vsel %vm293, %v4023, 0
      %v4087 = vsel %vm293, %v4025, 0
      %v4090 = vsel %vm293, %v4027, 0
      %v4093 = vsel %vm293, %v4029, 0
      %v4096 = vsel %vm293, %v4031, 0
      %v4099 = vsel %vm293, %v4033, 0
      %v4102 = vsel %vm293, %v4035, 0
      %v4105 = vsel %vm293, %v4037, 0
      %v4108 = vsel %vm293, %v4039, 0
      %v4111 = vsel %vm293, %v4041, 0
      %v4114 = vsel %vm293, %v4043, 0
      %v4117 = vsel %vm683, %v3969, 0
      %4119 = vmatprep.subr.bf16.mxu0 0
      %4120 = vmatpush1.bf16.msra.mxu0 %v4117
      %4121 = vmatprep.subr.bf16.mxu0 0
      %4122 = vmatpush1.bf16.msra.mxu0 0
      %4123 = vmatprep.subr.bf16.mxu0 0
      %4124 = vmatpush1.bf16.msra.mxu0 0
      %4125 = vmatprep.subr.bf16.mxu0 0
      %4126 = vmatpush1.bf16.msra.mxu0 0
      %4127 = vmatprep.subr.bf16.mxu0 0
      %4128 = vmatpush1.bf16.msra.mxu0 0
      %4129 = vmatprep.subr.bf16.mxu0 0
      %4130 = vmatpush1.bf16.msra.mxu0 0
      %4131 = vmatprep.subr.bf16.mxu0 0
      %4132 = vmatpush1.bf16.msra.mxu0 0
      %4133 = vmatprep.subr.bf16.mxu0 0
      %4134 = vmatpush1.bf16.msra.mxu0 0
      %4135 = vmatprep.subr.bf16.mxu0 0
      %4136 = vmatpush1.bf16.msra.mxu0 0
      %4137 = vmatprep.subr.bf16.mxu0 0
      %4138 = vmatpush1.bf16.msra.mxu0 0
      %4139 = vmatprep.subr.bf16.mxu0 0
      %4140 = vmatpush1.bf16.msra.mxu0 0
      %4141 = vmatprep.subr.bf16.mxu0 0
      %4142 = vmatpush1.bf16.msra.mxu0 0
      %4143 = vmatprep.subr.bf16.mxu0 0
      %4144 = vmatpush1.bf16.msra.mxu0 0
      %4145 = vmatprep.subr.bf16.mxu0 0
      %4146 = vmatpush1.bf16.msra.mxu0 0
      %4147 = vmatprep.subr.bf16.mxu0 0
      %4148 = vmatpush1.bf16.msra.mxu0 0
      %4149 = vmatprep.subr.bf16.mxu0 0
      %4150 = vmatpush1.bf16.msra.mxu0 0
      %4151 = vmatprep.mubr.bf16.mxu0 0
      %4152 = vmatmul.mubr.bf16.gmra.mrb[0].mxu0 %v4045
      %v4153 = vpop.f32.mrb[0].mxu0
      %v4154 = vadd.f32 0.0, %v4153
      %v4155 = vpop.f32.mrb[0].mxu0
      %v4156 = vpop.f32.mrb[0].mxu0
      %v4157 = vadd.f32 0.0, %v4156
      %v4158 = vpop.f32.mrb[0].mxu0
      %4159 = vmatprep.mubr.bf16.mxu0 0
      %4160 = vmatmul.mubr.bf16.gmra.mrb[0].mxu0 %v4048
      %v4161 = vpop.f32.mrb[0].mxu0
      %v4162 = vadd.f32 0.0, %v4161
      %v4163 = vpop.f32.mrb[0].mxu0
      %v4164 = vpop.f32.mrb[0].mxu0
      %v4165 = vadd.f32 0.0, %v4164
      %v4166 = vpop.f32.mrb[0].mxu0
      %4167 = vmatprep.mubr.bf16.mxu0 0
      %4168 = vmatmul.mubr.bf16.gmra.mrb[0].mxu0 %v4051
      %v4169 = vpop.f32.mrb[0].mxu0
      %v4170 = vadd.f32 0.0, %v4169
      %v4171 = vpop.f32.mrb[0].mxu0
      %v4172 = vpop.f32.mrb[0].mxu0
      %v4173 = vadd.f32 0.0, %v4172
      %v4174 = vpop.f32.mrb[0].mxu0
      %4175 = vmatprep.mubr.bf16.mxu0 0
      %4176 = vmatmul.mubr.bf16.gmra.mrb[0].mxu0 %v4054
      %v4177 = vpop.f32.mrb[0].mxu0
      %v4178 = vadd.f32 0.0, %v4177
      %v4179 = vpop.f32.mrb[0].mxu0
      %v4180 = vpop.f32.mrb[0].mxu0
      %v4181 = vadd.f32 0.0, %v4180
      %v4182 = vpop.f32.mrb[0].mxu0
      %4183 = vmatprep.mubr.bf16.mxu0 0
      %4184 = vmatmul.mubr.bf16.gmra.mrb[0].mxu0 %v4057
      %v4185 = vpop.f32.mrb[0].mxu0
      %v4186 = vadd.f32 0.0, %v4185
      %v4187 = vpop.f32.mrb[0].mxu0
      %v4188 = vpop.f32.mrb[0].mxu0
      %v4189 = vadd.f32 0.0, %v4188
      %v4190 = vpop.f32.mrb[0].mxu0
      %4191 = vmatprep.mubr.bf16.mxu0 0
      %4192 = vmatmul.mubr.bf16.gmra.mrb[0].mxu0 %v4060
      %v4193 = vpop.f32.mrb[0].mxu0
      %v4194 = vadd.f32 0.0, %v4193
      %v4195 = vpop.f32.mrb[0].mxu0
      %v4196 = vpop.f32.mrb[0].mxu0
      %v4197 = vadd.f32 0.0, %v4196
      %v4198 = vpop.f32.mrb[0].mxu0
      %4199 = vmatprep.mubr.bf16.mxu0 0
      %4200 = vmatmul.mubr.bf16.gmra.mrb[0].mxu0 %v4063
      %v4201 = vpop.f32.mrb[0].mxu0
      %v4202 = vadd.f32 0.0, %v4201
      %v4203 = vpop.f32.mrb[0].mxu0
      %v4204 = vpop.f32.mrb[0].mxu0
      %v4205 = vadd.f32 0.0, %v4204
      %v4206 = vpop.f32.mrb[0].mxu0
      %4207 = vmatprep.mubr.bf16.mxu0 0
      %4208 = vmatmul.mubr.bf16.gmra.mrb[0].mxu0 %v4066
      %v4209 = vpop.f32.mrb[0].mxu0
      %v4210 = vadd.f32 0.0, %v4209
      %v4211 = vpop.f32.mrb[0].mxu0
      %v4212 = vpop.f32.mrb[0].mxu0
      %v4213 = vadd.f32 0.0, %v4212
      %v4214 = vpop.f32.mrb[0].mxu0
      %4215 = vmatprep.mubr.bf16.mxu0 0
      %4216 = vmatmul.mubr.bf16.gmra.mrb[0].mxu0 %v4069
      %v4217 = vpop.f32.mrb[0].mxu0
      %v4218 = vadd.f32 0.0, %v4217
      %v4219 = vpop.f32.mrb[0].mxu0
      %v4220 = vpop.f32.mrb[0].mxu0
      %v4221 = vadd.f32 0.0, %v4220
      %v4222 = vpop.f32.mrb[0].mxu0
      %4223 = vmatprep.mubr.bf16.mxu0 0
      %4224 = vmatmul.mubr.bf16.gmra.mrb[0].mxu0 %v4072
      %v4225 = vpop.f32.mrb[0].mxu0
      %v4226 = vadd.f32 0.0, %v4225
      %v4227 = vpop.f32.mrb[0].mxu0
      %v4228 = vpop.f32.mrb[0].mxu0
      %v4229 = vadd.f32 0.0, %v4228
      %v4230 = vpop.f32.mrb[0].mxu0
      %4231 = vmatprep.mubr.bf16.mxu0 0
      %4232 = vmatmul.mubr.bf16.gmra.mrb[0].mxu0 %v4075
      %v4233 = vpop.f32.mrb[0].mxu0
      %v4234 = vadd.f32 0.0, %v4233
      %v4235 = vpop.f32.mrb[0].mxu0
      %v4236 = vpop.f32.mrb[0].mxu0
      %v4237 = vadd.f32 0.0, %v4236
      %v4238 = vpop.f32.mrb[0].mxu0
      %4239 = vmatprep.mubr.bf16.mxu0 0
      %4240 = vmatmul.mubr.bf16.gmra.mrb[0].mxu0 %v4078
      %v4241 = vpop.f32.mrb[0].mxu0
      %v4242 = vadd.f32 0.0, %v4241
      %v4243 = vpop.f32.mrb[0].mxu0
      %v4244 = vpop.f32.mrb[0].mxu0
      %v4245 = vadd.f32 0.0, %v4244
      %v4246 = vpop.f32.mrb[0].mxu0
      %4247 = vmatprep.mubr.bf16.mxu0 0
      %4248 = vmatmul.mubr.bf16.gmra.mrb[0].mxu0 %v4081
      %v4249 = vpop.f32.mrb[0].mxu0
      %v4250 = vadd.f32 0.0, %v4249
      %v4251 = vpop.f32.mrb[0].mxu0
      %v4252 = vpop.f32.mrb[0].mxu0
      %v4253 = vadd.f32 0.0, %v4252
      %v4254 = vpop.f32.mrb[0].mxu0
      %4255 = vmatprep.mubr.bf16.mxu0 0
      %4256 = vmatmul.mubr.bf16.gmra.mrb[0].mxu0 %v4084
      %v4257 = vpop.f32.mrb[0].mxu0
      %v4258 = vadd.f32 0.0, %v4257
      %v4259 = vpop.f32.mrb[0].mxu0
      %v4260 = vpop.f32.mrb[0].mxu0
      %v4261 = vadd.f32 0.0, %v4260
      %v4262 = vpop.f32.mrb[0].mxu0
      %4263 = vmatprep.mubr.bf16.mxu0 0
      %4264 = vmatmul.mubr.bf16.gmra.mrb[0].mxu0 %v4087
      %v4265 = vpop.f32.mrb[0].mxu0
      %v4266 = vadd.f32 0.0, %v4265
      %v4267 = vpop.f32.mrb[0].mxu0
      %v4268 = vpop.f32.mrb[0].mxu0
      %v4269 = vadd.f32 0.0, %v4268
      %v4270 = vpop.f32.mrb[0].mxu0
      %4271 = vmatprep.mubr.bf16.mxu0 0
      %4272 = vmatmul.mubr.bf16.gmra.mrb[0].mxu0 %v4090
      %v4273 = vpop.f32.mrb[0].mxu0
      %v4274 = vadd.f32 0.0, %v4273
      %v4275 = vpop.f32.mrb[0].mxu0
      %v4276 = vpop.f32.mrb[0].mxu0
      %v4277 = vadd.f32 0.0, %v4276
      %v4278 = vpop.f32.mrb[0].mxu0
      %4279 = vmatprep.mubr.bf16.mxu0 0
      %4280 = vmatmul.mubr.bf16.gmra.mrb[0].mxu0 %v4093
      %v4281 = vpop.f32.mrb[0].mxu0
      %v4282 = vadd.f32 0.0, %v4281
      %v4283 = vpop.f32.mrb[0].mxu0
      %v4284 = vpop.f32.mrb[0].mxu0
      %v4285 = vadd.f32 0.0, %v4284
      %v4286 = vpop.f32.mrb[0].mxu0
      %4287 = vmatprep.mubr.bf16.mxu0 0
      %4288 = vmatmul.mubr.bf16.gmra.mrb[0].mxu0 %v4096
      %v4289 = vpop.f32.mrb[0].mxu0
      %v4290 = vadd.f32 0.0, %v4289
      %v4291 = vpop.f32.mrb[0].mxu0
      %v4292 = vpop.f32.mrb[0].mxu0
      %v4293 = vadd.f32 0.0, %v4292
      %v4294 = vpop.f32.mrb[0].mxu0
      %4295 = vmatprep.mubr.bf16.mxu0 0
      %4296 = vmatmul.mubr.bf16.gmra.mrb[0].mxu0 %v4099
      %v4297 = vpop.f32.mrb[0].mxu0
      %v4298 = vadd.f32 0.0, %v4297
      %v4299 = vpop.f32.mrb[0].mxu0
      %v4300 = vpop.f32.mrb[0].mxu0
      %v4301 = vadd.f32 0.0, %v4300
      %v4302 = vpop.f32.mrb[0].mxu0
      %4303 = vmatprep.mubr.bf16.mxu0 0
      %4304 = vmatmul.mubr.bf16.gmra.mrb[0].mxu0 %v4102
      %v4305 = vpop.f32.mrb[0].mxu0
      %v4306 = vadd.f32 0.0, %v4305
      %v4307 = vpop.f32.mrb[0].mxu0
      %v4308 = vpop.f32.mrb[0].mxu0
      %v4309 = vadd.f32 0.0, %v4308
      %v4310 = vpop.f32.mrb[0].mxu0
      %4311 = vmatprep.mubr.bf16.mxu0 0
      %4312 = vmatmul.mubr.bf16.gmra.mrb[0].mxu0 %v4105
      %v4313 = vpop.f32.mrb[0].mxu0
      %v4314 = vadd.f32 0.0, %v4313
      %v4315 = vpop.f32.mrb[0].mxu0
      %v4316 = vpop.f32.mrb[0].mxu0
      %v4317 = vadd.f32 0.0, %v4316
      %v4318 = vpop.f32.mrb[0].mxu0
      %4319 = vmatprep.mubr.bf16.mxu0 0
      %4320 = vmatmul.mubr.bf16.gmra.mrb[0].mxu0 %v4108
      %v4321 = vpop.f32.mrb[0].mxu0
      %v4322 = vadd.f32 0.0, %v4321
      %v4323 = vpop.f32.mrb[0].mxu0
      %v4324 = vpop.f32.mrb[0].mxu0
      %v4325 = vadd.f32 0.0, %v4324
      %v4326 = vpop.f32.mrb[0].mxu0
      %4327 = vmatprep.mubr.bf16.mxu0 0
      %4328 = vmatmul.mubr.bf16.gmra.mrb[0].mxu0 %v4111
      %v4329 = vpop.f32.mrb[0].mxu0
      %v4330 = vadd.f32 0.0, %v4329
      %v4331 = vpop.f32.mrb[0].mxu0
      %v4332 = vpop.f32.mrb[0].mxu0
      %v4333 = vadd.f32 0.0, %v4332
      %v4334 = vpop.f32.mrb[0].mxu0
      %4335 = vmatprep.mubr.bf16.mxu0 0
      %4336 = vmatmul.mubr.bf16.gmra.mrb[0].mxu0 %v4114
      %v4337 = vpop.f32.mrb[0].mxu0
      %v4338 = vadd.f32 0.0, %v4337
      %v4339 = vpop.f32.mrb[0].mxu0
      %v4340 = vpop.f32.mrb[0].mxu0
      %v4341 = vadd.f32 0.0, %v4340
      %v4342 = vpop.f32.mrb[0].mxu0
      %4343 = vdwg.mxu0
      %v4344 = vadd.f32 %v3919, %v4154
      %v4345 = vadd.f32 %v3920, %v4157
      %v4346 = vadd.f32 %v3921, %v4162
      %v4347 = vadd.f32 %v3922, %v4165
      %v4348 = vadd.f32 %v3923, %v4170
      %v4349 = vadd.f32 %v3924, %v4173
      %v4350 = vadd.f32 %v3925, %v4178
      %v4351 = vadd.f32 %v3926, %v4181
      %v4352 = vadd.f32 %v3927, %v4186
      %v4353 = vadd.f32 %v3928, %v4189
      %v4354 = vadd.f32 %v3929, %v4194
      %v4355 = vadd.f32 %v3930, %v4197
      %v4356 = vadd.f32 %v3931, %v4202
      %v4357 = vadd.f32 %v3932, %v4205
      %v4358 = vadd.f32 %v3933, %v4210
      %v4359 = vadd.f32 %v3934, %v4213
      %v4360 = vadd.f32 %v3935, %v4218
      %v4361 = vadd.f32 %v3936, %v4221
      %v4362 = vadd.f32 %v3937, %v4226
      %v4363 = vadd.f32 %v3938, %v4229
      %v4364 = vadd.f32 %v3939, %v4234
      %v4365 = vadd.f32 %v3940, %v4237
      %v4366 = vadd.f32 %v3941, %v4242
      %v4367 = vadd.f32 %v3942, %v4245
      %v4368 = vadd.f32 %v3943, %v4250
      %v4369 = vadd.f32 %v3944, %v4253
      %v4370 = vadd.f32 %v3945, %v4258
      %v4371 = vadd.f32 %v3946, %v4261
      %v4372 = vadd.f32 %v3947, %v4266
      %v4373 = vadd.f32 %v3948, %v4269
      %v4374 = vadd.f32 %v3949, %v4274
      %v4375 = vadd.f32 %v3950, %v4277
      %v4376 = vadd.f32 %v3951, %v4282
      %v4377 = vadd.f32 %v3952, %v4285
      %v4378 = vadd.f32 %v3953, %v4290
      %v4379 = vadd.f32 %v3954, %v4293
      %v4380 = vadd.f32 %v3955, %v4298
      %v4381 = vadd.f32 %v3956, %v4301
      %v4382 = vadd.f32 %v3957, %v4306
      %v4383 = vadd.f32 %v3958, %v4309
      %v4384 = vadd.f32 %v3959, %v4314
      %v4385 = vadd.f32 %v3960, %v4317
      %v4386 = vadd.f32 %v3961, %v4322
      %v4387 = vadd.f32 %v3962, %v4325
      %v4388 = vadd.f32 %v3963, %v4330
      %v4389 = vadd.f32 %v3964, %v4333
      %v4390 = vadd.f32 %v3965, %v4338
      %v4391 = vadd.f32 %v3966, %v4341
      %v4392 = vld [vmem:[#allocation2 + $0xe0] sm:$0x1f]
      %s4393 = scalar_lea.vmem %s1, 16
      %v4394 = vld [vmem:[%s4393] sm:$0x3]
      %v4396 = vshrl.u32 %v3967, 16
      %v4398 = vrot.slane %v4396, 4
      %v4399 = vshll.u32 %v3967, 16
      %v4401 = vrot.slane %v4399, 5
      %v4402 = vor.u32 %v4398, %v4401
      %v4403 = vrot.slane %v3404, 4
      %v4404 = vrot.slane %v3407, 5
      %v4405 = vor.u32 %v4403, %v4404
      %v4406 = vsel %vm1440, %v4402, %v4405
      %v4407 = vrot.slane %v3413, 4
      %v4408 = vrot.slane %v3416, 5
      %v4409 = vor.u32 %v4407, %v4408
      %v4410 = vsel %vm1440, %v4405, %v4409
      %v4411 = vrot.slane %v3422, 4
      %v4412 = vrot.slane %v3425, 5
      %v4413 = vor.u32 %v4411, %v4412
      %v4414 = vsel %vm1440, %v4409, %v4413
      %v4415 = vrot.slane %v3431, 4
      %v4416 = vrot.slane %v3434, 5
      %v4417 = vor.u32 %v4415, %v4416
      %v4418 = vsel %vm1440, %v4413, %v4417
      %v4419 = vrot.slane %v3440, 4
      %v4420 = vrot.slane %v3443, 5
      %v4421 = vor.u32 %v4419, %v4420
      %v4422 = vsel %vm1440, %v4417, %v4421
      %v4423 = vrot.slane %v3449, 4
      %v4424 = vrot.slane %v3452, 5
      %v4425 = vor.u32 %v4423, %v4424
      %v4426 = vsel %vm1440, %v4421, %v4425
      %v4427 = vrot.slane %v3458, 4
      %v4428 = vrot.slane %v3461, 5
      %v4429 = vor.u32 %v4427, %v4428
      %v4430 = vsel %vm1440, %v4425, %v4429
      %v4431 = vrot.slane %v3467, 4
      %v4432 = vrot.slane %v3470, 5
      %v4433 = vor.u32 %v4431, %v4432
      %v4434 = vsel %vm1440, %v4429, %v4433
      %v4435 = vrot.slane %v3476, 4
      %v4436 = vrot.slane %v3479, 5
      %v4437 = vor.u32 %v4435, %v4436
      %v4438 = vsel %vm1440, %v4433, %v4437
      %v4439 = vrot.slane %v3485, 4
      %v4440 = vrot.slane %v3488, 5
      %v4441 = vor.u32 %v4439, %v4440
      %v4442 = vsel %vm1440, %v4437, %v4441
      %v4443 = vrot.slane %v3494, 4
      %v4444 = vrot.slane %v3497, 5
      %v4445 = vor.u32 %v4443, %v4444
      %v4446 = vsel %vm1440, %v4441, %v4445
      %v4447 = vrot.slane %v3503, 4
      %v4448 = vrot.slane %v3506, 5
      %v4449 = vor.u32 %v4447, %v4448
      %v4450 = vsel %vm1440, %v4445, %v4449
      %v4451 = vrot.slane %v3512, 4
      %v4452 = vrot.slane %v3515, 5
      %v4453 = vor.u32 %v4451, %v4452
      %v4454 = vsel %vm1440, %v4449, %v4453
      %v4455 = vrot.slane %v3521, 4
      %v4456 = vrot.slane %v3524, 5
      %v4457 = vor.u32 %v4455, %v4456
      %v4458 = vsel %vm1440, %v4453, %v4457
      %v4459 = vrot.slane %v3530, 4
      %v4460 = vrot.slane %v3533, 5
      %v4461 = vor.u32 %v4459, %v4460
      %v4462 = vsel %vm1440, %v4457, %v4461
      %v4463 = vrot.slane %v3539, 4
      %v4464 = vrot.slane %v3542, 5
      %v4465 = vor.u32 %v4463, %v4464
      %v4466 = vsel %vm1440, %v4461, %v4465
      %v4467 = vrot.slane %v3548, 4
      %v4468 = vrot.slane %v3551, 5
      %v4469 = vor.u32 %v4467, %v4468
      %v4470 = vsel %vm1440, %v4465, %v4469
      %v4471 = vrot.slane %v3557, 4
      %v4472 = vrot.slane %v3560, 5
      %v4473 = vor.u32 %v4471, %v4472
      %v4474 = vsel %vm1440, %v4469, %v4473
      %v4475 = vrot.slane %v3566, 4
      %v4476 = vrot.slane %v3569, 5
      %v4477 = vor.u32 %v4475, %v4476
      %v4478 = vsel %vm1440, %v4473, %v4477
      %v4479 = vrot.slane %v3575, 4
      %v4480 = vrot.slane %v3578, 5
      %v4481 = vor.u32 %v4479, %v4480
      %v4482 = vsel %vm1440, %v4477, %v4481
      %v4483 = vrot.slane %v3584, 4
      %v4484 = vrot.slane %v3587, 5
      %v4485 = vor.u32 %v4483, %v4484
      %v4486 = vsel %vm1440, %v4481, %v4485
      %v4487 = vrot.slane %v3593, 4
      %v4488 = vrot.slane %v3596, 5
      %v4489 = vor.u32 %v4487, %v4488
      %v4490 = vsel %vm1440, %v4485, %v4489
      %v4491 = vrot.slane %v3602, 4
      %v4492 = vrot.slane %v3605, 5
      %v4493 = vor.u32 %v4491, %v4492
      %v4494 = vsel %vm1440, %v4489, %v4493
      %v4496 = vshrl.u32 %v4392, 16
      %v4498 = vrot.slane %v4496, 4
      %v4499 = vshll.u32 %v4392, 16
      %v4501 = vrot.slane %v4499, 5
      %v4502 = vor.u32 %v4498, %v4501
      %v4503 = vsel %vm1440, %v4493, %v4502
      %v4505 = vsel %vm293, %v4406, 0
      %v4508 = vsel %vm293, %v4410, 0
      %v4511 = vsel %vm293, %v4414, 0
      %v4514 = vsel %vm293, %v4418, 0
      %v4517 = vsel %vm293, %v4422, 0
      %v4520 = vsel %vm293, %v4426, 0
      %v4523 = vsel %vm293, %v4430, 0
      %v4526 = vsel %vm293, %v4434, 0
      %v4529 = vsel %vm293, %v4438, 0
      %v4532 = vsel %vm293, %v4442, 0
      %v4535 = vsel %vm293, %v4446, 0
      %v4538 = vsel %vm293, %v4450, 0
      %v4541 = vsel %vm293, %v4454, 0
      %v4544 = vsel %vm293, %v4458, 0
      %v4547 = vsel %vm293, %v4462, 0
      %v4550 = vsel %vm293, %v4466, 0
      %v4553 = vsel %vm293, %v4470, 0
      %v4556 = vsel %vm293, %v4474, 0
      %v4559 = vsel %vm293, %v4478, 0
      %v4562 = vsel %vm293, %v4482, 0
      %v4565 = vsel %vm293, %v4486, 0
      %v4568 = vsel %vm293, %v4490, 0
      %v4571 = vsel %vm293, %v4494, 0
      %v4574 = vsel %vm293, %v4503, 0
      %v4577 = vsel %vm683, %v4394, 0
      %4579 = vmatprep.subr.bf16.mxu0 0
      %4580 = vmatpush1.bf16.msra.mxu0 %v4577
      %4581 = vmatprep.subr.bf16.mxu0 0
      %4582 = vmatpush1.bf16.msra.mxu0 0
      %4583 = vmatprep.subr.bf16.mxu0 0
      %4584 = vmatpush1.bf16.msra.mxu0 0
      %4585 = vmatprep.subr.bf16.mxu0 0
      %4586 = vmatpush1.bf16.msra.mxu0 0
      %4587 = vmatprep.subr.bf16.mxu0 0
      %4588 = vmatpush1.bf16.msra.mxu0 0
      %4589 = vmatprep.subr.bf16.mxu0 0
      %4590 = vmatpush1.bf16.msra.mxu0 0
      %4591 = vmatprep.subr.bf16.mxu0 0
      %4592 = vmatpush1.bf16.msra.mxu0 0
      %4593 = vmatprep.subr.bf16.mxu0 0
      %4594 = vmatpush1.bf16.msra.mxu0 0
      %4595 = vmatprep.subr.bf16.mxu0 0
      %4596 = vmatpush1.bf16.msra.mxu0 0
      %4597 = vmatprep.subr.bf16.mxu0 0
      %4598 = vmatpush1.bf16.msra.mxu0 0
      %4599 = vmatprep.subr.bf16.mxu0 0
      %4600 = vmatpush1.bf16.msra.mxu0 0
      %4601 = vmatprep.subr.bf16.mxu0 0
      %4602 = vmatpush1.bf16.msra.mxu0 0
      %4603 = vmatprep.subr.bf16.mxu0 0
      %4604 = vmatpush1.bf16.msra.mxu0 0
      %4605 = vmatprep.subr.bf16.mxu0 0
      %4606 = vmatpush1.bf16.msra.mxu0 0
      %4607 = vmatprep.subr.bf16.mxu0 0
      %4608 = vmatpush1.bf16.msra.mxu0 0
      %4609 = vmatprep.subr.bf16.mxu0 0
      %4610 = vmatpush1.bf16.msra.mxu0 0
      %4611 = vmatprep.mubr.bf16.mxu0 0
      %4612 = vmatmul.mubr.bf16.gmra.mrb[0].mxu0 %v4505
      %v4613 = vpop.f32.mrb[0].mxu0
      %v4614 = vadd.f32 0.0, %v4613
      %v4615 = vpop.f32.mrb[0].mxu0
      %v4616 = vpop.f32.mrb[0].mxu0
      %v4617 = vadd.f32 0.0, %v4616
      %v4618 = vpop.f32.mrb[0].mxu0
      %4619 = vmatprep.mubr.bf16.mxu0 0
      %4620 = vmatmul.mubr.bf16.gmra.mrb[0].mxu0 %v4508
      %v4621 = vpop.f32.mrb[0].mxu0
      %v4622 = vadd.f32 0.0, %v4621
      %v4623 = vpop.f32.mrb[0].mxu0
      %v4624 = vpop.f32.mrb[0].mxu0
      %v4625 = vadd.f32 0.0, %v4624
      %v4626 = vpop.f32.mrb[0].mxu0
      %4627 = vmatprep.mubr.bf16.mxu0 0
      %4628 = vmatmul.mubr.bf16.gmra.mrb[0].mxu0 %v4511
      %v4629 = vpop.f32.mrb[0].mxu0
      %v4630 = vadd.f32 0.0, %v4629
      %v4631 = vpop.f32.mrb[0].mxu0
      %v4632 = vpop.f32.mrb[0].mxu0
      %v4633 = vadd.f32 0.0, %v4632
      %v4634 = vpop.f32.mrb[0].mxu0
      %4635 = vmatprep.mubr.bf16.mxu0 0
      %4636 = vmatmul.mubr.bf16.gmra.mrb[0].mxu0 %v4514
      %v4637 = vpop.f32.mrb[0].mxu0
      %v4638 = vadd.f32 0.0, %v4637
      %v4639 = vpop.f32.mrb[0].mxu0
      %v4640 = vpop.f32.mrb[0].mxu0
      %v4641 = vadd.f32 0.0, %v4640
      %v4642 = vpop.f32.mrb[0].mxu0
      %4643 = vmatprep.mubr.bf16.mxu0 0
      %4644 = vmatmul.mubr.bf16.gmra.mrb[0].mxu0 %v4517
      %v4645 = vpop.f32.mrb[0].mxu0
      %v4646 = vadd.f32 0.0, %v4645
      %v4647 = vpop.f32.mrb[0].mxu0
      %v4648 = vpop.f32.mrb[0].mxu0
      %v4649 = vadd.f32 0.0, %v4648
      %v4650 = vpop.f32.mrb[0].mxu0
      %4651 = vmatprep.mubr.bf16.mxu0 0
      %4652 = vmatmul.mubr.bf16.gmra.mrb[0].mxu0 %v4520
      %v4653 = vpop.f32.mrb[0].mxu0
      %v4654 = vadd.f32 0.0, %v4653
      %v4655 = vpop.f32.mrb[0].mxu0
      %v4656 = vpop.f32.mrb[0].mxu0
      %v4657 = vadd.f32 0.0, %v4656
      %v4658 = vpop.f32.mrb[0].mxu0
      %4659 = vmatprep.mubr.bf16.mxu0 0
      %4660 = vmatmul.mubr.bf16.gmra.mrb[0].mxu0 %v4523
      %v4661 = vpop.f32.mrb[0].mxu0
      %v4662 = vadd.f32 0.0, %v4661
      %v4663 = vpop.f32.mrb[0].mxu0
      %v4664 = vpop.f32.mrb[0].mxu0
      %v4665 = vadd.f32 0.0, %v4664
      %v4666 = vpop.f32.mrb[0].mxu0
      %4667 = vmatprep.mubr.bf16.mxu0 0
      %4668 = vmatmul.mubr.bf16.gmra.mrb[0].mxu0 %v4526
      %v4669 = vpop.f32.mrb[0].mxu0
      %v4670 = vadd.f32 0.0, %v4669
      %v4671 = vpop.f32.mrb[0].mxu0
      %v4672 = vpop.f32.mrb[0].mxu0
      %v4673 = vadd.f32 0.0, %v4672
      %v4674 = vpop.f32.mrb[0].mxu0
      %4675 = vmatprep.mubr.bf16.mxu0 0
      %4676 = vmatmul.mubr.bf16.gmra.mrb[0].mxu0 %v4529
      %v4677 = vpop.f32.mrb[0].mxu0
      %v4678 = vadd.f32 0.0, %v4677
      %v4679 = vpop.f32.mrb[0].mxu0
      %v4680 = vpop.f32.mrb[0].mxu0
      %v4681 = vadd.f32 0.0, %v4680
      %v4682 = vpop.f32.mrb[0].mxu0
      %4683 = vmatprep.mubr.bf16.mxu0 0
      %4684 = vmatmul.mubr.bf16.gmra.mrb[0].mxu0 %v4532
      %v4685 = vpop.f32.mrb[0].mxu0
      %v4686 = vadd.f32 0.0, %v4685
      %v4687 = vpop.f32.mrb[0].mxu0
      %v4688 = vpop.f32.mrb[0].mxu0
      %v4689 = vadd.f32 0.0, %v4688
      %v4690 = vpop.f32.mrb[0].mxu0
      %4691 = vmatprep.mubr.bf16.mxu0 0
      %4692 = vmatmul.mubr.bf16.gmra.mrb[0].mxu0 %v4535
      %v4693 = vpop.f32.mrb[0].mxu0
      %v4694 = vadd.f32 0.0, %v4693
      %v4695 = vpop.f32.mrb[0].mxu0
      %v4696 = vpop.f32.mrb[0].mxu0
      %v4697 = vadd.f32 0.0, %v4696
      %v4698 = vpop.f32.mrb[0].mxu0
      %4699 = vmatprep.mubr.bf16.mxu0 0
      %4700 = vmatmul.mubr.bf16.gmra.mrb[0].mxu0 %v4538
      %v4701 = vpop.f32.mrb[0].mxu0
      %v4702 = vadd.f32 0.0, %v4701
      %v4703 = vpop.f32.mrb[0].mxu0
      %v4704 = vpop.f32.mrb[0].mxu0
      %v4705 = vadd.f32 0.0, %v4704
      %v4706 = vpop.f32.mrb[0].mxu0
      %4707 = vmatprep.mubr.bf16.mxu0 0
      %4708 = vmatmul.mubr.bf16.gmra.mrb[0].mxu0 %v4541
      %v4709 = vpop.f32.mrb[0].mxu0
      %v4710 = vadd.f32 0.0, %v4709
      %v4711 = vpop.f32.mrb[0].mxu0
      %v4712 = vpop.f32.mrb[0].mxu0
      %v4713 = vadd.f32 0.0, %v4712
      %v4714 = vpop.f32.mrb[0].mxu0
      %4715 = vmatprep.mubr.bf16.mxu0 0
      %4716 = vmatmul.mubr.bf16.gmra.mrb[0].mxu0 %v4544
      %v4717 = vpop.f32.mrb[0].mxu0
      %v4718 = vadd.f32 0.0, %v4717
      %v4719 = vpop.f32.mrb[0].mxu0
      %v4720 = vpop.f32.mrb[0].mxu0
      %v4721 = vadd.f32 0.0, %v4720
      %v4722 = vpop.f32.mrb[0].mxu0
      %4723 = vmatprep.mubr.bf16.mxu0 0
      %4724 = vmatmul.mubr.bf16.gmra.mrb[0].mxu0 %v4547
      %v4725 = vpop.f32.mrb[0].mxu0
      %v4726 = vadd.f32 0.0, %v4725
      %v4727 = vpop.f32.mrb[0].mxu0
      %v4728 = vpop.f32.mrb[0].mxu0
      %v4729 = vadd.f32 0.0, %v4728
      %v4730 = vpop.f32.mrb[0].mxu0
      %4731 = vmatprep.mubr.bf16.mxu0 0
      %4732 = vmatmul.mubr.bf16.gmra.mrb[0].mxu0 %v4550
      %v4733 = vpop.f32.mrb[0].mxu0
      %v4734 = vadd.f32 0.0, %v4733
      %v4735 = vpop.f32.mrb[0].mxu0
      %v4736 = vpop.f32.mrb[0].mxu0
      %v4737 = vadd.f32 0.0, %v4736
      %v4738 = vpop.f32.mrb[0].mxu0
      %4739 = vmatprep.mubr.bf16.mxu0 0
      %4740 = vmatmul.mubr.bf16.gmra.mrb[0].mxu0 %v4553
      %v4741 = vpop.f32.mrb[0].mxu0
      %v4742 = vadd.f32 0.0, %v4741
      %v4743 = vpop.f32.mrb[0].mxu0
      %v4744 = vpop.f32.mrb[0].mxu0
      %v4745 = vadd.f32 0.0, %v4744
      %v4746 = vpop.f32.mrb[0].mxu0
      %4747 = vmatprep.mubr.bf16.mxu0 0
      %4748 = vmatmul.mubr.bf16.gmra.mrb[0].mxu0 %v4556
      %v4749 = vpop.f32.mrb[0].mxu0
      %v4750 = vadd.f32 0.0, %v4749
      %v4751 = vpop.f32.mrb[0].mxu0
      %v4752 = vpop.f32.mrb[0].mxu0
      %v4753 = vadd.f32 0.0, %v4752
      %v4754 = vpop.f32.mrb[0].mxu0
      %4755 = vmatprep.mubr.bf16.mxu0 0
      %4756 = vmatmul.mubr.bf16.gmra.mrb[0].mxu0 %v4559
      %v4757 = vpop.f32.mrb[0].mxu0
      %v4758 = vadd.f32 0.0, %v4757
      %v4759 = vpop.f32.mrb[0].mxu0
      %v4760 = vpop.f32.mrb[0].mxu0
      %v4761 = vadd.f32 0.0, %v4760
      %v4762 = vpop.f32.mrb[0].mxu0
      %4763 = vmatprep.mubr.bf16.mxu0 0
      %4764 = vmatmul.mubr.bf16.gmra.mrb[0].mxu0 %v4562
      %v4765 = vpop.f32.mrb[0].mxu0
      %v4766 = vadd.f32 0.0, %v4765
      %v4767 = vpop.f32.mrb[0].mxu0
      %v4768 = vpop.f32.mrb[0].mxu0
      %v4769 = vadd.f32 0.0, %v4768
      %v4770 = vpop.f32.mrb[0].mxu0
      %4771 = vmatprep.mubr.bf16.mxu0 0
      %4772 = vmatmul.mubr.bf16.gmra.mrb[0].mxu0 %v4565
      %v4773 = vpop.f32.mrb[0].mxu0
      %v4774 = vadd.f32 0.0, %v4773
      %v4775 = vpop.f32.mrb[0].mxu0
      %v4776 = vpop.f32.mrb[0].mxu0
      %v4777 = vadd.f32 0.0, %v4776
      %v4778 = vpop.f32.mrb[0].mxu0
      %4779 = vmatprep.mubr.bf16.mxu0 0
      %4780 = vmatmul.mubr.bf16.gmra.mrb[0].mxu0 %v4568
      %v4781 = vpop.f32.mrb[0].mxu0
      %v4782 = vadd.f32 0.0, %v4781
      %v4783 = vpop.f32.mrb[0].mxu0
      %v4784 = vpop.f32.mrb[0].mxu0
      %v4785 = vadd.f32 0.0, %v4784
      %v4786 = vpop.f32.mrb[0].mxu0
      %4787 = vmatprep.mubr.bf16.mxu0 0
      %4788 = vmatmul.mubr.bf16.gmra.mrb[0].mxu0 %v4571
      %v4789 = vpop.f32.mrb[0].mxu0
      %v4790 = vadd.f32 0.0, %v4789
      %v4791 = vpop.f32.mrb[0].mxu0
      %v4792 = vpop.f32.mrb[0].mxu0
      %v4793 = vadd.f32 0.0, %v4792
      %v4794 = vpop.f32.mrb[0].mxu0
      %4795 = vmatprep.mubr.bf16.mxu0 0
      %4796 = vmatmul.mubr.bf16.gmra.mrb[0].mxu0 %v4574
      %v4797 = vpop.f32.mrb[0].mxu0
      %v4798 = vadd.f32 0.0, %v4797
      %v4799 = vpop.f32.mrb[0].mxu0
      %v4800 = vpop.f32.mrb[0].mxu0
      %v4801 = vadd.f32 0.0, %v4800
      %v4802 = vpop.f32.mrb[0].mxu0
      %4803 = vdwg.mxu0
      %v4804 = vadd.f32 %v4344, %v4614
      %v4805 = vadd.f32 %v4345, %v4617
      %v4806 = vadd.f32 %v4346, %v4622
      %v4807 = vadd.f32 %v4347, %v4625
      %v4808 = vadd.f32 %v4348, %v4630
      %v4809 = vadd.f32 %v4349, %v4633
      %v4810 = vadd.f32 %v4350, %v4638
      %v4811 = vadd.f32 %v4351, %v4641
      %v4812 = vadd.f32 %v4352, %v4646
      %v4813 = vadd.f32 %v4353, %v4649
      %v4814 = vadd.f32 %v4354, %v4654
      %v4815 = vadd.f32 %v4355, %v4657
      %v4816 = vadd.f32 %v4356, %v4662
      %v4817 = vadd.f32 %v4357, %v4665
      %v4818 = vadd.f32 %v4358, %v4670
      %v4819 = vadd.f32 %v4359, %v4673
      %v4820 = vadd.f32 %v4360, %v4678
      %v4821 = vadd.f32 %v4361, %v4681
      %v4822 = vadd.f32 %v4362, %v4686
      %v4823 = vadd.f32 %v4363, %v4689
      %v4824 = vadd.f32 %v4364, %v4694
      %v4825 = vadd.f32 %v4365, %v4697
      %v4826 = vadd.f32 %v4366, %v4702
      %v4827 = vadd.f32 %v4367, %v4705
      %v4828 = vadd.f32 %v4368, %v4710
      %v4829 = vadd.f32 %v4369, %v4713
      %v4830 = vadd.f32 %v4370, %v4718
      %v4831 = vadd.f32 %v4371, %v4721
      %v4832 = vadd.f32 %v4372, %v4726
      %v4833 = vadd.f32 %v4373, %v4729
      %v4834 = vadd.f32 %v4374, %v4734
      %v4835 = vadd.f32 %v4375, %v4737
      %v4836 = vadd.f32 %v4376, %v4742
      %v4837 = vadd.f32 %v4377, %v4745
      %v4838 = vadd.f32 %v4378, %v4750
      %v4839 = vadd.f32 %v4379, %v4753
      %v4840 = vadd.f32 %v4380, %v4758
      %v4841 = vadd.f32 %v4381, %v4761
      %v4842 = vadd.f32 %v4382, %v4766
      %v4843 = vadd.f32 %v4383, %v4769
      %v4844 = vadd.f32 %v4384, %v4774
      %v4845 = vadd.f32 %v4385, %v4777
      %v4846 = vadd.f32 %v4386, %v4782
      %v4847 = vadd.f32 %v4387, %v4785
      %v4848 = vadd.f32 %v4388, %v4790
      %v4849 = vadd.f32 %v4389, %v4793
      %v4850 = vadd.f32 %v4390, %v4798
      %v4851 = vadd.f32 %v4391, %v4801
      %v4852 = vld [vmem:[%s2] sm:$0x1]
      %v4854 = vlaneseq
      %v4855 = vshrl.u32 %v4854, 7
      %v4856 = vsub.s32 0, %v4855
      %v4857 = vrot.slane %v4852, %v4856
      %v4859 = vadd.f32 %v4804, %v4857
      %v4860 = vadd.f32 %v4805, %v4857
      %v4861 = vadd.f32 %v4806, %v4857
      %v4862 = vadd.f32 %v4807, %v4857
      %v4863 = vadd.f32 %v4808, %v4857
      %v4864 = vadd.f32 %v4809, %v4857
      %v4865 = vadd.f32 %v4810, %v4857
      %v4866 = vadd.f32 %v4811, %v4857
      %v4867 = vadd.f32 %v4812, %v4857
      %v4868 = vadd.f32 %v4813, %v4857
      %v4869 = vadd.f32 %v4814, %v4857
      %v4870 = vadd.f32 %v4815, %v4857
      %v4871 = vadd.f32 %v4816, %v4857
      %v4872 = vadd.f32 %v4817, %v4857
      %v4873 = vadd.f32 %v4818, %v4857
      %v4874 = vadd.f32 %v4819, %v4857
      %v4875 = vadd.f32 %v4820, %v4857
      %v4876 = vadd.f32 %v4821, %v4857
      %v4877 = vadd.f32 %v4822, %v4857
      %v4878 = vadd.f32 %v4823, %v4857
      %v4879 = vadd.f32 %v4824, %v4857
      %v4880 = vadd.f32 %v4825, %v4857
      %v4881 = vadd.f32 %v4826, %v4857
      %v4882 = vadd.f32 %v4827, %v4857
      %v4883 = vadd.f32 %v4828, %v4857
      %v4884 = vadd.f32 %v4829, %v4857
      %v4885 = vadd.f32 %v4830, %v4857
      %v4886 = vadd.f32 %v4831, %v4857
      %v4887 = vadd.f32 %v4832, %v4857
      %v4888 = vadd.f32 %v4833, %v4857
      %v4889 = vadd.f32 %v4834, %v4857
      %v4890 = vadd.f32 %v4835, %v4857
      %v4891 = vadd.f32 %v4836, %v4857
      %v4892 = vadd.f32 %v4837, %v4857
      %v4893 = vadd.f32 %v4838, %v4857
      %v4894 = vadd.f32 %v4839, %v4857
      %v4895 = vadd.f32 %v4840, %v4857
      %v4896 = vadd.f32 %v4841, %v4857
      %v4897 = vadd.f32 %v4842, %v4857
      %v4898 = vadd.f32 %v4843, %v4857
      %v4899 = vadd.f32 %v4844, %v4857
      %v4900 = vadd.f32 %v4845, %v4857
      %v4901 = vadd.f32 %v4846, %v4857
      %v4902 = vadd.f32 %v4847, %v4857
      %v4903 = vadd.f32 %v4848, %v4857
      %v4904 = vadd.f32 %v4849, %v4857
      %v4905 = vadd.f32 %v4850, %v4857
      %v4906 = vadd.f32 %v4851, %v4857
      %v4907 = vmax.f32 %v4859, 0.0
      %v4908 = vmax.f32 %v4860, 0.0
      %v4909 = vmax.f32 %v4861, 0.0
      %v4910 = vmax.f32 %v4862, 0.0
      %v4911 = vmax.f32 %v4863, 0.0
      %v4912 = vmax.f32 %v4864, 0.0
      %v4913 = vmax.f32 %v4865, 0.0
      %v4914 = vmax.f32 %v4866, 0.0
      %v4915 = vmax.f32 %v4867, 0.0
      %v4916 = vmax.f32 %v4868, 0.0
      %v4917 = vmax.f32 %v4869, 0.0
      %v4918 = vmax.f32 %v4870, 0.0
      %v4919 = vmax.f32 %v4871, 0.0
      %v4920 = vmax.f32 %v4872, 0.0
      %v4921 = vmax.f32 %v4873, 0.0
      %v4922 = vmax.f32 %v4874, 0.0
      %v4923 = vmax.f32 %v4875, 0.0
      %v4924 = vmax.f32 %v4876, 0.0
      %v4925 = vmax.f32 %v4877, 0.0
      %v4926 = vmax.f32 %v4878, 0.0
      %v4927 = vmax.f32 %v4879, 0.0
      %v4928 = vmax.f32 %v4880, 0.0
      %v4929 = vmax.f32 %v4881, 0.0
      %v4930 = vmax.f32 %v4882, 0.0
      %v4931 = vmax.f32 %v4883, 0.0
      %v4932 = vmax.f32 %v4884, 0.0
      %v4933 = vmax.f32 %v4885, 0.0
      %v4934 = vmax.f32 %v4886, 0.0
      %v4935 = vmax.f32 %v4887, 0.0
      %v4936 = vmax.f32 %v4888, 0.0
      %v4937 = vmax.f32 %v4889, 0.0
      %v4938 = vmax.f32 %v4890, 0.0
      %v4939 = vmax.f32 %v4891, 0.0
      %v4940 = vmax.f32 %v4892, 0.0
      %v4941 = vmax.f32 %v4893, 0.0
      %v4942 = vmax.f32 %v4894, 0.0
      %v4943 = vmax.f32 %v4895, 0.0
      %v4944 = vmax.f32 %v4896, 0.0
      %v4945 = vmax.f32 %v4897, 0.0
      %v4946 = vmax.f32 %v4898, 0.0
      %v4947 = vmax.f32 %v4899, 0.0
      %v4948 = vmax.f32 %v4900, 0.0
      %v4949 = vmax.f32 %v4901, 0.0
      %v4950 = vmax.f32 %v4902, 0.0
      %v4951 = vmax.f32 %v4903, 0.0
      %v4952 = vmax.f32 %v4904, 0.0
      %v4953 = vmax.f32 %v4905, 0.0
      %v4954 = vmax.f32 %v4906, 0.0
      %v4955 = vld [vmem:[%s5] sm:$0xff]
      %v4956 = vld [vmem:[%s5 + $0x8] sm:$0xff]
      %v4957 = vld [vmem:[%s5 + $0x10] sm:$0xff]
      %v4958 = vld [vmem:[%s5 + $0x18] sm:$0xff]
      %v4959 = vld [vmem:[%s5 + $0x20] sm:$0xff]
      %v4960 = vld [vmem:[%s5 + $0x28] sm:$0xff]
      %v4961 = vld [vmem:[%s5 + $0x30] sm:$0xff]
      %v4962 = vld [vmem:[%s5 + $0x38] sm:$0xff]
      %v4963 = vld [vmem:[%s5 + $0x40] sm:$0xff]
      %v4964 = vld [vmem:[%s5 + $0x48] sm:$0xff]
      %v4965 = vld [vmem:[%s5 + $0x50] sm:$0xff]
      %v4966 = vld [vmem:[%s5 + $0x58] sm:$0xff]
      %v4967 = vld [vmem:[%s5 + $0x60] sm:$0xff]
      %v4968 = vld [vmem:[%s5 + $0x68] sm:$0xff]
      %v4969 = vld [vmem:[%s5 + $0x70] sm:$0xff]
      %v4970 = vld [vmem:[%s5 + $0x78] sm:$0xff]
      %v4971 = vld [vmem:[%s5 + $0x80] sm:$0xff]
      %v4972 = vld [vmem:[%s5 + $0x88] sm:$0xff]
      %v4973 = vld [vmem:[%s5 + $0x90] sm:$0xff]
      %v4974 = vld [vmem:[%s5 + $0x98] sm:$0xff]
      %v4975 = vld [vmem:[%s5 + $0xa0] sm:$0xff]
      %v4976 = vld [vmem:[%s5 + $0xa8] sm:$0xff]
      %v4977 = vld [vmem:[%s5 + $0xb0] sm:$0xff]
      %v4978 = vld [vmem:[%s5 + $0xb8] sm:$0xff]
      %v4979 = vld [vmem:[%s5 + $0xc0] sm:$0xff]
      %v4980 = vld [vmem:[%s5 + $0xc8] sm:$0xff]
      %v4981 = vld [vmem:[%s5 + $0xd0] sm:$0xff]
      %v4982 = vld [vmem:[%s5 + $0xd8] sm:$0xff]
      %v4983 = vld [vmem:[%s5 + $0xe0] sm:$0xff]
      %v4984 = vld [vmem:[%s5 + $0xe8] sm:$0xff]
      %v4985 = vld [vmem:[%s5 + $0xf0] sm:$0xff]
      %v4986 = vld [vmem:[%s5 + $0xf8] sm:$0xff]
      %v4987 = vld [vmem:[%s5 + $0x100] sm:$0xff]
      %v4988 = vld [vmem:[%s5 + $0x108] sm:$0xff]
      %v4989 = vld [vmem:[%s5 + $0x110] sm:$0xff]
      %v4990 = vld [vmem:[%s5 + $0x118] sm:$0xff]
      %v4991 = vld [vmem:[%s5 + $0x120] sm:$0xff]
      %v4992 = vld [vmem:[%s5 + $0x128] sm:$0xff]
      %v4993 = vld [vmem:[%s5 + $0x130] sm:$0xff]
      %v4994 = vld [vmem:[%s5 + $0x138] sm:$0xff]
      %v4995 = vld [vmem:[%s5 + $0x140] sm:$0xff]
      %v4996 = vld [vmem:[%s5 + $0x148] sm:$0xff]
      %v4997 = vld [vmem:[%s5 + $0x150] sm:$0xff]
      %v4998 = vld [vmem:[%s5 + $0x158] sm:$0xff]
      %v4999 = vld [vmem:[%s5 + $0x160] sm:$0xff]
      %v5000 = vld [vmem:[%s5 + $0x168] sm:$0xff]
      %v5001 = vld [vmem:[%s5 + $0x170] sm:$0xff]
      %v5002 = vld [vmem:[%s5 + $0x178] sm:$0xff]
      %5004 = vset.pattern.permute.xlu0 0
      %5005 = vperm.xlu0 %5004, %v4955
      %v5006 = vpop.permute.xlu0 %5005
      %5009 = vset.pattern.permute.xlu0 0
      %5010 = vperm.xlu0 %5009, %v4956
      %v5011 = vpop.permute.xlu0 %5010
      %5014 = vset.pattern.permute.xlu0 0
      %5015 = vperm.xlu0 %5014, %v4957
      %v5016 = vpop.permute.xlu0 %5015
      %5019 = vset.pattern.permute.xlu0 0
      %5020 = vperm.xlu0 %5019, %v4958
      %v5021 = vpop.permute.xlu0 %5020
      %5024 = vset.pattern.permute.xlu0 0
      %5025 = vperm.xlu0 %5024, %v4959
      %v5026 = vpop.permute.xlu0 %5025
      %5029 = vset.pattern.permute.xlu0 0
      %5030 = vperm.xlu0 %5029, %v4960
      %v5031 = vpop.permute.xlu0 %5030
      %5034 = vset.pattern.permute.xlu0 0
      %5035 = vperm.xlu0 %5034, %v4961
      %v5036 = vpop.permute.xlu0 %5035
      %5039 = vset.pattern.permute.xlu0 0
      %5040 = vperm.xlu0 %5039, %v4962
      %v5041 = vpop.permute.xlu0 %5040
      %5044 = vset.pattern.permute.xlu0 0
      %5045 = vperm.xlu0 %5044, %v4963
      %v5046 = vpop.permute.xlu0 %5045
      %5049 = vset.pattern.permute.xlu0 0
      %5050 = vperm.xlu0 %5049, %v4964
      %v5051 = vpop.permute.xlu0 %5050
      %5054 = vset.pattern.permute.xlu0 0
      %5055 = vperm.xlu0 %5054, %v4965
      %v5056 = vpop.permute.xlu0 %5055
      %5059 = vset.pattern.permute.xlu0 0
      %5060 = vperm.xlu0 %5059, %v4966
      %v5061 = vpop.permute.xlu0 %5060
      %5064 = vset.pattern.permute.xlu0 0
      %5065 = vperm.xlu0 %5064, %v4967
      %v5066 = vpop.permute.xlu0 %5065
      %5069 = vset.pattern.permute.xlu0 0
      %5070 = vperm.xlu0 %5069, %v4968
      %v5071 = vpop.permute.xlu0 %5070
      %5074 = vset.pattern.permute.xlu0 0
      %5075 = vperm.xlu0 %5074, %v4969
      %v5076 = vpop.permute.xlu0 %5075
      %5079 = vset.pattern.permute.xlu0 0
      %5080 = vperm.xlu0 %5079, %v4970
      %v5081 = vpop.permute.xlu0 %5080
      %5084 = vset.pattern.permute.xlu0 0
      %5085 = vperm.xlu0 %5084, %v4971
      %v5086 = vpop.permute.xlu0 %5085
      %5089 = vset.pattern.permute.xlu0 0
      %5090 = vperm.xlu0 %5089, %v4972
      %v5091 = vpop.permute.xlu0 %5090
      %5094 = vset.pattern.permute.xlu0 0
      %5095 = vperm.xlu0 %5094, %v4973
      %v5096 = vpop.permute.xlu0 %5095
      %5099 = vset.pattern.permute.xlu0 0
      %5100 = vperm.xlu0 %5099, %v4974
      %v5101 = vpop.permute.xlu0 %5100
      %5104 = vset.pattern.permute.xlu0 0
      %5105 = vperm.xlu0 %5104, %v4975
      %v5106 = vpop.permute.xlu0 %5105
      %5109 = vset.pattern.permute.xlu0 0
      %5110 = vperm.xlu0 %5109, %v4976
      %v5111 = vpop.permute.xlu0 %5110
      %5114 = vset.pattern.permute.xlu0 0
      %5115 = vperm.xlu0 %5114, %v4977
      %v5116 = vpop.permute.xlu0 %5115
      %5119 = vset.pattern.permute.xlu0 0
      %5120 = vperm.xlu0 %5119, %v4978
      %v5121 = vpop.permute.xlu0 %5120
      %5124 = vset.pattern.permute.xlu0 0
      %5125 = vperm.xlu0 %5124, %v4979
      %v5126 = vpop.permute.xlu0 %5125
      %5129 = vset.pattern.permute.xlu0 0
      %5130 = vperm.xlu0 %5129, %v4980
      %v5131 = vpop.permute.xlu0 %5130
      %5134 = vset.pattern.permute.xlu0 0
      %5135 = vperm.xlu0 %5134, %v4981
      %v5136 = vpop.permute.xlu0 %5135
      %5139 = vset.pattern.permute.xlu0 0
      %5140 = vperm.xlu0 %5139, %v4982
      %v5141 = vpop.permute.xlu0 %5140
      %5144 = vset.pattern.permute.xlu0 0
      %5145 = vperm.xlu0 %5144, %v4983
      %v5146 = vpop.permute.xlu0 %5145
      %5149 = vset.pattern.permute.xlu0 0
      %5150 = vperm.xlu0 %5149, %v4984
      %v5151 = vpop.permute.xlu0 %5150
      %5154 = vset.pattern.permute.xlu0 0
      %5155 = vperm.xlu0 %5154, %v4985
      %v5156 = vpop.permute.xlu0 %5155
      %5159 = vset.pattern.permute.xlu0 0
      %5160 = vperm.xlu0 %5159, %v4986
      %v5161 = vpop.permute.xlu0 %5160
      %5164 = vset.pattern.permute.xlu0 0
      %5165 = vperm.xlu0 %5164, %v4987
      %v5166 = vpop.permute.xlu0 %5165
      %5169 = vset.pattern.permute.xlu0 0
      %5170 = vperm.xlu0 %5169, %v4988
      %v5171 = vpop.permute.xlu0 %5170
      %5174 = vset.pattern.permute.xlu0 0
      %5175 = vperm.xlu0 %5174, %v4989
      %v5176 = vpop.permute.xlu0 %5175
      %5179 = vset.pattern.permute.xlu0 0
      %5180 = vperm.xlu0 %5179, %v4990
      %v5181 = vpop.permute.xlu0 %5180
      %5184 = vset.pattern.permute.xlu0 0
      %5185 = vperm.xlu0 %5184, %v4991
      %v5186 = vpop.permute.xlu0 %5185
      %5189 = vset.pattern.permute.xlu0 0
      %5190 = vperm.xlu0 %5189, %v4992
      %v5191 = vpop.permute.xlu0 %5190
      %5194 = vset.pattern.permute.xlu0 0
      %5195 = vperm.xlu0 %5194, %v4993
      %v5196 = vpop.permute.xlu0 %5195
      %5199 = vset.pattern.permute.xlu0 0
      %5200 = vperm.xlu0 %5199, %v4994
      %v5201 = vpop.permute.xlu0 %5200
      %5204 = vset.pattern.permute.xlu0 0
      %5205 = vperm.xlu0 %5204, %v4995
      %v5206 = vpop.permute.xlu0 %5205
      %5209 = vset.pattern.permute.xlu0 0
      %5210 = vperm.xlu0 %5209, %v4996
      %v5211 = vpop.permute.xlu0 %5210
      %5214 = vset.pattern.permute.xlu0 0
      %5215 = vperm.xlu0 %5214, %v4997
      %v5216 = vpop.permute.xlu0 %5215
      %5219 = vset.pattern.permute.xlu0 0
      %5220 = vperm.xlu0 %5219, %v4998
      %v5221 = vpop.permute.xlu0 %5220
      %5224 = vset.pattern.permute.xlu0 0
      %5225 = vperm.xlu0 %5224, %v4999
      %v5226 = vpop.permute.xlu0 %5225
      %5229 = vset.pattern.permute.xlu0 0
      %5230 = vperm.xlu0 %5229, %v5000
      %v5231 = vpop.permute.xlu0 %5230
      %5234 = vset.pattern.permute.xlu0 0
      %5235 = vperm.xlu0 %5234, %v5001
      %v5236 = vpop.permute.xlu0 %5235
      %5239 = vset.pattern.permute.xlu0 0
      %5240 = vperm.xlu0 %5239, %v5002
      %v5241 = vpop.permute.xlu0 %5240
      %v5243 = vmul.f32 %v4907, %v5006
      %v5244 = vmul.f32 %v4908, %v5011
      %v5245 = vmul.f32 %v4909, %v5016
      %v5246 = vmul.f32 %v4910, %v5021
      %v5247 = vmul.f32 %v4911, %v5026
      %v5248 = vmul.f32 %v4912, %v5031
      %v5249 = vmul.f32 %v4913, %v5036
      %v5250 = vmul.f32 %v4914, %v5041
      %v5251 = vmul.f32 %v4915, %v5046
      %v5252 = vmul.f32 %v4916, %v5051
      %v5253 = vmul.f32 %v4917, %v5056
      %v5254 = vmul.f32 %v4918, %v5061
      %v5255 = vmul.f32 %v4919, %v5066
      %v5256 = vmul.f32 %v4920, %v5071
      %v5257 = vmul.f32 %v4921, %v5076
      %v5258 = vmul.f32 %v4922, %v5081
      %v5259 = vmul.f32 %v4923, %v5086
      %v5260 = vmul.f32 %v4924, %v5091
      %v5261 = vmul.f32 %v4925, %v5096
      %v5262 = vmul.f32 %v4926, %v5101
      %v5263 = vmul.f32 %v4927, %v5106
      %v5264 = vmul.f32 %v4928, %v5111
      %v5265 = vmul.f32 %v4929, %v5116
      %v5266 = vmul.f32 %v4930, %v5121
      %v5267 = vmul.f32 %v4931, %v5126
      %v5268 = vmul.f32 %v4932, %v5131
      %v5269 = vmul.f32 %v4933, %v5136
      %v5270 = vmul.f32 %v4934, %v5141
      %v5271 = vmul.f32 %v4935, %v5146
      %v5272 = vmul.f32 %v4936, %v5151
      %v5273 = vmul.f32 %v4937, %v5156
      %v5274 = vmul.f32 %v4938, %v5161
      %v5275 = vmul.f32 %v4939, %v5166
      %v5276 = vmul.f32 %v4940, %v5171
      %v5277 = vmul.f32 %v4941, %v5176
      %v5278 = vmul.f32 %v4942, %v5181
      %v5279 = vmul.f32 %v4943, %v5186
      %v5280 = vmul.f32 %v4944, %v5191
      %v5281 = vmul.f32 %v4945, %v5196
      %v5282 = vmul.f32 %v4946, %v5201
      %v5283 = vmul.f32 %v4947, %v5206
      %v5284 = vmul.f32 %v4948, %v5211
      %v5285 = vmul.f32 %v4949, %v5216
      %v5286 = vmul.f32 %v4950, %v5221
      %v5287 = vmul.f32 %v4951, %v5226
      %v5288 = vmul.f32 %v4952, %v5231
      %v5289 = vmul.f32 %v4953, %v5236
      %v5290 = vmul.f32 %v4954, %v5241
      %v5291 = vpack.c.bf16 %v5244, %v5243
      %v5292 = vpack.c.bf16 %v5246, %v5245
      %v5293 = vpack.c.bf16 %v5248, %v5247
      %v5294 = vpack.c.bf16 %v5250, %v5249
      %v5295 = vpack.c.bf16 %v5252, %v5251
      %v5296 = vpack.c.bf16 %v5254, %v5253
      %v5297 = vpack.c.bf16 %v5256, %v5255
      %v5298 = vpack.c.bf16 %v5258, %v5257
      %v5299 = vpack.c.bf16 %v5260, %v5259
      %v5300 = vpack.c.bf16 %v5262, %v5261
      %v5301 = vpack.c.bf16 %v5264, %v5263
      %v5302 = vpack.c.bf16 %v5266, %v5265
      %v5303 = vpack.c.bf16 %v5268, %v5267
      %v5304 = vpack.c.bf16 %v5270, %v5269
      %v5305 = vpack.c.bf16 %v5272, %v5271
      %v5306 = vpack.c.bf16 %v5274, %v5273
      %v5307 = vpack.c.bf16 %v5276, %v5275
      %v5308 = vpack.c.bf16 %v5278, %v5277
      %v5309 = vpack.c.bf16 %v5280, %v5279
      %v5310 = vpack.c.bf16 %v5282, %v5281
      %v5311 = vpack.c.bf16 %v5284, %v5283
      %v5312 = vpack.c.bf16 %v5286, %v5285
      %v5313 = vpack.c.bf16 %v5288, %v5287
      %v5314 = vpack.c.bf16 %v5290, %v5289
      %5315 = vst [vmem:[#allocation3 + $0x18] sm:$0xff] %v5291
      %5316 = vst [vmem:[#allocation3 + $0x20] sm:$0xff] %v5292
      %5317 = vst [vmem:[#allocation3 + $0x28] sm:$0xff] %v5293
      %5318 = vst [vmem:[#allocation3 + $0x30] sm:$0xff] %v5294
      %5319 = vst [vmem:[#allocation3 + $0x38] sm:$0xff] %v5295
      %5320 = vst [vmem:[#allocation3 + $0x40] sm:$0xff] %v5296
      %5321 = vst [vmem:[#allocation3 + $0x48] sm:$0xff] %v5297
      %5322 = vst [vmem:[#allocation3 + $0x50] sm:$0xff] %v5298
      %5323 = vst [vmem:[#allocation3 + $0x58] sm:$0xff] %v5299
      %5324 = vst [vmem:[#allocation3 + $0x60] sm:$0xff] %v5300
      %5325 = vst [vmem:[#allocation3 + $0x68] sm:$0xff] %v5301
      %5326 = vst [vmem:[#allocation3 + $0x70] sm:$0xff] %v5302
      %5327 = vst [vmem:[#allocation3 + $0x78] sm:$0xff] %v5303
      %5328 = vst [vmem:[#allocation3 + $0x80] sm:$0xff] %v5304
      %5329 = vst [vmem:[#allocation3 + $0x88] sm:$0xff] %v5305
      %5330 = vst [vmem:[#allocation3 + $0x90] sm:$0xff] %v5306
      %5331 = vst [vmem:[#allocation3 + $0x98] sm:$0xff] %v5307
      %5332 = vst [vmem:[#allocation3 + $0xa0] sm:$0xff] %v5308
      %5333 = vst [vmem:[#allocation3 + $0xa8] sm:$0xff] %v5309
      %5334 = vst [vmem:[#allocation3 + $0xb0] sm:$0xff] %v5310
      %5335 = vst [vmem:[#allocation3 + $0xb8] sm:$0xff] %v5311
      %5336 = vst [vmem:[#allocation3 + $0xc0] sm:$0xff] %v5312
      %5337 = vst [vmem:[#allocation3 + $0xc8] sm:$0xff] %v5313
      %5338 = vst [vmem:[#allocation3 + $0xd0] sm:$0xff] %v5314
      %v5339 = vld [vmem:[#allocation3 + $0x8] sm:$0xf8]
      %v5340 = vld [vmem:[#allocation3 + $0x10] sm:$0xff]
      %v5341 = vld [vmem:[#allocation3 + $0x18] sm:$0xff]
      %v5342 = vld [vmem:[#allocation3 + $0x20] sm:$0xff]
      %v5343 = vld [vmem:[#allocation3 + $0x28] sm:$0xff]
      %v5344 = vld [vmem:[#allocation3 + $0x30] sm:$0xff]
      %v5345 = vld [vmem:[#allocation3 + $0x38] sm:$0xff]
      %v5346 = vld [vmem:[#allocation3 + $0x40] sm:$0xff]
      %v5347 = vld [vmem:[#allocation3 + $0x48] sm:$0xff]
      %v5348 = vld [vmem:[#allocation3 + $0x50] sm:$0xff]
      %v5349 = vld [vmem:[#allocation3 + $0x58] sm:$0xff]
      %v5350 = vld [vmem:[#allocation3 + $0x60] sm:$0xff]
      %v5351 = vld [vmem:[#allocation3 + $0x68] sm:$0xff]
      %v5352 = vld [vmem:[#allocation3 + $0x70] sm:$0xff]
      %v5353 = vld [vmem:[#allocation3 + $0x78] sm:$0xff]
      %v5354 = vld [vmem:[#allocation3 + $0x80] sm:$0xff]
      %v5355 = vld [vmem:[#allocation3 + $0x88] sm:$0xff]
      %v5356 = vld [vmem:[#allocation3 + $0x90] sm:$0xff]
      %v5357 = vld [vmem:[#allocation3 + $0x98] sm:$0xff]
      %v5358 = vld [vmem:[#allocation3 + $0xa0] sm:$0xff]
      %v5359 = vld [vmem:[#allocation3 + $0xa8] sm:$0xff]
      %v5360 = vld [vmem:[#allocation3 + $0xb0] sm:$0xff]
      %v5361 = vld [vmem:[#allocation3 + $0xb8] sm:$0xff]
      %v5362 = vld [vmem:[#allocation3 + $0xc0] sm:$0xff]
      %v5363 = vld [vmem:[#allocation3 + $0xc8] sm:$0xf]
      %v5364 = vld [vmem:[%s3] sm:$0xf]
      %v5365 = vld [vmem:[%s3 + $0x4] sm:$0xf]
      %v5366 = vld [vmem:[%s3 + $0x8] sm:$0xf]
      %v5367 = vld [vmem:[%s3 + $0xc] sm:$0xf]
      %v5368 = vld [vmem:[%s3 + $0x10] sm:$0xf]
      %v5369 = vld [vmem:[%s3 + $0x14] sm:$0xf]
      %v5370 = vld [vmem:[%s3 + $0x18] sm:$0xf]
      %v5371 = vld [vmem:[%s3 + $0x1c] sm:$0xf]
      %v5372 = vld [vmem:[%s3 + $0x20] sm:$0xf]
      %v5373 = vld [vmem:[%s3 + $0x24] sm:$0xf]
      %v5374 = vld [vmem:[%s3 + $0x28] sm:$0xf]
      %v5375 = vld [vmem:[%s3 + $0x2c] sm:$0xf]
      %v5376 = vld [vmem:[%s3 + $0x30] sm:$0xf]
      %v5377 = vld [vmem:[%s3 + $0x34] sm:$0xf]
      %v5378 = vld [vmem:[%s3 + $0x38] sm:$0xf]
      %v5379 = vld [vmem:[%s3 + $0x3c] sm:$0xf]
      %v5380 = vld [vmem:[#allocation3 + $0x8] sm:$0xf0]
      %s5381 = scalar_lea.vmem %s3, 64
      %v5382 = vld [vmem:[%s5381] sm:$0xf]
      %v5383 = vld [vmem:[%s5381 + $0x4] sm:$0xf]
      %v5384 = vld [vmem:[%s5381 + $0x8] sm:$0xf]
      %v5385 = vld [vmem:[%s5381 + $0xc] sm:$0xf]
      %v5386 = vld [vmem:[%s5381 + $0x10] sm:$0xf]
      %v5387 = vld [vmem:[%s5381 + $0x14] sm:$0xf]
      %v5388 = vld [vmem:[%s5381 + $0x18] sm:$0xf]
      %v5389 = vld [vmem:[%s5381 + $0x1c] sm:$0xf]
      %v5390 = vld [vmem:[%s5381 + $0x20] sm:$0xf]
      %v5391 = vld [vmem:[%s5381 + $0x24] sm:$0xf]
      %v5392 = vld [vmem:[%s5381 + $0x28] sm:$0xf]
      %v5393 = vld [vmem:[%s5381 + $0x2c] sm:$0xf]
      %v5394 = vld [vmem:[%s5381 + $0x30] sm:$0xf]
      %v5395 = vld [vmem:[%s5381 + $0x34] sm:$0xf]
      %v5396 = vld [vmem:[%s5381 + $0x38] sm:$0xf]
      %v5397 = vld [vmem:[%s5381 + $0x3c] sm:$0xf]
      %v5423 = vrot.slane %v5380, 4
      %v5424 = vrot.slane %v5340, 4
      %v5425 = vsel %vm561, %v5423, %v5424
      %v5426 = vrot.slane %v5341, 4
      %v5427 = vsel %vm561, %v5424, %v5426
      %v5428 = vrot.slane %v5342, 4
      %v5429 = vsel %vm561, %v5426, %v5428
      %v5430 = vrot.slane %v5343, 4
      %v5431 = vsel %vm561, %v5428, %v5430
      %v5432 = vrot.slane %v5344, 4
      %v5433 = vsel %vm561, %v5430, %v5432
      %v5434 = vrot.slane %v5345, 4
      %v5435 = vsel %vm561, %v5432, %v5434
      %v5436 = vrot.slane %v5346, 4
      %v5437 = vsel %vm561, %v5434, %v5436
      %v5438 = vrot.slane %v5347, 4
      %v5439 = vsel %vm561, %v5436, %v5438
      %v5440 = vrot.slane %v5348, 4
      %v5441 = vsel %vm561, %v5438, %v5440
      %v5442 = vrot.slane %v5349, 4
      %v5443 = vsel %vm561, %v5440, %v5442
      %v5444 = vrot.slane %v5350, 4
      %v5445 = vsel %vm561, %v5442, %v5444
      %v5446 = vrot.slane %v5351, 4
      %v5447 = vsel %vm561, %v5444, %v5446
      %v5448 = vrot.slane %v5352, 4
      %v5449 = vsel %vm561, %v5446, %v5448
      %v5450 = vrot.slane %v5353, 4
      %v5451 = vsel %vm561, %v5448, %v5450
      %v5452 = vrot.slane %v5354, 4
      %v5453 = vsel %vm561, %v5450, %v5452
      %v5454 = vrot.slane %v5355, 4
      %v5455 = vsel %vm561, %v5452, %v5454
      %v5456 = vrot.slane %v5356, 4
      %v5457 = vsel %vm561, %v5454, %v5456
      %v5458 = vrot.slane %v5357, 4
      %v5459 = vsel %vm561, %v5456, %v5458
      %v5460 = vrot.slane %v5358, 4
      %v5461 = vsel %vm561, %v5458, %v5460
      %v5462 = vrot.slane %v5359, 4
      %v5463 = vsel %vm561, %v5460, %v5462
      %v5464 = vrot.slane %v5360, 4
      %v5465 = vsel %vm561, %v5462, %v5464
      %v5466 = vrot.slane %v5361, 4
      %v5467 = vsel %vm561, %v5464, %v5466
      %v5468 = vrot.slane %v5362, 4
      %v5469 = vsel %vm561, %v5466, %v5468
      %v5470 = vrot.slane %v5363, 4
      %v5471 = vsel %vm561, %v5468, %v5470
      %v5512 = vunpack.c.l.b16 %v5382
      %v5513 = vunpack.c.l.b16 %v5383
      %v5514 = vunpack.c.l.b16 %v5384
      %v5515 = vunpack.c.l.b16 %v5385
      %v5516 = vunpack.c.l.b16 %v5386
      %v5517 = vunpack.c.l.b16 %v5387
      %v5518 = vunpack.c.l.b16 %v5388
      %v5519 = vunpack.c.l.b16 %v5389
      %v5520 = vunpack.c.l.b16 %v5390
      %v5521 = vunpack.c.l.b16 %v5391
      %v5522 = vunpack.c.l.b16 %v5392
      %v5523 = vunpack.c.l.b16 %v5393
      %v5524 = vunpack.c.l.b16 %v5394
      %v5525 = vunpack.c.l.b16 %v5395
      %v5526 = vunpack.c.l.b16 %v5396
      %v5527 = vunpack.c.l.b16 %v5397
      %v5528 = vpack.c.b16 %v5513, %v5512
      %v5529 = vpack.c.b16 %v5515, %v5514
      %v5530 = vpack.c.b16 %v5517, %v5516
      %v5531 = vpack.c.b16 %v5519, %v5518
      %v5532 = vpack.c.b16 %v5521, %v5520
      %v5533 = vpack.c.b16 %v5523, %v5522
      %v5534 = vpack.c.b16 %v5525, %v5524
      %v5535 = vpack.c.b16 %v5527, %v5526
      %5544 = vmatprep.subr.bf16.mxu0 0
      %5545 = vmatpush1.bf16.msra.mxu0 %v5528
      %5546 = vmatprep.subr.bf16.mxu0 0
      %5547 = vmatpush1.bf16.msra.mxu0 %v5529
      %5548 = vmatprep.subr.bf16.mxu0 0
      %5549 = vmatpush1.bf16.msra.mxu0 %v5530
      %5550 = vmatprep.subr.bf16.mxu0 0
      %5551 = vmatpush1.bf16.msra.mxu0 %v5531
      %5552 = vmatprep.subr.bf16.mxu0 0
      %5553 = vmatpush1.bf16.msra.mxu0 %v5532
      %5554 = vmatprep.subr.bf16.mxu0 0
      %5555 = vmatpush1.bf16.msra.mxu0 %v5533
      %5556 = vmatprep.subr.bf16.mxu0 0
      %5557 = vmatpush1.bf16.msra.mxu0 %v5534
      %5558 = vmatprep.subr.bf16.mxu0 0
      %5559 = vmatpush1.bf16.msra.mxu0 %v5535
      %5560 = vmatprep.subr.bf16.mxu0 0
      %5561 = vmatpush1.bf16.msra.mxu0 0
      %5562 = vmatprep.subr.bf16.mxu0 0
      %5563 = vmatpush1.bf16.msra.mxu0 0
      %5564 = vmatprep.subr.bf16.mxu0 0
      %5565 = vmatpush1.bf16.msra.mxu0 0
      %5566 = vmatprep.subr.bf16.mxu0 0
      %5567 = vmatpush1.bf16.msra.mxu0 0
      %5568 = vmatprep.subr.bf16.mxu0 0
      %5569 = vmatpush1.bf16.msra.mxu0 0
      %5570 = vmatprep.subr.bf16.mxu0 0
      %5571 = vmatpush1.bf16.msra.mxu0 0
      %5572 = vmatprep.subr.bf16.mxu0 0
      %5573 = vmatpush1.bf16.msra.mxu0 0
      %5574 = vmatprep.subr.bf16.mxu0 0
      %5575 = vmatpush1.bf16.msra.mxu0 0
      %5576 = vmatprep.mubr.bf16.mxu0 0
      %5577 = vmatmul.mubr.bf16.gmra.mrb[0].mxu0 %v5425
      %v5578 = vpop.f32.mrb[0].mxu0
      %v5579 = vadd.f32 0.0, %v5578
      %v5580 = vpop.f32.mrb[0].mxu0
      %v5581 = vpop.f32.mrb[0].mxu0
      %v5582 = vadd.f32 0.0, %v5581
      %v5583 = vpop.f32.mrb[0].mxu0
      %5584 = vmatprep.mubr.bf16.mxu0 0
      %5585 = vmatmul.mubr.bf16.gmra.mrb[0].mxu0 %v5427
      %v5586 = vpop.f32.mrb[0].mxu0
      %v5587 = vpop.f32.mrb[0].mxu0
      %v5588 = vpop.f32.mrb[0].mxu0
      %v5589 = vadd.f32 0.0, %v5588
      %v5590 = vpop.f32.mrb[0].mxu0
      %5591 = vmatprep.mubr.bf16.mxu0 0
      %5592 = vmatmul.mubr.bf16.gmra.mrb[0].mxu0 %v5429
      %v5593 = vpop.f32.mrb[0].mxu0
      %v5594 = vadd.f32 0.0, %v5593
      %v5595 = vpop.f32.mrb[0].mxu0
      %v5596 = vpop.f32.mrb[0].mxu0
      %v5597 = vpop.f32.mrb[0].mxu0
      %5598 = vmatprep.mubr.bf16.mxu0 0
      %5599 = vmatmul.mubr.bf16.gmra.mrb[0].mxu0 %v5431
      %v5600 = vpop.f32.mrb[0].mxu0
      %v5601 = vadd.f32 0.0, %v5600
      %v5602 = vpop.f32.mrb[0].mxu0
      %v5603 = vpop.f32.mrb[0].mxu0
      %v5604 = vadd.f32 0.0, %v5603
      %v5605 = vpop.f32.mrb[0].mxu0
      %5606 = vmatprep.mubr.bf16.mxu0 0
      %5607 = vmatmul.mubr.bf16.gmra.mrb[0].mxu0 %v5433
      %v5608 = vpop.f32.mrb[0].mxu0
      %v5609 = vpop.f32.mrb[0].mxu0
      %v5610 = vpop.f32.mrb[0].mxu0
      %v5611 = vadd.f32 0.0, %v5610
      %v5612 = vpop.f32.mrb[0].mxu0
      %5613 = vmatprep.mubr.bf16.mxu0 0
      %5614 = vmatmul.mubr.bf16.gmra.mrb[0].mxu0 %v5435
      %v5615 = vpop.f32.mrb[0].mxu0
      %v5616 = vadd.f32 0.0, %v5615
      %v5617 = vpop.f32.mrb[0].mxu0
      %v5618 = vpop.f32.mrb[0].mxu0
      %v5619 = vpop.f32.mrb[0].mxu0
      %5620 = vmatprep.mubr.bf16.mxu0 0
      %5621 = vmatmul.mubr.bf16.gmra.mrb[0].mxu0 %v5437
      %v5622 = vpop.f32.mrb[0].mxu0
      %v5623 = vadd.f32 0.0, %v5622
      %v5624 = vpop.f32.mrb[0].mxu0
      %v5625 = vpop.f32.mrb[0].mxu0
      %v5626 = vadd.f32 0.0, %v5625
      %v5627 = vpop.f32.mrb[0].mxu0
      %5628 = vmatprep.mubr.bf16.mxu0 0
      %5629 = vmatmul.mubr.bf16.gmra.mrb[0].mxu0 %v5439
      %v5630 = vpop.f32.mrb[0].mxu0
      %v5631 = vpop.f32.mrb[0].mxu0
      %v5632 = vpop.f32.mrb[0].mxu0
      %v5633 = vadd.f32 0.0, %v5632
      %v5634 = vpop.f32.mrb[0].mxu0
      %5635 = vmatprep.mubr.bf16.mxu0 0
      %5636 = vmatmul.mubr.bf16.gmra.mrb[0].mxu0 %v5441
      %v5637 = vpop.f32.mrb[0].mxu0
      %v5638 = vadd.f32 0.0, %v5637
      %v5639 = vpop.f32.mrb[0].mxu0
      %v5640 = vpop.f32.mrb[0].mxu0
      %v5641 = vpop.f32.mrb[0].mxu0
      %5642 = vmatprep.mubr.bf16.mxu0 0
      %5643 = vmatmul.mubr.bf16.gmra.mrb[0].mxu0 %v5443
      %v5644 = vpop.f32.mrb[0].mxu0
      %v5645 = vadd.f32 0.0, %v5644
      %v5646 = vpop.f32.mrb[0].mxu0
      %v5647 = vpop.f32.mrb[0].mxu0
      %v5648 = vadd.f32 0.0, %v5647
      %v5649 = vpop.f32.mrb[0].mxu0
      %5650 = vmatprep.mubr.bf16.mxu0 0
      %5651 = vmatmul.mubr.bf16.gmra.mrb[0].mxu0 %v5445
      %v5652 = vpop.f32.mrb[0].mxu0
      %v5653 = vpop.f32.mrb[0].mxu0
      %v5654 = vpop.f32.mrb[0].mxu0
      %v5655 = vadd.f32 0.0, %v5654
      %v5656 = vpop.f32.mrb[0].mxu0
      %5657 = vmatprep.mubr.bf16.mxu0 0
      %5658 = vmatmul.mubr.bf16.gmra.mrb[0].mxu0 %v5447
      %v5659 = vpop.f32.mrb[0].mxu0
      %v5660 = vadd.f32 0.0, %v5659
      %v5661 = vpop.f32.mrb[0].mxu0
      %v5662 = vpop.f32.mrb[0].mxu0
      %v5663 = vpop.f32.mrb[0].mxu0
      %5664 = vmatprep.mubr.bf16.mxu0 0
      %5665 = vmatmul.mubr.bf16.gmra.mrb[0].mxu0 %v5449
      %v5666 = vpop.f32.mrb[0].mxu0
      %v5667 = vadd.f32 0.0, %v5666
      %v5668 = vpop.f32.mrb[0].mxu0
      %v5669 = vpop.f32.mrb[0].mxu0
      %v5670 = vadd.f32 0.0, %v5669
      %v5671 = vpop.f32.mrb[0].mxu0
      %5672 = vmatprep.mubr.bf16.mxu0 0
      %5673 = vmatmul.mubr.bf16.gmra.mrb[0].mxu0 %v5451
      %v5674 = vpop.f32.mrb[0].mxu0
      %v5675 = vpop.f32.mrb[0].mxu0
      %v5676 = vpop.f32.mrb[0].mxu0
      %v5677 = vadd.f32 0.0, %v5676
      %v5678 = vpop.f32.mrb[0].mxu0
      %5679 = vmatprep.mubr.bf16.mxu0 0
      %5680 = vmatmul.mubr.bf16.gmra.mrb[0].mxu0 %v5453
      %v5681 = vpop.f32.mrb[0].mxu0
      %v5682 = vadd.f32 0.0, %v5681
      %v5683 = vpop.f32.mrb[0].mxu0
      %v5684 = vpop.f32.mrb[0].mxu0
      %v5685 = vpop.f32.mrb[0].mxu0
      %5686 = vmatprep.mubr.bf16.mxu0 0
      %5687 = vmatmul.mubr.bf16.gmra.mrb[0].mxu0 %v5455
      %v5688 = vpop.f32.mrb[0].mxu0
      %v5689 = vadd.f32 0.0, %v5688
      %v5690 = vpop.f32.mrb[0].mxu0
      %v5691 = vpop.f32.mrb[0].mxu0
      %v5692 = vadd.f32 0.0, %v5691
      %v5693 = vpop.f32.mrb[0].mxu0
      %5694 = vmatprep.mubr.bf16.mxu0 0
      %5695 = vmatmul.mubr.bf16.gmra.mrb[0].mxu0 %v5457
      %v5696 = vpop.f32.mrb[0].mxu0
      %v5697 = vpop.f32.mrb[0].mxu0
      %v5698 = vpop.f32.mrb[0].mxu0
      %v5699 = vadd.f32 0.0, %v5698
      %v5700 = vpop.f32.mrb[0].mxu0
      %5701 = vmatprep.mubr.bf16.mxu0 0
      %5702 = vmatmul.mubr.bf16.gmra.mrb[0].mxu0 %v5459
      %v5703 = vpop.f32.mrb[0].mxu0
      %v5704 = vadd.f32 0.0, %v5703
      %v5705 = vpop.f32.mrb[0].mxu0
      %v5706 = vpop.f32.mrb[0].mxu0
      %v5707 = vpop.f32.mrb[0].mxu0
      %5708 = vmatprep.mubr.bf16.mxu0 0
      %5709 = vmatmul.mubr.bf16.gmra.mrb[0].mxu0 %v5461
      %v5710 = vpop.f32.mrb[0].mxu0
      %v5711 = vadd.f32 0.0, %v5710
      %v5712 = vpop.f32.mrb[0].mxu0
      %v5713 = vpop.f32.mrb[0].mxu0
      %v5714 = vadd.f32 0.0, %v5713
      %v5715 = vpop.f32.mrb[0].mxu0
      %5716 = vmatprep.mubr.bf16.mxu0 0
      %5717 = vmatmul.mubr.bf16.gmra.mrb[0].mxu0 %v5463
      %v5718 = vpop.f32.mrb[0].mxu0
      %v5719 = vpop.f32.mrb[0].mxu0
      %v5720 = vpop.f32.mrb[0].mxu0
      %v5721 = vadd.f32 0.0, %v5720
      %v5722 = vpop.f32.mrb[0].mxu0
      %5723 = vmatprep.mubr.bf16.mxu0 0
      %5724 = vmatmul.mubr.bf16.gmra.mrb[0].mxu0 %v5465
      %v5725 = vpop.f32.mrb[0].mxu0
      %v5726 = vadd.f32 0.0, %v5725
      %v5727 = vpop.f32.mrb[0].mxu0
      %v5728 = vpop.f32.mrb[0].mxu0
      %v5729 = vpop.f32.mrb[0].mxu0
      %5730 = vmatprep.mubr.bf16.mxu0 0
      %5731 = vmatmul.mubr.bf16.gmra.mrb[0].mxu0 %v5467
      %v5732 = vpop.f32.mrb[0].mxu0
      %v5733 = vadd.f32 0.0, %v5732
      %v5734 = vpop.f32.mrb[0].mxu0
      %v5735 = vpop.f32.mrb[0].mxu0
      %v5736 = vadd.f32 0.0, %v5735
      %v5737 = vpop.f32.mrb[0].mxu0
      %5738 = vmatprep.mubr.bf16.mxu0 0
      %5739 = vmatmul.mubr.bf16.gmra.mrb[0].mxu0 %v5469
      %v5740 = vpop.f32.mrb[0].mxu0
      %v5741 = vpop.f32.mrb[0].mxu0
      %v5742 = vpop.f32.mrb[0].mxu0
      %v5743 = vadd.f32 0.0, %v5742
      %v5744 = vpop.f32.mrb[0].mxu0
      %5745 = vmatprep.mubr.bf16.mxu0 0
      %5746 = vmatmul.mubr.bf16.gmra.mrb[0].mxu0 %v5471
      %v5747 = vpop.f32.mrb[0].mxu0
      %v5748 = vadd.f32 0.0, %v5747
      %v5749 = vpop.f32.mrb[0].mxu0
      %v5750 = vpop.f32.mrb[0].mxu0
      %v5751 = vpop.f32.mrb[0].mxu0
      %5752 = vdwg.mxu0
      %v5754 = vshrl.u32 %v5339, 16
      %v5756 = vrot.slane %v5754, 3
      %v5757 = vshll.u32 %v5339, 16
      %v5759 = vrot.slane %v5757, 4
      %v5760 = vor.u32 %v5756, %v5759
      %v5762 = vshrl.u32 %v5340, 16
      %v5764 = vrot.slane %v5762, 3
      %v5765 = vshll.u32 %v5340, 16
      %v5767 = vrot.slane %v5765, 4
      %v5768 = vor.u32 %v5764, %v5767
      %v5769 = vsel %vm912, %v5760, %v5768
      %v5771 = vshrl.u32 %v5341, 16
      %v5773 = vrot.slane %v5771, 3
      %v5774 = vshll.u32 %v5341, 16
      %v5776 = vrot.slane %v5774, 4
      %v5777 = vor.u32 %v5773, %v5776
      %v5778 = vsel %vm912, %v5768, %v5777
      %v5780 = vshrl.u32 %v5342, 16
      %v5782 = vrot.slane %v5780, 3
      %v5783 = vshll.u32 %v5342, 16
      %v5785 = vrot.slane %v5783, 4
      %v5786 = vor.u32 %v5782, %v5785
      %v5787 = vsel %vm912, %v5777, %v5786
      %v5789 = vshrl.u32 %v5343, 16
      %v5791 = vrot.slane %v5789, 3
      %v5792 = vshll.u32 %v5343, 16
      %v5794 = vrot.slane %v5792, 4
      %v5795 = vor.u32 %v5791, %v5794
      %v5796 = vsel %vm912, %v5786, %v5795
      %v5798 = vshrl.u32 %v5344, 16
      %v5800 = vrot.slane %v5798, 3
      %v5801 = vshll.u32 %v5344, 16
      %v5803 = vrot.slane %v5801, 4
      %v5804 = vor.u32 %v5800, %v5803
      %v5805 = vsel %vm912, %v5795, %v5804
      %v5807 = vshrl.u32 %v5345, 16
      %v5809 = vrot.slane %v5807, 3
      %v5810 = vshll.u32 %v5345, 16
      %v5812 = vrot.slane %v5810, 4
      %v5813 = vor.u32 %v5809, %v5812
      %v5814 = vsel %vm912, %v5804, %v5813
      %v5816 = vshrl.u32 %v5346, 16
      %v5818 = vrot.slane %v5816, 3
      %v5819 = vshll.u32 %v5346, 16
      %v5821 = vrot.slane %v5819, 4
      %v5822 = vor.u32 %v5818, %v5821
      %v5823 = vsel %vm912, %v5813, %v5822
      %v5825 = vshrl.u32 %v5347, 16
      %v5827 = vrot.slane %v5825, 3
      %v5828 = vshll.u32 %v5347, 16
      %v5830 = vrot.slane %v5828, 4
      %v5831 = vor.u32 %v5827, %v5830
      %v5832 = vsel %vm912, %v5822, %v5831
      %v5834 = vshrl.u32 %v5348, 16
      %v5836 = vrot.slane %v5834, 3
      %v5837 = vshll.u32 %v5348, 16
      %v5839 = vrot.slane %v5837, 4
      %v5840 = vor.u32 %v5836, %v5839
      %v5841 = vsel %vm912, %v5831, %v5840
      %v5843 = vshrl.u32 %v5349, 16
      %v5845 = vrot.slane %v5843, 3
      %v5846 = vshll.u32 %v5349, 16
      %v5848 = vrot.slane %v5846, 4
      %v5849 = vor.u32 %v5845, %v5848
      %v5850 = vsel %vm912, %v5840, %v5849
      %v5852 = vshrl.u32 %v5350, 16
      %v5854 = vrot.slane %v5852, 3
      %v5855 = vshll.u32 %v5350, 16
      %v5857 = vrot.slane %v5855, 4
      %v5858 = vor.u32 %v5854, %v5857
      %v5859 = vsel %vm912, %v5849, %v5858
      %v5861 = vshrl.u32 %v5351, 16
      %v5863 = vrot.slane %v5861, 3
      %v5864 = vshll.u32 %v5351, 16
      %v5866 = vrot.slane %v5864, 4
      %v5867 = vor.u32 %v5863, %v5866
      %v5868 = vsel %vm912, %v5858, %v5867
      %v5870 = vshrl.u32 %v5352, 16
      %v5872 = vrot.slane %v5870, 3
      %v5873 = vshll.u32 %v5352, 16
      %v5875 = vrot.slane %v5873, 4
      %v5876 = vor.u32 %v5872, %v5875
      %v5877 = vsel %vm912, %v5867, %v5876
      %v5879 = vshrl.u32 %v5353, 16
      %v5881 = vrot.slane %v5879, 3
      %v5882 = vshll.u32 %v5353, 16
      %v5884 = vrot.slane %v5882, 4
      %v5885 = vor.u32 %v5881, %v5884
      %v5886 = vsel %vm912, %v5876, %v5885
      %v5888 = vshrl.u32 %v5354, 16
      %v5890 = vrot.slane %v5888, 3
      %v5891 = vshll.u32 %v5354, 16
      %v5893 = vrot.slane %v5891, 4
      %v5894 = vor.u32 %v5890, %v5893
      %v5895 = vsel %vm912, %v5885, %v5894
      %v5897 = vshrl.u32 %v5355, 16
      %v5899 = vrot.slane %v5897, 3
      %v5900 = vshll.u32 %v5355, 16
      %v5902 = vrot.slane %v5900, 4
      %v5903 = vor.u32 %v5899, %v5902
      %v5904 = vsel %vm912, %v5894, %v5903
      %v5906 = vshrl.u32 %v5356, 16
      %v5908 = vrot.slane %v5906, 3
      %v5909 = vshll.u32 %v5356, 16
      %v5911 = vrot.slane %v5909, 4
      %v5912 = vor.u32 %v5908, %v5911
      %v5913 = vsel %vm912, %v5903, %v5912
      %v5915 = vshrl.u32 %v5357, 16
      %v5917 = vrot.slane %v5915, 3
      %v5918 = vshll.u32 %v5357, 16
      %v5920 = vrot.slane %v5918, 4
      %v5921 = vor.u32 %v5917, %v5920
      %v5922 = vsel %vm912, %v5912, %v5921
      %v5924 = vshrl.u32 %v5358, 16
      %v5926 = vrot.slane %v5924, 3
      %v5927 = vshll.u32 %v5358, 16
      %v5929 = vrot.slane %v5927, 4
      %v5930 = vor.u32 %v5926, %v5929
      %v5931 = vsel %vm912, %v5921, %v5930
      %v5933 = vshrl.u32 %v5359, 16
      %v5935 = vrot.slane %v5933, 3
      %v5936 = vshll.u32 %v5359, 16
      %v5938 = vrot.slane %v5936, 4
      %v5939 = vor.u32 %v5935, %v5938
      %v5940 = vsel %vm912, %v5930, %v5939
      %v5942 = vshrl.u32 %v5360, 16
      %v5944 = vrot.slane %v5942, 3
      %v5945 = vshll.u32 %v5360, 16
      %v5947 = vrot.slane %v5945, 4
      %v5948 = vor.u32 %v5944, %v5947
      %v5949 = vsel %vm912, %v5939, %v5948
      %v5951 = vshrl.u32 %v5361, 16
      %v5953 = vrot.slane %v5951, 3
      %v5954 = vshll.u32 %v5361, 16
      %v5956 = vrot.slane %v5954, 4
      %v5957 = vor.u32 %v5953, %v5956
      %v5958 = vsel %vm912, %v5948, %v5957
      %v5960 = vshrl.u32 %v5362, 16
      %v5962 = vrot.slane %v5960, 3
      %v5963 = vshll.u32 %v5362, 16
      %v5965 = vrot.slane %v5963, 4
      %v5966 = vor.u32 %v5962, %v5965
      %v5967 = vsel %vm912, %v5957, %v5966
      %v5969 = vshrl.u32 %v5363, 16
      %v5971 = vrot.slane %v5969, 3
      %v5972 = vshll.u32 %v5363, 16
      %v5974 = vrot.slane %v5972, 4
      %v5975 = vor.u32 %v5971, %v5974
      %v5976 = vsel %vm912, %v5966, %v5975
      %v6017 = vunpack.c.l.b16 %v5364
      %v6018 = vunpack.c.l.b16 %v5365
      %v6019 = vunpack.c.l.b16 %v5366
      %v6020 = vunpack.c.l.b16 %v5367
      %v6021 = vunpack.c.l.b16 %v5368
      %v6022 = vunpack.c.l.b16 %v5369
      %v6023 = vunpack.c.l.b16 %v5370
      %v6024 = vunpack.c.l.b16 %v5371
      %v6025 = vunpack.c.l.b16 %v5372
      %v6026 = vunpack.c.l.b16 %v5373
      %v6027 = vunpack.c.l.b16 %v5374
      %v6028 = vunpack.c.l.b16 %v5375
      %v6029 = vunpack.c.l.b16 %v5376
      %v6030 = vunpack.c.l.b16 %v5377
      %v6031 = vunpack.c.l.b16 %v5378
      %v6032 = vunpack.c.l.b16 %v5379
      %v6033 = vpack.c.b16 %v6018, %v6017
      %v6034 = vpack.c.b16 %v6020, %v6019
      %v6035 = vpack.c.b16 %v6022, %v6021
      %v6036 = vpack.c.b16 %v6024, %v6023
      %v6037 = vpack.c.b16 %v6026, %v6025
      %v6038 = vpack.c.b16 %v6028, %v6027
      %v6039 = vpack.c.b16 %v6030, %v6029
      %v6040 = vpack.c.b16 %v6032, %v6031
      %6049 = vmatprep.subr.bf16.mxu0 0
      %6050 = vmatpush1.bf16.msra.mxu0 %v6033
      %6051 = vmatprep.subr.bf16.mxu0 0
      %6052 = vmatpush1.bf16.msra.mxu0 %v6034
      %6053 = vmatprep.subr.bf16.mxu0 0
      %6054 = vmatpush1.bf16.msra.mxu0 %v6035
      %6055 = vmatprep.subr.bf16.mxu0 0
      %6056 = vmatpush1.bf16.msra.mxu0 %v6036
      %6057 = vmatprep.subr.bf16.mxu0 0
      %6058 = vmatpush1.bf16.msra.mxu0 %v6037
      %6059 = vmatprep.subr.bf16.mxu0 0
      %6060 = vmatpush1.bf16.msra.mxu0 %v6038
      %6061 = vmatprep.subr.bf16.mxu0 0
      %6062 = vmatpush1.bf16.msra.mxu0 %v6039
      %6063 = vmatprep.subr.bf16.mxu0 0
      %6064 = vmatpush1.bf16.msra.mxu0 %v6040
      %6065 = vmatprep.subr.bf16.mxu0 0
      %6066 = vmatpush1.bf16.msra.mxu0 0
      %6067 = vmatprep.subr.bf16.mxu0 0
      %6068 = vmatpush1.bf16.msra.mxu0 0
      %6069 = vmatprep.subr.bf16.mxu0 0
      %6070 = vmatpush1.bf16.msra.mxu0 0
      %6071 = vmatprep.subr.bf16.mxu0 0
      %6072 = vmatpush1.bf16.msra.mxu0 0
      %6073 = vmatprep.subr.bf16.mxu0 0
      %6074 = vmatpush1.bf16.msra.mxu0 0
      %6075 = vmatprep.subr.bf16.mxu0 0
      %6076 = vmatpush1.bf16.msra.mxu0 0
      %6077 = vmatprep.subr.bf16.mxu0 0
      %6078 = vmatpush1.bf16.msra.mxu0 0
      %6079 = vmatprep.subr.bf16.mxu0 0
      %6080 = vmatpush1.bf16.msra.mxu0 0
      %6081 = vmatprep.mubr.bf16.mxu0 0
      %6082 = vmatmul.mubr.bf16.gmra.mrb[0].mxu0 %v5769
      %v6083 = vpop.f32.mrb[0].mxu0
      %v6084 = vadd.f32 %v5579, %v6083
      %v6085 = vpop.f32.mrb[0].mxu0
      %v6086 = vpop.f32.mrb[0].mxu0
      %v6087 = vadd.f32 %v5582, %v6086
      %v6088 = vpop.f32.mrb[0].mxu0
      %6089 = vmatprep.mubr.bf16.mxu0 0
      %6090 = vmatmul.mubr.bf16.gmra.mrb[0].mxu0 %v5778
      %v6091 = vpop.f32.mrb[0].mxu0
      %v6092 = vpop.f32.mrb[0].mxu0
      %v6093 = vpop.f32.mrb[0].mxu0
      %v6094 = vadd.f32 %v5589, %v6093
      %v6095 = vpop.f32.mrb[0].mxu0
      %6096 = vmatprep.mubr.bf16.mxu0 0
      %6097 = vmatmul.mubr.bf16.gmra.mrb[0].mxu0 %v5787
      %v6098 = vpop.f32.mrb[0].mxu0
      %v6099 = vadd.f32 %v5594, %v6098
      %v6100 = vpop.f32.mrb[0].mxu0
      %v6101 = vpop.f32.mrb[0].mxu0
      %v6102 = vpop.f32.mrb[0].mxu0
      %6103 = vmatprep.mubr.bf16.mxu0 0
      %6104 = vmatmul.mubr.bf16.gmra.mrb[0].mxu0 %v5796
      %v6105 = vpop.f32.mrb[0].mxu0
      %v6106 = vadd.f32 %v5601, %v6105
      %v6107 = vpop.f32.mrb[0].mxu0
      %v6108 = vpop.f32.mrb[0].mxu0
      %v6109 = vadd.f32 %v5604, %v6108
      %v6110 = vpop.f32.mrb[0].mxu0
      %6111 = vmatprep.mubr.bf16.mxu0 0
      %6112 = vmatmul.mubr.bf16.gmra.mrb[0].mxu0 %v5805
      %v6113 = vpop.f32.mrb[0].mxu0
      %v6114 = vpop.f32.mrb[0].mxu0
      %v6115 = vpop.f32.mrb[0].mxu0
      %v6116 = vadd.f32 %v5611, %v6115
      %v6117 = vpop.f32.mrb[0].mxu0
      %6118 = vmatprep.mubr.bf16.mxu0 0
      %6119 = vmatmul.mubr.bf16.gmra.mrb[0].mxu0 %v5814
      %v6120 = vpop.f32.mrb[0].mxu0
      %v6121 = vadd.f32 %v5616, %v6120
      %v6122 = vpop.f32.mrb[0].mxu0
      %v6123 = vpop.f32.mrb[0].mxu0
      %v6124 = vpop.f32.mrb[0].mxu0
      %6125 = vmatprep.mubr.bf16.mxu0 0
      %6126 = vmatmul.mubr.bf16.gmra.mrb[0].mxu0 %v5823
      %v6127 = vpop.f32.mrb[0].mxu0
      %v6128 = vadd.f32 %v5623, %v6127
      %v6129 = vpop.f32.mrb[0].mxu0
      %v6130 = vpop.f32.mrb[0].mxu0
      %v6131 = vadd.f32 %v5626, %v6130
      %v6132 = vpop.f32.mrb[0].mxu0
      %6133 = vmatprep.mubr.bf16.mxu0 0
      %6134 = vmatmul.mubr.bf16.gmra.mrb[0].mxu0 %v5832
      %v6135 = vpop.f32.mrb[0].mxu0
      %v6136 = vpop.f32.mrb[0].mxu0
      %v6137 = vpop.f32.mrb[0].mxu0
      %v6138 = vadd.f32 %v5633, %v6137
      %v6139 = vpop.f32.mrb[0].mxu0
      %6140 = vmatprep.mubr.bf16.mxu0 0
      %6141 = vmatmul.mubr.bf16.gmra.mrb[0].mxu0 %v5841
      %v6142 = vpop.f32.mrb[0].mxu0
      %v6143 = vadd.f32 %v5638, %v6142
      %v6144 = vpop.f32.mrb[0].mxu0
      %v6145 = vpop.f32.mrb[0].mxu0
      %v6146 = vpop.f32.mrb[0].mxu0
      %6147 = vmatprep.mubr.bf16.mxu0 0
      %6148 = vmatmul.mubr.bf16.gmra.mrb[0].mxu0 %v5850
      %v6149 = vpop.f32.mrb[0].mxu0
      %v6150 = vadd.f32 %v5645, %v6149
      %v6151 = vpop.f32.mrb[0].mxu0
      %v6152 = vpop.f32.mrb[0].mxu0
      %v6153 = vadd.f32 %v5648, %v6152
      %v6154 = vpop.f32.mrb[0].mxu0
      %6155 = vmatprep.mubr.bf16.mxu0 0
      %6156 = vmatmul.mubr.bf16.gmra.mrb[0].mxu0 %v5859
      %v6157 = vpop.f32.mrb[0].mxu0
      %v6158 = vpop.f32.mrb[0].mxu0
      %v6159 = vpop.f32.mrb[0].mxu0
      %v6160 = vadd.f32 %v5655, %v6159
      %v6161 = vpop.f32.mrb[0].mxu0
      %6162 = vmatprep.mubr.bf16.mxu0 0
      %6163 = vmatmul.mubr.bf16.gmra.mrb[0].mxu0 %v5868
      %v6164 = vpop.f32.mrb[0].mxu0
      %v6165 = vadd.f32 %v5660, %v6164
      %v6166 = vpop.f32.mrb[0].mxu0
      %v6167 = vpop.f32.mrb[0].mxu0
      %v6168 = vpop.f32.mrb[0].mxu0
      %6169 = vmatprep.mubr.bf16.mxu0 0
      %6170 = vmatmul.mubr.bf16.gmra.mrb[0].mxu0 %v5877
      %v6171 = vpop.f32.mrb[0].mxu0
      %v6172 = vadd.f32 %v5667, %v6171
      %v6173 = vpop.f32.mrb[0].mxu0
      %v6174 = vpop.f32.mrb[0].mxu0
      %v6175 = vadd.f32 %v5670, %v6174
      %v6176 = vpop.f32.mrb[0].mxu0
      %6177 = vmatprep.mubr.bf16.mxu0 0
      %6178 = vmatmul.mubr.bf16.gmra.mrb[0].mxu0 %v5886
      %v6179 = vpop.f32.mrb[0].mxu0
      %v6180 = vpop.f32.mrb[0].mxu0
      %v6181 = vpop.f32.mrb[0].mxu0
      %v6182 = vadd.f32 %v5677, %v6181
      %v6183 = vpop.f32.mrb[0].mxu0
      %6184 = vmatprep.mubr.bf16.mxu0 0
      %6185 = vmatmul.mubr.bf16.gmra.mrb[0].mxu0 %v5895
      %v6186 = vpop.f32.mrb[0].mxu0
      %v6187 = vadd.f32 %v5682, %v6186
      %v6188 = vpop.f32.mrb[0].mxu0
      %v6189 = vpop.f32.mrb[0].mxu0
      %v6190 = vpop.f32.mrb[0].mxu0
      %6191 = vmatprep.mubr.bf16.mxu0 0
      %6192 = vmatmul.mubr.bf16.gmra.mrb[0].mxu0 %v5904
      %v6193 = vpop.f32.mrb[0].mxu0
      %v6194 = vadd.f32 %v5689, %v6193
      %v6195 = vpop.f32.mrb[0].mxu0
      %v6196 = vpop.f32.mrb[0].mxu0
      %v6197 = vadd.f32 %v5692, %v6196
      %v6198 = vpop.f32.mrb[0].mxu0
      %6199 = vmatprep.mubr.bf16.mxu0 0
      %6200 = vmatmul.mubr.bf16.gmra.mrb[0].mxu0 %v5913
      %v6201 = vpop.f32.mrb[0].mxu0
      %v6202 = vpop.f32.mrb[0].mxu0
      %v6203 = vpop.f32.mrb[0].mxu0
      %v6204 = vadd.f32 %v5699, %v6203
      %v6205 = vpop.f32.mrb[0].mxu0
      %6206 = vmatprep.mubr.bf16.mxu0 0
      %6207 = vmatmul.mubr.bf16.gmra.mrb[0].mxu0 %v5922
      %v6208 = vpop.f32.mrb[0].mxu0
      %v6209 = vadd.f32 %v5704, %v6208
      %v6210 = vpop.f32.mrb[0].mxu0
      %v6211 = vpop.f32.mrb[0].mxu0
      %v6212 = vpop.f32.mrb[0].mxu0
      %6213 = vmatprep.mubr.bf16.mxu0 0
      %6214 = vmatmul.mubr.bf16.gmra.mrb[0].mxu0 %v5931
      %v6215 = vpop.f32.mrb[0].mxu0
      %v6216 = vadd.f32 %v5711, %v6215
      %v6217 = vpop.f32.mrb[0].mxu0
      %v6218 = vpop.f32.mrb[0].mxu0
      %v6219 = vadd.f32 %v5714, %v6218
      %v6220 = vpop.f32.mrb[0].mxu0
      %6221 = vmatprep.mubr.bf16.mxu0 0
      %6222 = vmatmul.mubr.bf16.gmra.mrb[0].mxu0 %v5940
      %v6223 = vpop.f32.mrb[0].mxu0
      %v6224 = vpop.f32.mrb[0].mxu0
      %v6225 = vpop.f32.mrb[0].mxu0
      %v6226 = vadd.f32 %v5721, %v6225
      %v6227 = vpop.f32.mrb[0].mxu0
      %6228 = vmatprep.mubr.bf16.mxu0 0
      %6229 = vmatmul.mubr.bf16.gmra.mrb[0].mxu0 %v5949
      %v6230 = vpop.f32.mrb[0].mxu0
      %v6231 = vadd.f32 %v5726, %v6230
      %v6232 = vpop.f32.mrb[0].mxu0
      %v6233 = vpop.f32.mrb[0].mxu0
      %v6234 = vpop.f32.mrb[0].mxu0
      %6235 = vmatprep.mubr.bf16.mxu0 0
      %6236 = vmatmul.mubr.bf16.gmra.mrb[0].mxu0 %v5958
      %v6237 = vpop.f32.mrb[0].mxu0
      %v6238 = vadd.f32 %v5733, %v6237
      %v6239 = vpop.f32.mrb[0].mxu0
      %v6240 = vpop.f32.mrb[0].mxu0
      %v6241 = vadd.f32 %v5736, %v6240
      %v6242 = vpop.f32.mrb[0].mxu0
      %6243 = vmatprep.mubr.bf16.mxu0 0
      %6244 = vmatmul.mubr.bf16.gmra.mrb[0].mxu0 %v5967
      %v6245 = vpop.f32.mrb[0].mxu0
      %v6246 = vpop.f32.mrb[0].mxu0
      %v6247 = vpop.f32.mrb[0].mxu0
      %v6248 = vadd.f32 %v5743, %v6247
      %v6249 = vpop.f32.mrb[0].mxu0
      %6250 = vmatprep.mubr.bf16.mxu0 0
      %6251 = vmatmul.mubr.bf16.gmra.mrb[0].mxu0 %v5976
      %v6252 = vpop.f32.mrb[0].mxu0
      %v6253 = vadd.f32 %v5748, %v6252
      %v6254 = vpop.f32.mrb[0].mxu0
      %v6255 = vpop.f32.mrb[0].mxu0
      %v6256 = vpop.f32.mrb[0].mxu0
      %6257 = vdwg.mxu0
      %v6258 = vld [vmem:[#allocation3 + $0xc8] sm:$0x1f]
      %s6259 = scalar_lea.vmem %s3, 128
      %v6260 = vld [vmem:[%s6259] sm:$0xf]
      %v6261 = vld [vmem:[%s6259 + $0x4] sm:$0xf]
      %v6262 = vld [vmem:[%s6259 + $0x8] sm:$0xf]
      %v6263 = vld [vmem:[%s6259 + $0xc] sm:$0xf]
      %v6264 = vld [vmem:[%s6259 + $0x10] sm:$0xf]
      %v6265 = vld [vmem:[%s6259 + $0x14] sm:$0xf]
      %v6266 = vld [vmem:[%s6259 + $0x18] sm:$0xf]
      %v6267 = vld [vmem:[%s6259 + $0x1c] sm:$0xf]
      %v6268 = vld [vmem:[%s6259 + $0x20] sm:$0xf]
      %v6269 = vld [vmem:[%s6259 + $0x24] sm:$0xf]
      %v6270 = vld [vmem:[%s6259 + $0x28] sm:$0xf]
      %v6271 = vld [vmem:[%s6259 + $0x2c] sm:$0xf]
      %v6272 = vld [vmem:[%s6259 + $0x30] sm:$0xf]
      %v6273 = vld [vmem:[%s6259 + $0x34] sm:$0xf]
      %v6274 = vld [vmem:[%s6259 + $0x38] sm:$0xf]
      %v6275 = vld [vmem:[%s6259 + $0x3c] sm:$0xf]
      %v6277 = vshrl.u32 %v5380, 16
      %v6279 = vrot.slane %v6277, 4
      %v6280 = vshll.u32 %v5380, 16
      %v6282 = vrot.slane %v6280, 5
      %v6283 = vor.u32 %v6279, %v6282
      %v6284 = vrot.slane %v5762, 4
      %v6285 = vrot.slane %v5765, 5
      %v6286 = vor.u32 %v6284, %v6285
      %v6287 = vsel %vm1440, %v6283, %v6286
      %v6288 = vrot.slane %v5771, 4
      %v6289 = vrot.slane %v5774, 5
      %v6290 = vor.u32 %v6288, %v6289
      %v6291 = vsel %vm1440, %v6286, %v6290
      %v6292 = vrot.slane %v5780, 4
      %v6293 = vrot.slane %v5783, 5
      %v6294 = vor.u32 %v6292, %v6293
      %v6295 = vsel %vm1440, %v6290, %v6294
      %v6296 = vrot.slane %v5789, 4
      %v6297 = vrot.slane %v5792, 5
      %v6298 = vor.u32 %v6296, %v6297
      %v6299 = vsel %vm1440, %v6294, %v6298
      %v6300 = vrot.slane %v5798, 4
      %v6301 = vrot.slane %v5801, 5
      %v6302 = vor.u32 %v6300, %v6301
      %v6303 = vsel %vm1440, %v6298, %v6302
      %v6304 = vrot.slane %v5807, 4
      %v6305 = vrot.slane %v5810, 5
      %v6306 = vor.u32 %v6304, %v6305
      %v6307 = vsel %vm1440, %v6302, %v6306
      %v6308 = vrot.slane %v5816, 4
      %v6309 = vrot.slane %v5819, 5
      %v6310 = vor.u32 %v6308, %v6309
      %v6311 = vsel %vm1440, %v6306, %v6310
      %v6312 = vrot.slane %v5825, 4
      %v6313 = vrot.slane %v5828, 5
      %v6314 = vor.u32 %v6312, %v6313
      %v6315 = vsel %vm1440, %v6310, %v6314
      %v6316 = vrot.slane %v5834, 4
      %v6317 = vrot.slane %v5837, 5
      %v6318 = vor.u32 %v6316, %v6317
      %v6319 = vsel %vm1440, %v6314, %v6318
      %v6320 = vrot.slane %v5843, 4
      %v6321 = vrot.slane %v5846, 5
      %v6322 = vor.u32 %v6320, %v6321
      %v6323 = vsel %vm1440, %v6318, %v6322
      %v6324 = vrot.slane %v5852, 4
      %v6325 = vrot.slane %v5855, 5
      %v6326 = vor.u32 %v6324, %v6325
      %v6327 = vsel %vm1440, %v6322, %v6326
      %v6328 = vrot.slane %v5861, 4
      %v6329 = vrot.slane %v5864, 5
      %v6330 = vor.u32 %v6328, %v6329
      %v6331 = vsel %vm1440, %v6326, %v6330
      %v6332 = vrot.slane %v5870, 4
      %v6333 = vrot.slane %v5873, 5
      %v6334 = vor.u32 %v6332, %v6333
      %v6335 = vsel %vm1440, %v6330, %v6334
      %v6336 = vrot.slane %v5879, 4
      %v6337 = vrot.slane %v5882, 5
      %v6338 = vor.u32 %v6336, %v6337
      %v6339 = vsel %vm1440, %v6334, %v6338
      %v6340 = vrot.slane %v5888, 4
      %v6341 = vrot.slane %v5891, 5
      %v6342 = vor.u32 %v6340, %v6341
      %v6343 = vsel %vm1440, %v6338, %v6342
      %v6344 = vrot.slane %v5897, 4
      %v6345 = vrot.slane %v5900, 5
      %v6346 = vor.u32 %v6344, %v6345
      %v6347 = vsel %vm1440, %v6342, %v6346
      %v6348 = vrot.slane %v5906, 4
      %v6349 = vrot.slane %v5909, 5
      %v6350 = vor.u32 %v6348, %v6349
      %v6351 = vsel %vm1440, %v6346, %v6350
      %v6352 = vrot.slane %v5915, 4
      %v6353 = vrot.slane %v5918, 5
      %v6354 = vor.u32 %v6352, %v6353
      %v6355 = vsel %vm1440, %v6350, %v6354
      %v6356 = vrot.slane %v5924, 4
      %v6357 = vrot.slane %v5927, 5
      %v6358 = vor.u32 %v6356, %v6357
      %v6359 = vsel %vm1440, %v6354, %v6358
      %v6360 = vrot.slane %v5933, 4
      %v6361 = vrot.slane %v5936, 5
      %v6362 = vor.u32 %v6360, %v6361
      %v6363 = vsel %vm1440, %v6358, %v6362
      %v6364 = vrot.slane %v5942, 4
      %v6365 = vrot.slane %v5945, 5
      %v6366 = vor.u32 %v6364, %v6365
      %v6367 = vsel %vm1440, %v6362, %v6366
      %v6368 = vrot.slane %v5951, 4
      %v6369 = vrot.slane %v5954, 5
      %v6370 = vor.u32 %v6368, %v6369
      %v6371 = vsel %vm1440, %v6366, %v6370
      %v6372 = vrot.slane %v5960, 4
      %v6373 = vrot.slane %v5963, 5
      %v6374 = vor.u32 %v6372, %v6373
      %v6375 = vsel %vm1440, %v6370, %v6374
      %v6377 = vshrl.u32 %v6258, 16
      %v6379 = vrot.slane %v6377, 4
      %v6380 = vshll.u32 %v6258, 16
      %v6382 = vrot.slane %v6380, 5
      %v6383 = vor.u32 %v6379, %v6382
      %v6384 = vsel %vm1440, %v6374, %v6383
      %v6425 = vunpack.c.l.b16 %v6260
      %v6426 = vunpack.c.l.b16 %v6261
      %v6427 = vunpack.c.l.b16 %v6262
      %v6428 = vunpack.c.l.b16 %v6263
      %v6429 = vunpack.c.l.b16 %v6264
      %v6430 = vunpack.c.l.b16 %v6265
      %v6431 = vunpack.c.l.b16 %v6266
      %v6432 = vunpack.c.l.b16 %v6267
      %v6433 = vunpack.c.l.b16 %v6268
      %v6434 = vunpack.c.l.b16 %v6269
      %v6435 = vunpack.c.l.b16 %v6270
      %v6436 = vunpack.c.l.b16 %v6271
      %v6437 = vunpack.c.l.b16 %v6272
      %v6438 = vunpack.c.l.b16 %v6273
      %v6439 = vunpack.c.l.b16 %v6274
      %v6440 = vunpack.c.l.b16 %v6275
      %v6441 = vpack.c.b16 %v6426, %v6425
      %v6442 = vpack.c.b16 %v6428, %v6427
      %v6443 = vpack.c.b16 %v6430, %v6429
      %v6444 = vpack.c.b16 %v6432, %v6431
      %v6445 = vpack.c.b16 %v6434, %v6433
      %v6446 = vpack.c.b16 %v6436, %v6435
      %v6447 = vpack.c.b16 %v6438, %v6437
      %v6448 = vpack.c.b16 %v6440, %v6439
      %6457 = vmatprep.subr.bf16.mxu0 0
      %6458 = vmatpush1.bf16.msra.mxu0 %v6441
      %6459 = vmatprep.subr.bf16.mxu0 0
      %6460 = vmatpush1.bf16.msra.mxu0 %v6442
      %6461 = vmatprep.subr.bf16.mxu0 0
      %6462 = vmatpush1.bf16.msra.mxu0 %v6443
      %6463 = vmatprep.subr.bf16.mxu0 0
      %6464 = vmatpush1.bf16.msra.mxu0 %v6444
      %6465 = vmatprep.subr.bf16.mxu0 0
      %6466 = vmatpush1.bf16.msra.mxu0 %v6445
      %6467 = vmatprep.subr.bf16.mxu0 0
      %6468 = vmatpush1.bf16.msra.mxu0 %v6446
      %6469 = vmatprep.subr.bf16.mxu0 0
      %6470 = vmatpush1.bf16.msra.mxu0 %v6447
      %6471 = vmatprep.subr.bf16.mxu0 0
      %6472 = vmatpush1.bf16.msra.mxu0 %v6448
      %6473 = vmatprep.subr.bf16.mxu0 0
      %6474 = vmatpush1.bf16.msra.mxu0 0
      %6475 = vmatprep.subr.bf16.mxu0 0
      %6476 = vmatpush1.bf16.msra.mxu0 0
      %6477 = vmatprep.subr.bf16.mxu0 0
      %6478 = vmatpush1.bf16.msra.mxu0 0
      %6479 = vmatprep.subr.bf16.mxu0 0
      %6480 = vmatpush1.bf16.msra.mxu0 0
      %6481 = vmatprep.subr.bf16.mxu0 0
      %6482 = vmatpush1.bf16.msra.mxu0 0
      %6483 = vmatprep.subr.bf16.mxu0 0
      %6484 = vmatpush1.bf16.msra.mxu0 0
      %6485 = vmatprep.subr.bf16.mxu0 0
      %6486 = vmatpush1.bf16.msra.mxu0 0
      %6487 = vmatprep.subr.bf16.mxu0 0
      %6488 = vmatpush1.bf16.msra.mxu0 0
      %6489 = vmatprep.mubr.bf16.mxu0 0
      %6490 = vmatmul.mubr.bf16.gmra.mrb[0].mxu0 %v6287
      %v6491 = vpop.f32.mrb[0].mxu0
      %v6492 = vadd.f32 0.0, %v6491
      %v6493 = vpop.f32.mrb[0].mxu0
      %v6494 = vpop.f32.mrb[0].mxu0
      %v6495 = vadd.f32 0.0, %v6494
      %v6496 = vpop.f32.mrb[0].mxu0
      %6497 = vmatprep.mubr.bf16.mxu0 0
      %6498 = vmatmul.mubr.bf16.gmra.mrb[0].mxu0 %v6291
      %v6499 = vpop.f32.mrb[0].mxu0
      %v6500 = vpop.f32.mrb[0].mxu0
      %v6501 = vpop.f32.mrb[0].mxu0
      %v6502 = vadd.f32 0.0, %v6501
      %v6503 = vpop.f32.mrb[0].mxu0
      %6504 = vmatprep.mubr.bf16.mxu0 0
      %6505 = vmatmul.mubr.bf16.gmra.mrb[0].mxu0 %v6295
      %v6506 = vpop.f32.mrb[0].mxu0
      %v6507 = vadd.f32 0.0, %v6506
      %v6508 = vpop.f32.mrb[0].mxu0
      %v6509 = vpop.f32.mrb[0].mxu0
      %v6510 = vpop.f32.mrb[0].mxu0
      %6511 = vmatprep.mubr.bf16.mxu0 0
      %6512 = vmatmul.mubr.bf16.gmra.mrb[0].mxu0 %v6299
      %v6513 = vpop.f32.mrb[0].mxu0
      %v6514 = vadd.f32 0.0, %v6513
      %v6515 = vpop.f32.mrb[0].mxu0
      %v6516 = vpop.f32.mrb[0].mxu0
      %v6517 = vadd.f32 0.0, %v6516
      %v6518 = vpop.f32.mrb[0].mxu0
      %6519 = vmatprep.mubr.bf16.mxu0 0
      %6520 = vmatmul.mubr.bf16.gmra.mrb[0].mxu0 %v6303
      %v6521 = vpop.f32.mrb[0].mxu0
      %v6522 = vpop.f32.mrb[0].mxu0
      %v6523 = vpop.f32.mrb[0].mxu0
      %v6524 = vadd.f32 0.0, %v6523
      %v6525 = vpop.f32.mrb[0].mxu0
      %6526 = vmatprep.mubr.bf16.mxu0 0
      %6527 = vmatmul.mubr.bf16.gmra.mrb[0].mxu0 %v6307
      %v6528 = vpop.f32.mrb[0].mxu0
      %v6529 = vadd.f32 0.0, %v6528
      %v6530 = vpop.f32.mrb[0].mxu0
      %v6531 = vpop.f32.mrb[0].mxu0
      %v6532 = vpop.f32.mrb[0].mxu0
      %6533 = vmatprep.mubr.bf16.mxu0 0
      %6534 = vmatmul.mubr.bf16.gmra.mrb[0].mxu0 %v6311
      %v6535 = vpop.f32.mrb[0].mxu0
      %v6536 = vadd.f32 0.0, %v6535
      %v6537 = vpop.f32.mrb[0].mxu0
      %v6538 = vpop.f32.mrb[0].mxu0
      %v6539 = vadd.f32 0.0, %v6538
      %v6540 = vpop.f32.mrb[0].mxu0
      %6541 = vmatprep.mubr.bf16.mxu0 0
      %6542 = vmatmul.mubr.bf16.gmra.mrb[0].mxu0 %v6315
      %v6543 = vpop.f32.mrb[0].mxu0
      %v6544 = vpop.f32.mrb[0].mxu0
      %v6545 = vpop.f32.mrb[0].mxu0
      %v6546 = vadd.f32 0.0, %v6545
      %v6547 = vpop.f32.mrb[0].mxu0
      %6548 = vmatprep.mubr.bf16.mxu0 0
      %6549 = vmatmul.mubr.bf16.gmra.mrb[0].mxu0 %v6319
      %v6550 = vpop.f32.mrb[0].mxu0
      %v6551 = vadd.f32 0.0, %v6550
      %v6552 = vpop.f32.mrb[0].mxu0
      %v6553 = vpop.f32.mrb[0].mxu0
      %v6554 = vpop.f32.mrb[0].mxu0
      %6555 = vmatprep.mubr.bf16.mxu0 0
      %6556 = vmatmul.mubr.bf16.gmra.mrb[0].mxu0 %v6323
      %v6557 = vpop.f32.mrb[0].mxu0
      %v6558 = vadd.f32 0.0, %v6557
      %v6559 = vpop.f32.mrb[0].mxu0
      %v6560 = vpop.f32.mrb[0].mxu0
      %v6561 = vadd.f32 0.0, %v6560
      %v6562 = vpop.f32.mrb[0].mxu0
      %6563 = vmatprep.mubr.bf16.mxu0 0
      %6564 = vmatmul.mubr.bf16.gmra.mrb[0].mxu0 %v6327
      %v6565 = vpop.f32.mrb[0].mxu0
      %v6566 = vpop.f32.mrb[0].mxu0
      %v6567 = vpop.f32.mrb[0].mxu0
      %v6568 = vadd.f32 0.0, %v6567
      %v6569 = vpop.f32.mrb[0].mxu0
      %6570 = vmatprep.mubr.bf16.mxu0 0
      %6571 = vmatmul.mubr.bf16.gmra.mrb[0].mxu0 %v6331
      %v6572 = vpop.f32.mrb[0].mxu0
      %v6573 = vadd.f32 0.0, %v6572
      %v6574 = vpop.f32.mrb[0].mxu0
      %v6575 = vpop.f32.mrb[0].mxu0
      %v6576 = vpop.f32.mrb[0].mxu0
      %6577 = vmatprep.mubr.bf16.mxu0 0
      %6578 = vmatmul.mubr.bf16.gmra.mrb[0].mxu0 %v6335
      %v6579 = vpop.f32.mrb[0].mxu0
      %v6580 = vadd.f32 0.0, %v6579
      %v6581 = vpop.f32.mrb[0].mxu0
      %v6582 = vpop.f32.mrb[0].mxu0
      %v6583 = vadd.f32 0.0, %v6582
      %v6584 = vpop.f32.mrb[0].mxu0
      %6585 = vmatprep.mubr.bf16.mxu0 0
      %6586 = vmatmul.mubr.bf16.gmra.mrb[0].mxu0 %v6339
      %v6587 = vpop.f32.mrb[0].mxu0
      %v6588 = vpop.f32.mrb[0].mxu0
      %v6589 = vpop.f32.mrb[0].mxu0
      %v6590 = vadd.f32 0.0, %v6589
      %v6591 = vpop.f32.mrb[0].mxu0
      %6592 = vmatprep.mubr.bf16.mxu0 0
      %6593 = vmatmul.mubr.bf16.gmra.mrb[0].mxu0 %v6343
      %v6594 = vpop.f32.mrb[0].mxu0
      %v6595 = vadd.f32 0.0, %v6594
      %v6596 = vpop.f32.mrb[0].mxu0
      %v6597 = vpop.f32.mrb[0].mxu0
      %v6598 = vpop.f32.mrb[0].mxu0
      %6599 = vmatprep.mubr.bf16.mxu0 0
      %6600 = vmatmul.mubr.bf16.gmra.mrb[0].mxu0 %v6347
      %v6601 = vpop.f32.mrb[0].mxu0
      %v6602 = vadd.f32 0.0, %v6601
      %v6603 = vpop.f32.mrb[0].mxu0
      %v6604 = vpop.f32.mrb[0].mxu0
      %v6605 = vadd.f32 0.0, %v6604
      %v6606 = vpop.f32.mrb[0].mxu0
      %6607 = vmatprep.mubr.bf16.mxu0 0
      %6608 = vmatmul.mubr.bf16.gmra.mrb[0].mxu0 %v6351
      %v6609 = vpop.f32.mrb[0].mxu0
      %v6610 = vpop.f32.mrb[0].mxu0
      %v6611 = vpop.f32.mrb[0].mxu0
      %v6612 = vadd.f32 0.0, %v6611
      %v6613 = vpop.f32.mrb[0].mxu0
      %6614 = vmatprep.mubr.bf16.mxu0 0
      %6615 = vmatmul.mubr.bf16.gmra.mrb[0].mxu0 %v6355
      %v6616 = vpop.f32.mrb[0].mxu0
      %v6617 = vadd.f32 0.0, %v6616
      %v6618 = vpop.f32.mrb[0].mxu0
      %v6619 = vpop.f32.mrb[0].mxu0
      %v6620 = vpop.f32.mrb[0].mxu0
      %6621 = vmatprep.mubr.bf16.mxu0 0
      %6622 = vmatmul.mubr.bf16.gmra.mrb[0].mxu0 %v6359
      %v6623 = vpop.f32.mrb[0].mxu0
      %v6624 = vadd.f32 0.0, %v6623
      %v6625 = vpop.f32.mrb[0].mxu0
      %v6626 = vpop.f32.mrb[0].mxu0
      %v6627 = vadd.f32 0.0, %v6626
      %v6628 = vpop.f32.mrb[0].mxu0
      %6629 = vmatprep.mubr.bf16.mxu0 0
      %6630 = vmatmul.mubr.bf16.gmra.mrb[0].mxu0 %v6363
      %v6631 = vpop.f32.mrb[0].mxu0
      %v6632 = vpop.f32.mrb[0].mxu0
      %v6633 = vpop.f32.mrb[0].mxu0
      %v6634 = vadd.f32 0.0, %v6633
      %v6635 = vpop.f32.mrb[0].mxu0
      %6636 = vmatprep.mubr.bf16.mxu0 0
      %6637 = vmatmul.mubr.bf16.gmra.mrb[0].mxu0 %v6367
      %v6638 = vpop.f32.mrb[0].mxu0
      %v6639 = vadd.f32 0.0, %v6638
      %v6640 = vpop.f32.mrb[0].mxu0
      %v6641 = vpop.f32.mrb[0].mxu0
      %v6642 = vpop.f32.mrb[0].mxu0
      %6643 = vmatprep.mubr.bf16.mxu0 0
      %6644 = vmatmul.mubr.bf16.gmra.mrb[0].mxu0 %v6371
      %v6645 = vpop.f32.mrb[0].mxu0
      %v6646 = vadd.f32 0.0, %v6645
      %v6647 = vpop.f32.mrb[0].mxu0
      %v6648 = vpop.f32.mrb[0].mxu0
      %v6649 = vadd.f32 0.0, %v6648
      %v6650 = vpop.f32.mrb[0].mxu0
      %6651 = vmatprep.mubr.bf16.mxu0 0
      %6652 = vmatmul.mubr.bf16.gmra.mrb[0].mxu0 %v6375
      %v6653 = vpop.f32.mrb[0].mxu0
      %v6654 = vpop.f32.mrb[0].mxu0
      %v6655 = vpop.f32.mrb[0].mxu0
      %v6656 = vadd.f32 0.0, %v6655
      %v6657 = vpop.f32.mrb[0].mxu0
      %6658 = vmatprep.mubr.bf16.mxu0 0
      %6659 = vmatmul.mubr.bf16.gmra.mrb[0].mxu0 %v6384
      %v6660 = vpop.f32.mrb[0].mxu0
      %v6661 = vadd.f32 0.0, %v6660
      %v6662 = vpop.f32.mrb[0].mxu0
      %v6663 = vpop.f32.mrb[0].mxu0
      %v6664 = vpop.f32.mrb[0].mxu0
      %6665 = vdwg.mxu0
      %v6666 = vadd.f32 %v6084, %v6492
      %v6667 = vadd.f32 %v6087, %v6495
      %v6668 = vadd.f32 %v6094, %v6502
      %v6669 = vadd.f32 %v6099, %v6507
      %v6670 = vadd.f32 %v6106, %v6514
      %v6671 = vadd.f32 %v6109, %v6517
      %v6672 = vadd.f32 %v6116, %v6524
      %v6673 = vadd.f32 %v6121, %v6529
      %v6674 = vadd.f32 %v6128, %v6536
      %v6675 = vadd.f32 %v6131, %v6539
      %v6676 = vadd.f32 %v6138, %v6546
      %v6677 = vadd.f32 %v6143, %v6551
      %v6678 = vadd.f32 %v6150, %v6558
      %v6679 = vadd.f32 %v6153, %v6561
      %v6680 = vadd.f32 %v6160, %v6568
      %v6681 = vadd.f32 %v6165, %v6573
      %v6682 = vadd.f32 %v6172, %v6580
      %v6683 = vadd.f32 %v6175, %v6583
      %v6684 = vadd.f32 %v6182, %v6590
      %v6685 = vadd.f32 %v6187, %v6595
      %v6686 = vadd.f32 %v6194, %v6602
      %v6687 = vadd.f32 %v6197, %v6605
      %v6688 = vadd.f32 %v6204, %v6612
      %v6689 = vadd.f32 %v6209, %v6617
      %v6690 = vadd.f32 %v6216, %v6624
      %v6691 = vadd.f32 %v6219, %v6627
      %v6692 = vadd.f32 %v6226, %v6634
      %v6693 = vadd.f32 %v6231, %v6639
      %v6694 = vadd.f32 %v6238, %v6646
      %v6695 = vadd.f32 %v6241, %v6649
      %v6696 = vadd.f32 %v6248, %v6656
      %v6697 = vadd.f32 %v6253, %v6661
      %v6698 = vld [vmem:[#allocation3 + $0x10] sm:$0x80]
      %v6699 = vld [vmem:[#allocation3 + $0x18] sm:$0xff]
      %v6700 = vld [vmem:[#allocation3 + $0x20] sm:$0xff]
      %v6701 = vld [vmem:[#allocation3 + $0x28] sm:$0xff]
      %v6702 = vld [vmem:[#allocation3 + $0x30] sm:$0xff]
      %v6703 = vld [vmem:[#allocation3 + $0x38] sm:$0xff]
      %v6704 = vld [vmem:[#allocation3 + $0x40] sm:$0xff]
      %v6705 = vld [vmem:[#allocation3 + $0x48] sm:$0xff]
      %v6706 = vld [vmem:[#allocation3 + $0x50] sm:$0xff]
      %v6707 = vld [vmem:[#allocation3 + $0x58] sm:$0xff]
      %v6708 = vld [vmem:[#allocation3 + $0x60] sm:$0xff]
      %v6709 = vld [vmem:[#allocation3 + $0x68] sm:$0xff]
      %v6710 = vld [vmem:[#allocation3 + $0x70] sm:$0xff]
      %v6711 = vld [vmem:[#allocation3 + $0x78] sm:$0xff]
      %v6712 = vld [vmem:[#allocation3 + $0x80] sm:$0xff]
      %v6713 = vld [vmem:[#allocation3 + $0x88] sm:$0xff]
      %v6714 = vld [vmem:[#allocation3 + $0x90] sm:$0xff]
      %v6715 = vld [vmem:[#allocation3 + $0x98] sm:$0xff]
      %v6716 = vld [vmem:[#allocation3 + $0xa0] sm:$0xff]
      %v6717 = vld [vmem:[#allocation3 + $0xa8] sm:$0xff]
      %v6718 = vld [vmem:[#allocation3 + $0xb0] sm:$0xff]
      %v6719 = vld [vmem:[#allocation3 + $0xb8] sm:$0xff]
      %v6720 = vld [vmem:[#allocation3 + $0xc0] sm:$0xff]
      %v6721 = vld [vmem:[#allocation3 + $0xc8] sm:$0xff]
      %v6722 = vld [vmem:[#allocation3 + $0xd0] sm:$0xff]
      %s6723 = scalar_lea.vmem %s3, 192
      %v6724 = vld [vmem:[%s6723] sm:$0xf]
      %v6725 = vld [vmem:[%s6723 + $0x4] sm:$0xf]
      %v6726 = vld [vmem:[%s6723 + $0x8] sm:$0xf]
      %v6727 = vld [vmem:[%s6723 + $0xc] sm:$0xf]
      %v6728 = vld [vmem:[%s6723 + $0x10] sm:$0xf]
      %v6729 = vld [vmem:[%s6723 + $0x14] sm:$0xf]
      %v6730 = vld [vmem:[%s6723 + $0x18] sm:$0xf]
      %v6731 = vld [vmem:[%s6723 + $0x1c] sm:$0xf]
      %v6732 = vld [vmem:[%s6723 + $0x20] sm:$0xf]
      %v6733 = vld [vmem:[%s6723 + $0x24] sm:$0xf]
      %v6734 = vld [vmem:[%s6723 + $0x28] sm:$0xf]
      %v6735 = vld [vmem:[%s6723 + $0x2c] sm:$0xf]
      %v6736 = vld [vmem:[%s6723 + $0x30] sm:$0xf]
      %v6737 = vld [vmem:[%s6723 + $0x34] sm:$0xf]
      %v6738 = vld [vmem:[%s6723 + $0x38] sm:$0xf]
      %v6739 = vld [vmem:[%s6723 + $0x3c] sm:$0xf]
      %v6741 = vshrl.u32 %v6698, 16
      %v6743 = vrot.slane %v6741, 7
      %v6745 = vshrl.u32 %v6699, 16
      %v6747 = vrot.slane %v6745, 7
      %v6748 = vshll.u32 %v6699, 16
      %v6750 = vor.u32 %v6747, %v6748
      %v6751 = vsel %vm1925, %v6743, %v6750
      %v6753 = vshrl.u32 %v6700, 16
      %v6755 = vrot.slane %v6753, 7
      %v6756 = vshll.u32 %v6700, 16
      %v6758 = vor.u32 %v6755, %v6756
      %v6759 = vsel %vm1925, %v6747, %v6758
      %v6761 = vshrl.u32 %v6701, 16
      %v6763 = vrot.slane %v6761, 7
      %v6764 = vshll.u32 %v6701, 16
      %v6766 = vor.u32 %v6763, %v6764
      %v6767 = vsel %vm1925, %v6755, %v6766
      %v6769 = vshrl.u32 %v6702, 16
      %v6771 = vrot.slane %v6769, 7
      %v6772 = vshll.u32 %v6702, 16
      %v6774 = vor.u32 %v6771, %v6772
      %v6775 = vsel %vm1925, %v6763, %v6774
      %v6777 = vshrl.u32 %v6703, 16
      %v6779 = vrot.slane %v6777, 7
      %v6780 = vshll.u32 %v6703, 16
      %v6782 = vor.u32 %v6779, %v6780
      %v6783 = vsel %vm1925, %v6771, %v6782
      %v6785 = vshrl.u32 %v6704, 16
      %v6787 = vrot.slane %v6785, 7
      %v6788 = vshll.u32 %v6704, 16
      %v6790 = vor.u32 %v6787, %v6788
      %v6791 = vsel %vm1925, %v6779, %v6790
      %v6793 = vshrl.u32 %v6705, 16
      %v6795 = vrot.slane %v6793, 7
      %v6796 = vshll.u32 %v6705, 16
      %v6798 = vor.u32 %v6795, %v6796
      %v6799 = vsel %vm1925, %v6787, %v6798
      %v6801 = vshrl.u32 %v6706, 16
      %v6803 = vrot.slane %v6801, 7
      %v6804 = vshll.u32 %v6706, 16
      %v6806 = vor.u32 %v6803, %v6804
      %v6807 = vsel %vm1925, %v6795, %v6806
      %v6809 = vshrl.u32 %v6707, 16
      %v6811 = vrot.slane %v6809, 7
      %v6812 = vshll.u32 %v6707, 16
      %v6814 = vor.u32 %v6811, %v6812
      %v6815 = vsel %vm1925, %v6803, %v6814
      %v6817 = vshrl.u32 %v6708, 16
      %v6819 = vrot.slane %v6817, 7
      %v6820 = vshll.u32 %v6708, 16
      %v6822 = vor.u32 %v6819, %v6820
      %v6823 = vsel %vm1925, %v6811, %v6822
      %v6825 = vshrl.u32 %v6709, 16
      %v6827 = vrot.slane %v6825, 7
      %v6828 = vshll.u32 %v6709, 16
      %v6830 = vor.u32 %v6827, %v6828
      %v6831 = vsel %vm1925, %v6819, %v6830
      %v6833 = vshrl.u32 %v6710, 16
      %v6835 = vrot.slane %v6833, 7
      %v6836 = vshll.u32 %v6710, 16
      %v6838 = vor.u32 %v6835, %v6836
      %v6839 = vsel %vm1925, %v6827, %v6838
      %v6841 = vshrl.u32 %v6711, 16
      %v6843 = vrot.slane %v6841, 7
      %v6844 = vshll.u32 %v6711, 16
      %v6846 = vor.u32 %v6843, %v6844
      %v6847 = vsel %vm1925, %v6835, %v6846
      %v6849 = vshrl.u32 %v6712, 16
      %v6851 = vrot.slane %v6849, 7
      %v6852 = vshll.u32 %v6712, 16
      %v6854 = vor.u32 %v6851, %v6852
      %v6855 = vsel %vm1925, %v6843, %v6854
      %v6857 = vshrl.u32 %v6713, 16
      %v6859 = vrot.slane %v6857, 7
      %v6860 = vshll.u32 %v6713, 16
      %v6862 = vor.u32 %v6859, %v6860
      %v6863 = vsel %vm1925, %v6851, %v6862
      %v6865 = vshrl.u32 %v6714, 16
      %v6867 = vrot.slane %v6865, 7
      %v6868 = vshll.u32 %v6714, 16
      %v6870 = vor.u32 %v6867, %v6868
      %v6871 = vsel %vm1925, %v6859, %v6870
      %v6873 = vshrl.u32 %v6715, 16
      %v6875 = vrot.slane %v6873, 7
      %v6876 = vshll.u32 %v6715, 16
      %v6878 = vor.u32 %v6875, %v6876
      %v6879 = vsel %vm1925, %v6867, %v6878
      %v6881 = vshrl.u32 %v6716, 16
      %v6883 = vrot.slane %v6881, 7
      %v6884 = vshll.u32 %v6716, 16
      %v6886 = vor.u32 %v6883, %v6884
      %v6887 = vsel %vm1925, %v6875, %v6886
      %v6889 = vshrl.u32 %v6717, 16
      %v6891 = vrot.slane %v6889, 7
      %v6892 = vshll.u32 %v6717, 16
      %v6894 = vor.u32 %v6891, %v6892
      %v6895 = vsel %vm1925, %v6883, %v6894
      %v6897 = vshrl.u32 %v6718, 16
      %v6899 = vrot.slane %v6897, 7
      %v6900 = vshll.u32 %v6718, 16
      %v6902 = vor.u32 %v6899, %v6900
      %v6903 = vsel %vm1925, %v6891, %v6902
      %v6905 = vshrl.u32 %v6719, 16
      %v6907 = vrot.slane %v6905, 7
      %v6908 = vshll.u32 %v6719, 16
      %v6910 = vor.u32 %v6907, %v6908
      %v6911 = vsel %vm1925, %v6899, %v6910
      %v6913 = vshrl.u32 %v6720, 16
      %v6915 = vrot.slane %v6913, 7
      %v6916 = vshll.u32 %v6720, 16
      %v6918 = vor.u32 %v6915, %v6916
      %v6919 = vsel %vm1925, %v6907, %v6918
      %v6921 = vshrl.u32 %v6721, 16
      %v6923 = vrot.slane %v6921, 7
      %v6924 = vshll.u32 %v6721, 16
      %v6926 = vor.u32 %v6923, %v6924
      %v6927 = vsel %vm1925, %v6915, %v6926
      %v6929 = vshrl.u32 %v6722, 16
      %v6931 = vrot.slane %v6929, 7
      %v6932 = vshll.u32 %v6722, 16
      %v6934 = vor.u32 %v6931, %v6932
      %v6935 = vsel %vm1925, %v6923, %v6934
      %v6976 = vunpack.c.l.b16 %v6724
      %v6977 = vunpack.c.l.b16 %v6725
      %v6978 = vunpack.c.l.b16 %v6726
      %v6979 = vunpack.c.l.b16 %v6727
      %v6980 = vunpack.c.l.b16 %v6728
      %v6981 = vunpack.c.l.b16 %v6729
      %v6982 = vunpack.c.l.b16 %v6730
      %v6983 = vunpack.c.l.b16 %v6731
      %v6984 = vunpack.c.l.b16 %v6732
      %v6985 = vunpack.c.l.b16 %v6733
      %v6986 = vunpack.c.l.b16 %v6734
      %v6987 = vunpack.c.l.b16 %v6735
      %v6988 = vunpack.c.l.b16 %v6736
      %v6989 = vunpack.c.l.b16 %v6737
      %v6990 = vunpack.c.l.b16 %v6738
      %v6991 = vunpack.c.l.b16 %v6739
      %v6992 = vpack.c.b16 %v6977, %v6976
      %v6993 = vpack.c.b16 %v6979, %v6978
      %v6994 = vpack.c.b16 %v6981, %v6980
      %v6995 = vpack.c.b16 %v6983, %v6982
      %v6996 = vpack.c.b16 %v6985, %v6984
      %v6997 = vpack.c.b16 %v6987, %v6986
      %v6998 = vpack.c.b16 %v6989, %v6988
      %v6999 = vpack.c.b16 %v6991, %v6990
      %7008 = vmatprep.subr.bf16.mxu0 0
      %7009 = vmatpush1.bf16.msra.mxu0 %v6992
      %7010 = vmatprep.subr.bf16.mxu0 0
      %7011 = vmatpush1.bf16.msra.mxu0 %v6993
      %7012 = vmatprep.subr.bf16.mxu0 0
      %7013 = vmatpush1.bf16.msra.mxu0 %v6994
      %7014 = vmatprep.subr.bf16.mxu0 0
      %7015 = vmatpush1.bf16.msra.mxu0 %v6995
      %7016 = vmatprep.subr.bf16.mxu0 0
      %7017 = vmatpush1.bf16.msra.mxu0 %v6996
      %7018 = vmatprep.subr.bf16.mxu0 0
      %7019 = vmatpush1.bf16.msra.mxu0 %v6997
      %7020 = vmatprep.subr.bf16.mxu0 0
      %7021 = vmatpush1.bf16.msra.mxu0 %v6998
      %7022 = vmatprep.subr.bf16.mxu0 0
      %7023 = vmatpush1.bf16.msra.mxu0 %v6999
      %7024 = vmatprep.subr.bf16.mxu0 0
      %7025 = vmatpush1.bf16.msra.mxu0 0
      %7026 = vmatprep.subr.bf16.mxu0 0
      %7027 = vmatpush1.bf16.msra.mxu0 0
      %7028 = vmatprep.subr.bf16.mxu0 0
      %7029 = vmatpush1.bf16.msra.mxu0 0
      %7030 = vmatprep.subr.bf16.mxu0 0
      %7031 = vmatpush1.bf16.msra.mxu0 0
      %7032 = vmatprep.subr.bf16.mxu0 0
      %7033 = vmatpush1.bf16.msra.mxu0 0
      %7034 = vmatprep.subr.bf16.mxu0 0
      %7035 = vmatpush1.bf16.msra.mxu0 0
      %7036 = vmatprep.subr.bf16.mxu0 0
      %7037 = vmatpush1.bf16.msra.mxu0 0
      %7038 = vmatprep.subr.bf16.mxu0 0
      %7039 = vmatpush1.bf16.msra.mxu0 0
      %7040 = vmatprep.mubr.bf16.mxu0 0
      %7041 = vmatmul.mubr.bf16.gmra.mrb[0].mxu0 %v6751
      %v7042 = vpop.f32.mrb[0].mxu0
      %v7043 = vadd.f32 0.0, %v7042
      %v7044 = vpop.f32.mrb[0].mxu0
      %v7045 = vpop.f32.mrb[0].mxu0
      %v7046 = vadd.f32 0.0, %v7045
      %v7047 = vpop.f32.mrb[0].mxu0
      %7048 = vmatprep.mubr.bf16.mxu0 0
      %7049 = vmatmul.mubr.bf16.gmra.mrb[0].mxu0 %v6759
      %v7050 = vpop.f32.mrb[0].mxu0
      %v7051 = vpop.f32.mrb[0].mxu0
      %v7052 = vpop.f32.mrb[0].mxu0
      %v7053 = vadd.f32 0.0, %v7052
      %v7054 = vpop.f32.mrb[0].mxu0
      %7055 = vmatprep.mubr.bf16.mxu0 0
      %7056 = vmatmul.mubr.bf16.gmra.mrb[0].mxu0 %v6767
      %v7057 = vpop.f32.mrb[0].mxu0
      %v7058 = vadd.f32 0.0, %v7057
      %v7059 = vpop.f32.mrb[0].mxu0
      %v7060 = vpop.f32.mrb[0].mxu0
      %v7061 = vpop.f32.mrb[0].mxu0
      %7062 = vmatprep.mubr.bf16.mxu0 0
      %7063 = vmatmul.mubr.bf16.gmra.mrb[0].mxu0 %v6775
      %v7064 = vpop.f32.mrb[0].mxu0
      %v7065 = vadd.f32 0.0, %v7064
      %v7066 = vpop.f32.mrb[0].mxu0
      %v7067 = vpop.f32.mrb[0].mxu0
      %v7068 = vadd.f32 0.0, %v7067
      %v7069 = vpop.f32.mrb[0].mxu0
      %7070 = vmatprep.mubr.bf16.mxu0 0
      %7071 = vmatmul.mubr.bf16.gmra.mrb[0].mxu0 %v6783
      %v7072 = vpop.f32.mrb[0].mxu0
      %v7073 = vpop.f32.mrb[0].mxu0
      %v7074 = vpop.f32.mrb[0].mxu0
      %v7075 = vadd.f32 0.0, %v7074
      %v7076 = vpop.f32.mrb[0].mxu0
      %7077 = vmatprep.mubr.bf16.mxu0 0
      %7078 = vmatmul.mubr.bf16.gmra.mrb[0].mxu0 %v6791
      %v7079 = vpop.f32.mrb[0].mxu0
      %v7080 = vadd.f32 0.0, %v7079
      %v7081 = vpop.f32.mrb[0].mxu0
      %v7082 = vpop.f32.mrb[0].mxu0
      %v7083 = vpop.f32.mrb[0].mxu0
      %7084 = vmatprep.mubr.bf16.mxu0 0
      %7085 = vmatmul.mubr.bf16.gmra.mrb[0].mxu0 %v6799
      %v7086 = vpop.f32.mrb[0].mxu0
      %v7087 = vadd.f32 0.0, %v7086
      %v7088 = vpop.f32.mrb[0].mxu0
      %v7089 = vpop.f32.mrb[0].mxu0
      %v7090 = vadd.f32 0.0, %v7089
      %v7091 = vpop.f32.mrb[0].mxu0
      %7092 = vmatprep.mubr.bf16.mxu0 0
      %7093 = vmatmul.mubr.bf16.gmra.mrb[0].mxu0 %v6807
      %v7094 = vpop.f32.mrb[0].mxu0
      %v7095 = vpop.f32.mrb[0].mxu0
      %v7096 = vpop.f32.mrb[0].mxu0
      %v7097 = vadd.f32 0.0, %v7096
      %v7098 = vpop.f32.mrb[0].mxu0
      %7099 = vmatprep.mubr.bf16.mxu0 0
      %7100 = vmatmul.mubr.bf16.gmra.mrb[0].mxu0 %v6815
      %v7101 = vpop.f32.mrb[0].mxu0
      %v7102 = vadd.f32 0.0, %v7101
      %v7103 = vpop.f32.mrb[0].mxu0
      %v7104 = vpop.f32.mrb[0].mxu0
      %v7105 = vpop.f32.mrb[0].mxu0
      %7106 = vmatprep.mubr.bf16.mxu0 0
      %7107 = vmatmul.mubr.bf16.gmra.mrb[0].mxu0 %v6823
      %v7108 = vpop.f32.mrb[0].mxu0
      %v7109 = vadd.f32 0.0, %v7108
      %v7110 = vpop.f32.mrb[0].mxu0
      %v7111 = vpop.f32.mrb[0].mxu0
      %v7112 = vadd.f32 0.0, %v7111
      %v7113 = vpop.f32.mrb[0].mxu0
      %7114 = vmatprep.mubr.bf16.mxu0 0
      %7115 = vmatmul.mubr.bf16.gmra.mrb[0].mxu0 %v6831
      %v7116 = vpop.f32.mrb[0].mxu0
      %v7117 = vpop.f32.mrb[0].mxu0
      %v7118 = vpop.f32.mrb[0].mxu0
      %v7119 = vadd.f32 0.0, %v7118
      %v7120 = vpop.f32.mrb[0].mxu0
      %7121 = vmatprep.mubr.bf16.mxu0 0
      %7122 = vmatmul.mubr.bf16.gmra.mrb[0].mxu0 %v6839
      %v7123 = vpop.f32.mrb[0].mxu0
      %v7124 = vadd.f32 0.0, %v7123
      %v7125 = vpop.f32.mrb[0].mxu0
      %v7126 = vpop.f32.mrb[0].mxu0
      %v7127 = vpop.f32.mrb[0].mxu0
      %7128 = vmatprep.mubr.bf16.mxu0 0
      %7129 = vmatmul.mubr.bf16.gmra.mrb[0].mxu0 %v6847
      %v7130 = vpop.f32.mrb[0].mxu0
      %v7131 = vadd.f32 0.0, %v7130
      %v7132 = vpop.f32.mrb[0].mxu0
      %v7133 = vpop.f32.mrb[0].mxu0
      %v7134 = vadd.f32 0.0, %v7133
      %v7135 = vpop.f32.mrb[0].mxu0
      %7136 = vmatprep.mubr.bf16.mxu0 0
      %7137 = vmatmul.mubr.bf16.gmra.mrb[0].mxu0 %v6855
      %v7138 = vpop.f32.mrb[0].mxu0
      %v7139 = vpop.f32.mrb[0].mxu0
      %v7140 = vpop.f32.mrb[0].mxu0
      %v7141 = vadd.f32 0.0, %v7140
      %v7142 = vpop.f32.mrb[0].mxu0
      %7143 = vmatprep.mubr.bf16.mxu0 0
      %7144 = vmatmul.mubr.bf16.gmra.mrb[0].mxu0 %v6863
      %v7145 = vpop.f32.mrb[0].mxu0
      %v7146 = vadd.f32 0.0, %v7145
      %v7147 = vpop.f32.mrb[0].mxu0
      %v7148 = vpop.f32.mrb[0].mxu0
      %v7149 = vpop.f32.mrb[0].mxu0
      %7150 = vmatprep.mubr.bf16.mxu0 0
      %7151 = vmatmul.mubr.bf16.gmra.mrb[0].mxu0 %v6871
      %v7152 = vpop.f32.mrb[0].mxu0
      %v7153 = vadd.f32 0.0, %v7152
      %v7154 = vpop.f32.mrb[0].mxu0
      %v7155 = vpop.f32.mrb[0].mxu0
      %v7156 = vadd.f32 0.0, %v7155
      %v7157 = vpop.f32.mrb[0].mxu0
      %7158 = vmatprep.mubr.bf16.mxu0 0
      %7159 = vmatmul.mubr.bf16.gmra.mrb[0].mxu0 %v6879
      %v7160 = vpop.f32.mrb[0].mxu0
      %v7161 = vpop.f32.mrb[0].mxu0
      %v7162 = vpop.f32.mrb[0].mxu0
      %v7163 = vadd.f32 0.0, %v7162
      %v7164 = vpop.f32.mrb[0].mxu0
      %7165 = vmatprep.mubr.bf16.mxu0 0
      %7166 = vmatmul.mubr.bf16.gmra.mrb[0].mxu0 %v6887
      %v7167 = vpop.f32.mrb[0].mxu0
      %v7168 = vadd.f32 0.0, %v7167
      %v7169 = vpop.f32.mrb[0].mxu0
      %v7170 = vpop.f32.mrb[0].mxu0
      %v7171 = vpop.f32.mrb[0].mxu0
      %7172 = vmatprep.mubr.bf16.mxu0 0
      %7173 = vmatmul.mubr.bf16.gmra.mrb[0].mxu0 %v6895
      %v7174 = vpop.f32.mrb[0].mxu0
      %v7175 = vadd.f32 0.0, %v7174
      %v7176 = vpop.f32.mrb[0].mxu0
      %v7177 = vpop.f32.mrb[0].mxu0
      %v7178 = vadd.f32 0.0, %v7177
      %v7179 = vpop.f32.mrb[0].mxu0
      %7180 = vmatprep.mubr.bf16.mxu0 0
      %7181 = vmatmul.mubr.bf16.gmra.mrb[0].mxu0 %v6903
      %v7182 = vpop.f32.mrb[0].mxu0
      %v7183 = vpop.f32.mrb[0].mxu0
      %v7184 = vpop.f32.mrb[0].mxu0
      %v7185 = vadd.f32 0.0, %v7184
      %v7186 = vpop.f32.mrb[0].mxu0
      %7187 = vmatprep.mubr.bf16.mxu0 0
      %7188 = vmatmul.mubr.bf16.gmra.mrb[0].mxu0 %v6911
      %v7189 = vpop.f32.mrb[0].mxu0
      %v7190 = vadd.f32 0.0, %v7189
      %v7191 = vpop.f32.mrb[0].mxu0
      %v7192 = vpop.f32.mrb[0].mxu0
      %v7193 = vpop.f32.mrb[0].mxu0
      %7194 = vmatprep.mubr.bf16.mxu0 0
      %7195 = vmatmul.mubr.bf16.gmra.mrb[0].mxu0 %v6919
      %v7196 = vpop.f32.mrb[0].mxu0
      %v7197 = vadd.f32 0.0, %v7196
      %v7198 = vpop.f32.mrb[0].mxu0
      %v7199 = vpop.f32.mrb[0].mxu0
      %v7200 = vadd.f32 0.0, %v7199
      %v7201 = vpop.f32.mrb[0].mxu0
      %7202 = vmatprep.mubr.bf16.mxu0 0
      %7203 = vmatmul.mubr.bf16.gmra.mrb[0].mxu0 %v6927
      %v7204 = vpop.f32.mrb[0].mxu0
      %v7205 = vpop.f32.mrb[0].mxu0
      %v7206 = vpop.f32.mrb[0].mxu0
      %v7207 = vadd.f32 0.0, %v7206
      %v7208 = vpop.f32.mrb[0].mxu0
      %7209 = vmatprep.mubr.bf16.mxu0 0
      %7210 = vmatmul.mubr.bf16.gmra.mrb[0].mxu0 %v6935
      %v7211 = vpop.f32.mrb[0].mxu0
      %v7212 = vadd.f32 0.0, %v7211
      %v7213 = vpop.f32.mrb[0].mxu0
      %v7214 = vpop.f32.mrb[0].mxu0
      %v7215 = vpop.f32.mrb[0].mxu0
      %7216 = vdwg.mxu0
      %v7217 = vadd.f32 %v6666, %v7043
      %v7218 = vadd.f32 %v6667, %v7046
      %v7219 = vadd.f32 %v6668, %v7053
      %v7220 = vadd.f32 %v6669, %v7058
      %v7221 = vadd.f32 %v6670, %v7065
      %v7222 = vadd.f32 %v6671, %v7068
      %v7223 = vadd.f32 %v6672, %v7075
      %v7224 = vadd.f32 %v6673, %v7080
      %v7225 = vadd.f32 %v6674, %v7087
      %v7226 = vadd.f32 %v6675, %v7090
      %v7227 = vadd.f32 %v6676, %v7097
      %v7228 = vadd.f32 %v6677, %v7102
      %v7229 = vadd.f32 %v6678, %v7109
      %v7230 = vadd.f32 %v6679, %v7112
      %v7231 = vadd.f32 %v6680, %v7119
      %v7232 = vadd.f32 %v6681, %v7124
      %v7233 = vadd.f32 %v6682, %v7131
      %v7234 = vadd.f32 %v6683, %v7134
      %v7235 = vadd.f32 %v6684, %v7141
      %v7236 = vadd.f32 %v6685, %v7146
      %v7237 = vadd.f32 %v6686, %v7153
      %v7238 = vadd.f32 %v6687, %v7156
      %v7239 = vadd.f32 %v6688, %v7163
      %v7240 = vadd.f32 %v6689, %v7168
      %v7241 = vadd.f32 %v6690, %v7175
      %v7242 = vadd.f32 %v6691, %v7178
      %v7243 = vadd.f32 %v6692, %v7185
      %v7244 = vadd.f32 %v6693, %v7190
      %v7245 = vadd.f32 %v6694, %v7197
      %v7246 = vadd.f32 %v6695, %v7200
      %v7247 = vadd.f32 %v6696, %v7207
      %v7248 = vadd.f32 %v6697, %v7212
      %s7249 = scalar_lea.vmem %s3, 256
      %v7250 = vld [vmem:[%s7249] sm:$0xf]
      %v7251 = vld [vmem:[%s7249 + $0x4] sm:$0xf]
      %v7252 = vld [vmem:[%s7249 + $0x8] sm:$0xf]
      %v7253 = vld [vmem:[%s7249 + $0xc] sm:$0xf]
      %v7254 = vld [vmem:[%s7249 + $0x10] sm:$0xf]
      %v7255 = vld [vmem:[%s7249 + $0x14] sm:$0xf]
      %v7256 = vld [vmem:[%s7249 + $0x18] sm:$0xf]
      %v7257 = vld [vmem:[%s7249 + $0x1c] sm:$0xf]
      %v7258 = vld [vmem:[%s7249 + $0x20] sm:$0xf]
      %v7259 = vld [vmem:[%s7249 + $0x24] sm:$0xf]
      %v7260 = vld [vmem:[%s7249 + $0x28] sm:$0xf]
      %v7261 = vld [vmem:[%s7249 + $0x2c] sm:$0xf]
      %v7262 = vld [vmem:[%s7249 + $0x30] sm:$0xf]
      %v7263 = vld [vmem:[%s7249 + $0x34] sm:$0xf]
      %v7264 = vld [vmem:[%s7249 + $0x38] sm:$0xf]
      %v7265 = vld [vmem:[%s7249 + $0x3c] sm:$0xf]
      %v7282 = vunpack.c.l.b16 %v7250
      %v7283 = vunpack.c.l.b16 %v7251
      %v7284 = vunpack.c.l.b16 %v7252
      %v7285 = vunpack.c.l.b16 %v7253
      %v7286 = vunpack.c.l.b16 %v7254
      %v7287 = vunpack.c.l.b16 %v7255
      %v7288 = vunpack.c.l.b16 %v7256
      %v7289 = vunpack.c.l.b16 %v7257
      %v7290 = vunpack.c.l.b16 %v7258
      %v7291 = vunpack.c.l.b16 %v7259
      %v7292 = vunpack.c.l.b16 %v7260
      %v7293 = vunpack.c.l.b16 %v7261
      %v7294 = vunpack.c.l.b16 %v7262
      %v7295 = vunpack.c.l.b16 %v7263
      %v7296 = vunpack.c.l.b16 %v7264
      %v7297 = vunpack.c.l.b16 %v7265
      %v7298 = vpack.c.b16 %v7283, %v7282
      %v7299 = vpack.c.b16 %v7285, %v7284
      %v7300 = vpack.c.b16 %v7287, %v7286
      %v7301 = vpack.c.b16 %v7289, %v7288
      %v7302 = vpack.c.b16 %v7291, %v7290
      %v7303 = vpack.c.b16 %v7293, %v7292
      %v7304 = vpack.c.b16 %v7295, %v7294
      %v7305 = vpack.c.b16 %v7297, %v7296
      %7314 = vmatprep.subr.bf16.mxu0 0
      %7315 = vmatpush1.bf16.msra.mxu0 %v7298
      %7316 = vmatprep.subr.bf16.mxu0 0
      %7317 = vmatpush1.bf16.msra.mxu0 %v7299
      %7318 = vmatprep.subr.bf16.mxu0 0
      %7319 = vmatpush1.bf16.msra.mxu0 %v7300
      %7320 = vmatprep.subr.bf16.mxu0 0
      %7321 = vmatpush1.bf16.msra.mxu0 %v7301
      %7322 = vmatprep.subr.bf16.mxu0 0
      %7323 = vmatpush1.bf16.msra.mxu0 %v7302
      %7324 = vmatprep.subr.bf16.mxu0 0
      %7325 = vmatpush1.bf16.msra.mxu0 %v7303
      %7326 = vmatprep.subr.bf16.mxu0 0
      %7327 = vmatpush1.bf16.msra.mxu0 %v7304
      %7328 = vmatprep.subr.bf16.mxu0 0
      %7329 = vmatpush1.bf16.msra.mxu0 %v7305
      %7330 = vmatprep.subr.bf16.mxu0 0
      %7331 = vmatpush1.bf16.msra.mxu0 0
      %7332 = vmatprep.subr.bf16.mxu0 0
      %7333 = vmatpush1.bf16.msra.mxu0 0
      %7334 = vmatprep.subr.bf16.mxu0 0
      %7335 = vmatpush1.bf16.msra.mxu0 0
      %7336 = vmatprep.subr.bf16.mxu0 0
      %7337 = vmatpush1.bf16.msra.mxu0 0
      %7338 = vmatprep.subr.bf16.mxu0 0
      %7339 = vmatpush1.bf16.msra.mxu0 0
      %7340 = vmatprep.subr.bf16.mxu0 0
      %7341 = vmatpush1.bf16.msra.mxu0 0
      %7342 = vmatprep.subr.bf16.mxu0 0
      %7343 = vmatpush1.bf16.msra.mxu0 0
      %7344 = vmatprep.subr.bf16.mxu0 0
      %7345 = vmatpush1.bf16.msra.mxu0 0
      %7346 = vmatprep.mubr.bf16.mxu0 0
      %7347 = vmatmul.mubr.bf16.gmra.mrb[0].mxu0 %v6699
      %v7348 = vpop.f32.mrb[0].mxu0
      %v7349 = vadd.f32 0.0, %v7348
      %v7350 = vpop.f32.mrb[0].mxu0
      %v7351 = vpop.f32.mrb[0].mxu0
      %v7352 = vadd.f32 0.0, %v7351
      %v7353 = vpop.f32.mrb[0].mxu0
      %7354 = vmatprep.mubr.bf16.mxu0 0
      %7355 = vmatmul.mubr.bf16.gmra.mrb[0].mxu0 %v6700
      %v7356 = vpop.f32.mrb[0].mxu0
      %v7357 = vpop.f32.mrb[0].mxu0
      %v7358 = vpop.f32.mrb[0].mxu0
      %v7359 = vadd.f32 0.0, %v7358
      %v7360 = vpop.f32.mrb[0].mxu0
      %7361 = vmatprep.mubr.bf16.mxu0 0
      %7362 = vmatmul.mubr.bf16.gmra.mrb[0].mxu0 %v6701
      %v7363 = vpop.f32.mrb[0].mxu0
      %v7364 = vadd.f32 0.0, %v7363
      %v7365 = vpop.f32.mrb[0].mxu0
      %v7366 = vpop.f32.mrb[0].mxu0
      %v7367 = vpop.f32.mrb[0].mxu0
      %7368 = vmatprep.mubr.bf16.mxu0 0
      %7369 = vmatmul.mubr.bf16.gmra.mrb[0].mxu0 %v6702
      %v7370 = vpop.f32.mrb[0].mxu0
      %v7371 = vadd.f32 0.0, %v7370
      %v7372 = vpop.f32.mrb[0].mxu0
      %v7373 = vpop.f32.mrb[0].mxu0
      %v7374 = vadd.f32 0.0, %v7373
      %v7375 = vpop.f32.mrb[0].mxu0
      %7376 = vmatprep.mubr.bf16.mxu0 0
      %7377 = vmatmul.mubr.bf16.gmra.mrb[0].mxu0 %v6703
      %v7378 = vpop.f32.mrb[0].mxu0
      %v7379 = vpop.f32.mrb[0].mxu0
      %v7380 = vpop.f32.mrb[0].mxu0
      %v7381 = vadd.f32 0.0, %v7380
      %v7382 = vpop.f32.mrb[0].mxu0
      %7383 = vmatprep.mubr.bf16.mxu0 0
      %7384 = vmatmul.mubr.bf16.gmra.mrb[0].mxu0 %v6704
      %v7385 = vpop.f32.mrb[0].mxu0
      %v7386 = vadd.f32 0.0, %v7385
      %v7387 = vpop.f32.mrb[0].mxu0
      %v7388 = vpop.f32.mrb[0].mxu0
      %v7389 = vpop.f32.mrb[0].mxu0
      %7390 = vmatprep.mubr.bf16.mxu0 0
      %7391 = vmatmul.mubr.bf16.gmra.mrb[0].mxu0 %v6705
      %v7392 = vpop.f32.mrb[0].mxu0
      %v7393 = vadd.f32 0.0, %v7392
      %v7394 = vpop.f32.mrb[0].mxu0
      %v7395 = vpop.f32.mrb[0].mxu0
      %v7396 = vadd.f32 0.0, %v7395
      %v7397 = vpop.f32.mrb[0].mxu0
      %7398 = vmatprep.mubr.bf16.mxu0 0
      %7399 = vmatmul.mubr.bf16.gmra.mrb[0].mxu0 %v6706
      %v7400 = vpop.f32.mrb[0].mxu0
      %v7401 = vpop.f32.mrb[0].mxu0
      %v7402 = vpop.f32.mrb[0].mxu0
      %v7403 = vadd.f32 0.0, %v7402
      %v7404 = vpop.f32.mrb[0].mxu0
      %7405 = vmatprep.mubr.bf16.mxu0 0
      %7406 = vmatmul.mubr.bf16.gmra.mrb[0].mxu0 %v6707
      %v7407 = vpop.f32.mrb[0].mxu0
      %v7408 = vadd.f32 0.0, %v7407
      %v7409 = vpop.f32.mrb[0].mxu0
      %v7410 = vpop.f32.mrb[0].mxu0
      %v7411 = vpop.f32.mrb[0].mxu0
      %7412 = vmatprep.mubr.bf16.mxu0 0
      %7413 = vmatmul.mubr.bf16.gmra.mrb[0].mxu0 %v6708
      %v7414 = vpop.f32.mrb[0].mxu0
      %v7415 = vadd.f32 0.0, %v7414
      %v7416 = vpop.f32.mrb[0].mxu0
      %v7417 = vpop.f32.mrb[0].mxu0
      %v7418 = vadd.f32 0.0, %v7417
      %v7419 = vpop.f32.mrb[0].mxu0
      %7420 = vmatprep.mubr.bf16.mxu0 0
      %7421 = vmatmul.mubr.bf16.gmra.mrb[0].mxu0 %v6709
      %v7422 = vpop.f32.mrb[0].mxu0
      %v7423 = vpop.f32.mrb[0].mxu0
      %v7424 = vpop.f32.mrb[0].mxu0
      %v7425 = vadd.f32 0.0, %v7424
      %v7426 = vpop.f32.mrb[0].mxu0
      %7427 = vmatprep.mubr.bf16.mxu0 0
      %7428 = vmatmul.mubr.bf16.gmra.mrb[0].mxu0 %v6710
      %v7429 = vpop.f32.mrb[0].mxu0
      %v7430 = vadd.f32 0.0, %v7429
      %v7431 = vpop.f32.mrb[0].mxu0
      %v7432 = vpop.f32.mrb[0].mxu0
      %v7433 = vpop.f32.mrb[0].mxu0
      %7434 = vmatprep.mubr.bf16.mxu0 0
      %7435 = vmatmul.mubr.bf16.gmra.mrb[0].mxu0 %v6711
      %v7436 = vpop.f32.mrb[0].mxu0
      %v7437 = vadd.f32 0.0, %v7436
      %v7438 = vpop.f32.mrb[0].mxu0
      %v7439 = vpop.f32.mrb[0].mxu0
      %v7440 = vadd.f32 0.0, %v7439
      %v7441 = vpop.f32.mrb[0].mxu0
      %7442 = vmatprep.mubr.bf16.mxu0 0
      %7443 = vmatmul.mubr.bf16.gmra.mrb[0].mxu0 %v6712
      %v7444 = vpop.f32.mrb[0].mxu0
      %v7445 = vpop.f32.mrb[0].mxu0
      %v7446 = vpop.f32.mrb[0].mxu0
      %v7447 = vadd.f32 0.0, %v7446
      %v7448 = vpop.f32.mrb[0].mxu0
      %7449 = vmatprep.mubr.bf16.mxu0 0
      %7450 = vmatmul.mubr.bf16.gmra.mrb[0].mxu0 %v6713
      %v7451 = vpop.f32.mrb[0].mxu0
      %v7452 = vadd.f32 0.0, %v7451
      %v7453 = vpop.f32.mrb[0].mxu0
      %v7454 = vpop.f32.mrb[0].mxu0
      %v7455 = vpop.f32.mrb[0].mxu0
      %7456 = vmatprep.mubr.bf16.mxu0 0
      %7457 = vmatmul.mubr.bf16.gmra.mrb[0].mxu0 %v6714
      %v7458 = vpop.f32.mrb[0].mxu0
      %v7459 = vadd.f32 0.0, %v7458
      %v7460 = vpop.f32.mrb[0].mxu0
      %v7461 = vpop.f32.mrb[0].mxu0
      %v7462 = vadd.f32 0.0, %v7461
      %v7463 = vpop.f32.mrb[0].mxu0
      %7464 = vmatprep.mubr.bf16.mxu0 0
      %7465 = vmatmul.mubr.bf16.gmra.mrb[0].mxu0 %v6715
      %v7466 = vpop.f32.mrb[0].mxu0
      %v7467 = vpop.f32.mrb[0].mxu0
      %v7468 = vpop.f32.mrb[0].mxu0
      %v7469 = vadd.f32 0.0, %v7468
      %v7470 = vpop.f32.mrb[0].mxu0
      %7471 = vmatprep.mubr.bf16.mxu0 0
      %7472 = vmatmul.mubr.bf16.gmra.mrb[0].mxu0 %v6716
      %v7473 = vpop.f32.mrb[0].mxu0
      %v7474 = vadd.f32 0.0, %v7473
      %v7475 = vpop.f32.mrb[0].mxu0
      %v7476 = vpop.f32.mrb[0].mxu0
      %v7477 = vpop.f32.mrb[0].mxu0
      %7478 = vmatprep.mubr.bf16.mxu0 0
      %7479 = vmatmul.mubr.bf16.gmra.mrb[0].mxu0 %v6717
      %v7480 = vpop.f32.mrb[0].mxu0
      %v7481 = vadd.f32 0.0, %v7480
      %v7482 = vpop.f32.mrb[0].mxu0
      %v7483 = vpop.f32.mrb[0].mxu0
      %v7484 = vadd.f32 0.0, %v7483
      %v7485 = vpop.f32.mrb[0].mxu0
      %7486 = vmatprep.mubr.bf16.mxu0 0
      %7487 = vmatmul.mubr.bf16.gmra.mrb[0].mxu0 %v6718
      %v7488 = vpop.f32.mrb[0].mxu0
      %v7489 = vpop.f32.mrb[0].mxu0
      %v7490 = vpop.f32.mrb[0].mxu0
      %v7491 = vadd.f32 0.0, %v7490
      %v7492 = vpop.f32.mrb[0].mxu0
      %7493 = vmatprep.mubr.bf16.mxu0 0
      %7494 = vmatmul.mubr.bf16.gmra.mrb[0].mxu0 %v6719
      %v7495 = vpop.f32.mrb[0].mxu0
      %v7496 = vadd.f32 0.0, %v7495
      %v7497 = vpop.f32.mrb[0].mxu0
      %v7498 = vpop.f32.mrb[0].mxu0
      %v7499 = vpop.f32.mrb[0].mxu0
      %7500 = vmatprep.mubr.bf16.mxu0 0
      %7501 = vmatmul.mubr.bf16.gmra.mrb[0].mxu0 %v6720
      %v7502 = vpop.f32.mrb[0].mxu0
      %v7503 = vadd.f32 0.0, %v7502
      %v7504 = vpop.f32.mrb[0].mxu0
      %v7505 = vpop.f32.mrb[0].mxu0
      %v7506 = vadd.f32 0.0, %v7505
      %v7507 = vpop.f32.mrb[0].mxu0
      %7508 = vmatprep.mubr.bf16.mxu0 0
      %7509 = vmatmul.mubr.bf16.gmra.mrb[0].mxu0 %v6721
      %v7510 = vpop.f32.mrb[0].mxu0
      %v7511 = vpop.f32.mrb[0].mxu0
      %v7512 = vpop.f32.mrb[0].mxu0
      %v7513 = vadd.f32 0.0, %v7512
      %v7514 = vpop.f32.mrb[0].mxu0
      %7515 = vmatprep.mubr.bf16.mxu0 0
      %7516 = vmatmul.mubr.bf16.gmra.mrb[0].mxu0 %v6722
      %v7517 = vpop.f32.mrb[0].mxu0
      %v7518 = vadd.f32 0.0, %v7517
      %v7519 = vpop.f32.mrb[0].mxu0
      %v7520 = vpop.f32.mrb[0].mxu0
      %v7521 = vpop.f32.mrb[0].mxu0
      %7522 = vdwg.mxu0
      %v7523 = vadd.f32 %v7217, %v7349
      %v7524 = vadd.f32 %v7218, %v7352
      %v7525 = vadd.f32 %v7219, %v7359
      %v7526 = vadd.f32 %v7220, %v7364
      %v7527 = vadd.f32 %v7221, %v7371
      %v7528 = vadd.f32 %v7222, %v7374
      %v7529 = vadd.f32 %v7223, %v7381
      %v7530 = vadd.f32 %v7224, %v7386
      %v7531 = vadd.f32 %v7225, %v7393
      %v7532 = vadd.f32 %v7226, %v7396
      %v7533 = vadd.f32 %v7227, %v7403
      %v7534 = vadd.f32 %v7228, %v7408
      %v7535 = vadd.f32 %v7229, %v7415
      %v7536 = vadd.f32 %v7230, %v7418
      %v7537 = vadd.f32 %v7231, %v7425
      %v7538 = vadd.f32 %v7232, %v7430
      %v7539 = vadd.f32 %v7233, %v7437
      %v7540 = vadd.f32 %v7234, %v7440
      %v7541 = vadd.f32 %v7235, %v7447
      %v7542 = vadd.f32 %v7236, %v7452
      %v7543 = vadd.f32 %v7237, %v7459
      %v7544 = vadd.f32 %v7238, %v7462
      %v7545 = vadd.f32 %v7239, %v7469
      %v7546 = vadd.f32 %v7240, %v7474
      %v7547 = vadd.f32 %v7241, %v7481
      %v7548 = vadd.f32 %v7242, %v7484
      %v7549 = vadd.f32 %v7243, %v7491
      %v7550 = vadd.f32 %v7244, %v7496
      %v7551 = vadd.f32 %v7245, %v7503
      %v7552 = vadd.f32 %v7246, %v7506
      %v7553 = vadd.f32 %v7247, %v7513
      %v7554 = vadd.f32 %v7248, %v7518
      %v7555 = vld [vmem:[#allocation3 + $0x18] sm:$0xff]
      %v7556 = vld [vmem:[#allocation3 + $0x20] sm:$0xff]
      %v7557 = vld [vmem:[#allocation3 + $0x28] sm:$0xff]
      %v7558 = vld [vmem:[#allocation3 + $0x30] sm:$0xff]
      %v7559 = vld [vmem:[#allocation3 + $0x38] sm:$0xff]
      %v7560 = vld [vmem:[#allocation3 + $0x40] sm:$0xff]
      %v7561 = vld [vmem:[#allocation3 + $0x48] sm:$0xff]
      %v7562 = vld [vmem:[#allocation3 + $0x50] sm:$0xff]
      %v7563 = vld [vmem:[#allocation3 + $0x58] sm:$0xff]
      %v7564 = vld [vmem:[#allocation3 + $0x60] sm:$0xff]
      %v7565 = vld [vmem:[#allocation3 + $0x68] sm:$0xff]
      %v7566 = vld [vmem:[#allocation3 + $0x70] sm:$0xff]
      %v7567 = vld [vmem:[#allocation3 + $0x78] sm:$0xff]
      %v7568 = vld [vmem:[#allocation3 + $0x80] sm:$0xff]
      %v7569 = vld [vmem:[#allocation3 + $0x88] sm:$0xff]
      %v7570 = vld [vmem:[#allocation3 + $0x90] sm:$0xff]
      %v7571 = vld [vmem:[#allocation3 + $0x98] sm:$0xff]
      %v7572 = vld [vmem:[#allocation3 + $0xa0] sm:$0xff]
      %v7573 = vld [vmem:[#allocation3 + $0xa8] sm:$0xff]
      %v7574 = vld [vmem:[#allocation3 + $0xb0] sm:$0xff]
      %v7575 = vld [vmem:[#allocation3 + $0xb8] sm:$0xff]
      %v7576 = vld [vmem:[#allocation3 + $0xc0] sm:$0xff]
      %v7577 = vld [vmem:[#allocation3 + $0xc8] sm:$0xff]
      %v7578 = vld [vmem:[#allocation3 + $0xd0] sm:$0xff]
      %v7579 = vld [vmem:[#allocation3 + $0xd8] sm:$0x1]
      %s7580 = scalar_lea.vmem %s3, 320
      %v7581 = vld [vmem:[%s7580] sm:$0xf]
      %v7582 = vld [vmem:[%s7580 + $0x4] sm:$0xf]
      %v7583 = vld [vmem:[%s7580 + $0x8] sm:$0xf]
      %v7584 = vld [vmem:[%s7580 + $0xc] sm:$0xf]
      %v7585 = vld [vmem:[%s7580 + $0x10] sm:$0xf]
      %v7586 = vld [vmem:[%s7580 + $0x14] sm:$0xf]
      %v7587 = vld [vmem:[%s7580 + $0x18] sm:$0xf]
      %v7588 = vld [vmem:[%s7580 + $0x1c] sm:$0xf]
      %v7589 = vld [vmem:[%s7580 + $0x20] sm:$0xf]
      %v7590 = vld [vmem:[%s7580 + $0x24] sm:$0xf]
      %v7591 = vld [vmem:[%s7580 + $0x28] sm:$0xf]
      %v7592 = vld [vmem:[%s7580 + $0x2c] sm:$0xf]
      %v7593 = vld [vmem:[%s7580 + $0x30] sm:$0xf]
      %v7594 = vld [vmem:[%s7580 + $0x34] sm:$0xf]
      %v7595 = vld [vmem:[%s7580 + $0x38] sm:$0xf]
      %v7596 = vld [vmem:[%s7580 + $0x3c] sm:$0xf]
      %v7598 = vshrl.u32 %v7555, 16
      %v7600 = vshll.u32 %v7555, 16
      %v7602 = vrot.slane %v7600, 1
      %v7603 = vor.u32 %v7598, %v7602
      %v7605 = vshll.u32 %v7556, 16
      %v7607 = vrot.slane %v7605, 1
      %v7608 = vsel %vm2823, %v7603, %v7607
      %v7609 = vshrl.u32 %v7556, 16
      %v7611 = vor.u32 %v7609, %v7607
      %v7613 = vshll.u32 %v7557, 16
      %v7615 = vrot.slane %v7613, 1
      %v7616 = vsel %vm2823, %v7611, %v7615
      %v7617 = vshrl.u32 %v7557, 16
      %v7619 = vor.u32 %v7617, %v7615
      %v7621 = vshll.u32 %v7558, 16
      %v7623 = vrot.slane %v7621, 1
      %v7624 = vsel %vm2823, %v7619, %v7623
      %v7625 = vshrl.u32 %v7558, 16
      %v7627 = vor.u32 %v7625, %v7623
      %v7629 = vshll.u32 %v7559, 16
      %v7631 = vrot.slane %v7629, 1
      %v7632 = vsel %vm2823, %v7627, %v7631
      %v7633 = vshrl.u32 %v7559, 16
      %v7635 = vor.u32 %v7633, %v7631
      %v7637 = vshll.u32 %v7560, 16
      %v7639 = vrot.slane %v7637, 1
      %v7640 = vsel %vm2823, %v7635, %v7639
      %v7641 = vshrl.u32 %v7560, 16
      %v7643 = vor.u32 %v7641, %v7639
      %v7645 = vshll.u32 %v7561, 16
      %v7647 = vrot.slane %v7645, 1
      %v7648 = vsel %vm2823, %v7643, %v7647
      %v7649 = vshrl.u32 %v7561, 16
      %v7651 = vor.u32 %v7649, %v7647
      %v7653 = vshll.u32 %v7562, 16
      %v7655 = vrot.slane %v7653, 1
      %v7656 = vsel %vm2823, %v7651, %v7655
      %v7657 = vshrl.u32 %v7562, 16
      %v7659 = vor.u32 %v7657, %v7655
      %v7661 = vshll.u32 %v7563, 16
      %v7663 = vrot.slane %v7661, 1
      %v7664 = vsel %vm2823, %v7659, %v7663
      %v7665 = vshrl.u32 %v7563, 16
      %v7667 = vor.u32 %v7665, %v7663
      %v7669 = vshll.u32 %v7564, 16
      %v7671 = vrot.slane %v7669, 1
      %v7672 = vsel %vm2823, %v7667, %v7671
      %v7673 = vshrl.u32 %v7564, 16
      %v7675 = vor.u32 %v7673, %v7671
      %v7677 = vshll.u32 %v7565, 16
      %v7679 = vrot.slane %v7677, 1
      %v7680 = vsel %vm2823, %v7675, %v7679
      %v7681 = vshrl.u32 %v7565, 16
      %v7683 = vor.u32 %v7681, %v7679
      %v7685 = vshll.u32 %v7566, 16
      %v7687 = vrot.slane %v7685, 1
      %v7688 = vsel %vm2823, %v7683, %v7687
      %v7689 = vshrl.u32 %v7566, 16
      %v7691 = vor.u32 %v7689, %v7687
      %v7693 = vshll.u32 %v7567, 16
      %v7695 = vrot.slane %v7693, 1
      %v7696 = vsel %vm2823, %v7691, %v7695
      %v7697 = vshrl.u32 %v7567, 16
      %v7699 = vor.u32 %v7697, %v7695
      %v7701 = vshll.u32 %v7568, 16
      %v7703 = vrot.slane %v7701, 1
      %v7704 = vsel %vm2823, %v7699, %v7703
      %v7705 = vshrl.u32 %v7568, 16
      %v7707 = vor.u32 %v7705, %v7703
      %v7709 = vshll.u32 %v7569, 16
      %v7711 = vrot.slane %v7709, 1
      %v7712 = vsel %vm2823, %v7707, %v7711
      %v7713 = vshrl.u32 %v7569, 16
      %v7715 = vor.u32 %v7713, %v7711
      %v7717 = vshll.u32 %v7570, 16
      %v7719 = vrot.slane %v7717, 1
      %v7720 = vsel %vm2823, %v7715, %v7719
      %v7721 = vshrl.u32 %v7570, 16
      %v7723 = vor.u32 %v7721, %v7719
      %v7725 = vshll.u32 %v7571, 16
      %v7727 = vrot.slane %v7725, 1
      %v7728 = vsel %vm2823, %v7723, %v7727
      %v7729 = vshrl.u32 %v7571, 16
      %v7731 = vor.u32 %v7729, %v7727
      %v7733 = vshll.u32 %v7572, 16
      %v7735 = vrot.slane %v7733, 1
      %v7736 = vsel %vm2823, %v7731, %v7735
      %v7737 = vshrl.u32 %v7572, 16
      %v7739 = vor.u32 %v7737, %v7735
      %v7741 = vshll.u32 %v7573, 16
      %v7743 = vrot.slane %v7741, 1
      %v7744 = vsel %vm2823, %v7739, %v7743
      %v7745 = vshrl.u32 %v7573, 16
      %v7747 = vor.u32 %v7745, %v7743
      %v7749 = vshll.u32 %v7574, 16
      %v7751 = vrot.slane %v7749, 1
      %v7752 = vsel %vm2823, %v7747, %v7751
      %v7753 = vshrl.u32 %v7574, 16
      %v7755 = vor.u32 %v7753, %v7751
      %v7757 = vshll.u32 %v7575, 16
      %v7759 = vrot.slane %v7757, 1
      %v7760 = vsel %vm2823, %v7755, %v7759
      %v7761 = vshrl.u32 %v7575, 16
      %v7763 = vor.u32 %v7761, %v7759
      %v7765 = vshll.u32 %v7576, 16
      %v7767 = vrot.slane %v7765, 1
      %v7768 = vsel %vm2823, %v7763, %v7767
      %v7769 = vshrl.u32 %v7576, 16
      %v7771 = vor.u32 %v7769, %v7767
      %v7773 = vshll.u32 %v7577, 16
      %v7775 = vrot.slane %v7773, 1
      %v7776 = vsel %vm2823, %v7771, %v7775
      %v7777 = vshrl.u32 %v7577, 16
      %v7779 = vor.u32 %v7777, %v7775
      %v7781 = vshll.u32 %v7578, 16
      %v7783 = vrot.slane %v7781, 1
      %v7784 = vsel %vm2823, %v7779, %v7783
      %v7785 = vshrl.u32 %v7578, 16
      %v7787 = vor.u32 %v7785, %v7783
      %v7789 = vshll.u32 %v7579, 16
      %v7791 = vrot.slane %v7789, 1
      %v7792 = vsel %vm2823, %v7787, %v7791
      %v7833 = vunpack.c.l.b16 %v7581
      %v7834 = vunpack.c.l.b16 %v7582
      %v7835 = vunpack.c.l.b16 %v7583
      %v7836 = vunpack.c.l.b16 %v7584
      %v7837 = vunpack.c.l.b16 %v7585
      %v7838 = vunpack.c.l.b16 %v7586
      %v7839 = vunpack.c.l.b16 %v7587
      %v7840 = vunpack.c.l.b16 %v7588
      %v7841 = vunpack.c.l.b16 %v7589
      %v7842 = vunpack.c.l.b16 %v7590
      %v7843 = vunpack.c.l.b16 %v7591
      %v7844 = vunpack.c.l.b16 %v7592
      %v7845 = vunpack.c.l.b16 %v7593
      %v7846 = vunpack.c.l.b16 %v7594
      %v7847 = vunpack.c.l.b16 %v7595
      %v7848 = vunpack.c.l.b16 %v7596
      %v7849 = vpack.c.b16 %v7834, %v7833
      %v7850 = vpack.c.b16 %v7836, %v7835
      %v7851 = vpack.c.b16 %v7838, %v7837
      %v7852 = vpack.c.b16 %v7840, %v7839
      %v7853 = vpack.c.b16 %v7842, %v7841
      %v7854 = vpack.c.b16 %v7844, %v7843
      %v7855 = vpack.c.b16 %v7846, %v7845
      %v7856 = vpack.c.b16 %v7848, %v7847
      %7865 = vmatprep.subr.bf16.mxu0 0
      %7866 = vmatpush1.bf16.msra.mxu0 %v7849
      %7867 = vmatprep.subr.bf16.mxu0 0
      %7868 = vmatpush1.bf16.msra.mxu0 %v7850
      %7869 = vmatprep.subr.bf16.mxu0 0
      %7870 = vmatpush1.bf16.msra.mxu0 %v7851
      %7871 = vmatprep.subr.bf16.mxu0 0
      %7872 = vmatpush1.bf16.msra.mxu0 %v7852
      %7873 = vmatprep.subr.bf16.mxu0 0
      %7874 = vmatpush1.bf16.msra.mxu0 %v7853
      %7875 = vmatprep.subr.bf16.mxu0 0
      %7876 = vmatpush1.bf16.msra.mxu0 %v7854
      %7877 = vmatprep.subr.bf16.mxu0 0
      %7878 = vmatpush1.bf16.msra.mxu0 %v7855
      %7879 = vmatprep.subr.bf16.mxu0 0
      %7880 = vmatpush1.bf16.msra.mxu0 %v7856
      %7881 = vmatprep.subr.bf16.mxu0 0
      %7882 = vmatpush1.bf16.msra.mxu0 0
      %7883 = vmatprep.subr.bf16.mxu0 0
      %7884 = vmatpush1.bf16.msra.mxu0 0
      %7885 = vmatprep.subr.bf16.mxu0 0
      %7886 = vmatpush1.bf16.msra.mxu0 0
      %7887 = vmatprep.subr.bf16.mxu0 0
      %7888 = vmatpush1.bf16.msra.mxu0 0
      %7889 = vmatprep.subr.bf16.mxu0 0
      %7890 = vmatpush1.bf16.msra.mxu0 0
      %7891 = vmatprep.subr.bf16.mxu0 0
      %7892 = vmatpush1.bf16.msra.mxu0 0
      %7893 = vmatprep.subr.bf16.mxu0 0
      %7894 = vmatpush1.bf16.msra.mxu0 0
      %7895 = vmatprep.subr.bf16.mxu0 0
      %7896 = vmatpush1.bf16.msra.mxu0 0
      %7897 = vmatprep.mubr.bf16.mxu0 0
      %7898 = vmatmul.mubr.bf16.gmra.mrb[0].mxu0 %v7608
      %v7899 = vpop.f32.mrb[0].mxu0
      %v7900 = vadd.f32 0.0, %v7899
      %v7901 = vpop.f32.mrb[0].mxu0
      %v7902 = vpop.f32.mrb[0].mxu0
      %v7903 = vadd.f32 0.0, %v7902
      %v7904 = vpop.f32.mrb[0].mxu0
      %7905 = vmatprep.mubr.bf16.mxu0 0
      %7906 = vmatmul.mubr.bf16.gmra.mrb[0].mxu0 %v7616
      %v7907 = vpop.f32.mrb[0].mxu0
      %v7908 = vpop.f32.mrb[0].mxu0
      %v7909 = vpop.f32.mrb[0].mxu0
      %v7910 = vadd.f32 0.0, %v7909
      %v7911 = vpop.f32.mrb[0].mxu0
      %7912 = vmatprep.mubr.bf16.mxu0 0
      %7913 = vmatmul.mubr.bf16.gmra.mrb[0].mxu0 %v7624
      %v7914 = vpop.f32.mrb[0].mxu0
      %v7915 = vadd.f32 0.0, %v7914
      %v7916 = vpop.f32.mrb[0].mxu0
      %v7917 = vpop.f32.mrb[0].mxu0
      %v7918 = vpop.f32.mrb[0].mxu0
      %7919 = vmatprep.mubr.bf16.mxu0 0
      %7920 = vmatmul.mubr.bf16.gmra.mrb[0].mxu0 %v7632
      %v7921 = vpop.f32.mrb[0].mxu0
      %v7922 = vadd.f32 0.0, %v7921
      %v7923 = vpop.f32.mrb[0].mxu0
      %v7924 = vpop.f32.mrb[0].mxu0
      %v7925 = vadd.f32 0.0, %v7924
      %v7926 = vpop.f32.mrb[0].mxu0
      %7927 = vmatprep.mubr.bf16.mxu0 0
      %7928 = vmatmul.mubr.bf16.gmra.mrb[0].mxu0 %v7640
      %v7929 = vpop.f32.mrb[0].mxu0
      %v7930 = vpop.f32.mrb[0].mxu0
      %v7931 = vpop.f32.mrb[0].mxu0
      %v7932 = vadd.f32 0.0, %v7931
      %v7933 = vpop.f32.mrb[0].mxu0
      %7934 = vmatprep.mubr.bf16.mxu0 0
      %7935 = vmatmul.mubr.bf16.gmra.mrb[0].mxu0 %v7648
      %v7936 = vpop.f32.mrb[0].mxu0
      %v7937 = vadd.f32 0.0, %v7936
      %v7938 = vpop.f32.mrb[0].mxu0
      %v7939 = vpop.f32.mrb[0].mxu0
      %v7940 = vpop.f32.mrb[0].mxu0
      %7941 = vmatprep.mubr.bf16.mxu0 0
      %7942 = vmatmul.mubr.bf16.gmra.mrb[0].mxu0 %v7656
      %v7943 = vpop.f32.mrb[0].mxu0
      %v7944 = vadd.f32 0.0, %v7943
      %v7945 = vpop.f32.mrb[0].mxu0
      %v7946 = vpop.f32.mrb[0].mxu0
      %v7947 = vadd.f32 0.0, %v7946
      %v7948 = vpop.f32.mrb[0].mxu0
      %7949 = vmatprep.mubr.bf16.mxu0 0
      %7950 = vmatmul.mubr.bf16.gmra.mrb[0].mxu0 %v7664
      %v7951 = vpop.f32.mrb[0].mxu0
      %v7952 = vpop.f32.mrb[0].mxu0
      %v7953 = vpop.f32.mrb[0].mxu0
      %v7954 = vadd.f32 0.0, %v7953
      %v7955 = vpop.f32.mrb[0].mxu0
      %7956 = vmatprep.mubr.bf16.mxu0 0
      %7957 = vmatmul.mubr.bf16.gmra.mrb[0].mxu0 %v7672
      %v7958 = vpop.f32.mrb[0].mxu0
      %v7959 = vadd.f32 0.0, %v7958
      %v7960 = vpop.f32.mrb[0].mxu0
      %v7961 = vpop.f32.mrb[0].mxu0
      %v7962 = vpop.f32.mrb[0].mxu0
      %7963 = vmatprep.mubr.bf16.mxu0 0
      %7964 = vmatmul.mubr.bf16.gmra.mrb[0].mxu0 %v7680
      %v7965 = vpop.f32.mrb[0].mxu0
      %v7966 = vadd.f32 0.0, %v7965
      %v7967 = vpop.f32.mrb[0].mxu0
      %v7968 = vpop.f32.mrb[0].mxu0
      %v7969 = vadd.f32 0.0, %v7968
      %v7970 = vpop.f32.mrb[0].mxu0
      %7971 = vmatprep.mubr.bf16.mxu0 0
      %7972 = vmatmul.mubr.bf16.gmra.mrb[0].mxu0 %v7688
      %v7973 = vpop.f32.mrb[0].mxu0
      %v7974 = vpop.f32.mrb[0].mxu0
      %v7975 = vpop.f32.mrb[0].mxu0
      %v7976 = vadd.f32 0.0, %v7975
      %v7977 = vpop.f32.mrb[0].mxu0
      %7978 = vmatprep.mubr.bf16.mxu0 0
      %7979 = vmatmul.mubr.bf16.gmra.mrb[0].mxu0 %v7696
      %v7980 = vpop.f32.mrb[0].mxu0
      %v7981 = vadd.f32 0.0, %v7980
      %v7982 = vpop.f32.mrb[0].mxu0
      %v7983 = vpop.f32.mrb[0].mxu0
      %v7984 = vpop.f32.mrb[0].mxu0
      %7985 = vmatprep.mubr.bf16.mxu0 0
      %7986 = vmatmul.mubr.bf16.gmra.mrb[0].mxu0 %v7704
      %v7987 = vpop.f32.mrb[0].mxu0
      %v7988 = vadd.f32 0.0, %v7987
      %v7989 = vpop.f32.mrb[0].mxu0
      %v7990 = vpop.f32.mrb[0].mxu0
      %v7991 = vadd.f32 0.0, %v7990
      %v7992 = vpop.f32.mrb[0].mxu0
      %7993 = vmatprep.mubr.bf16.mxu0 0
      %7994 = vmatmul.mubr.bf16.gmra.mrb[0].mxu0 %v7712
      %v7995 = vpop.f32.mrb[0].mxu0
      %v7996 = vpop.f32.mrb[0].mxu0
      %v7997 = vpop.f32.mrb[0].mxu0
      %v7998 = vadd.f32 0.0, %v7997
      %v7999 = vpop.f32.mrb[0].mxu0
      %8000 = vmatprep.mubr.bf16.mxu0 0
      %8001 = vmatmul.mubr.bf16.gmra.mrb[0].mxu0 %v7720
      %v8002 = vpop.f32.mrb[0].mxu0
      %v8003 = vadd.f32 0.0, %v8002
      %v8004 = vpop.f32.mrb[0].mxu0
      %v8005 = vpop.f32.mrb[0].mxu0
      %v8006 = vpop.f32.mrb[0].mxu0
      %8007 = vmatprep.mubr.bf16.mxu0 0
      %8008 = vmatmul.mubr.bf16.gmra.mrb[0].mxu0 %v7728
      %v8009 = vpop.f32.mrb[0].mxu0
      %v8010 = vadd.f32 0.0, %v8009
      %v8011 = vpop.f32.mrb[0].mxu0
      %v8012 = vpop.f32.mrb[0].mxu0
      %v8013 = vadd.f32 0.0, %v8012
      %v8014 = vpop.f32.mrb[0].mxu0
      %8015 = vmatprep.mubr.bf16.mxu0 0
      %8016 = vmatmul.mubr.bf16.gmra.mrb[0].mxu0 %v7736
      %v8017 = vpop.f32.mrb[0].mxu0
      %v8018 = vpop.f32.mrb[0].mxu0
      %v8019 = vpop.f32.mrb[0].mxu0
      %v8020 = vadd.f32 0.0, %v8019
      %v8021 = vpop.f32.mrb[0].mxu0
      %8022 = vmatprep.mubr.bf16.mxu0 0
      %8023 = vmatmul.mubr.bf16.gmra.mrb[0].mxu0 %v7744
      %v8024 = vpop.f32.mrb[0].mxu0
      %v8025 = vadd.f32 0.0, %v8024
      %v8026 = vpop.f32.mrb[0].mxu0
      %v8027 = vpop.f32.mrb[0].mxu0
      %v8028 = vpop.f32.mrb[0].mxu0
      %8029 = vmatprep.mubr.bf16.mxu0 0
      %8030 = vmatmul.mubr.bf16.gmra.mrb[0].mxu0 %v7752
      %v8031 = vpop.f32.mrb[0].mxu0
      %v8032 = vadd.f32 0.0, %v8031
      %v8033 = vpop.f32.mrb[0].mxu0
      %v8034 = vpop.f32.mrb[0].mxu0
      %v8035 = vadd.f32 0.0, %v8034
      %v8036 = vpop.f32.mrb[0].mxu0
      %8037 = vmatprep.mubr.bf16.mxu0 0
      %8038 = vmatmul.mubr.bf16.gmra.mrb[0].mxu0 %v7760
      %v8039 = vpop.f32.mrb[0].mxu0
      %v8040 = vpop.f32.mrb[0].mxu0
      %v8041 = vpop.f32.mrb[0].mxu0
      %v8042 = vadd.f32 0.0, %v8041
      %v8043 = vpop.f32.mrb[0].mxu0
      %8044 = vmatprep.mubr.bf16.mxu0 0
      %8045 = vmatmul.mubr.bf16.gmra.mrb[0].mxu0 %v7768
      %v8046 = vpop.f32.mrb[0].mxu0
      %v8047 = vadd.f32 0.0, %v8046
      %v8048 = vpop.f32.mrb[0].mxu0
      %v8049 = vpop.f32.mrb[0].mxu0
      %v8050 = vpop.f32.mrb[0].mxu0
      %8051 = vmatprep.mubr.bf16.mxu0 0
      %8052 = vmatmul.mubr.bf16.gmra.mrb[0].mxu0 %v7776
      %v8053 = vpop.f32.mrb[0].mxu0
      %v8054 = vadd.f32 0.0, %v8053
      %v8055 = vpop.f32.mrb[0].mxu0
      %v8056 = vpop.f32.mrb[0].mxu0
      %v8057 = vadd.f32 0.0, %v8056
      %v8058 = vpop.f32.mrb[0].mxu0
      %8059 = vmatprep.mubr.bf16.mxu0 0
      %8060 = vmatmul.mubr.bf16.gmra.mrb[0].mxu0 %v7784
      %v8061 = vpop.f32.mrb[0].mxu0
      %v8062 = vpop.f32.mrb[0].mxu0
      %v8063 = vpop.f32.mrb[0].mxu0
      %v8064 = vadd.f32 0.0, %v8063
      %v8065 = vpop.f32.mrb[0].mxu0
      %8066 = vmatprep.mubr.bf16.mxu0 0
      %8067 = vmatmul.mubr.bf16.gmra.mrb[0].mxu0 %v7792
      %v8068 = vpop.f32.mrb[0].mxu0
      %v8069 = vadd.f32 0.0, %v8068
      %v8070 = vpop.f32.mrb[0].mxu0
      %v8071 = vpop.f32.mrb[0].mxu0
      %v8072 = vpop.f32.mrb[0].mxu0
      %8073 = vdwg.mxu0
      %v8074 = vadd.f32 %v7523, %v7900
      %v8075 = vadd.f32 %v7524, %v7903
      %v8076 = vadd.f32 %v7525, %v7910
      %v8077 = vadd.f32 %v7526, %v7915
      %v8078 = vadd.f32 %v7527, %v7922
      %v8079 = vadd.f32 %v7528, %v7925
      %v8080 = vadd.f32 %v7529, %v7932
      %v8081 = vadd.f32 %v7530, %v7937
      %v8082 = vadd.f32 %v7531, %v7944
      %v8083 = vadd.f32 %v7532, %v7947
      %v8084 = vadd.f32 %v7533, %v7954
      %v8085 = vadd.f32 %v7534, %v7959
      %v8086 = vadd.f32 %v7535, %v7966
      %v8087 = vadd.f32 %v7536, %v7969
      %v8088 = vadd.f32 %v7537, %v7976
      %v8089 = vadd.f32 %v7538, %v7981
      %v8090 = vadd.f32 %v7539, %v7988
      %v8091 = vadd.f32 %v7540, %v7991
      %v8092 = vadd.f32 %v7541, %v7998
      %v8093 = vadd.f32 %v7542, %v8003
      %v8094 = vadd.f32 %v7543, %v8010
      %v8095 = vadd.f32 %v7544, %v8013
      %v8096 = vadd.f32 %v7545, %v8020
      %v8097 = vadd.f32 %v7546, %v8025
      %v8098 = vadd.f32 %v7547, %v8032
      %v8099 = vadd.f32 %v7548, %v8035
      %v8100 = vadd.f32 %v7549, %v8042
      %v8101 = vadd.f32 %v7550, %v8047
      %v8102 = vadd.f32 %v7551, %v8054
      %v8103 = vadd.f32 %v7552, %v8057
      %v8104 = vadd.f32 %v7553, %v8064
      %v8105 = vadd.f32 %v7554, %v8069
      %v8106 = vld [vmem:[#allocation3 + $0x20] sm:$0xf8]
      %v8107 = vld [vmem:[#allocation3 + $0x28] sm:$0xff]
      %v8108 = vld [vmem:[#allocation3 + $0x30] sm:$0xff]
      %v8109 = vld [vmem:[#allocation3 + $0x38] sm:$0xff]
      %v8110 = vld [vmem:[#allocation3 + $0x40] sm:$0xff]
      %v8111 = vld [vmem:[#allocation3 + $0x48] sm:$0xff]
      %v8112 = vld [vmem:[#allocation3 + $0x50] sm:$0xff]
      %v8113 = vld [vmem:[#allocation3 + $0x58] sm:$0xff]
      %v8114 = vld [vmem:[#allocation3 + $0x60] sm:$0xff]
      %v8115 = vld [vmem:[#allocation3 + $0x68] sm:$0xff]
      %v8116 = vld [vmem:[#allocation3 + $0x70] sm:$0xff]
      %v8117 = vld [vmem:[#allocation3 + $0x78] sm:$0xff]
      %v8118 = vld [vmem:[#allocation3 + $0x80] sm:$0xff]
      %v8119 = vld [vmem:[#allocation3 + $0x88] sm:$0xff]
      %v8120 = vld [vmem:[#allocation3 + $0x90] sm:$0xff]
      %v8121 = vld [vmem:[#allocation3 + $0x98] sm:$0xff]
      %v8122 = vld [vmem:[#allocation3 + $0xa0] sm:$0xff]
      %v8123 = vld [vmem:[#allocation3 + $0xa8] sm:$0xff]
      %v8124 = vld [vmem:[#allocation3 + $0xb0] sm:$0xff]
      %v8125 = vld [vmem:[#allocation3 + $0xb8] sm:$0xff]
      %v8126 = vld [vmem:[#allocation3 + $0xc0] sm:$0xff]
      %v8127 = vld [vmem:[#allocation3 + $0xc8] sm:$0xff]
      %v8128 = vld [vmem:[#allocation3 + $0xd0] sm:$0xff]
      %v8129 = vld [vmem:[#allocation3 + $0xd8] sm:$0xff]
      %v8130 = vld [vmem:[#allocation3 + $0xe0] sm:$0xf]
      %s8131 = scalar_lea.vmem %s3, 384
      %v8132 = vld [vmem:[%s8131] sm:$0xf]
      %v8133 = vld [vmem:[%s8131 + $0x4] sm:$0xf]
      %v8134 = vld [vmem:[%s8131 + $0x8] sm:$0xf]
      %v8135 = vld [vmem:[%s8131 + $0xc] sm:$0xf]
      %v8136 = vld [vmem:[%s8131 + $0x10] sm:$0xf]
      %v8137 = vld [vmem:[%s8131 + $0x14] sm:$0xf]
      %v8138 = vld [vmem:[%s8131 + $0x18] sm:$0xf]
      %v8139 = vld [vmem:[%s8131 + $0x1c] sm:$0xf]
      %v8140 = vld [vmem:[%s8131 + $0x20] sm:$0xf]
      %v8141 = vld [vmem:[%s8131 + $0x24] sm:$0xf]
      %v8142 = vld [vmem:[%s8131 + $0x28] sm:$0xf]
      %v8143 = vld [vmem:[%s8131 + $0x2c] sm:$0xf]
      %v8144 = vld [vmem:[%s8131 + $0x30] sm:$0xf]
      %v8145 = vld [vmem:[%s8131 + $0x34] sm:$0xf]
      %v8146 = vld [vmem:[%s8131 + $0x38] sm:$0xf]
      %v8147 = vld [vmem:[%s8131 + $0x3c] sm:$0xf]
      %v8149 = vshrl.u32 %v8106, 16
      %v8151 = vrot.slane %v8149, 3
      %v8152 = vshll.u32 %v8106, 16
      %v8154 = vrot.slane %v8152, 4
      %v8155 = vor.u32 %v8151, %v8154
      %v8157 = vshrl.u32 %v8107, 16
      %v8159 = vrot.slane %v8157, 3
      %v8160 = vshll.u32 %v8107, 16
      %v8162 = vrot.slane %v8160, 4
      %v8163 = vor.u32 %v8159, %v8162
      %v8164 = vsel %vm912, %v8155, %v8163
      %v8166 = vshrl.u32 %v8108, 16
      %v8168 = vrot.slane %v8166, 3
      %v8169 = vshll.u32 %v8108, 16
      %v8171 = vrot.slane %v8169, 4
      %v8172 = vor.u32 %v8168, %v8171
      %v8173 = vsel %vm912, %v8163, %v8172
      %v8175 = vshrl.u32 %v8109, 16
      %v8177 = vrot.slane %v8175, 3
      %v8178 = vshll.u32 %v8109, 16
      %v8180 = vrot.slane %v8178, 4
      %v8181 = vor.u32 %v8177, %v8180
      %v8182 = vsel %vm912, %v8172, %v8181
      %v8184 = vshrl.u32 %v8110, 16
      %v8186 = vrot.slane %v8184, 3
      %v8187 = vshll.u32 %v8110, 16
      %v8189 = vrot.slane %v8187, 4
      %v8190 = vor.u32 %v8186, %v8189
      %v8191 = vsel %vm912, %v8181, %v8190
      %v8193 = vshrl.u32 %v8111, 16
      %v8195 = vrot.slane %v8193, 3
      %v8196 = vshll.u32 %v8111, 16
      %v8198 = vrot.slane %v8196, 4
      %v8199 = vor.u32 %v8195, %v8198
      %v8200 = vsel %vm912, %v8190, %v8199
      %v8202 = vshrl.u32 %v8112, 16
      %v8204 = vrot.slane %v8202, 3
      %v8205 = vshll.u32 %v8112, 16
      %v8207 = vrot.slane %v8205, 4
      %v8208 = vor.u32 %v8204, %v8207
      %v8209 = vsel %vm912, %v8199, %v8208
      %v8211 = vshrl.u32 %v8113, 16
      %v8213 = vrot.slane %v8211, 3
      %v8214 = vshll.u32 %v8113, 16
      %v8216 = vrot.slane %v8214, 4
      %v8217 = vor.u32 %v8213, %v8216
      %v8218 = vsel %vm912, %v8208, %v8217
      %v8220 = vshrl.u32 %v8114, 16
      %v8222 = vrot.slane %v8220, 3
      %v8223 = vshll.u32 %v8114, 16
      %v8225 = vrot.slane %v8223, 4
      %v8226 = vor.u32 %v8222, %v8225
      %v8227 = vsel %vm912, %v8217, %v8226
      %v8229 = vshrl.u32 %v8115, 16
      %v8231 = vrot.slane %v8229, 3
      %v8232 = vshll.u32 %v8115, 16
      %v8234 = vrot.slane %v8232, 4
      %v8235 = vor.u32 %v8231, %v8234
      %v8236 = vsel %vm912, %v8226, %v8235
      %v8238 = vshrl.u32 %v8116, 16
      %v8240 = vrot.slane %v8238, 3
      %v8241 = vshll.u32 %v8116, 16
      %v8243 = vrot.slane %v8241, 4
      %v8244 = vor.u32 %v8240, %v8243
      %v8245 = vsel %vm912, %v8235, %v8244
      %v8247 = vshrl.u32 %v8117, 16
      %v8249 = vrot.slane %v8247, 3
      %v8250 = vshll.u32 %v8117, 16
      %v8252 = vrot.slane %v8250, 4
      %v8253 = vor.u32 %v8249, %v8252
      %v8254 = vsel %vm912, %v8244, %v8253
      %v8256 = vshrl.u32 %v8118, 16
      %v8258 = vrot.slane %v8256, 3
      %v8259 = vshll.u32 %v8118, 16
      %v8261 = vrot.slane %v8259, 4
      %v8262 = vor.u32 %v8258, %v8261
      %v8263 = vsel %vm912, %v8253, %v8262
      %v8265 = vshrl.u32 %v8119, 16
      %v8267 = vrot.slane %v8265, 3
      %v8268 = vshll.u32 %v8119, 16
      %v8270 = vrot.slane %v8268, 4
      %v8271 = vor.u32 %v8267, %v8270
      %v8272 = vsel %vm912, %v8262, %v8271
      %v8274 = vshrl.u32 %v8120, 16
      %v8276 = vrot.slane %v8274, 3
      %v8277 = vshll.u32 %v8120, 16
      %v8279 = vrot.slane %v8277, 4
      %v8280 = vor.u32 %v8276, %v8279
      %v8281 = vsel %vm912, %v8271, %v8280
      %v8283 = vshrl.u32 %v8121, 16
      %v8285 = vrot.slane %v8283, 3
      %v8286 = vshll.u32 %v8121, 16
      %v8288 = vrot.slane %v8286, 4
      %v8289 = vor.u32 %v8285, %v8288
      %v8290 = vsel %vm912, %v8280, %v8289
      %v8292 = vshrl.u32 %v8122, 16
      %v8294 = vrot.slane %v8292, 3
      %v8295 = vshll.u32 %v8122, 16
      %v8297 = vrot.slane %v8295, 4
      %v8298 = vor.u32 %v8294, %v8297
      %v8299 = vsel %vm912, %v8289, %v8298
      %v8301 = vshrl.u32 %v8123, 16
      %v8303 = vrot.slane %v8301, 3
      %v8304 = vshll.u32 %v8123, 16
      %v8306 = vrot.slane %v8304, 4
      %v8307 = vor.u32 %v8303, %v8306
      %v8308 = vsel %vm912, %v8298, %v8307
      %v8310 = vshrl.u32 %v8124, 16
      %v8312 = vrot.slane %v8310, 3
      %v8313 = vshll.u32 %v8124, 16
      %v8315 = vrot.slane %v8313, 4
      %v8316 = vor.u32 %v8312, %v8315
      %v8317 = vsel %vm912, %v8307, %v8316
      %v8319 = vshrl.u32 %v8125, 16
      %v8321 = vrot.slane %v8319, 3
      %v8322 = vshll.u32 %v8125, 16
      %v8324 = vrot.slane %v8322, 4
      %v8325 = vor.u32 %v8321, %v8324
      %v8326 = vsel %vm912, %v8316, %v8325
      %v8328 = vshrl.u32 %v8126, 16
      %v8330 = vrot.slane %v8328, 3
      %v8331 = vshll.u32 %v8126, 16
      %v8333 = vrot.slane %v8331, 4
      %v8334 = vor.u32 %v8330, %v8333
      %v8335 = vsel %vm912, %v8325, %v8334
      %v8337 = vshrl.u32 %v8127, 16
      %v8339 = vrot.slane %v8337, 3
      %v8340 = vshll.u32 %v8127, 16
      %v8342 = vrot.slane %v8340, 4
      %v8343 = vor.u32 %v8339, %v8342
      %v8344 = vsel %vm912, %v8334, %v8343
      %v8346 = vshrl.u32 %v8128, 16
      %v8348 = vrot.slane %v8346, 3
      %v8349 = vshll.u32 %v8128, 16
      %v8351 = vrot.slane %v8349, 4
      %v8352 = vor.u32 %v8348, %v8351
      %v8353 = vsel %vm912, %v8343, %v8352
      %v8355 = vshrl.u32 %v8129, 16
      %v8357 = vrot.slane %v8355, 3
      %v8358 = vshll.u32 %v8129, 16
      %v8360 = vrot.slane %v8358, 4
      %v8361 = vor.u32 %v8357, %v8360
      %v8362 = vsel %vm912, %v8352, %v8361
      %v8364 = vshrl.u32 %v8130, 16
      %v8366 = vrot.slane %v8364, 3
      %v8367 = vshll.u32 %v8130, 16
      %v8369 = vrot.slane %v8367, 4
      %v8370 = vor.u32 %v8366, %v8369
      %v8371 = vsel %vm912, %v8361, %v8370
      %v8412 = vunpack.c.l.b16 %v8132
      %v8413 = vunpack.c.l.b16 %v8133
      %v8414 = vunpack.c.l.b16 %v8134
      %v8415 = vunpack.c.l.b16 %v8135
      %v8416 = vunpack.c.l.b16 %v8136
      %v8417 = vunpack.c.l.b16 %v8137
      %v8418 = vunpack.c.l.b16 %v8138
      %v8419 = vunpack.c.l.b16 %v8139
      %v8420 = vunpack.c.l.b16 %v8140
      %v8421 = vunpack.c.l.b16 %v8141
      %v8422 = vunpack.c.l.b16 %v8142
      %v8423 = vunpack.c.l.b16 %v8143
      %v8424 = vunpack.c.l.b16 %v8144
      %v8425 = vunpack.c.l.b16 %v8145
      %v8426 = vunpack.c.l.b16 %v8146
      %v8427 = vunpack.c.l.b16 %v8147
      %v8428 = vpack.c.b16 %v8413, %v8412
      %v8429 = vpack.c.b16 %v8415, %v8414
      %v8430 = vpack.c.b16 %v8417, %v8416
      %v8431 = vpack.c.b16 %v8419, %v8418
      %v8432 = vpack.c.b16 %v8421, %v8420
      %v8433 = vpack.c.b16 %v8423, %v8422
      %v8434 = vpack.c.b16 %v8425, %v8424
      %v8435 = vpack.c.b16 %v8427, %v8426
      %8444 = vmatprep.subr.bf16.mxu0 0
      %8445 = vmatpush1.bf16.msra.mxu0 %v8428
      %8446 = vmatprep.subr.bf16.mxu0 0
      %8447 = vmatpush1.bf16.msra.mxu0 %v8429
      %8448 = vmatprep.subr.bf16.mxu0 0
      %8449 = vmatpush1.bf16.msra.mxu0 %v8430
      %8450 = vmatprep.subr.bf16.mxu0 0
      %8451 = vmatpush1.bf16.msra.mxu0 %v8431
      %8452 = vmatprep.subr.bf16.mxu0 0
      %8453 = vmatpush1.bf16.msra.mxu0 %v8432
      %8454 = vmatprep.subr.bf16.mxu0 0
      %8455 = vmatpush1.bf16.msra.mxu0 %v8433
      %8456 = vmatprep.subr.bf16.mxu0 0
      %8457 = vmatpush1.bf16.msra.mxu0 %v8434
      %8458 = vmatprep.subr.bf16.mxu0 0
      %8459 = vmatpush1.bf16.msra.mxu0 %v8435
      %8460 = vmatprep.subr.bf16.mxu0 0
      %8461 = vmatpush1.bf16.msra.mxu0 0
      %8462 = vmatprep.subr.bf16.mxu0 0
      %8463 = vmatpush1.bf16.msra.mxu0 0
      %8464 = vmatprep.subr.bf16.mxu0 0
      %8465 = vmatpush1.bf16.msra.mxu0 0
      %8466 = vmatprep.subr.bf16.mxu0 0
      %8467 = vmatpush1.bf16.msra.mxu0 0
      %8468 = vmatprep.subr.bf16.mxu0 0
      %8469 = vmatpush1.bf16.msra.mxu0 0
      %8470 = vmatprep.subr.bf16.mxu0 0
      %8471 = vmatpush1.bf16.msra.mxu0 0
      %8472 = vmatprep.subr.bf16.mxu0 0
      %8473 = vmatpush1.bf16.msra.mxu0 0
      %8474 = vmatprep.subr.bf16.mxu0 0
      %8475 = vmatpush1.bf16.msra.mxu0 0
      %8476 = vmatprep.mubr.bf16.mxu0 0
      %8477 = vmatmul.mubr.bf16.gmra.mrb[0].mxu0 %v8164
      %v8478 = vpop.f32.mrb[0].mxu0
      %v8479 = vadd.f32 0.0, %v8478
      %v8480 = vpop.f32.mrb[0].mxu0
      %v8481 = vpop.f32.mrb[0].mxu0
      %v8482 = vadd.f32 0.0, %v8481
      %v8483 = vpop.f32.mrb[0].mxu0
      %8484 = vmatprep.mubr.bf16.mxu0 0
      %8485 = vmatmul.mubr.bf16.gmra.mrb[0].mxu0 %v8173
      %v8486 = vpop.f32.mrb[0].mxu0
      %v8487 = vpop.f32.mrb[0].mxu0
      %v8488 = vpop.f32.mrb[0].mxu0
      %v8489 = vadd.f32 0.0, %v8488
      %v8490 = vpop.f32.mrb[0].mxu0
      %8491 = vmatprep.mubr.bf16.mxu0 0
      %8492 = vmatmul.mubr.bf16.gmra.mrb[0].mxu0 %v8182
      %v8493 = vpop.f32.mrb[0].mxu0
      %v8494 = vadd.f32 0.0, %v8493
      %v8495 = vpop.f32.mrb[0].mxu0
      %v8496 = vpop.f32.mrb[0].mxu0
      %v8497 = vpop.f32.mrb[0].mxu0
      %8498 = vmatprep.mubr.bf16.mxu0 0
      %8499 = vmatmul.mubr.bf16.gmra.mrb[0].mxu0 %v8191
      %v8500 = vpop.f32.mrb[0].mxu0
      %v8501 = vadd.f32 0.0, %v8500
      %v8502 = vpop.f32.mrb[0].mxu0
      %v8503 = vpop.f32.mrb[0].mxu0
      %v8504 = vadd.f32 0.0, %v8503
      %v8505 = vpop.f32.mrb[0].mxu0
      %8506 = vmatprep.mubr.bf16.mxu0 0
      %8507 = vmatmul.mubr.bf16.gmra.mrb[0].mxu0 %v8200
      %v8508 = vpop.f32.mrb[0].mxu0
      %v8509 = vpop.f32.mrb[0].mxu0
      %v8510 = vpop.f32.mrb[0].mxu0
      %v8511 = vadd.f32 0.0, %v8510
      %v8512 = vpop.f32.mrb[0].mxu0
      %8513 = vmatprep.mubr.bf16.mxu0 0
      %8514 = vmatmul.mubr.bf16.gmra.mrb[0].mxu0 %v8209
      %v8515 = vpop.f32.mrb[0].mxu0
      %v8516 = vadd.f32 0.0, %v8515
      %v8517 = vpop.f32.mrb[0].mxu0
      %v8518 = vpop.f32.mrb[0].mxu0
      %v8519 = vpop.f32.mrb[0].mxu0
      %8520 = vmatprep.mubr.bf16.mxu0 0
      %8521 = vmatmul.mubr.bf16.gmra.mrb[0].mxu0 %v8218
      %v8522 = vpop.f32.mrb[0].mxu0
      %v8523 = vadd.f32 0.0, %v8522
      %v8524 = vpop.f32.mrb[0].mxu0
      %v8525 = vpop.f32.mrb[0].mxu0
      %v8526 = vadd.f32 0.0, %v8525
      %v8527 = vpop.f32.mrb[0].mxu0
      %8528 = vmatprep.mubr.bf16.mxu0 0
      %8529 = vmatmul.mubr.bf16.gmra.mrb[0].mxu0 %v8227
      %v8530 = vpop.f32.mrb[0].mxu0
      %v8531 = vpop.f32.mrb[0].mxu0
      %v8532 = vpop.f32.mrb[0].mxu0
      %v8533 = vadd.f32 0.0, %v8532
      %v8534 = vpop.f32.mrb[0].mxu0
      %8535 = vmatprep.mubr.bf16.mxu0 0
      %8536 = vmatmul.mubr.bf16.gmra.mrb[0].mxu0 %v8236
      %v8537 = vpop.f32.mrb[0].mxu0
      %v8538 = vadd.f32 0.0, %v8537
      %v8539 = vpop.f32.mrb[0].mxu0
      %v8540 = vpop.f32.mrb[0].mxu0
      %v8541 = vpop.f32.mrb[0].mxu0
      %8542 = vmatprep.mubr.bf16.mxu0 0
      %8543 = vmatmul.mubr.bf16.gmra.mrb[0].mxu0 %v8245
      %v8544 = vpop.f32.mrb[0].mxu0
      %v8545 = vadd.f32 0.0, %v8544
      %v8546 = vpop.f32.mrb[0].mxu0
      %v8547 = vpop.f32.mrb[0].mxu0
      %v8548 = vadd.f32 0.0, %v8547
      %v8549 = vpop.f32.mrb[0].mxu0
      %8550 = vmatprep.mubr.bf16.mxu0 0
      %8551 = vmatmul.mubr.bf16.gmra.mrb[0].mxu0 %v8254
      %v8552 = vpop.f32.mrb[0].mxu0
      %v8553 = vpop.f32.mrb[0].mxu0
      %v8554 = vpop.f32.mrb[0].mxu0
      %v8555 = vadd.f32 0.0, %v8554
      %v8556 = vpop.f32.mrb[0].mxu0
      %8557 = vmatprep.mubr.bf16.mxu0 0
      %8558 = vmatmul.mubr.bf16.gmra.mrb[0].mxu0 %v8263
      %v8559 = vpop.f32.mrb[0].mxu0
      %v8560 = vadd.f32 0.0, %v8559
      %v8561 = vpop.f32.mrb[0].mxu0
      %v8562 = vpop.f32.mrb[0].mxu0
      %v8563 = vpop.f32.mrb[0].mxu0
      %8564 = vmatprep.mubr.bf16.mxu0 0
      %8565 = vmatmul.mubr.bf16.gmra.mrb[0].mxu0 %v8272
      %v8566 = vpop.f32.mrb[0].mxu0
      %v8567 = vadd.f32 0.0, %v8566
      %v8568 = vpop.f32.mrb[0].mxu0
      %v8569 = vpop.f32.mrb[0].mxu0
      %v8570 = vadd.f32 0.0, %v8569
      %v8571 = vpop.f32.mrb[0].mxu0
      %8572 = vmatprep.mubr.bf16.mxu0 0
      %8573 = vmatmul.mubr.bf16.gmra.mrb[0].mxu0 %v8281
      %v8574 = vpop.f32.mrb[0].mxu0
      %v8575 = vpop.f32.mrb[0].mxu0
      %v8576 = vpop.f32.mrb[0].mxu0
      %v8577 = vadd.f32 0.0, %v8576
      %v8578 = vpop.f32.mrb[0].mxu0
      %8579 = vmatprep.mubr.bf16.mxu0 0
      %8580 = vmatmul.mubr.bf16.gmra.mrb[0].mxu0 %v8290
      %v8581 = vpop.f32.mrb[0].mxu0
      %v8582 = vadd.f32 0.0, %v8581
      %v8583 = vpop.f32.mrb[0].mxu0
      %v8584 = vpop.f32.mrb[0].mxu0
      %v8585 = vpop.f32.mrb[0].mxu0
      %8586 = vmatprep.mubr.bf16.mxu0 0
      %8587 = vmatmul.mubr.bf16.gmra.mrb[0].mxu0 %v8299
      %v8588 = vpop.f32.mrb[0].mxu0
      %v8589 = vadd.f32 0.0, %v8588
      %v8590 = vpop.f32.mrb[0].mxu0
      %v8591 = vpop.f32.mrb[0].mxu0
      %v8592 = vadd.f32 0.0, %v8591
      %v8593 = vpop.f32.mrb[0].mxu0
      %8594 = vmatprep.mubr.bf16.mxu0 0
      %8595 = vmatmul.mubr.bf16.gmra.mrb[0].mxu0 %v8308
      %v8596 = vpop.f32.mrb[0].mxu0
      %v8597 = vpop.f32.mrb[0].mxu0
      %v8598 = vpop.f32.mrb[0].mxu0
      %v8599 = vadd.f32 0.0, %v8598
      %v8600 = vpop.f32.mrb[0].mxu0
      %8601 = vmatprep.mubr.bf16.mxu0 0
      %8602 = vmatmul.mubr.bf16.gmra.mrb[0].mxu0 %v8317
      %v8603 = vpop.f32.mrb[0].mxu0
      %v8604 = vadd.f32 0.0, %v8603
      %v8605 = vpop.f32.mrb[0].mxu0
      %v8606 = vpop.f32.mrb[0].mxu0
      %v8607 = vpop.f32.mrb[0].mxu0
      %8608 = vmatprep.mubr.bf16.mxu0 0
      %8609 = vmatmul.mubr.bf16.gmra.mrb[0].mxu0 %v8326
      %v8610 = vpop.f32.mrb[0].mxu0
      %v8611 = vadd.f32 0.0, %v8610
      %v8612 = vpop.f32.mrb[0].mxu0
      %v8613 = vpop.f32.mrb[0].mxu0
      %v8614 = vadd.f32 0.0, %v8613
      %v8615 = vpop.f32.mrb[0].mxu0
      %8616 = vmatprep.mubr.bf16.mxu0 0
      %8617 = vmatmul.mubr.bf16.gmra.mrb[0].mxu0 %v8335
      %v8618 = vpop.f32.mrb[0].mxu0
      %v8619 = vpop.f32.mrb[0].mxu0
      %v8620 = vpop.f32.mrb[0].mxu0
      %v8621 = vadd.f32 0.0, %v8620
      %v8622 = vpop.f32.mrb[0].mxu0
      %8623 = vmatprep.mubr.bf16.mxu0 0
      %8624 = vmatmul.mubr.bf16.gmra.mrb[0].mxu0 %v8344
      %v8625 = vpop.f32.mrb[0].mxu0
      %v8626 = vadd.f32 0.0, %v8625
      %v8627 = vpop.f32.mrb[0].mxu0
      %v8628 = vpop.f32.mrb[0].mxu0
      %v8629 = vpop.f32.mrb[0].mxu0
      %8630 = vmatprep.mubr.bf16.mxu0 0
      %8631 = vmatmul.mubr.bf16.gmra.mrb[0].mxu0 %v8353
      %v8632 = vpop.f32.mrb[0].mxu0
      %v8633 = vadd.f32 0.0, %v8632
      %v8634 = vpop.f32.mrb[0].mxu0
      %v8635 = vpop.f32.mrb[0].mxu0
      %v8636 = vadd.f32 0.0, %v8635
      %v8637 = vpop.f32.mrb[0].mxu0
      %8638 = vmatprep.mubr.bf16.mxu0 0
      %8639 = vmatmul.mubr.bf16.gmra.mrb[0].mxu0 %v8362
      %v8640 = vpop.f32.mrb[0].mxu0
      %v8641 = vpop.f32.mrb[0].mxu0
      %v8642 = vpop.f32.mrb[0].mxu0
      %v8643 = vadd.f32 0.0, %v8642
      %v8644 = vpop.f32.mrb[0].mxu0
      %8645 = vmatprep.mubr.bf16.mxu0 0
      %8646 = vmatmul.mubr.bf16.gmra.mrb[0].mxu0 %v8371
      %v8647 = vpop.f32.mrb[0].mxu0
      %v8648 = vadd.f32 0.0, %v8647
      %v8649 = vpop.f32.mrb[0].mxu0
      %v8650 = vpop.f32.mrb[0].mxu0
      %v8651 = vpop.f32.mrb[0].mxu0
      %8652 = vdwg.mxu0
      %v8653 = vadd.f32 %v8074, %v8479
      %v8654 = vadd.f32 %v8075, %v8482
      %v8655 = vadd.f32 %v8076, %v8489
      %v8656 = vadd.f32 %v8077, %v8494
      %v8657 = vadd.f32 %v8078, %v8501
      %v8658 = vadd.f32 %v8079, %v8504
      %v8659 = vadd.f32 %v8080, %v8511
      %v8660 = vadd.f32 %v8081, %v8516
      %v8661 = vadd.f32 %v8082, %v8523
      %v8662 = vadd.f32 %v8083, %v8526
      %v8663 = vadd.f32 %v8084, %v8533
      %v8664 = vadd.f32 %v8085, %v8538
      %v8665 = vadd.f32 %v8086, %v8545
      %v8666 = vadd.f32 %v8087, %v8548
      %v8667 = vadd.f32 %v8088, %v8555
      %v8668 = vadd.f32 %v8089, %v8560
      %v8669 = vadd.f32 %v8090, %v8567
      %v8670 = vadd.f32 %v8091, %v8570
      %v8671 = vadd.f32 %v8092, %v8577
      %v8672 = vadd.f32 %v8093, %v8582
      %v8673 = vadd.f32 %v8094, %v8589
      %v8674 = vadd.f32 %v8095, %v8592
      %v8675 = vadd.f32 %v8096, %v8599
      %v8676 = vadd.f32 %v8097, %v8604
      %v8677 = vadd.f32 %v8098, %v8611
      %v8678 = vadd.f32 %v8099, %v8614
      %v8679 = vadd.f32 %v8100, %v8621
      %v8680 = vadd.f32 %v8101, %v8626
      %v8681 = vadd.f32 %v8102, %v8633
      %v8682 = vadd.f32 %v8103, %v8636
      %v8683 = vadd.f32 %v8104, %v8643
      %v8684 = vadd.f32 %v8105, %v8648
      %v8685 = vld [vmem:[#allocation3 + $0x20] sm:$0xf0]
      %s8686 = scalar_lea.vmem %s3, 448
      %v8687 = vld [vmem:[%s8686] sm:$0xf]
      %v8688 = vld [vmem:[%s8686 + $0x4] sm:$0xf]
      %v8689 = vld [vmem:[%s8686 + $0x8] sm:$0xf]
      %v8690 = vld [vmem:[%s8686 + $0xc] sm:$0xf]
      %v8691 = vld [vmem:[%s8686 + $0x10] sm:$0xf]
      %v8692 = vld [vmem:[%s8686 + $0x14] sm:$0xf]
      %v8693 = vld [vmem:[%s8686 + $0x18] sm:$0xf]
      %v8694 = vld [vmem:[%s8686 + $0x1c] sm:$0xf]
      %v8695 = vld [vmem:[%s8686 + $0x20] sm:$0xf]
      %v8696 = vld [vmem:[%s8686 + $0x24] sm:$0xf]
      %v8697 = vld [vmem:[%s8686 + $0x28] sm:$0xf]
      %v8698 = vld [vmem:[%s8686 + $0x2c] sm:$0xf]
      %v8699 = vld [vmem:[%s8686 + $0x30] sm:$0xf]
      %v8700 = vld [vmem:[%s8686 + $0x34] sm:$0xf]
      %v8701 = vld [vmem:[%s8686 + $0x38] sm:$0xf]
      %v8702 = vld [vmem:[%s8686 + $0x3c] sm:$0xf]
      %v8728 = vrot.slane %v8685, 4
      %v8729 = vrot.slane %v8107, 4
      %v8730 = vsel %vm561, %v8728, %v8729
      %v8731 = vrot.slane %v8108, 4
      %v8732 = vsel %vm561, %v8729, %v8731
      %v8733 = vrot.slane %v8109, 4
      %v8734 = vsel %vm561, %v8731, %v8733
      %v8735 = vrot.slane %v8110, 4
      %v8736 = vsel %vm561, %v8733, %v8735
      %v8737 = vrot.slane %v8111, 4
      %v8738 = vsel %vm561, %v8735, %v8737
      %v8739 = vrot.slane %v8112, 4
      %v8740 = vsel %vm561, %v8737, %v8739
      %v8741 = vrot.slane %v8113, 4
      %v8742 = vsel %vm561, %v8739, %v8741
      %v8743 = vrot.slane %v8114, 4
      %v8744 = vsel %vm561, %v8741, %v8743
      %v8745 = vrot.slane %v8115, 4
      %v8746 = vsel %vm561, %v8743, %v8745
      %v8747 = vrot.slane %v8116, 4
      %v8748 = vsel %vm561, %v8745, %v8747
      %v8749 = vrot.slane %v8117, 4
      %v8750 = vsel %vm561, %v8747, %v8749
      %v8751 = vrot.slane %v8118, 4
      %v8752 = vsel %vm561, %v8749, %v8751
      %v8753 = vrot.slane %v8119, 4
      %v8754 = vsel %vm561, %v8751, %v8753
      %v8755 = vrot.slane %v8120, 4
      %v8756 = vsel %vm561, %v8753, %v8755
      %v8757 = vrot.slane %v8121, 4
      %v8758 = vsel %vm561, %v8755, %v8757
      %v8759 = vrot.slane %v8122, 4
      %v8760 = vsel %vm561, %v8757, %v8759
      %v8761 = vrot.slane %v8123, 4
      %v8762 = vsel %vm561, %v8759, %v8761
      %v8763 = vrot.slane %v8124, 4
      %v8764 = vsel %vm561, %v8761, %v8763
      %v8765 = vrot.slane %v8125, 4
      %v8766 = vsel %vm561, %v8763, %v8765
      %v8767 = vrot.slane %v8126, 4
      %v8768 = vsel %vm561, %v8765, %v8767
      %v8769 = vrot.slane %v8127, 4
      %v8770 = vsel %vm561, %v8767, %v8769
      %v8771 = vrot.slane %v8128, 4
      %v8772 = vsel %vm561, %v8769, %v8771
      %v8773 = vrot.slane %v8129, 4
      %v8774 = vsel %vm561, %v8771, %v8773
      %v8775 = vrot.slane %v8130, 4
      %v8776 = vsel %vm561, %v8773, %v8775
      %v8817 = vunpack.c.l.b16 %v8687
      %v8818 = vunpack.c.l.b16 %v8688
      %v8819 = vunpack.c.l.b16 %v8689
      %v8820 = vunpack.c.l.b16 %v8690
      %v8821 = vunpack.c.l.b16 %v8691
      %v8822 = vunpack.c.l.b16 %v8692
      %v8823 = vunpack.c.l.b16 %v8693
      %v8824 = vunpack.c.l.b16 %v8694
      %v8825 = vunpack.c.l.b16 %v8695
      %v8826 = vunpack.c.l.b16 %v8696
      %v8827 = vunpack.c.l.b16 %v8697
      %v8828 = vunpack.c.l.b16 %v8698
      %v8829 = vunpack.c.l.b16 %v8699
      %v8830 = vunpack.c.l.b16 %v8700
      %v8831 = vunpack.c.l.b16 %v8701
      %v8832 = vunpack.c.l.b16 %v8702
      %v8833 = vpack.c.b16 %v8818, %v8817
      %v8834 = vpack.c.b16 %v8820, %v8819
      %v8835 = vpack.c.b16 %v8822, %v8821
      %v8836 = vpack.c.b16 %v8824, %v8823
      %v8837 = vpack.c.b16 %v8826, %v8825
      %v8838 = vpack.c.b16 %v8828, %v8827
      %v8839 = vpack.c.b16 %v8830, %v8829
      %v8840 = vpack.c.b16 %v8832, %v8831
      %8849 = vmatprep.subr.bf16.mxu0 0
      %8850 = vmatpush1.bf16.msra.mxu0 %v8833
      %8851 = vmatprep.subr.bf16.mxu0 0
      %8852 = vmatpush1.bf16.msra.mxu0 %v8834
      %8853 = vmatprep.subr.bf16.mxu0 0
      %8854 = vmatpush1.bf16.msra.mxu0 %v8835
      %8855 = vmatprep.subr.bf16.mxu0 0
      %8856 = vmatpush1.bf16.msra.mxu0 %v8836
      %8857 = vmatprep.subr.bf16.mxu0 0
      %8858 = vmatpush1.bf16.msra.mxu0 %v8837
      %8859 = vmatprep.subr.bf16.mxu0 0
      %8860 = vmatpush1.bf16.msra.mxu0 %v8838
      %8861 = vmatprep.subr.bf16.mxu0 0
      %8862 = vmatpush1.bf16.msra.mxu0 %v8839
      %8863 = vmatprep.subr.bf16.mxu0 0
      %8864 = vmatpush1.bf16.msra.mxu0 %v8840
      %8865 = vmatprep.subr.bf16.mxu0 0
      %8866 = vmatpush1.bf16.msra.mxu0 0
      %8867 = vmatprep.subr.bf16.mxu0 0
      %8868 = vmatpush1.bf16.msra.mxu0 0
      %8869 = vmatprep.subr.bf16.mxu0 0
      %8870 = vmatpush1.bf16.msra.mxu0 0
      %8871 = vmatprep.subr.bf16.mxu0 0
      %8872 = vmatpush1.bf16.msra.mxu0 0
      %8873 = vmatprep.subr.bf16.mxu0 0
      %8874 = vmatpush1.bf16.msra.mxu0 0
      %8875 = vmatprep.subr.bf16.mxu0 0
      %8876 = vmatpush1.bf16.msra.mxu0 0
      %8877 = vmatprep.subr.bf16.mxu0 0
      %8878 = vmatpush1.bf16.msra.mxu0 0
      %8879 = vmatprep.subr.bf16.mxu0 0
      %8880 = vmatpush1.bf16.msra.mxu0 0
      %8881 = vmatprep.mubr.bf16.mxu0 0
      %8882 = vmatmul.mubr.bf16.gmra.mrb[0].mxu0 %v8730
      %v8883 = vpop.f32.mrb[0].mxu0
      %v8884 = vadd.f32 0.0, %v8883
      %v8885 = vpop.f32.mrb[0].mxu0
      %v8886 = vpop.f32.mrb[0].mxu0
      %v8887 = vadd.f32 0.0, %v8886
      %v8888 = vpop.f32.mrb[0].mxu0
      %8889 = vmatprep.mubr.bf16.mxu0 0
      %8890 = vmatmul.mubr.bf16.gmra.mrb[0].mxu0 %v8732
      %v8891 = vpop.f32.mrb[0].mxu0
      %v8892 = vpop.f32.mrb[0].mxu0
      %v8893 = vpop.f32.mrb[0].mxu0
      %v8894 = vadd.f32 0.0, %v8893
      %v8895 = vpop.f32.mrb[0].mxu0
      %8896 = vmatprep.mubr.bf16.mxu0 0
      %8897 = vmatmul.mubr.bf16.gmra.mrb[0].mxu0 %v8734
      %v8898 = vpop.f32.mrb[0].mxu0
      %v8899 = vadd.f32 0.0, %v8898
      %v8900 = vpop.f32.mrb[0].mxu0
      %v8901 = vpop.f32.mrb[0].mxu0
      %v8902 = vpop.f32.mrb[0].mxu0
      %8903 = vmatprep.mubr.bf16.mxu0 0
      %8904 = vmatmul.mubr.bf16.gmra.mrb[0].mxu0 %v8736
      %v8905 = vpop.f32.mrb[0].mxu0
      %v8906 = vadd.f32 0.0, %v8905
      %v8907 = vpop.f32.mrb[0].mxu0
      %v8908 = vpop.f32.mrb[0].mxu0
      %v8909 = vadd.f32 0.0, %v8908
      %v8910 = vpop.f32.mrb[0].mxu0
      %8911 = vmatprep.mubr.bf16.mxu0 0
      %8912 = vmatmul.mubr.bf16.gmra.mrb[0].mxu0 %v8738
      %v8913 = vpop.f32.mrb[0].mxu0
      %v8914 = vpop.f32.mrb[0].mxu0
      %v8915 = vpop.f32.mrb[0].mxu0
      %v8916 = vadd.f32 0.0, %v8915
      %v8917 = vpop.f32.mrb[0].mxu0
      %8918 = vmatprep.mubr.bf16.mxu0 0
      %8919 = vmatmul.mubr.bf16.gmra.mrb[0].mxu0 %v8740
      %v8920 = vpop.f32.mrb[0].mxu0
      %v8921 = vadd.f32 0.0, %v8920
      %v8922 = vpop.f32.mrb[0].mxu0
      %v8923 = vpop.f32.mrb[0].mxu0
      %v8924 = vpop.f32.mrb[0].mxu0
      %8925 = vmatprep.mubr.bf16.mxu0 0
      %8926 = vmatmul.mubr.bf16.gmra.mrb[0].mxu0 %v8742
      %v8927 = vpop.f32.mrb[0].mxu0
      %v8928 = vadd.f32 0.0, %v8927
      %v8929 = vpop.f32.mrb[0].mxu0
      %v8930 = vpop.f32.mrb[0].mxu0
      %v8931 = vadd.f32 0.0, %v8930
      %v8932 = vpop.f32.mrb[0].mxu0
      %8933 = vmatprep.mubr.bf16.mxu0 0
      %8934 = vmatmul.mubr.bf16.gmra.mrb[0].mxu0 %v8744
      %v8935 = vpop.f32.mrb[0].mxu0
      %v8936 = vpop.f32.mrb[0].mxu0
      %v8937 = vpop.f32.mrb[0].mxu0
      %v8938 = vadd.f32 0.0, %v8937
      %v8939 = vpop.f32.mrb[0].mxu0
      %8940 = vmatprep.mubr.bf16.mxu0 0
      %8941 = vmatmul.mubr.bf16.gmra.mrb[0].mxu0 %v8746
      %v8942 = vpop.f32.mrb[0].mxu0
      %v8943 = vadd.f32 0.0, %v8942
      %v8944 = vpop.f32.mrb[0].mxu0
      %v8945 = vpop.f32.mrb[0].mxu0
      %v8946 = vpop.f32.mrb[0].mxu0
      %8947 = vmatprep.mubr.bf16.mxu0 0
      %8948 = vmatmul.mubr.bf16.gmra.mrb[0].mxu0 %v8748
      %v8949 = vpop.f32.mrb[0].mxu0
      %v8950 = vadd.f32 0.0, %v8949
      %v8951 = vpop.f32.mrb[0].mxu0
      %v8952 = vpop.f32.mrb[0].mxu0
      %v8953 = vadd.f32 0.0, %v8952
      %v8954 = vpop.f32.mrb[0].mxu0
      %8955 = vmatprep.mubr.bf16.mxu0 0
      %8956 = vmatmul.mubr.bf16.gmra.mrb[0].mxu0 %v8750
      %v8957 = vpop.f32.mrb[0].mxu0
      %v8958 = vpop.f32.mrb[0].mxu0
      %v8959 = vpop.f32.mrb[0].mxu0
      %v8960 = vadd.f32 0.0, %v8959
      %v8961 = vpop.f32.mrb[0].mxu0
      %8962 = vmatprep.mubr.bf16.mxu0 0
      %8963 = vmatmul.mubr.bf16.gmra.mrb[0].mxu0 %v8752
      %v8964 = vpop.f32.mrb[0].mxu0
      %v8965 = vadd.f32 0.0, %v8964
      %v8966 = vpop.f32.mrb[0].mxu0
      %v8967 = vpop.f32.mrb[0].mxu0
      %v8968 = vpop.f32.mrb[0].mxu0
      %8969 = vmatprep.mubr.bf16.mxu0 0
      %8970 = vmatmul.mubr.bf16.gmra.mrb[0].mxu0 %v8754
      %v8971 = vpop.f32.mrb[0].mxu0
      %v8972 = vadd.f32 0.0, %v8971
      %v8973 = vpop.f32.mrb[0].mxu0
      %v8974 = vpop.f32.mrb[0].mxu0
      %v8975 = vadd.f32 0.0, %v8974
      %v8976 = vpop.f32.mrb[0].mxu0
      %8977 = vmatprep.mubr.bf16.mxu0 0
      %8978 = vmatmul.mubr.bf16.gmra.mrb[0].mxu0 %v8756
      %v8979 = vpop.f32.mrb[0].mxu0
      %v8980 = vpop.f32.mrb[0].mxu0
      %v8981 = vpop.f32.mrb[0].mxu0
      %v8982 = vadd.f32 0.0, %v8981
      %v8983 = vpop.f32.mrb[0].mxu0
      %8984 = vmatprep.mubr.bf16.mxu0 0
      %8985 = vmatmul.mubr.bf16.gmra.mrb[0].mxu0 %v8758
      %v8986 = vpop.f32.mrb[0].mxu0
      %v8987 = vadd.f32 0.0, %v8986
      %v8988 = vpop.f32.mrb[0].mxu0
      %v8989 = vpop.f32.mrb[0].mxu0
      %v8990 = vpop.f32.mrb[0].mxu0
      %8991 = vmatprep.mubr.bf16.mxu0 0
      %8992 = vmatmul.mubr.bf16.gmra.mrb[0].mxu0 %v8760
      %v8993 = vpop.f32.mrb[0].mxu0
      %v8994 = vadd.f32 0.0, %v8993
      %v8995 = vpop.f32.mrb[0].mxu0
      %v8996 = vpop.f32.mrb[0].mxu0
      %v8997 = vadd.f32 0.0, %v8996
      %v8998 = vpop.f32.mrb[0].mxu0
      %8999 = vmatprep.mubr.bf16.mxu0 0
      %9000 = vmatmul.mubr.bf16.gmra.mrb[0].mxu0 %v8762
      %v9001 = vpop.f32.mrb[0].mxu0
      %v9002 = vpop.f32.mrb[0].mxu0
      %v9003 = vpop.f32.mrb[0].mxu0
      %v9004 = vadd.f32 0.0, %v9003
      %v9005 = vpop.f32.mrb[0].mxu0
      %9006 = vmatprep.mubr.bf16.mxu0 0
      %9007 = vmatmul.mubr.bf16.gmra.mrb[0].mxu0 %v8764
      %v9008 = vpop.f32.mrb[0].mxu0
      %v9009 = vadd.f32 0.0, %v9008
      %v9010 = vpop.f32.mrb[0].mxu0
      %v9011 = vpop.f32.mrb[0].mxu0
      %v9012 = vpop.f32.mrb[0].mxu0
      %9013 = vmatprep.mubr.bf16.mxu0 0
      %9014 = vmatmul.mubr.bf16.gmra.mrb[0].mxu0 %v8766
      %v9015 = vpop.f32.mrb[0].mxu0
      %v9016 = vadd.f32 0.0, %v9015
      %v9017 = vpop.f32.mrb[0].mxu0
      %v9018 = vpop.f32.mrb[0].mxu0
      %v9019 = vadd.f32 0.0, %v9018
      %v9020 = vpop.f32.mrb[0].mxu0
      %9021 = vmatprep.mubr.bf16.mxu0 0
      %9022 = vmatmul.mubr.bf16.gmra.mrb[0].mxu0 %v8768
      %v9023 = vpop.f32.mrb[0].mxu0
      %v9024 = vpop.f32.mrb[0].mxu0
      %v9025 = vpop.f32.mrb[0].mxu0
      %v9026 = vadd.f32 0.0, %v9025
      %v9027 = vpop.f32.mrb[0].mxu0
      %9028 = vmatprep.mubr.bf16.mxu0 0
      %9029 = vmatmul.mubr.bf16.gmra.mrb[0].mxu0 %v8770
      %v9030 = vpop.f32.mrb[0].mxu0
      %v9031 = vadd.f32 0.0, %v9030
      %v9032 = vpop.f32.mrb[0].mxu0
      %v9033 = vpop.f32.mrb[0].mxu0
      %v9034 = vpop.f32.mrb[0].mxu0
      %9035 = vmatprep.mubr.bf16.mxu0 0
      %9036 = vmatmul.mubr.bf16.gmra.mrb[0].mxu0 %v8772
      %v9037 = vpop.f32.mrb[0].mxu0
      %v9038 = vadd.f32 0.0, %v9037
      %v9039 = vpop.f32.mrb[0].mxu0
      %v9040 = vpop.f32.mrb[0].mxu0
      %v9041 = vadd.f32 0.0, %v9040
      %v9042 = vpop.f32.mrb[0].mxu0
      %9043 = vmatprep.mubr.bf16.mxu0 0
      %9044 = vmatmul.mubr.bf16.gmra.mrb[0].mxu0 %v8774
      %v9045 = vpop.f32.mrb[0].mxu0
      %v9046 = vpop.f32.mrb[0].mxu0
      %v9047 = vpop.f32.mrb[0].mxu0
      %v9048 = vadd.f32 0.0, %v9047
      %v9049 = vpop.f32.mrb[0].mxu0
      %9050 = vmatprep.mubr.bf16.mxu0 0
      %9051 = vmatmul.mubr.bf16.gmra.mrb[0].mxu0 %v8776
      %v9052 = vpop.f32.mrb[0].mxu0
      %v9053 = vadd.f32 0.0, %v9052
      %v9054 = vpop.f32.mrb[0].mxu0
      %v9055 = vpop.f32.mrb[0].mxu0
      %v9056 = vpop.f32.mrb[0].mxu0
      %9057 = vdwg.mxu0
      %v9058 = vadd.f32 %v8653, %v8884
      %v9059 = vadd.f32 %v8654, %v8887
      %v9060 = vadd.f32 %v8655, %v8894
      %v9061 = vadd.f32 %v8656, %v8899
      %v9062 = vadd.f32 %v8657, %v8906
      %v9063 = vadd.f32 %v8658, %v8909
      %v9064 = vadd.f32 %v8659, %v8916
      %v9065 = vadd.f32 %v8660, %v8921
      %v9066 = vadd.f32 %v8661, %v8928
      %v9067 = vadd.f32 %v8662, %v8931
      %v9068 = vadd.f32 %v8663, %v8938
      %v9069 = vadd.f32 %v8664, %v8943
      %v9070 = vadd.f32 %v8665, %v8950
      %v9071 = vadd.f32 %v8666, %v8953
      %v9072 = vadd.f32 %v8667, %v8960
      %v9073 = vadd.f32 %v8668, %v8965
      %v9074 = vadd.f32 %v8669, %v8972
      %v9075 = vadd.f32 %v8670, %v8975
      %v9076 = vadd.f32 %v8671, %v8982
      %v9077 = vadd.f32 %v8672, %v8987
      %v9078 = vadd.f32 %v8673, %v8994
      %v9079 = vadd.f32 %v8674, %v8997
      %v9080 = vadd.f32 %v8675, %v9004
      %v9081 = vadd.f32 %v8676, %v9009
      %v9082 = vadd.f32 %v8677, %v9016
      %v9083 = vadd.f32 %v8678, %v9019
      %v9084 = vadd.f32 %v8679, %v9026
      %v9085 = vadd.f32 %v8680, %v9031
      %v9086 = vadd.f32 %v8681, %v9038
      %v9087 = vadd.f32 %v8682, %v9041
      %v9088 = vadd.f32 %v8683, %v9048
      %v9089 = vadd.f32 %v8684, %v9053
      %v9090 = vld [vmem:[#allocation3 + $0xe0] sm:$0x1f]
      %s9091 = scalar_lea.vmem %s3, 512
      %v9092 = vld [vmem:[%s9091] sm:$0xf]
      %v9093 = vld [vmem:[%s9091 + $0x4] sm:$0xf]
      %v9094 = vld [vmem:[%s9091 + $0x8] sm:$0xf]
      %v9095 = vld [vmem:[%s9091 + $0xc] sm:$0xf]
      %v9096 = vld [vmem:[%s9091 + $0x10] sm:$0xf]
      %v9097 = vld [vmem:[%s9091 + $0x14] sm:$0xf]
      %v9098 = vld [vmem:[%s9091 + $0x18] sm:$0xf]
      %v9099 = vld [vmem:[%s9091 + $0x1c] sm:$0xf]
      %v9100 = vld [vmem:[%s9091 + $0x20] sm:$0xf]
      %v9101 = vld [vmem:[%s9091 + $0x24] sm:$0xf]
      %v9102 = vld [vmem:[%s9091 + $0x28] sm:$0xf]
      %v9103 = vld [vmem:[%s9091 + $0x2c] sm:$0xf]
      %v9104 = vld [vmem:[%s9091 + $0x30] sm:$0xf]
      %v9105 = vld [vmem:[%s9091 + $0x34] sm:$0xf]
      %v9106 = vld [vmem:[%s9091 + $0x38] sm:$0xf]
      %v9107 = vld [vmem:[%s9091 + $0x3c] sm:$0xf]
      %v9109 = vshrl.u32 %v8685, 16
      %v9111 = vrot.slane %v9109, 4
      %v9112 = vshll.u32 %v8685, 16
      %v9114 = vrot.slane %v9112, 5
      %v9115 = vor.u32 %v9111, %v9114
      %v9116 = vrot.slane %v8157, 4
      %v9117 = vrot.slane %v8160, 5
      %v9118 = vor.u32 %v9116, %v9117
      %v9119 = vsel %vm1440, %v9115, %v9118
      %v9120 = vrot.slane %v8166, 4
      %v9121 = vrot.slane %v8169, 5
      %v9122 = vor.u32 %v9120, %v9121
      %v9123 = vsel %vm1440, %v9118, %v9122
      %v9124 = vrot.slane %v8175, 4
      %v9125 = vrot.slane %v8178, 5
      %v9126 = vor.u32 %v9124, %v9125
      %v9127 = vsel %vm1440, %v9122, %v9126
      %v9128 = vrot.slane %v8184, 4
      %v9129 = vrot.slane %v8187, 5
      %v9130 = vor.u32 %v9128, %v9129
      %v9131 = vsel %vm1440, %v9126, %v9130
      %v9132 = vrot.slane %v8193, 4
      %v9133 = vrot.slane %v8196, 5
      %v9134 = vor.u32 %v9132, %v9133
      %v9135 = vsel %vm1440, %v9130, %v9134
      %v9136 = vrot.slane %v8202, 4
      %v9137 = vrot.slane %v8205, 5
      %v9138 = vor.u32 %v9136, %v9137
      %v9139 = vsel %vm1440, %v9134, %v9138
      %v9140 = vrot.slane %v8211, 4
      %v9141 = vrot.slane %v8214, 5
      %v9142 = vor.u32 %v9140, %v9141
      %v9143 = vsel %vm1440, %v9138, %v9142
      %v9144 = vrot.slane %v8220, 4
      %v9145 = vrot.slane %v8223, 5
      %v9146 = vor.u32 %v9144, %v9145
      %v9147 = vsel %vm1440, %v9142, %v9146
      %v9148 = vrot.slane %v8229, 4
      %v9149 = vrot.slane %v8232, 5
      %v9150 = vor.u32 %v9148, %v9149
      %v9151 = vsel %vm1440, %v9146, %v9150
      %v9152 = vrot.slane %v8238, 4
      %v9153 = vrot.slane %v8241, 5
      %v9154 = vor.u32 %v9152, %v9153
      %v9155 = vsel %vm1440, %v9150, %v9154
      %v9156 = vrot.slane %v8247, 4
      %v9157 = vrot.slane %v8250, 5
      %v9158 = vor.u32 %v9156, %v9157
      %v9159 = vsel %vm1440, %v9154, %v9158
      %v9160 = vrot.slane %v8256, 4
      %v9161 = vrot.slane %v8259, 5
      %v9162 = vor.u32 %v9160, %v9161
      %v9163 = vsel %vm1440, %v9158, %v9162
      %v9164 = vrot.slane %v8265, 4
      %v9165 = vrot.slane %v8268, 5
      %v9166 = vor.u32 %v9164, %v9165
      %v9167 = vsel %vm1440, %v9162, %v9166
      %v9168 = vrot.slane %v8274, 4
      %v9169 = vrot.slane %v8277, 5
      %v9170 = vor.u32 %v9168, %v9169
      %v9171 = vsel %vm1440, %v9166, %v9170
      %v9172 = vrot.slane %v8283, 4
      %v9173 = vrot.slane %v8286, 5
      %v9174 = vor.u32 %v9172, %v9173
      %v9175 = vsel %vm1440, %v9170, %v9174
      %v9176 = vrot.slane %v8292, 4
      %v9177 = vrot.slane %v8295, 5
      %v9178 = vor.u32 %v9176, %v9177
      %v9179 = vsel %vm1440, %v9174, %v9178
      %v9180 = vrot.slane %v8301, 4
      %v9181 = vrot.slane %v8304, 5
      %v9182 = vor.u32 %v9180, %v9181
      %v9183 = vsel %vm1440, %v9178, %v9182
      %v9184 = vrot.slane %v8310, 4
      %v9185 = vrot.slane %v8313, 5
      %v9186 = vor.u32 %v9184, %v9185
      %v9187 = vsel %vm1440, %v9182, %v9186
      %v9188 = vrot.slane %v8319, 4
      %v9189 = vrot.slane %v8322, 5
      %v9190 = vor.u32 %v9188, %v9189
      %v9191 = vsel %vm1440, %v9186, %v9190
      %v9192 = vrot.slane %v8328, 4
      %v9193 = vrot.slane %v8331, 5
      %v9194 = vor.u32 %v9192, %v9193
      %v9195 = vsel %vm1440, %v9190, %v9194
      %v9196 = vrot.slane %v8337, 4
      %v9197 = vrot.slane %v8340, 5
      %v9198 = vor.u32 %v9196, %v9197
      %v9199 = vsel %vm1440, %v9194, %v9198
      %v9200 = vrot.slane %v8346, 4
      %v9201 = vrot.slane %v8349, 5
      %v9202 = vor.u32 %v9200, %v9201
      %v9203 = vsel %vm1440, %v9198, %v9202
      %v9204 = vrot.slane %v8355, 4
      %v9205 = vrot.slane %v8358, 5
      %v9206 = vor.u32 %v9204, %v9205
      %v9207 = vsel %vm1440, %v9202, %v9206
      %v9209 = vshrl.u32 %v9090, 16
      %v9211 = vrot.slane %v9209, 4
      %v9212 = vshll.u32 %v9090, 16
      %v9214 = vrot.slane %v9212, 5
      %v9215 = vor.u32 %v9211, %v9214
      %v9216 = vsel %vm1440, %v9206, %v9215
      %v9257 = vunpack.c.l.b16 %v9092
      %v9258 = vunpack.c.l.b16 %v9093
      %v9259 = vunpack.c.l.b16 %v9094
      %v9260 = vunpack.c.l.b16 %v9095
      %v9261 = vunpack.c.l.b16 %v9096
      %v9262 = vunpack.c.l.b16 %v9097
      %v9263 = vunpack.c.l.b16 %v9098
      %v9264 = vunpack.c.l.b16 %v9099
      %v9265 = vunpack.c.l.b16 %v9100
      %v9266 = vunpack.c.l.b16 %v9101
      %v9267 = vunpack.c.l.b16 %v9102
      %v9268 = vunpack.c.l.b16 %v9103
      %v9269 = vunpack.c.l.b16 %v9104
      %v9270 = vunpack.c.l.b16 %v9105
      %v9271 = vunpack.c.l.b16 %v9106
      %v9272 = vunpack.c.l.b16 %v9107
      %v9273 = vpack.c.b16 %v9258, %v9257
      %v9274 = vpack.c.b16 %v9260, %v9259
      %v9275 = vpack.c.b16 %v9262, %v9261
      %v9276 = vpack.c.b16 %v9264, %v9263
      %v9277 = vpack.c.b16 %v9266, %v9265
      %v9278 = vpack.c.b16 %v9268, %v9267
      %v9279 = vpack.c.b16 %v9270, %v9269
      %v9280 = vpack.c.b16 %v9272, %v9271
      %9289 = vmatprep.subr.bf16.mxu0 0
      %9290 = vmatpush1.bf16.msra.mxu0 %v9273
      %9291 = vmatprep.subr.bf16.mxu0 0
      %9292 = vmatpush1.bf16.msra.mxu0 %v9274
      %9293 = vmatprep.subr.bf16.mxu0 0
      %9294 = vmatpush1.bf16.msra.mxu0 %v9275
      %9295 = vmatprep.subr.bf16.mxu0 0
      %9296 = vmatpush1.bf16.msra.mxu0 %v9276
      %9297 = vmatprep.subr.bf16.mxu0 0
      %9298 = vmatpush1.bf16.msra.mxu0 %v9277
      %9299 = vmatprep.subr.bf16.mxu0 0
      %9300 = vmatpush1.bf16.msra.mxu0 %v9278
      %9301 = vmatprep.subr.bf16.mxu0 0
      %9302 = vmatpush1.bf16.msra.mxu0 %v9279
      %9303 = vmatprep.subr.bf16.mxu0 0
      %9304 = vmatpush1.bf16.msra.mxu0 %v9280
      %9305 = vmatprep.subr.bf16.mxu0 0
      %9306 = vmatpush1.bf16.msra.mxu0 0
      %9307 = vmatprep.subr.bf16.mxu0 0
      %9308 = vmatpush1.bf16.msra.mxu0 0
      %9309 = vmatprep.subr.bf16.mxu0 0
      %9310 = vmatpush1.bf16.msra.mxu0 0
      %9311 = vmatprep.subr.bf16.mxu0 0
      %9312 = vmatpush1.bf16.msra.mxu0 0
      %9313 = vmatprep.subr.bf16.mxu0 0
      %9314 = vmatpush1.bf16.msra.mxu0 0
      %9315 = vmatprep.subr.bf16.mxu0 0
      %9316 = vmatpush1.bf16.msra.mxu0 0
      %9317 = vmatprep.subr.bf16.mxu0 0
      %9318 = vmatpush1.bf16.msra.mxu0 0
      %9319 = vmatprep.subr.bf16.mxu0 0
      %9320 = vmatpush1.bf16.msra.mxu0 0
      %9321 = vmatprep.mubr.bf16.mxu0 0
      %9322 = vmatmul.mubr.bf16.gmra.mrb[0].mxu0 %v9119
      %v9323 = vpop.f32.mrb[0].mxu0
      %v9324 = vadd.f32 0.0, %v9323
      %v9325 = vpop.f32.mrb[0].mxu0
      %v9326 = vpop.f32.mrb[0].mxu0
      %v9327 = vadd.f32 0.0, %v9326
      %v9328 = vpop.f32.mrb[0].mxu0
      %9329 = vmatprep.mubr.bf16.mxu0 0
      %9330 = vmatmul.mubr.bf16.gmra.mrb[0].mxu0 %v9123
      %v9331 = vpop.f32.mrb[0].mxu0
      %v9332 = vpop.f32.mrb[0].mxu0
      %v9333 = vpop.f32.mrb[0].mxu0
      %v9334 = vadd.f32 0.0, %v9333
      %v9335 = vpop.f32.mrb[0].mxu0
      %9336 = vmatprep.mubr.bf16.mxu0 0
      %9337 = vmatmul.mubr.bf16.gmra.mrb[0].mxu0 %v9127
      %v9338 = vpop.f32.mrb[0].mxu0
      %v9339 = vadd.f32 0.0, %v9338
      %v9340 = vpop.f32.mrb[0].mxu0
      %v9341 = vpop.f32.mrb[0].mxu0
      %v9342 = vpop.f32.mrb[0].mxu0
      %9343 = vmatprep.mubr.bf16.mxu0 0
      %9344 = vmatmul.mubr.bf16.gmra.mrb[0].mxu0 %v9131
      %v9345 = vpop.f32.mrb[0].mxu0
      %v9346 = vadd.f32 0.0, %v9345
      %v9347 = vpop.f32.mrb[0].mxu0
      %v9348 = vpop.f32.mrb[0].mxu0
      %v9349 = vadd.f32 0.0, %v9348
      %v9350 = vpop.f32.mrb[0].mxu0
      %9351 = vmatprep.mubr.bf16.mxu0 0
      %9352 = vmatmul.mubr.bf16.gmra.mrb[0].mxu0 %v9135
      %v9353 = vpop.f32.mrb[0].mxu0
      %v9354 = vpop.f32.mrb[0].mxu0
      %v9355 = vpop.f32.mrb[0].mxu0
      %v9356 = vadd.f32 0.0, %v9355
      %v9357 = vpop.f32.mrb[0].mxu0
      %9358 = vmatprep.mubr.bf16.mxu0 0
      %9359 = vmatmul.mubr.bf16.gmra.mrb[0].mxu0 %v9139
      %v9360 = vpop.f32.mrb[0].mxu0
      %v9361 = vadd.f32 0.0, %v9360
      %v9362 = vpop.f32.mrb[0].mxu0
      %v9363 = vpop.f32.mrb[0].mxu0
      %v9364 = vpop.f32.mrb[0].mxu0
      %9365 = vmatprep.mubr.bf16.mxu0 0
      %9366 = vmatmul.mubr.bf16.gmra.mrb[0].mxu0 %v9143
      %v9367 = vpop.f32.mrb[0].mxu0
      %v9368 = vadd.f32 0.0, %v9367
      %v9369 = vpop.f32.mrb[0].mxu0
      %v9370 = vpop.f32.mrb[0].mxu0
      %v9371 = vadd.f32 0.0, %v9370
      %v9372 = vpop.f32.mrb[0].mxu0
      %9373 = vmatprep.mubr.bf16.mxu0 0
      %9374 = vmatmul.mubr.bf16.gmra.mrb[0].mxu0 %v9147
      %v9375 = vpop.f32.mrb[0].mxu0
      %v9376 = vpop.f32.mrb[0].mxu0
      %v9377 = vpop.f32.mrb[0].mxu0
      %v9378 = vadd.f32 0.0, %v9377
      %v9379 = vpop.f32.mrb[0].mxu0
      %9380 = vmatprep.mubr.bf16.mxu0 0
      %9381 = vmatmul.mubr.bf16.gmra.mrb[0].mxu0 %v9151
      %v9382 = vpop.f32.mrb[0].mxu0
      %v9383 = vadd.f32 0.0, %v9382
      %v9384 = vpop.f32.mrb[0].mxu0
      %v9385 = vpop.f32.mrb[0].mxu0
      %v9386 = vpop.f32.mrb[0].mxu0
      %9387 = vmatprep.mubr.bf16.mxu0 0
      %9388 = vmatmul.mubr.bf16.gmra.mrb[0].mxu0 %v9155
      %v9389 = vpop.f32.mrb[0].mxu0
      %v9390 = vadd.f32 0.0, %v9389
      %v9391 = vpop.f32.mrb[0].mxu0
      %v9392 = vpop.f32.mrb[0].mxu0
      %v9393 = vadd.f32 0.0, %v9392
      %v9394 = vpop.f32.mrb[0].mxu0
      %9395 = vmatprep.mubr.bf16.mxu0 0
      %9396 = vmatmul.mubr.bf16.gmra.mrb[0].mxu0 %v9159
      %v9397 = vpop.f32.mrb[0].mxu0
      %v9398 = vpop.f32.mrb[0].mxu0
      %v9399 = vpop.f32.mrb[0].mxu0
      %v9400 = vadd.f32 0.0, %v9399
      %v9401 = vpop.f32.mrb[0].mxu0
      %9402 = vmatprep.mubr.bf16.mxu0 0
      %9403 = vmatmul.mubr.bf16.gmra.mrb[0].mxu0 %v9163
      %v9404 = vpop.f32.mrb[0].mxu0
      %v9405 = vadd.f32 0.0, %v9404
      %v9406 = vpop.f32.mrb[0].mxu0
      %v9407 = vpop.f32.mrb[0].mxu0
      %v9408 = vpop.f32.mrb[0].mxu0
      %9409 = vmatprep.mubr.bf16.mxu0 0
      %9410 = vmatmul.mubr.bf16.gmra.mrb[0].mxu0 %v9167
      %v9411 = vpop.f32.mrb[0].mxu0
      %v9412 = vadd.f32 0.0, %v9411
      %v9413 = vpop.f32.mrb[0].mxu0
      %v9414 = vpop.f32.mrb[0].mxu0
      %v9415 = vadd.f32 0.0, %v9414
      %v9416 = vpop.f32.mrb[0].mxu0
      %9417 = vmatprep.mubr.bf16.mxu0 0
      %9418 = vmatmul.mubr.bf16.gmra.mrb[0].mxu0 %v9171
      %v9419 = vpop.f32.mrb[0].mxu0
      %v9420 = vpop.f32.mrb[0].mxu0
      %v9421 = vpop.f32.mrb[0].mxu0
      %v9422 = vadd.f32 0.0, %v9421
      %v9423 = vpop.f32.mrb[0].mxu0
      %9424 = vmatprep.mubr.bf16.mxu0 0
      %9425 = vmatmul.mubr.bf16.gmra.mrb[0].mxu0 %v9175
      %v9426 = vpop.f32.mrb[0].mxu0
      %v9427 = vadd.f32 0.0, %v9426
      %v9428 = vpop.f32.mrb[0].mxu0
      %v9429 = vpop.f32.mrb[0].mxu0
      %v9430 = vpop.f32.mrb[0].mxu0
      %9431 = vmatprep.mubr.bf16.mxu0 0
      %9432 = vmatmul.mubr.bf16.gmra.mrb[0].mxu0 %v9179
      %v9433 = vpop.f32.mrb[0].mxu0
      %v9434 = vadd.f32 0.0, %v9433
      %v9435 = vpop.f32.mrb[0].mxu0
      %v9436 = vpop.f32.mrb[0].mxu0
      %v9437 = vadd.f32 0.0, %v9436
      %v9438 = vpop.f32.mrb[0].mxu0
      %9439 = vmatprep.mubr.bf16.mxu0 0
      %9440 = vmatmul.mubr.bf16.gmra.mrb[0].mxu0 %v9183
      %v9441 = vpop.f32.mrb[0].mxu0
      %v9442 = vpop.f32.mrb[0].mxu0
      %v9443 = vpop.f32.mrb[0].mxu0
      %v9444 = vadd.f32 0.0, %v9443
      %v9445 = vpop.f32.mrb[0].mxu0
      %9446 = vmatprep.mubr.bf16.mxu0 0
      %9447 = vmatmul.mubr.bf16.gmra.mrb[0].mxu0 %v9187
      %v9448 = vpop.f32.mrb[0].mxu0
      %v9449 = vadd.f32 0.0, %v9448
      %v9450 = vpop.f32.mrb[0].mxu0
      %v9451 = vpop.f32.mrb[0].mxu0
      %v9452 = vpop.f32.mrb[0].mxu0
      %9453 = vmatprep.mubr.bf16.mxu0 0
      %9454 = vmatmul.mubr.bf16.gmra.mrb[0].mxu0 %v9191
      %v9455 = vpop.f32.mrb[0].mxu0
      %v9456 = vadd.f32 0.0, %v9455
      %v9457 = vpop.f32.mrb[0].mxu0
      %v9458 = vpop.f32.mrb[0].mxu0
      %v9459 = vadd.f32 0.0, %v9458
      %v9460 = vpop.f32.mrb[0].mxu0
      %9461 = vmatprep.mubr.bf16.mxu0 0
      %9462 = vmatmul.mubr.bf16.gmra.mrb[0].mxu0 %v9195
      %v9463 = vpop.f32.mrb[0].mxu0
      %v9464 = vpop.f32.mrb[0].mxu0
      %v9465 = vpop.f32.mrb[0].mxu0
      %v9466 = vadd.f32 0.0, %v9465
      %v9467 = vpop.f32.mrb[0].mxu0
      %9468 = vmatprep.mubr.bf16.mxu0 0
      %9469 = vmatmul.mubr.bf16.gmra.mrb[0].mxu0 %v9199
      %v9470 = vpop.f32.mrb[0].mxu0
      %v9471 = vadd.f32 0.0, %v9470
      %v9472 = vpop.f32.mrb[0].mxu0
      %v9473 = vpop.f32.mrb[0].mxu0
      %v9474 = vpop.f32.mrb[0].mxu0
      %9475 = vmatprep.mubr.bf16.mxu0 0
      %9476 = vmatmul.mubr.bf16.gmra.mrb[0].mxu0 %v9203
      %v9477 = vpop.f32.mrb[0].mxu0
      %v9478 = vadd.f32 0.0, %v9477
      %v9479 = vpop.f32.mrb[0].mxu0
      %v9480 = vpop.f32.mrb[0].mxu0
      %v9481 = vadd.f32 0.0, %v9480
      %v9482 = vpop.f32.mrb[0].mxu0
      %9483 = vmatprep.mubr.bf16.mxu0 0
      %9484 = vmatmul.mubr.bf16.gmra.mrb[0].mxu0 %v9207
      %v9485 = vpop.f32.mrb[0].mxu0
      %v9486 = vpop.f32.mrb[0].mxu0
      %v9487 = vpop.f32.mrb[0].mxu0
      %v9488 = vadd.f32 0.0, %v9487
      %v9489 = vpop.f32.mrb[0].mxu0
      %9490 = vmatprep.mubr.bf16.mxu0 0
      %9491 = vmatmul.mubr.bf16.gmra.mrb[0].mxu0 %v9216
      %v9492 = vpop.f32.mrb[0].mxu0
      %v9493 = vadd.f32 0.0, %v9492
      %v9494 = vpop.f32.mrb[0].mxu0
      %v9495 = vpop.f32.mrb[0].mxu0
      %v9496 = vpop.f32.mrb[0].mxu0
      %9497 = vdwg.mxu0
      %v9498 = vadd.f32 %v9058, %v9324
      %v9499 = vadd.f32 %v9059, %v9327
      %v9500 = vadd.f32 %v9060, %v9334
      %v9501 = vadd.f32 %v9061, %v9339
      %v9502 = vadd.f32 %v9062, %v9346
      %v9503 = vadd.f32 %v9063, %v9349
      %v9504 = vadd.f32 %v9064, %v9356
      %v9505 = vadd.f32 %v9065, %v9361
      %v9506 = vadd.f32 %v9066, %v9368
      %v9507 = vadd.f32 %v9067, %v9371
      %v9508 = vadd.f32 %v9068, %v9378
      %v9509 = vadd.f32 %v9069, %v9383
      %v9510 = vadd.f32 %v9070, %v9390
      %v9511 = vadd.f32 %v9071, %v9393
      %v9512 = vadd.f32 %v9072, %v9400
      %v9513 = vadd.f32 %v9073, %v9405
      %v9514 = vadd.f32 %v9074, %v9412
      %v9515 = vadd.f32 %v9075, %v9415
      %v9516 = vadd.f32 %v9076, %v9422
      %v9517 = vadd.f32 %v9077, %v9427
      %v9518 = vadd.f32 %v9078, %v9434
      %v9519 = vadd.f32 %v9079, %v9437
      %v9520 = vadd.f32 %v9080, %v9444
      %v9521 = vadd.f32 %v9081, %v9449
      %v9522 = vadd.f32 %v9082, %v9456
      %v9523 = vadd.f32 %v9083, %v9459
      %v9524 = vadd.f32 %v9084, %v9466
      %v9525 = vadd.f32 %v9085, %v9471
      %v9526 = vadd.f32 %v9086, %v9478
      %v9527 = vadd.f32 %v9087, %v9481
      %v9528 = vadd.f32 %v9088, %v9488
      %v9529 = vadd.f32 %v9089, %v9493
      %v9530 = vld [vmem:[%s4] sm:$0x1]
      %v9532 = vlaneseq
      %v9533 = vshrl.u32 %v9532, 7
      %v9534 = vsub.s32 0, %v9533
      %v9535 = vrot.slane %v9530, %v9534
      %v9537 = vadd.f32 %v9498, %v9535
      %v9538 = vadd.f32 %v9499, %v9535
      %v9539 = vadd.f32 %v9500, %v9535
      %v9540 = vadd.f32 %v9501, %v9535
      %v9541 = vadd.f32 %v9502, %v9535
      %v9542 = vadd.f32 %v9503, %v9535
      %v9543 = vadd.f32 %v9504, %v9535
      %v9544 = vadd.f32 %v9505, %v9535
      %v9545 = vadd.f32 %v9506, %v9535
      %v9546 = vadd.f32 %v9507, %v9535
      %v9547 = vadd.f32 %v9508, %v9535
      %v9548 = vadd.f32 %v9509, %v9535
      %v9549 = vadd.f32 %v9510, %v9535
      %v9550 = vadd.f32 %v9511, %v9535
      %v9551 = vadd.f32 %v9512, %v9535
      %v9552 = vadd.f32 %v9513, %v9535
      %v9553 = vadd.f32 %v9514, %v9535
      %v9554 = vadd.f32 %v9515, %v9535
      %v9555 = vadd.f32 %v9516, %v9535
      %v9556 = vadd.f32 %v9517, %v9535
      %v9557 = vadd.f32 %v9518, %v9535
      %v9558 = vadd.f32 %v9519, %v9535
      %v9559 = vadd.f32 %v9520, %v9535
      %v9560 = vadd.f32 %v9521, %v9535
      %v9561 = vadd.f32 %v9522, %v9535
      %v9562 = vadd.f32 %v9523, %v9535
      %v9563 = vadd.f32 %v9524, %v9535
      %v9564 = vadd.f32 %v9525, %v9535
      %v9565 = vadd.f32 %v9526, %v9535
      %v9566 = vadd.f32 %v9527, %v9535
      %v9567 = vadd.f32 %v9528, %v9535
      %v9568 = vadd.f32 %v9529, %v9535
      %v9569 = vmax.f32 %v9537, 0.0
      %v9570 = vmax.f32 %v9538, 0.0
      %v9571 = vmax.f32 %v9539, 0.0
      %v9572 = vmax.f32 %v9540, 0.0
      %v9573 = vmax.f32 %v9541, 0.0
      %v9574 = vmax.f32 %v9542, 0.0
      %v9575 = vmax.f32 %v9543, 0.0
      %v9576 = vmax.f32 %v9544, 0.0
      %v9577 = vmax.f32 %v9545, 0.0
      %v9578 = vmax.f32 %v9546, 0.0
      %v9579 = vmax.f32 %v9547, 0.0
      %v9580 = vmax.f32 %v9548, 0.0
      %v9581 = vmax.f32 %v9549, 0.0
      %v9582 = vmax.f32 %v9550, 0.0
      %v9583 = vmax.f32 %v9551, 0.0
      %v9584 = vmax.f32 %v9552, 0.0
      %v9585 = vmax.f32 %v9553, 0.0
      %v9586 = vmax.f32 %v9554, 0.0
      %v9587 = vmax.f32 %v9555, 0.0
      %v9588 = vmax.f32 %v9556, 0.0
      %v9589 = vmax.f32 %v9557, 0.0
      %v9590 = vmax.f32 %v9558, 0.0
      %v9591 = vmax.f32 %v9559, 0.0
      %v9592 = vmax.f32 %v9560, 0.0
      %v9593 = vmax.f32 %v9561, 0.0
      %v9594 = vmax.f32 %v9562, 0.0
      %v9595 = vmax.f32 %v9563, 0.0
      %v9596 = vmax.f32 %v9564, 0.0
      %v9597 = vmax.f32 %v9565, 0.0
      %v9598 = vmax.f32 %v9566, 0.0
      %v9599 = vmax.f32 %v9567, 0.0
      %v9600 = vmax.f32 %v9568, 0.0
      %9601 = vst [vmem:[%s291] sm:$0xff] %v9569
      %9602 = vst [vmem:[%s291 + $0x8] sm:$0xff] %v9570
      %9603 = vst [vmem:[%s291 + $0x10] sm:$0xff] %v9571
      %9604 = vst [vmem:[%s291 + $0x18] sm:$0xff] %v9572
      %9605 = vst [vmem:[%s291 + $0x20] sm:$0xff] %v9573
      %9606 = vst [vmem:[%s291 + $0x28] sm:$0xff] %v9574
      %9607 = vst [vmem:[%s291 + $0x30] sm:$0xff] %v9575
      %9608 = vst [vmem:[%s291 + $0x38] sm:$0xff] %v9576
      %9609 = vst [vmem:[%s291 + $0x40] sm:$0xff] %v9577
      %9610 = vst [vmem:[%s291 + $0x48] sm:$0xff] %v9578
      %9611 = vst [vmem:[%s291 + $0x50] sm:$0xff] %v9579
      %9612 = vst [vmem:[%s291 + $0x58] sm:$0xff] %v9580
      %9613 = vst [vmem:[%s291 + $0x60] sm:$0xff] %v9581
      %9614 = vst [vmem:[%s291 + $0x68] sm:$0xff] %v9582
      %9615 = vst [vmem:[%s291 + $0x70] sm:$0xff] %v9583
      %9616 = vst [vmem:[%s291 + $0x78] sm:$0xff] %v9584
      %9617 = vst [vmem:[%s291 + $0x80] sm:$0xff] %v9585
      %9618 = vst [vmem:[%s291 + $0x88] sm:$0xff] %v9586
      %9619 = vst [vmem:[%s291 + $0x90] sm:$0xff] %v9587
      %9620 = vst [vmem:[%s291 + $0x98] sm:$0xff] %v9588
      %9621 = vst [vmem:[%s291 + $0xa0] sm:$0xff] %v9589
      %9622 = vst [vmem:[%s291 + $0xa8] sm:$0xff] %v9590
      %9623 = vst [vmem:[%s291 + $0xb0] sm:$0xff] %v9591
      %9624 = vst [vmem:[%s291 + $0xb8] sm:$0xff] %v9592
      %9625 = vst [vmem:[%s291 + $0xc0] sm:$0xff] %v9593
      %9626 = vst [vmem:[%s291 + $0xc8] sm:$0xff] %v9594
      %9627 = vst [vmem:[%s291 + $0xd0] sm:$0xff] %v9595
      %9628 = vst [vmem:[%s291 + $0xd8] sm:$0xff] %v9596
      %9629 = vst [vmem:[%s291 + $0xe0] sm:$0xff] %v9597
      %9630 = vst [vmem:[%s291 + $0xe8] sm:$0xff] %v9598
      %9631 = vst [vmem:[%s291 + $0xf0] sm:$0xff] %v9599
      %9632 = vst [vmem:[%s291 + $0xf8] sm:$0xff] %v9600
      %v9633 = vmax.f32 %v9569, %v9571
      %v9634 = vmax.f32 %v9570, %v9572
      %v9635 = vmax.f32 %v9573, %v9575
      %v9636 = vmax.f32 %v9574, %v9576
      %v9637 = vmax.f32 %v9577, %v9579
      %v9638 = vmax.f32 %v9578, %v9580
      %v9639 = vmax.f32 %v9581, %v9583
      %v9640 = vmax.f32 %v9582, %v9584
      %v9641 = vmax.f32 %v9585, %v9587
      %v9642 = vmax.f32 %v9586, %v9588
      %v9643 = vmax.f32 %v9589, %v9591
      %v9644 = vmax.f32 %v9590, %v9592
      %v9645 = vmax.f32 %v9593, %v9595
      %v9646 = vmax.f32 %v9594, %v9596
      %v9647 = vmax.f32 %v9597, %v9599
      %v9648 = vmax.f32 %v9598, %v9600
      %v9665 = vcombine.high %v9633, %v9633
      %v9667 = vunpack.c.l.s4 1983009808
      %v9668 = vunpack.c.0.s8 %v9667
      %v9669 = vlaneseq
      %v9670 = vshrl.u32 %v9669, 7
      %v9671 = vsub.s32 %v9668, %v9670
      %v9672 = vrot.slane %v9633, %v9671
      %v9674 = vunpack.c.l.s4 1983009808
      %v9675 = vunpack.c.0.s8 %v9674
      %v9676 = vlaneseq
      %v9677 = vshrl.u32 %v9676, 7
      %v9678 = vsub.s32 %v9675, %v9677
      %v9679 = vrot.slane %v9665, %v9678
      %v9680 = vcombine.high %v9672, %v9672
      %v9681 = vcombine.high %v9679, %v9679
      %v9682 = vcombine.high %v9634, %v9634
      %v9684 = vunpack.c.l.s4 1983009808
      %v9685 = vunpack.c.0.s8 %v9684
      %v9686 = vlaneseq
      %v9687 = vshrl.u32 %v9686, 7
      %v9688 = vsub.s32 %v9685, %v9687
      %v9689 = vrot.slane %v9634, %v9688
      %v9691 = vunpack.c.l.s4 1983009808
      %v9692 = vunpack.c.0.s8 %v9691
      %v9693 = vlaneseq
      %v9694 = vshrl.u32 %v9693, 7
      %v9695 = vsub.s32 %v9692, %v9694
      %v9696 = vrot.slane %v9682, %v9695
      %v9697 = vcombine.high %v9689, %v9689
      %v9698 = vcombine.high %v9696, %v9696
      %v9699 = vcombine.high %v9635, %v9635
      %v9701 = vunpack.c.l.s4 1983009808
      %v9702 = vunpack.c.0.s8 %v9701
      %v9703 = vlaneseq
      %v9704 = vshrl.u32 %v9703, 7
      %v9705 = vsub.s32 %v9702, %v9704
      %v9706 = vrot.slane %v9635, %v9705
      %v9708 = vunpack.c.l.s4 1983009808
      %v9709 = vunpack.c.0.s8 %v9708
      %v9710 = vlaneseq
      %v9711 = vshrl.u32 %v9710, 7
      %v9712 = vsub.s32 %v9709, %v9711
      %v9713 = vrot.slane %v9699, %v9712
      %v9714 = vcombine.high %v9706, %v9706
      %v9715 = vcombine.high %v9713, %v9713
      %v9716 = vcombine.high %v9636, %v9636
      %v9718 = vunpack.c.l.s4 1983009808
      %v9719 = vunpack.c.0.s8 %v9718
      %v9720 = vlaneseq
      %v9721 = vshrl.u32 %v9720, 7
      %v9722 = vsub.s32 %v9719, %v9721
      %v9723 = vrot.slane %v9636, %v9722
      %v9725 = vunpack.c.l.s4 1983009808
      %v9726 = vunpack.c.0.s8 %v9725
      %v9727 = vlaneseq
      %v9728 = vshrl.u32 %v9727, 7
      %v9729 = vsub.s32 %v9726, %v9728
      %v9730 = vrot.slane %v9716, %v9729
      %v9731 = vcombine.high %v9723, %v9723
      %v9732 = vcombine.high %v9730, %v9730
      %v9733 = vcombine.high %v9637, %v9637
      %v9735 = vunpack.c.l.s4 1983009808
      %v9736 = vunpack.c.0.s8 %v9735
      %v9737 = vlaneseq
      %v9738 = vshrl.u32 %v9737, 7
      %v9739 = vsub.s32 %v9736, %v9738
      %v9740 = vrot.slane %v9637, %v9739
      %v9742 = vunpack.c.l.s4 1983009808
      %v9743 = vunpack.c.0.s8 %v9742
      %v9744 = vlaneseq
      %v9745 = vshrl.u32 %v9744, 7
      %v9746 = vsub.s32 %v9743, %v9745
      %v9747 = vrot.slane %v9733, %v9746
      %v9748 = vcombine.high %v9740, %v9740
      %v9749 = vcombine.high %v9747, %v9747
      %v9750 = vcombine.high %v9638, %v9638
      %v9752 = vunpack.c.l.s4 1983009808
      %v9753 = vunpack.c.0.s8 %v9752
      %v9754 = vlaneseq
      %v9755 = vshrl.u32 %v9754, 7
      %v9756 = vsub.s32 %v9753, %v9755
      %v9757 = vrot.slane %v9638, %v9756
      %v9759 = vunpack.c.l.s4 1983009808
      %v9760 = vunpack.c.0.s8 %v9759
      %v9761 = vlaneseq
      %v9762 = vshrl.u32 %v9761, 7
      %v9763 = vsub.s32 %v9760, %v9762
      %v9764 = vrot.slane %v9750, %v9763
      %v9765 = vcombine.high %v9757, %v9757
      %v9766 = vcombine.high %v9764, %v9764
      %v9767 = vcombine.high %v9639, %v9639
      %v9769 = vunpack.c.l.s4 1983009808
      %v9770 = vunpack.c.0.s8 %v9769
      %v9771 = vlaneseq
      %v9772 = vshrl.u32 %v9771, 7
      %v9773 = vsub.s32 %v9770, %v9772
      %v9774 = vrot.slane %v9639, %v9773
      %v9776 = vunpack.c.l.s4 1983009808
      %v9777 = vunpack.c.0.s8 %v9776
      %v9778 = vlaneseq
      %v9779 = vshrl.u32 %v9778, 7
      %v9780 = vsub.s32 %v9777, %v9779
      %v9781 = vrot.slane %v9767, %v9780
      %v9782 = vcombine.high %v9774, %v9774
      %v9783 = vcombine.high %v9781, %v9781
      %v9784 = vcombine.high %v9640, %v9640
      %v9786 = vunpack.c.l.s4 1983009808
      %v9787 = vunpack.c.0.s8 %v9786
      %v9788 = vlaneseq
      %v9789 = vshrl.u32 %v9788, 7
      %v9790 = vsub.s32 %v9787, %v9789
      %v9791 = vrot.slane %v9640, %v9790
      %v9793 = vunpack.c.l.s4 1983009808
      %v9794 = vunpack.c.0.s8 %v9793
      %v9795 = vlaneseq
      %v9796 = vshrl.u32 %v9795, 7
      %v9797 = vsub.s32 %v9794, %v9796
      %v9798 = vrot.slane %v9784, %v9797
      %v9799 = vcombine.high %v9791, %v9791
      %v9800 = vcombine.high %v9798, %v9798
      %v9801 = vcombine.high %v9641, %v9641
      %v9803 = vunpack.c.l.s4 1983009808
      %v9804 = vunpack.c.0.s8 %v9803
      %v9805 = vlaneseq
      %v9806 = vshrl.u32 %v9805, 7
      %v9807 = vsub.s32 %v9804, %v9806
      %v9808 = vrot.slane %v9641, %v9807
      %v9810 = vunpack.c.l.s4 1983009808
      %v9811 = vunpack.c.0.s8 %v9810
      %v9812 = vlaneseq
      %v9813 = vshrl.u32 %v9812, 7
      %v9814 = vsub.s32 %v9811, %v9813
      %v9815 = vrot.slane %v9801, %v9814
      %v9816 = vcombine.high %v9808, %v9808
      %v9817 = vcombine.high %v9815, %v9815
      %v9818 = vcombine.high %v9642, %v9642
      %v9820 = vunpack.c.l.s4 1983009808
      %v9821 = vunpack.c.0.s8 %v9820
      %v9822 = vlaneseq
      %v9823 = vshrl.u32 %v9822, 7
      %v9824 = vsub.s32 %v9821, %v9823
      %v9825 = vrot.slane %v9642, %v9824
      %v9827 = vunpack.c.l.s4 1983009808
      %v9828 = vunpack.c.0.s8 %v9827
      %v9829 = vlaneseq
      %v9830 = vshrl.u32 %v9829, 7
      %v9831 = vsub.s32 %v9828, %v9830
      %v9832 = vrot.slane %v9818, %v9831
      %v9833 = vcombine.high %v9825, %v9825
      %v9834 = vcombine.high %v9832, %v9832
      %v9835 = vcombine.high %v9643, %v9643
      %v9837 = vunpack.c.l.s4 1983009808
      %v9838 = vunpack.c.0.s8 %v9837
      %v9839 = vlaneseq
      %v9840 = vshrl.u32 %v9839, 7
      %v9841 = vsub.s32 %v9838, %v9840
      %v9842 = vrot.slane %v9643, %v9841
      %v9844 = vunpack.c.l.s4 1983009808
      %v9845 = vunpack.c.0.s8 %v9844
      %v9846 = vlaneseq
      %v9847 = vshrl.u32 %v9846, 7
      %v9848 = vsub.s32 %v9845, %v9847
      %v9849 = vrot.slane %v9835, %v9848
      %v9850 = vcombine.high %v9842, %v9842
      %v9851 = vcombine.high %v9849, %v9849
      %v9852 = vcombine.high %v9644, %v9644
      %v9854 = vunpack.c.l.s4 1983009808
      %v9855 = vunpack.c.0.s8 %v9854
      %v9856 = vlaneseq
      %v9857 = vshrl.u32 %v9856, 7
      %v9858 = vsub.s32 %v9855, %v9857
      %v9859 = vrot.slane %v9644, %v9858
      %v9861 = vunpack.c.l.s4 1983009808
      %v9862 = vunpack.c.0.s8 %v9861
      %v9863 = vlaneseq
      %v9864 = vshrl.u32 %v9863, 7
      %v9865 = vsub.s32 %v9862, %v9864
      %v9866 = vrot.slane %v9852, %v9865
      %v9867 = vcombine.high %v9859, %v9859
      %v9868 = vcombine.high %v9866, %v9866
      %v9869 = vcombine.high %v9645, %v9645
      %v9871 = vunpack.c.l.s4 1983009808
      %v9872 = vunpack.c.0.s8 %v9871
      %v9873 = vlaneseq
      %v9874 = vshrl.u32 %v9873, 7
      %v9875 = vsub.s32 %v9872, %v9874
      %v9876 = vrot.slane %v9645, %v9875
      %v9878 = vunpack.c.l.s4 1983009808
      %v9879 = vunpack.c.0.s8 %v9878
      %v9880 = vlaneseq
      %v9881 = vshrl.u32 %v9880, 7
      %v9882 = vsub.s32 %v9879, %v9881
      %v9883 = vrot.slane %v9869, %v9882
      %v9884 = vcombine.high %v9876, %v9876
      %v9885 = vcombine.high %v9883, %v9883
      %v9886 = vcombine.high %v9646, %v9646
      %v9888 = vunpack.c.l.s4 1983009808
      %v9889 = vunpack.c.0.s8 %v9888
      %v9890 = vlaneseq
      %v9891 = vshrl.u32 %v9890, 7
      %v9892 = vsub.s32 %v9889, %v9891
      %v9893 = vrot.slane %v9646, %v9892
      %v9895 = vunpack.c.l.s4 1983009808
      %v9896 = vunpack.c.0.s8 %v9895
      %v9897 = vlaneseq
      %v9898 = vshrl.u32 %v9897, 7
      %v9899 = vsub.s32 %v9896, %v9898
      %v9900 = vrot.slane %v9886, %v9899
      %v9901 = vcombine.high %v9893, %v9893
      %v9902 = vcombine.high %v9900, %v9900
      %v9903 = vcombine.high %v9647, %v9647
      %v9905 = vunpack.c.l.s4 1983009808
      %v9906 = vunpack.c.0.s8 %v9905
      %v9907 = vlaneseq
      %v9908 = vshrl.u32 %v9907, 7
      %v9909 = vsub.s32 %v9906, %v9908
      %v9910 = vrot.slane %v9647, %v9909
      %v9912 = vunpack.c.l.s4 1983009808
      %v9913 = vunpack.c.0.s8 %v9912
      %v9914 = vlaneseq
      %v9915 = vshrl.u32 %v9914, 7
      %v9916 = vsub.s32 %v9913, %v9915
      %v9917 = vrot.slane %v9903, %v9916
      %v9918 = vcombine.high %v9910, %v9910
      %v9919 = vcombine.high %v9917, %v9917
      %v9920 = vcombine.high %v9648, %v9648
      %v9922 = vunpack.c.l.s4 1983009808
      %v9923 = vunpack.c.0.s8 %v9922
      %v9924 = vlaneseq
      %v9925 = vshrl.u32 %v9924, 7
      %v9926 = vsub.s32 %v9923, %v9925
      %v9927 = vrot.slane %v9648, %v9926
      %v9929 = vunpack.c.l.s4 1983009808
      %v9930 = vunpack.c.0.s8 %v9929
      %v9931 = vlaneseq
      %v9932 = vshrl.u32 %v9931, 7
      %v9933 = vsub.s32 %v9930, %v9932
      %v9934 = vrot.slane %v9920, %v9933
      %v9935 = vcombine.high %v9927, %v9927
      %v9936 = vcombine.high %v9934, %v9934
      %v10001 = vsel %vm683, %v9672, -inf
      %v10002 = vrot.slane %v10001, 4
      %v10003 = vmax.f32 %v10001, %v10002
      %v10004 = vrot.slane %v10003, 2
      %v10005 = vmax.f32 %v10003, %v10004
      %v10006 = vrot.slane %v10005, 1
      %v10007 = vmax.f32 %v10005, %v10006
      %v10008 = vsel %vm683, %v9680, -inf
      %v10009 = vrot.slane %v10008, 4
      %v10010 = vmax.f32 %v10008, %v10009
      %v10011 = vrot.slane %v10010, 2
      %v10012 = vmax.f32 %v10010, %v10011
      %v10013 = vrot.slane %v10012, 1
      %v10014 = vmax.f32 %v10012, %v10013
      %v10015 = vsel %vm683, %v9679, -inf
      %v10016 = vrot.slane %v10015, 4
      %v10017 = vmax.f32 %v10015, %v10016
      %v10018 = vrot.slane %v10017, 2
      %v10019 = vmax.f32 %v10017, %v10018
      %v10020 = vrot.slane %v10019, 1
      %v10021 = vmax.f32 %v10019, %v10020
      %v10022 = vsel %vm683, %v9681, -inf
      %v10023 = vrot.slane %v10022, 4
      %v10024 = vmax.f32 %v10022, %v10023
      %v10025 = vrot.slane %v10024, 2
      %v10026 = vmax.f32 %v10024, %v10025
      %v10027 = vrot.slane %v10026, 1
      %v10028 = vmax.f32 %v10026, %v10027
      %v10029 = vsel %vm683, %v9689, -inf
      %v10030 = vrot.slane %v10029, 4
      %v10031 = vmax.f32 %v10029, %v10030
      %v10032 = vrot.slane %v10031, 2
      %v10033 = vmax.f32 %v10031, %v10032
      %v10034 = vrot.slane %v10033, 1
      %v10035 = vmax.f32 %v10033, %v10034
      %v10036 = vsel %vm683, %v9697, -inf
      %v10037 = vrot.slane %v10036, 4
      %v10038 = vmax.f32 %v10036, %v10037
      %v10039 = vrot.slane %v10038, 2
      %v10040 = vmax.f32 %v10038, %v10039
      %v10041 = vrot.slane %v10040, 1
      %v10042 = vmax.f32 %v10040, %v10041
      %v10043 = vsel %vm683, %v9696, -inf
      %v10044 = vrot.slane %v10043, 4
      %v10045 = vmax.f32 %v10043, %v10044
      %v10046 = vrot.slane %v10045, 2
      %v10047 = vmax.f32 %v10045, %v10046
      %v10048 = vrot.slane %v10047, 1
      %v10049 = vmax.f32 %v10047, %v10048
      %v10050 = vsel %vm683, %v9698, -inf
      %v10051 = vrot.slane %v10050, 4
      %v10052 = vmax.f32 %v10050, %v10051
      %v10053 = vrot.slane %v10052, 2
      %v10054 = vmax.f32 %v10052, %v10053
      %v10055 = vrot.slane %v10054, 1
      %v10056 = vmax.f32 %v10054, %v10055
      %v10057 = vsel %vm683, %v9706, -inf
      %v10058 = vrot.slane %v10057, 4
      %v10059 = vmax.f32 %v10057, %v10058
      %v10060 = vrot.slane %v10059, 2
      %v10061 = vmax.f32 %v10059, %v10060
      %v10062 = vrot.slane %v10061, 1
      %v10063 = vmax.f32 %v10061, %v10062
      %v10064 = vsel %vm683, %v9714, -inf
      %v10065 = vrot.slane %v10064, 4
      %v10066 = vmax.f32 %v10064, %v10065
      %v10067 = vrot.slane %v10066, 2
      %v10068 = vmax.f32 %v10066, %v10067
      %v10069 = vrot.slane %v10068, 1
      %v10070 = vmax.f32 %v10068, %v10069
      %v10071 = vsel %vm683, %v9713, -inf
      %v10072 = vrot.slane %v10071, 4
      %v10073 = vmax.f32 %v10071, %v10072
      %v10074 = vrot.slane %v10073, 2
      %v10075 = vmax.f32 %v10073, %v10074
      %v10076 = vrot.slane %v10075, 1
      %v10077 = vmax.f32 %v10075, %v10076
      %v10078 = vsel %vm683, %v9715, -inf
      %v10079 = vrot.slane %v10078, 4
      %v10080 = vmax.f32 %v10078, %v10079
      %v10081 = vrot.slane %v10080, 2
      %v10082 = vmax.f32 %v10080, %v10081
      %v10083 = vrot.slane %v10082, 1
      %v10084 = vmax.f32 %v10082, %v10083
      %v10085 = vsel %vm683, %v9723, -inf
      %v10086 = vrot.slane %v10085, 4
      %v10087 = vmax.f32 %v10085, %v10086
      %v10088 = vrot.slane %v10087, 2
      %v10089 = vmax.f32 %v10087, %v10088
      %v10090 = vrot.slane %v10089, 1
      %v10091 = vmax.f32 %v10089, %v10090
      %v10092 = vsel %vm683, %v9731, -inf
      %v10093 = vrot.slane %v10092, 4
      %v10094 = vmax.f32 %v10092, %v10093
      %v10095 = vrot.slane %v10094, 2
      %v10096 = vmax.f32 %v10094, %v10095
      %v10097 = vrot.slane %v10096, 1
      %v10098 = vmax.f32 %v10096, %v10097
      %v10099 = vsel %vm683, %v9730, -inf
      %v10100 = vrot.slane %v10099, 4
      %v10101 = vmax.f32 %v10099, %v10100
      %v10102 = vrot.slane %v10101, 2
      %v10103 = vmax.f32 %v10101, %v10102
      %v10104 = vrot.slane %v10103, 1
      %v10105 = vmax.f32 %v10103, %v10104
      %v10106 = vsel %vm683, %v9732, -inf
      %v10107 = vrot.slane %v10106, 4
      %v10108 = vmax.f32 %v10106, %v10107
      %v10109 = vrot.slane %v10108, 2
      %v10110 = vmax.f32 %v10108, %v10109
      %v10111 = vrot.slane %v10110, 1
      %v10112 = vmax.f32 %v10110, %v10111
      %v10113 = vsel %vm683, %v9740, -inf
      %v10114 = vrot.slane %v10113, 4
      %v10115 = vmax.f32 %v10113, %v10114
      %v10116 = vrot.slane %v10115, 2
      %v10117 = vmax.f32 %v10115, %v10116
      %v10118 = vrot.slane %v10117, 1
      %v10119 = vmax.f32 %v10117, %v10118
      %v10120 = vsel %vm683, %v9748, -inf
      %v10121 = vrot.slane %v10120, 4
      %v10122 = vmax.f32 %v10120, %v10121
      %v10123 = vrot.slane %v10122, 2
      %v10124 = vmax.f32 %v10122, %v10123
      %v10125 = vrot.slane %v10124, 1
      %v10126 = vmax.f32 %v10124, %v10125
      %v10127 = vsel %vm683, %v9747, -inf
      %v10128 = vrot.slane %v10127, 4
      %v10129 = vmax.f32 %v10127, %v10128
      %v10130 = vrot.slane %v10129, 2
      %v10131 = vmax.f32 %v10129, %v10130
      %v10132 = vrot.slane %v10131, 1
      %v10133 = vmax.f32 %v10131, %v10132
      %v10134 = vsel %vm683, %v9749, -inf
      %v10135 = vrot.slane %v10134, 4
      %v10136 = vmax.f32 %v10134, %v10135
      %v10137 = vrot.slane %v10136, 2
      %v10138 = vmax.f32 %v10136, %v10137
      %v10139 = vrot.slane %v10138, 1
      %v10140 = vmax.f32 %v10138, %v10139
      %v10141 = vsel %vm683, %v9757, -inf
      %v10142 = vrot.slane %v10141, 4
      %v10143 = vmax.f32 %v10141, %v10142
      %v10144 = vrot.slane %v10143, 2
      %v10145 = vmax.f32 %v10143, %v10144
      %v10146 = vrot.slane %v10145, 1
      %v10147 = vmax.f32 %v10145, %v10146
      %v10148 = vsel %vm683, %v9765, -inf
      %v10149 = vrot.slane %v10148, 4
      %v10150 = vmax.f32 %v10148, %v10149
      %v10151 = vrot.slane %v10150, 2
      %v10152 = vmax.f32 %v10150, %v10151
      %v10153 = vrot.slane %v10152, 1
      %v10154 = vmax.f32 %v10152, %v10153
      %v10155 = vsel %vm683, %v9764, -inf
      %v10156 = vrot.slane %v10155, 4
      %v10157 = vmax.f32 %v10155, %v10156
      %v10158 = vrot.slane %v10157, 2
      %v10159 = vmax.f32 %v10157, %v10158
      %v10160 = vrot.slane %v10159, 1
      %v10161 = vmax.f32 %v10159, %v10160
      %v10162 = vsel %vm683, %v9766, -inf
      %v10163 = vrot.slane %v10162, 4
      %v10164 = vmax.f32 %v10162, %v10163
      %v10165 = vrot.slane %v10164, 2
      %v10166 = vmax.f32 %v10164, %v10165
      %v10167 = vrot.slane %v10166, 1
      %v10168 = vmax.f32 %v10166, %v10167
      %v10169 = vsel %vm683, %v9774, -inf
      %v10170 = vrot.slane %v10169, 4
      %v10171 = vmax.f32 %v10169, %v10170
      %v10172 = vrot.slane %v10171, 2
      %v10173 = vmax.f32 %v10171, %v10172
      %v10174 = vrot.slane %v10173, 1
      %v10175 = vmax.f32 %v10173, %v10174
      %v10176 = vsel %vm683, %v9782, -inf
      %v10177 = vrot.slane %v10176, 4
      %v10178 = vmax.f32 %v10176, %v10177
      %v10179 = vrot.slane %v10178, 2
      %v10180 = vmax.f32 %v10178, %v10179
      %v10181 = vrot.slane %v10180, 1
      %v10182 = vmax.f32 %v10180, %v10181
      %v10183 = vsel %vm683, %v9781, -inf
      %v10184 = vrot.slane %v10183, 4
      %v10185 = vmax.f32 %v10183, %v10184
      %v10186 = vrot.slane %v10185, 2
      %v10187 = vmax.f32 %v10185, %v10186
      %v10188 = vrot.slane %v10187, 1
      %v10189 = vmax.f32 %v10187, %v10188
      %v10190 = vsel %vm683, %v9783, -inf
      %v10191 = vrot.slane %v10190, 4
      %v10192 = vmax.f32 %v10190, %v10191
      %v10193 = vrot.slane %v10192, 2
      %v10194 = vmax.f32 %v10192, %v10193
      %v10195 = vrot.slane %v10194, 1
      %v10196 = vmax.f32 %v10194, %v10195
      %v10197 = vsel %vm683, %v9791, -inf
      %v10198 = vrot.slane %v10197, 4
      %v10199 = vmax.f32 %v10197, %v10198
      %v10200 = vrot.slane %v10199, 2
      %v10201 = vmax.f32 %v10199, %v10200
      %v10202 = vrot.slane %v10201, 1
      %v10203 = vmax.f32 %v10201, %v10202
      %v10204 = vsel %vm683, %v9799, -inf
      %v10205 = vrot.slane %v10204, 4
      %v10206 = vmax.f32 %v10204, %v10205
      %v10207 = vrot.slane %v10206, 2
      %v10208 = vmax.f32 %v10206, %v10207
      %v10209 = vrot.slane %v10208, 1
      %v10210 = vmax.f32 %v10208, %v10209
      %v10211 = vsel %vm683, %v9798, -inf
      %v10212 = vrot.slane %v10211, 4
      %v10213 = vmax.f32 %v10211, %v10212
      %v10214 = vrot.slane %v10213, 2
      %v10215 = vmax.f32 %v10213, %v10214
      %v10216 = vrot.slane %v10215, 1
      %v10217 = vmax.f32 %v10215, %v10216
      %v10218 = vsel %vm683, %v9800, -inf
      %v10219 = vrot.slane %v10218, 4
      %v10220 = vmax.f32 %v10218, %v10219
      %v10221 = vrot.slane %v10220, 2
      %v10222 = vmax.f32 %v10220, %v10221
      %v10223 = vrot.slane %v10222, 1
      %v10224 = vmax.f32 %v10222, %v10223
      %v10225 = vsel %vm683, %v9808, -inf
      %v10226 = vrot.slane %v10225, 4
      %v10227 = vmax.f32 %v10225, %v10226
      %v10228 = vrot.slane %v10227, 2
      %v10229 = vmax.f32 %v10227, %v10228
      %v10230 = vrot.slane %v10229, 1
      %v10231 = vmax.f32 %v10229, %v10230
      %v10232 = vsel %vm683, %v9816, -inf
      %v10233 = vrot.slane %v10232, 4
      %v10234 = vmax.f32 %v10232, %v10233
      %v10235 = vrot.slane %v10234, 2
      %v10236 = vmax.f32 %v10234, %v10235
      %v10237 = vrot.slane %v10236, 1
      %v10238 = vmax.f32 %v10236, %v10237
      %v10239 = vsel %vm683, %v9815, -inf
      %v10240 = vrot.slane %v10239, 4
      %v10241 = vmax.f32 %v10239, %v10240
      %v10242 = vrot.slane %v10241, 2
      %v10243 = vmax.f32 %v10241, %v10242
      %v10244 = vrot.slane %v10243, 1
      %v10245 = vmax.f32 %v10243, %v10244
      %v10246 = vsel %vm683, %v9817, -inf
      %v10247 = vrot.slane %v10246, 4
      %v10248 = vmax.f32 %v10246, %v10247
      %v10249 = vrot.slane %v10248, 2
      %v10250 = vmax.f32 %v10248, %v10249
      %v10251 = vrot.slane %v10250, 1
      %v10252 = vmax.f32 %v10250, %v10251
      %v10253 = vsel %vm683, %v9825, -inf
      %v10254 = vrot.slane %v10253, 4
      %v10255 = vmax.f32 %v10253, %v10254
      %v10256 = vrot.slane %v10255, 2
      %v10257 = vmax.f32 %v10255, %v10256
      %v10258 = vrot.slane %v10257, 1
      %v10259 = vmax.f32 %v10257, %v10258
      %v10260 = vsel %vm683, %v9833, -inf
      %v10261 = vrot.slane %v10260, 4
      %v10262 = vmax.f32 %v10260, %v10261
      %v10263 = vrot.slane %v10262, 2
      %v10264 = vmax.f32 %v10262, %v10263
      %v10265 = vrot.slane %v10264, 1
      %v10266 = vmax.f32 %v10264, %v10265
      %v10267 = vsel %vm683, %v9832, -inf
      %v10268 = vrot.slane %v10267, 4
      %v10269 = vmax.f32 %v10267, %v10268
      %v10270 = vrot.slane %v10269, 2
      %v10271 = vmax.f32 %v10269, %v10270
      %v10272 = vrot.slane %v10271, 1
      %v10273 = vmax.f32 %v10271, %v10272
      %v10274 = vsel %vm683, %v9834, -inf
      %v10275 = vrot.slane %v10274, 4
      %v10276 = vmax.f32 %v10274, %v10275
      %v10277 = vrot.slane %v10276, 2
      %v10278 = vmax.f32 %v10276, %v10277
      %v10279 = vrot.slane %v10278, 1
      %v10280 = vmax.f32 %v10278, %v10279
      %v10281 = vsel %vm683, %v9842, -inf
      %v10282 = vrot.slane %v10281, 4
      %v10283 = vmax.f32 %v10281, %v10282
      %v10284 = vrot.slane %v10283, 2
      %v10285 = vmax.f32 %v10283, %v10284
      %v10286 = vrot.slane %v10285, 1
      %v10287 = vmax.f32 %v10285, %v10286
      %v10288 = vsel %vm683, %v9850, -inf
      %v10289 = vrot.slane %v10288, 4
      %v10290 = vmax.f32 %v10288, %v10289
      %v10291 = vrot.slane %v10290, 2
      %v10292 = vmax.f32 %v10290, %v10291
      %v10293 = vrot.slane %v10292, 1
      %v10294 = vmax.f32 %v10292, %v10293
      %v10295 = vsel %vm683, %v9849, -inf
      %v10296 = vrot.slane %v10295, 4
      %v10297 = vmax.f32 %v10295, %v10296
      %v10298 = vrot.slane %v10297, 2
      %v10299 = vmax.f32 %v10297, %v10298
      %v10300 = vrot.slane %v10299, 1
      %v10301 = vmax.f32 %v10299, %v10300
      %v10302 = vsel %vm683, %v9851, -inf
      %v10303 = vrot.slane %v10302, 4
      %v10304 = vmax.f32 %v10302, %v10303
      %v10305 = vrot.slane %v10304, 2
      %v10306 = vmax.f32 %v10304, %v10305
      %v10307 = vrot.slane %v10306, 1
      %v10308 = vmax.f32 %v10306, %v10307
      %v10309 = vsel %vm683, %v9859, -inf
      %v10310 = vrot.slane %v10309, 4
      %v10311 = vmax.f32 %v10309, %v10310
      %v10312 = vrot.slane %v10311, 2
      %v10313 = vmax.f32 %v10311, %v10312
      %v10314 = vrot.slane %v10313, 1
      %v10315 = vmax.f32 %v10313, %v10314
      %v10316 = vsel %vm683, %v9867, -inf
      %v10317 = vrot.slane %v10316, 4
      %v10318 = vmax.f32 %v10316, %v10317
      %v10319 = vrot.slane %v10318, 2
      %v10320 = vmax.f32 %v10318, %v10319
      %v10321 = vrot.slane %v10320, 1
      %v10322 = vmax.f32 %v10320, %v10321
      %v10323 = vsel %vm683, %v9866, -inf
      %v10324 = vrot.slane %v10323, 4
      %v10325 = vmax.f32 %v10323, %v10324
      %v10326 = vrot.slane %v10325, 2
      %v10327 = vmax.f32 %v10325, %v10326
      %v10328 = vrot.slane %v10327, 1
      %v10329 = vmax.f32 %v10327, %v10328
      %v10330 = vsel %vm683, %v9868, -inf
      %v10331 = vrot.slane %v10330, 4
      %v10332 = vmax.f32 %v10330, %v10331
      %v10333 = vrot.slane %v10332, 2
      %v10334 = vmax.f32 %v10332, %v10333
      %v10335 = vrot.slane %v10334, 1
      %v10336 = vmax.f32 %v10334, %v10335
      %v10337 = vsel %vm683, %v9876, -inf
      %v10338 = vrot.slane %v10337, 4
      %v10339 = vmax.f32 %v10337, %v10338
      %v10340 = vrot.slane %v10339, 2
      %v10341 = vmax.f32 %v10339, %v10340
      %v10342 = vrot.slane %v10341, 1
      %v10343 = vmax.f32 %v10341, %v10342
      %v10344 = vsel %vm683, %v9884, -inf
      %v10345 = vrot.slane %v10344, 4
      %v10346 = vmax.f32 %v10344, %v10345
      %v10347 = vrot.slane %v10346, 2
      %v10348 = vmax.f32 %v10346, %v10347
      %v10349 = vrot.slane %v10348, 1
      %v10350 = vmax.f32 %v10348, %v10349
      %v10351 = vsel %vm683, %v9883, -inf
      %v10352 = vrot.slane %v10351, 4
      %v10353 = vmax.f32 %v10351, %v10352
      %v10354 = vrot.slane %v10353, 2
      %v10355 = vmax.f32 %v10353, %v10354
      %v10356 = vrot.slane %v10355, 1
      %v10357 = vmax.f32 %v10355, %v10356
      %v10358 = vsel %vm683, %v9885, -inf
      %v10359 = vrot.slane %v10358, 4
      %v10360 = vmax.f32 %v10358, %v10359
      %v10361 = vrot.slane %v10360, 2
      %v10362 = vmax.f32 %v10360, %v10361
      %v10363 = vrot.slane %v10362, 1
      %v10364 = vmax.f32 %v10362, %v10363
      %v10365 = vsel %vm683, %v9893, -inf
      %v10366 = vrot.slane %v10365, 4
      %v10367 = vmax.f32 %v10365, %v10366
      %v10368 = vrot.slane %v10367, 2
      %v10369 = vmax.f32 %v10367, %v10368
      %v10370 = vrot.slane %v10369, 1
      %v10371 = vmax.f32 %v10369, %v10370
      %v10372 = vsel %vm683, %v9901, -inf
      %v10373 = vrot.slane %v10372, 4
      %v10374 = vmax.f32 %v10372, %v10373
      %v10375 = vrot.slane %v10374, 2
      %v10376 = vmax.f32 %v10374, %v10375
      %v10377 = vrot.slane %v10376, 1
      %v10378 = vmax.f32 %v10376, %v10377
      %v10379 = vsel %vm683, %v9900, -inf
      %v10380 = vrot.slane %v10379, 4
      %v10381 = vmax.f32 %v10379, %v10380
      %v10382 = vrot.slane %v10381, 2
      %v10383 = vmax.f32 %v10381, %v10382
      %v10384 = vrot.slane %v10383, 1
      %v10385 = vmax.f32 %v10383, %v10384
      %v10386 = vsel %vm683, %v9902, -inf
      %v10387 = vrot.slane %v10386, 4
      %v10388 = vmax.f32 %v10386, %v10387
      %v10389 = vrot.slane %v10388, 2
      %v10390 = vmax.f32 %v10388, %v10389
      %v10391 = vrot.slane %v10390, 1
      %v10392 = vmax.f32 %v10390, %v10391
      %v10393 = vsel %vm683, %v9910, -inf
      %v10394 = vrot.slane %v10393, 4
      %v10395 = vmax.f32 %v10393, %v10394
      %v10396 = vrot.slane %v10395, 2
      %v10397 = vmax.f32 %v10395, %v10396
      %v10398 = vrot.slane %v10397, 1
      %v10399 = vmax.f32 %v10397, %v10398
      %v10400 = vsel %vm683, %v9918, -inf
      %v10401 = vrot.slane %v10400, 4
      %v10402 = vmax.f32 %v10400, %v10401
      %v10403 = vrot.slane %v10402, 2
      %v10404 = vmax.f32 %v10402, %v10403
      %v10405 = vrot.slane %v10404, 1
      %v10406 = vmax.f32 %v10404, %v10405
      %v10407 = vsel %vm683, %v9917, -inf
      %v10408 = vrot.slane %v10407, 4
      %v10409 = vmax.f32 %v10407, %v10408
      %v10410 = vrot.slane %v10409, 2
      %v10411 = vmax.f32 %v10409, %v10410
      %v10412 = vrot.slane %v10411, 1
      %v10413 = vmax.f32 %v10411, %v10412
      %v10414 = vsel %vm683, %v9919, -inf
      %v10415 = vrot.slane %v10414, 4
      %v10416 = vmax.f32 %v10414, %v10415
      %v10417 = vrot.slane %v10416, 2
      %v10418 = vmax.f32 %v10416, %v10417
      %v10419 = vrot.slane %v10418, 1
      %v10420 = vmax.f32 %v10418, %v10419
      %v10421 = vsel %vm683, %v9927, -inf
      %v10422 = vrot.slane %v10421, 4
      %v10423 = vmax.f32 %v10421, %v10422
      %v10424 = vrot.slane %v10423, 2
      %v10425 = vmax.f32 %v10423, %v10424
      %v10426 = vrot.slane %v10425, 1
      %v10427 = vmax.f32 %v10425, %v10426
      %v10428 = vsel %vm683, %v9935, -inf
      %v10429 = vrot.slane %v10428, 4
      %v10430 = vmax.f32 %v10428, %v10429
      %v10431 = vrot.slane %v10430, 2
      %v10432 = vmax.f32 %v10430, %v10431
      %v10433 = vrot.slane %v10432, 1
      %v10434 = vmax.f32 %v10432, %v10433
      %v10435 = vsel %vm683, %v9934, -inf
      %v10436 = vrot.slane %v10435, 4
      %v10437 = vmax.f32 %v10435, %v10436
      %v10438 = vrot.slane %v10437, 2
      %v10439 = vmax.f32 %v10437, %v10438
      %v10440 = vrot.slane %v10439, 1
      %v10441 = vmax.f32 %v10439, %v10440
      %v10442 = vsel %vm683, %v9936, -inf
      %v10443 = vrot.slane %v10442, 4
      %v10444 = vmax.f32 %v10442, %v10443
      %v10445 = vrot.slane %v10444, 2
      %v10446 = vmax.f32 %v10444, %v10445
      %v10447 = vrot.slane %v10446, 1
      %v10448 = vmax.f32 %v10446, %v10447
      %vm10513 = vcmask 1041409
      %v10514 = vsel %vm10513, %v10014, %v10007
      %vm10515 = vcmask 1042434
      %v10516 = vsel %vm10515, %v10021, %v10514
      %vm10517 = vcmask 1043459
      %v10518 = vsel %vm10517, %v10028, %v10516
      %vm10519 = vcmask 1044484
      %v10520 = vsel %vm10519, %v10035, %v10518
      %vm10521 = vcmask 1045509
      %v10522 = vsel %vm10521, %v10042, %v10520
      %vm10523 = vcmask 1046534
      %v10524 = vsel %vm10523, %v10049, %v10522
      %vm10525 = vcmask 1047559
      %v10526 = vsel %vm10525, %v10056, %v10524
      %v10527 = vsel %vm10513, %v10070, %v10063
      %v10528 = vsel %vm10515, %v10077, %v10527
      %v10529 = vsel %vm10517, %v10084, %v10528
      %v10530 = vsel %vm10519, %v10091, %v10529
      %v10531 = vsel %vm10521, %v10098, %v10530
      %v10532 = vsel %vm10523, %v10105, %v10531
      %v10533 = vsel %vm10525, %v10112, %v10532
      %v10534 = vsel %vm10513, %v10126, %v10119
      %v10535 = vsel %vm10515, %v10133, %v10534
      %v10536 = vsel %vm10517, %v10140, %v10535
      %v10537 = vsel %vm10519, %v10147, %v10536
      %v10538 = vsel %vm10521, %v10154, %v10537
      %v10539 = vsel %vm10523, %v10161, %v10538
      %v10540 = vsel %vm10525, %v10168, %v10539
      %v10541 = vsel %vm10513, %v10182, %v10175
      %v10542 = vsel %vm10515, %v10189, %v10541
      %v10543 = vsel %vm10517, %v10196, %v10542
      %v10544 = vsel %vm10519, %v10203, %v10543
      %v10545 = vsel %vm10521, %v10210, %v10544
      %v10546 = vsel %vm10523, %v10217, %v10545
      %v10547 = vsel %vm10525, %v10224, %v10546
      %v10548 = vsel %vm10513, %v10238, %v10231
      %v10549 = vsel %vm10515, %v10245, %v10548
      %v10550 = vsel %vm10517, %v10252, %v10549
      %v10551 = vsel %vm10519, %v10259, %v10550
      %v10552 = vsel %vm10521, %v10266, %v10551
      %v10553 = vsel %vm10523, %v10273, %v10552
      %v10554 = vsel %vm10525, %v10280, %v10553
      %v10555 = vsel %vm10513, %v10294, %v10287
      %v10556 = vsel %vm10515, %v10301, %v10555
      %v10557 = vsel %vm10517, %v10308, %v10556
      %v10558 = vsel %vm10519, %v10315, %v10557
      %v10559 = vsel %vm10521, %v10322, %v10558
      %v10560 = vsel %vm10523, %v10329, %v10559
      %v10561 = vsel %vm10525, %v10336, %v10560
      %v10562 = vsel %vm10513, %v10350, %v10343
      %v10563 = vsel %vm10515, %v10357, %v10562
      %v10564 = vsel %vm10517, %v10364, %v10563
      %v10565 = vsel %vm10519, %v10371, %v10564
      %v10566 = vsel %vm10521, %v10378, %v10565
      %v10567 = vsel %vm10523, %v10385, %v10566
      %v10568 = vsel %vm10525, %v10392, %v10567
      %v10569 = vsel %vm10513, %v10406, %v10399
      %v10570 = vsel %vm10515, %v10413, %v10569
      %v10571 = vsel %vm10517, %v10420, %v10570
      %v10572 = vsel %vm10519, %v10427, %v10571
      %v10573 = vsel %vm10521, %v10434, %v10572
      %v10574 = vsel %vm10523, %v10441, %v10573
      %v10575 = vsel %vm10525, %v10448, %v10574
      %10584 = vst [vmem:[%s286] sm:$0xff] %v10526
      %10585 = vst [vmem:[%s286 + $0x8] sm:$0xff] %v10533
      %10586 = vst [vmem:[%s286 + $0x10] sm:$0xff] %v10540
      %10587 = vst [vmem:[%s286 + $0x18] sm:$0xff] %v10547
      %10588 = vst [vmem:[%s286 + $0x20] sm:$0xff] %v10554
      %10589 = vst [vmem:[%s286 + $0x28] sm:$0xff] %v10561
      %10590 = vst [vmem:[%s286 + $0x30] sm:$0xff] %v10568
      %10591 = vst [vmem:[%s286 + $0x38] sm:$0xff] %v10575
      %p10592 = scmp.lt.s32.totalorder %s19, 1
      %s10593 = scalar_select %p10592, %s19, 1
      %s10594 = smul.addr %s10593, 8
      %s10595 = smul.addr %s10594, 8
      %s10596 = scalar_lea.vmem %s6, %s10595
      %p10597 = scmp.lt.s32.totalorder %s19, 1
      %s10598 = scalar_select %p10597, %s19, 1
      %s10599 = smul.addr %s10598, 32
      %s10600 = smul.addr %s10599, 8
      %s10601 = scalar_lea.vmem %s7, %s10600
      // Predicated region
      $region45: #{encoder_step_pallas.1} parent=43 // pred_check
        %p10602 = pneg %p168
      $region46: #{encoder_step_pallas.1} parent=43 // pred_check_branch
        %10604 = sbr.rel (%p10602) target = $region48
      $region47: #{encoder_step_pallas.1} parent=43 // pred_region
        _
      $region48: #{encoder_step_pallas.1} parent=43 // pred_fallthru
        _
      // Predicated region
      $region49: #{encoder_step_pallas.1} parent=43 // pred_check
        %p10605 = pneg %p194
      $region50: #{encoder_step_pallas.1} parent=43 // pred_check_branch
        %10607 = sbr.rel (%p10605) target = $region52
      $region51: #{encoder_step_pallas.1} parent=43 // pred_region
        _
      $region52: #{encoder_step_pallas.1} parent=43 // pred_fallthru
        _
    $region44: #{encoder_step_pallas.1} parent=5 // pred_fallthru
      _
    %p10608 = scmp.le.s32.totalorder 2, %s14
    // Predicated region
    $region53: #{encoder_step_pallas.1} parent=5 // pred_check
      %p10609 = pneg %p10608
    $region54: #{encoder_step_pallas.1} parent=5 // pred_check_branch
      %10611 = sbr.rel (%p10609) target = $region56
    $region55: #{encoder_step_pallas.1} parent=5 // pred_region
      %s10612 = ssub.s32 %s14, 2
      // Predicated region
      $region57: #{encoder_step_pallas.1} parent=55 // pred_check
        %p10613 = pneg %p174
      $region58: #{encoder_step_pallas.1} parent=55 // pred_check_branch
        %10615 = sbr.rel (%p10613) target = $region60
      $region59: #{encoder_step_pallas.1} parent=55 // pred_region
        %p10616 = scmp.lt.s32.totalorder %s20, 1
        %s10617 = scalar_select %p10616, %s20, 1
        %s10618 = smul.addr %s10617, 8
        %s10619 = smul.addr %s10618, 8
        %s10620 = scalar_lea.vmem %s6, %s10619
      $region60: #{encoder_step_pallas.1} parent=55 // pred_fallthru
        _
      // Predicated region
      $region61: #{encoder_step_pallas.1} parent=55 // pred_check
        %p10621 = pneg %p200
      $region62: #{encoder_step_pallas.1} parent=55 // pred_check_branch
        %10623 = sbr.rel (%p10621) target = $region64
      $region63: #{encoder_step_pallas.1} parent=55 // pred_region
        %p10624 = scmp.lt.s32.totalorder %s20, 1
        %s10625 = scalar_select %p10624, %s20, 1
        %s10626 = smul.addr %s10625, 32
        %s10627 = smul.addr %s10626, 8
        %s10628 = scalar_lea.vmem %s7, %s10627
      $region64: #{encoder_step_pallas.1} parent=55 // pred_fallthru
        _
    $region56: #{encoder_step_pallas.1} parent=5 // pred_fallthru
      _
  $region6: #{encoder_step_pallas.1} parent=0 // loop_footer
    %s18 = sadd.s32 1, %s14
  $region7: #{encoder_step_pallas.1} parent=0 // loop_footer_branch
    %13 = sbr.rel target = $region3
  $region8: #{encoder_step_pallas.1} parent=0 // loop_exit
    _

</llo_original>
